<compile_context>
chip_gen: v7x
topology: tpu7x:2x2x1
jax: 0.10.0
libtpu: 0.0.40
codegen_flags: <defaults>
</compile_context>

<pallas_src>
import jax
import jax.numpy as jnp
from jax.experimental import pallas as pl
from jax.experimental.pallas import tpu as pltpu


# ---------------------------------------------------------------------------
# Fused encoder + decoder kernel (single grid-less invocation)
# ---------------------------------------------------------------------------
def _enc_dec_kernel(m_len_ref, amask_ref, gx_enc_ref, gx_dec_ref,
                    whh_ref, w32_ref, vec_ref,
                    states_ref, preout_ref, hfin_ref):
    S = gx_enc_ref.shape[1]
    B = gx_enc_ref.shape[2]
    T = gx_dec_ref.shape[0]
    H = w32_ref.shape[1]
    H2, H3 = 2 * H, 3 * H
    f32 = jnp.float32

    # small (1,H) vectors (row-packed): bridge bias, energy vector v, b_hn's
    bb = vec_ref[0:1, :]
    v_row = vec_ref[1:2, :]
    bhn_f = vec_ref[2:3, :]
    bhn_b = vec_ref[3:4, :]
    bhn_d = vec_ref[4:5, :]

    def gru_step(gx, h, whh, bhn):
        # gx already holds x@W_ih + b_ih + [b_hr,b_hz,0] (PyTorch gate order
        # [r|z|n]).  One fused (H,3H) hidden matmul on the serial chain; the
        # r|z sigmoid is a single EUP issue over the first 2H lanes.
        ghh = jnp.dot(h, whh, preferred_element_type=f32)            # (B,3H)
        rz = jax.nn.sigmoid(gx[:, :H2] + ghh[:, :H2])
        r, z = rz[:, :H], rz[:, H:]
        n = jnp.tanh(gx[:, H2:] + r * (ghh[:, H2:] + bhn))
        return (1.0 - z) * n + z * h

    # ---- encoder: masked bi-GRU, fwd/bwd chains interleaved (2x ILP) ------
    whh_f = whh_ref[0:H, :]
    whh_b = whh_ref[H:H2, :]

    h_f = jnp.zeros((B, H), f32)
    h_b = jnp.zeros((B, H), f32)
    encf_steps = [None] * S
    encb_steps = [None] * S
    for i in range(S):
        tf, tb = i, S - 1 - i
        mf = m_len_ref[tf]                                   # (B,1)
        hf_new = gru_step(gx_enc_ref[0, tf], h_f, whh_f, bhn_f)
        h_f = mf * hf_new + (1.0 - mf) * h_f                 # pack_padded emu
        encf_steps[tf] = h_f * mf                            # padded rows -> 0
        mb = m_len_ref[tb]
        hb_new = gru_step(gx_enc_ref[1, tb], h_b, whh_b, bhn_b)
        h_b = mb * hb_new + (1.0 - mb) * h_b
        encb_steps[tb] = h_b * mb

    # ---- bridge: h0 = tanh(W_b [h_f ; h_b] + b_b), concat avoided ---------
    h = jnp.tanh(jnp.dot(h_f, w32_ref[0:H, :], preferred_element_type=f32)
                 + jnp.dot(h_b, w32_ref[H:H2, :], preferred_element_type=f32)
                 + bb)

    # ---- per-batch stacked encoder states (dense (S,H) tiles, bounded
    #      live ranges) + bulk attention key projection (kept in vregs) -----
    encf_b = [jnp.concatenate([st[b:b + 1, :] for st in encf_steps], axis=0)
              for b in range(B)]                             # (S,H) each
    encb_b = [jnp.concatenate([st[b:b + 1, :] for st in encb_steps], axis=0)
              for b in range(B)]
    wk_f = w32_ref[H2:3 * H, :]
    wk_b = w32_ref[3 * H:4 * H, :]
    pk_b = [jnp.dot(encf_b[b], wk_f, preferred_element_type=f32)
            + jnp.dot(encb_b[b], wk_b, preferred_element_type=f32)
            for b in range(B)]                               # (S,H) each
    amask_b = [amask_ref[b] for b in range(B)]               # (S,1) additive

    # loop-invariant hoists
    v_bc = jnp.broadcast_to(v_row, (S, H))

    whh_d = whh_ref[H2:H3, :]
    wctx_f = whh_ref[H3:4 * H, :]
    wctx_b = whh_ref[4 * H:5 * H, :]
    wq = w32_ref[4 * H:5 * H, :]
    wpre_h = w32_ref[5 * H:6 * H, :]
    wpre_cf = w32_ref[6 * H:7 * H, :]
    wpre_cb = w32_ref[7 * H:8 * H, :]

    # ---- decoder: Bahdanau attention + conditional GRU, fully unrolled ----
    for t in range(T):
        # attention query uses the hidden state BEFORE the GRU update
        q = jnp.dot(h, wq, preferred_element_type=f32)        # (B,H)
        ctxf_rows, ctxb_rows = [], []
        for b in range(B):
            # dense (S,H) energies: 1 EUP tanh, XLU lane reduce for scores
            energy = jnp.tanh(pk_b[b] + q[b:b + 1, :])        # (S,H)
            sc = jnp.sum(energy * v_bc, axis=1, keepdims=True) + amask_b[b]
            smax = jnp.max(sc, axis=0, keepdims=True)         # (1,1)
            e = jnp.exp(sc - smax)
            denom = jnp.sum(e, axis=0, keepdims=True)
            alpha = e * pl.reciprocal(denom, approx=True)     # (S,1)
            # context accumulated per direction via sublane reductions
            ctxf_rows.append(jnp.sum(alpha * encf_b[b], axis=0, keepdims=True))
            ctxb_rows.append(jnp.sum(alpha * encb_b[b], axis=0, keepdims=True))
        ctx_f = jnp.concatenate(ctxf_rows, axis=0)            # (B,H)
        ctx_b = jnp.concatenate(ctxb_rows, axis=0)            # (B,H)

        # conditional GRU on [prev_embed, context]; embedding part hoisted
        gi = (gx_dec_ref[t, :, 0:H3]
              + jnp.dot(ctx_f, wctx_f, preferred_element_type=f32)
              + jnp.dot(ctx_b, wctx_b, preferred_element_type=f32))
        h = gru_step(gi, h, whh_d, bhn_d)

        # outputs written in (B,T,H) directly; pre_output in-loop (off the
        # recurrence critical path, bounds live ranges)
        states_ref[:, t, :] = h
        preout_ref[:, t, :] = (gx_dec_ref[t, :, H3:]
                               + jnp.dot(h, wpre_h, preferred_element_type=f32)
                               + jnp.dot(ctx_f, wpre_cf, preferred_element_type=f32)
                               + jnp.dot(ctx_b, wpre_cb, preferred_element_type=f32))

    hfin_ref[0] = h


# ---------------------------------------------------------------------------
# Parameters, one-time packing, and the plain-JAX glue around the kernel
# ---------------------------------------------------------------------------
_VMEM = pl.BlockSpec(memory_space=pltpu.MemorySpace.VMEM)


def init_params(key, vocab, emb, hidden):
    keys = jax.random.split(key, 32)
    idx = iter(range(32))

    def rnd(shape, scale=0.1):
        return (scale * jax.random.normal(keys[next(idx)], shape)).astype(jnp.float32)

    H, E, V = hidden, emb, vocab
    return {
        'src_emb': rnd((V, E)),
        'trg_emb': rnd((V, E)),
        # encoder bidirectional GRU (weights stored transposed: x @ W)
        'enc_wih_f': rnd((E, 3 * H)), 'enc_whh_f': rnd((H, 3 * H)),
        'enc_bih_f': rnd((1, 3 * H)), 'enc_bhh_f': rnd((1, 3 * H)),
        'enc_wih_b': rnd((E, 3 * H)), 'enc_whh_b': rnd((H, 3 * H)),
        'enc_bih_b': rnd((1, 3 * H)), 'enc_bhh_b': rnd((1, 3 * H)),
        # decoder bridge Linear(2H, H)
        'wb': rnd((2 * H, H)), 'bb': rnd((1, H)),
        # Bahdanau attention (key/query/energy layers, no bias)
        'wk': rnd((2 * H, H)), 'wq': rnd((H, H)), 'v': rnd((1, H)),
        # decoder GRU, input = [emb, context] -> rows [0:E]=emb, [E:]=ctx
        'dec_wih': rnd((E + 2 * H, 3 * H)), 'dec_whh': rnd((H, 3 * H)),
        'dec_bih': rnd((1, 3 * H)), 'dec_bhh': rnd((1, 3 * H)),
        # pre_output_layer Linear(E + 3H, H, bias=False): rows [emb|h|ctx]
        'wpre': rnd((E + 3 * H, H)),
        # generator (constructed but NOT applied in forward, like the module)
        'wgen': rnd((H, V)), 'bgen': rnd((1, V)),
    }


def pack_params(p):
    """One-time packing into the few fused arrays the kernel consumes
    (fewer prologue DMAs, fewer per-call XLA ops)."""
    H = p['dec_whh'].shape[0]
    E = p['src_emb'].shape[1]
    f32 = jnp.float32

    def fold(b_ih, b_hh):
        # b_ih + [b_hr, b_hz, 0]; b_hn stays inside the r*(...) term
        return b_ih + jnp.concatenate([b_hh[:, :2 * H],
                                       jnp.zeros((1, H), f32)], axis=1)

    return {
        'src_emb': p['src_emb'],
        'trg_emb': p['trg_emb'],
        # fused input-to-hidden projection weights / folded biases
        'w_in_src': jnp.concatenate([p['enc_wih_f'], p['enc_wih_b']], axis=1),
        'b_in_src': jnp.concatenate([fold(p['enc_bih_f'], p['enc_bhh_f']),
                                     fold(p['enc_bih_b'], p['enc_bhh_b'])], axis=1),
        'w_in_trg': jnp.concatenate([p['dec_wih'][:E], p['wpre'][:E]], axis=1),
        'b_in_trg': jnp.concatenate([fold(p['dec_bih'], p['dec_bhh']),
                                     jnp.zeros((1, H), f32)], axis=1),
        # 3H-column weights, row-packed: [whh_f|whh_b|whh_d|wctx_f|wctx_b]
        'whh_all': jnp.concatenate([p['enc_whh_f'], p['enc_whh_b'],
                                    p['dec_whh'], p['dec_wih'][E:]], axis=0),
        # H-column weights, row-packed:
        # [wb_f|wb_b|wk_f|wk_b|wq|wpre_h|wpre_cf|wpre_cb]  (8H x H)
        'w32_all': jnp.concatenate([p['wb'], p['wk'], p['wq'],
                                    p['wpre'][E:E + H], p['wpre'][E + H:]],
                                   axis=0),
        # small (1,H) vectors: [bb | v | bhn_f | bhn_b | bhn_d | pad...]
        'vecs': jnp.concatenate([p['bb'], p['v'],
                                 p['enc_bhh_f'][:, 2 * H:],
                                 p['enc_bhh_b'][:, 2 * H:],
                                 p['dec_bhh'][:, 2 * H:],
                                 jnp.zeros((3, H), f32)], axis=0),
    }


def encoder_decoder_forward(packed, src, trg, src_mask, trg_mask,
                            src_lengths, trg_lengths):
    # trg_lengths accepted (to match the PyTorch signature) but unused,
    # exactly like the reference forward().
    B, S = src.shape
    _, T = trg.shape
    E = packed['src_emb'].shape[1]
    H = packed['w32_all'].shape[1]
    H3 = 3 * H
    f32 = jnp.float32

    # embeddings (XLA gather) + time-major flattening: row = s*B + b
    x_src = jnp.transpose(jnp.take(packed['src_emb'], src, axis=0),
                          (1, 0, 2)).reshape(S * B, E)
    x_trg = jnp.transpose(jnp.take(packed['trg_emb'], trg, axis=0),
                          (1, 0, 2)).reshape(T * B, E)

    # hoisted bulk input projections, one fused lane-dense matmul per side
    gsrc = x_src @ packed['w_in_src'] + packed['b_in_src']          # (S*B,6H)
    gx_enc = jnp.stack([gsrc[:, :H3].reshape(S, B, H3),
                        gsrc[:, H3:].reshape(S, B, H3)], axis=0)    # (2,S,B,3H)
    gx_dec = (x_trg @ packed['w_in_trg']
              + packed['b_in_trg']).reshape(T, B, 4 * H)            # (T,B,4H)

    # masks: length mask (packed-sequence emulation) + additive attn mask
    m_len = (jnp.arange(S)[None, :] < src_lengths[:, None]).astype(f32)
    m_len = jnp.transpose(m_len, (1, 0))[:, :, None]                # (S,B,1)
    amask = jnp.where(src_mask, 0.0, -1e30).astype(f32)[:, :, None]  # (B,S,1)

    out_shapes = (jax.ShapeDtypeStruct((B, T, H), f32),   # decoder states
                  jax.ShapeDtypeStruct((B, T, H), f32),   # pre_output
                  jax.ShapeDtypeStruct((1, B, H), f32))   # final hidden

    states, preout, hfin = pl.pallas_call(
        _enc_dec_kernel,
        out_shape=out_shapes,
        in_specs=[_VMEM] * 7,
        out_specs=(_VMEM, _VMEM, _VMEM),
    )(m_len, amask, gx_enc, gx_dec,
      packed['whh_all'], packed['w32_all'], packed['vecs'])

    return states, hfin, preout


# ---------------------------------------------------------------------------
if __name__ == "__main__":
    B, S, T = 2, 8, 8          # batch, src len, trg len
    V, E, H = 50, 32, 32       # vocab, embedding, hidden

    key = jax.random.PRNGKey(0)
    kp, ks, kt = jax.random.split(key, 3)
    params = init_params(kp, V, E, H)
    packed = pack_params(params)   # one-time packing, outside the per-call jit

    src = jax.random.randint(ks, (B, S), 1, V, dtype=jnp.int32)
    trg = jax.random.randint(kt, (B, T), 1, V, dtype=jnp.int32)
    src_lengths = jnp.array([8, 5], dtype=jnp.int32)
    trg_lengths = jnp.array([8, 6], dtype=jnp.int32)
    src_mask = (jnp.arange(S)[None, :] < src_lengths[:, None])       # (B,S) bool
    trg_mask = (jnp.arange(T)[None, :] < trg_lengths[:, None])       # (B,T) bool

    fwd = jax.jit(encoder_decoder_forward)
    decoder_states, hidden, pre_output = fwd(packed, src, trg, src_mask,
                                             trg_mask, src_lengths, trg_lengths)
    jax.block_until_ready((decoder_states, hidden, pre_output))

    assert decoder_states.shape == (B, T, H)
    assert hidden.shape == (1, B, H)
    assert pre_output.shape == (B, T, H)
    assert bool(jnp.all(jnp.isfinite(decoder_states)))
    assert bool(jnp.all(jnp.isfinite(pre_output)))
    # TODO(synk): Generator (Linear + log_softmax) is instantiated but, per the
    # reference forward(), never applied in the forward pass.
    print("KERNEL_OK")
</pallas_src>

<mosaic_0001>
module attributes {stable_mosaic.version = 11 : i64} {
  func.func @_enc_dec_kernel(%arg0: memref<8x2x1xf32, #tpu.memory_space<vmem>>, %arg1: memref<2x8x1xf32, #tpu.memory_space<vmem>>, %arg2: memref<2x8x2x96xf32, #tpu.memory_space<vmem>>, %arg3: memref<8x2x128xf32, #tpu.memory_space<vmem>>, %arg4: memref<160x96xf32, #tpu.memory_space<vmem>>, %arg5: memref<256x32xf32, #tpu.memory_space<vmem>>, %arg6: memref<8x32xf32, #tpu.memory_space<vmem>>, %arg7: memref<2x8x32xf32, #tpu.memory_space<vmem>>, %arg8: memref<2x8x32xf32, #tpu.memory_space<vmem>>, %arg9: memref<1x2x32xf32, #tpu.memory_space<vmem>>) attributes {dimension_semantics = [], scalar_prefetch = 0 : i64, scratch_operands = 0 : i64, tpu.core_type = #tpu.core_type<tc>} {
    %c0 = arith.constant 0 : index
    %c0_0 = arith.constant 0 : index
    %0 = vector.load %arg6[%c0, %c0_0] : memref<8x32xf32, #tpu.memory_space<vmem>>, vector<1x32xf32>
    %c1 = arith.constant 1 : index
    %c0_1 = arith.constant 0 : index
    %1 = vector.load %arg6[%c1, %c0_1] : memref<8x32xf32, #tpu.memory_space<vmem>>, vector<1x32xf32>
    %c2 = arith.constant 2 : index
    %c0_2 = arith.constant 0 : index
    %2 = vector.load %arg6[%c2, %c0_2] : memref<8x32xf32, #tpu.memory_space<vmem>>, vector<1x32xf32>
    %c3 = arith.constant 3 : index
    %c0_3 = arith.constant 0 : index
    %3 = vector.load %arg6[%c3, %c0_3] : memref<8x32xf32, #tpu.memory_space<vmem>>, vector<1x32xf32>
    %c4 = arith.constant 4 : index
    %c0_4 = arith.constant 0 : index
    %4 = vector.load %arg6[%c4, %c0_4] : memref<8x32xf32, #tpu.memory_space<vmem>>, vector<1x32xf32>
    %c0_5 = arith.constant 0 : index
    %c0_6 = arith.constant 0 : index
    %5 = vector.load %arg4[%c0_5, %c0_6] : memref<160x96xf32, #tpu.memory_space<vmem>>, vector<32x96xf32>
    %c32 = arith.constant 32 : index
    %c0_7 = arith.constant 0 : index
    %6 = vector.load %arg4[%c32, %c0_7] : memref<160x96xf32, #tpu.memory_space<vmem>>, vector<32x96xf32>
    %cst = arith.constant 0.000000e+00 : f32
    %7 = vector.broadcast %cst : f32 to vector<2x32xf32>
    %cst_8 = arith.constant 0.000000e+00 : f32
    %8 = vector.broadcast %cst_8 : f32 to vector<2x32xf32>
    %c0_9 = arith.constant 0 : index
    %c0_10 = arith.constant 0 : index
    %c0_11 = arith.constant 0 : index
    %9 = vector.load %arg0[%c0_9, %c0_10, %c0_11] : memref<8x2x1xf32, #tpu.memory_space<vmem>>, vector<1x2x1xf32>
    %10 = vector.shape_cast %9 : vector<1x2x1xf32> to vector<2x1xf32>
    %c0_12 = arith.constant 0 : index
    %c0_13 = arith.constant 0 : index
    %c0_14 = arith.constant 0 : index
    %c0_15 = arith.constant 0 : index
    %11 = vector.load %arg2[%c0_12, %c0_13, %c0_14, %c0_15] : memref<2x8x2x96xf32, #tpu.memory_space<vmem>>, vector<1x1x2x96xf32>
    %12 = vector.shape_cast %11 : vector<1x1x2x96xf32> to vector<2x96xf32>
    %cst_16 = arith.constant dense<0.000000e+00> : vector<2x96xf32>
    %13 = tpu.matmul %7, %5, %cst_16 {dimension_numbers = #tpu.dot_dimension_numbers<[1], [0], [0], [1], [0, 0, 1, 1], [], []>} : vector<2x32xf32>, vector<32x96xf32>, vector<2x96xf32> -> vector<2x96xf32>
    %14 = vector.extract_strided_slice %12 {offsets = [0, 0], sizes = [2, 64], strides = [1, 1]} : vector<2x96xf32> to vector<2x64xf32>
    %15 = vector.extract_strided_slice %13 {offsets = [0, 0], sizes = [2, 64], strides = [1, 1]} : vector<2x96xf32> to vector<2x64xf32>
    %16 = arith.addf %14, %15 : vector<2x64xf32>
    %17 = arith.negf %16 : vector<2x64xf32>
    %18 = math.exp %17 : vector<2x64xf32>
    %cst_17 = arith.constant 1.000000e+00 : f32
    %19 = vector.broadcast %cst_17 : f32 to vector<2x64xf32>
    %20 = arith.addf %19, %18 : vector<2x64xf32>
    %21 = arith.divf %19, %20 : vector<2x64xf32>
    %22 = vector.extract_strided_slice %21 {offsets = [0, 0], sizes = [2, 32], strides = [1, 1]} : vector<2x64xf32> to vector<2x32xf32>
    %23 = vector.extract_strided_slice %21 {offsets = [0, 32], sizes = [2, 32], strides = [1, 1]} : vector<2x64xf32> to vector<2x32xf32>
    %24 = vector.extract_strided_slice %12 {offsets = [0, 64], sizes = [2, 32], strides = [1, 1]} : vector<2x96xf32> to vector<2x32xf32>
    %25 = vector.extract_strided_slice %13 {offsets = [0, 64], sizes = [2, 32], strides = [1, 1]} : vector<2x96xf32> to vector<2x32xf32>
    %26 = vector.broadcast %2 : vector<1x32xf32> to vector<2x32xf32>
    %27 = arith.addf %25, %26 : vector<2x32xf32>
    %28 = arith.mulf %22, %27 : vector<2x32xf32>
    %29 = arith.addf %24, %28 : vector<2x32xf32>
    %30 = math.tanh %29 : vector<2x32xf32>
    %cst_18 = arith.constant 1.000000e+00 : f32
    %31 = vector.broadcast %cst_18 : f32 to vector<2x32xf32>
    %32 = arith.subf %31, %23 : vector<2x32xf32>
    %33 = arith.mulf %32, %30 : vector<2x32xf32>
    %34 = arith.mulf %23, %7 : vector<2x32xf32>
    %35 = arith.addf %33, %34 : vector<2x32xf32>
    %36 = vector.broadcast %10 : vector<2x1xf32> to vector<2x32xf32>
    %37 = arith.mulf %36, %35 : vector<2x32xf32>
    %cst_19 = arith.constant 1.000000e+00 : f32
    %38 = vector.broadcast %cst_19 : f32 to vector<2x1xf32>
    %39 = arith.subf %38, %10 : vector<2x1xf32>
    %40 = vector.broadcast %39 : vector<2x1xf32> to vector<2x32xf32>
    %41 = arith.mulf %40, %7 : vector<2x32xf32>
    %42 = arith.addf %37, %41 : vector<2x32xf32>
    %43 = vector.broadcast %10 : vector<2x1xf32> to vector<2x32xf32>
    %44 = arith.mulf %42, %43 : vector<2x32xf32>
    %c7 = arith.constant 7 : index
    %c0_20 = arith.constant 0 : index
    %c0_21 = arith.constant 0 : index
    %45 = vector.load %arg0[%c7, %c0_20, %c0_21] : memref<8x2x1xf32, #tpu.memory_space<vmem>>, vector<1x2x1xf32>
    %46 = vector.shape_cast %45 : vector<1x2x1xf32> to vector<2x1xf32>
    %c1_22 = arith.constant 1 : index
    %c7_23 = arith.constant 7 : index
    %c0_24 = arith.constant 0 : index
    %c0_25 = arith.constant 0 : index
    %47 = vector.load %arg2[%c1_22, %c7_23, %c0_24, %c0_25] : memref<2x8x2x96xf32, #tpu.memory_space<vmem>>, vector<1x1x2x96xf32>
    %48 = vector.shape_cast %47 : vector<1x1x2x96xf32> to vector<2x96xf32>
    %cst_26 = arith.constant dense<0.000000e+00> : vector<2x96xf32>
    %49 = tpu.matmul %8, %6, %cst_26 {dimension_numbers = #tpu.dot_dimension_numbers<[1], [0], [0], [1], [0, 0, 1, 1], [], []>} : vector<2x32xf32>, vector<32x96xf32>, vector<2x96xf32> -> vector<2x96xf32>
    %50 = vector.extract_strided_slice %48 {offsets = [0, 0], sizes = [2, 64], strides = [1, 1]} : vector<2x96xf32> to vector<2x64xf32>
    %51 = vector.extract_strided_slice %49 {offsets = [0, 0], sizes = [2, 64], strides = [1, 1]} : vector<2x96xf32> to vector<2x64xf32>
    %52 = arith.addf %50, %51 : vector<2x64xf32>
    %53 = arith.negf %52 : vector<2x64xf32>
    %54 = math.exp %53 : vector<2x64xf32>
    %cst_27 = arith.constant 1.000000e+00 : f32
    %55 = vector.broadcast %cst_27 : f32 to vector<2x64xf32>
    %56 = arith.addf %55, %54 : vector<2x64xf32>
    %57 = arith.divf %55, %56 : vector<2x64xf32>
    %58 = vector.extract_strided_slice %57 {offsets = [0, 0], sizes = [2, 32], strides = [1, 1]} : vector<2x64xf32> to vector<2x32xf32>
    %59 = vector.extract_strided_slice %57 {offsets = [0, 32], sizes = [2, 32], strides = [1, 1]} : vector<2x64xf32> to vector<2x32xf32>
    %60 = vector.extract_strided_slice %48 {offsets = [0, 64], sizes = [2, 32], strides = [1, 1]} : vector<2x96xf32> to vector<2x32xf32>
    %61 = vector.extract_strided_slice %49 {offsets = [0, 64], sizes = [2, 32], strides = [1, 1]} : vector<2x96xf32> to vector<2x32xf32>
    %62 = vector.broadcast %3 : vector<1x32xf32> to vector<2x32xf32>
    %63 = arith.addf %61, %62 : vector<2x32xf32>
    %64 = arith.mulf %58, %63 : vector<2x32xf32>
    %65 = arith.addf %60, %64 : vector<2x32xf32>
    %66 = math.tanh %65 : vector<2x32xf32>
    %cst_28 = arith.constant 1.000000e+00 : f32
    %67 = vector.broadcast %cst_28 : f32 to vector<2x32xf32>
    %68 = arith.subf %67, %59 : vector<2x32xf32>
    %69 = arith.mulf %68, %66 : vector<2x32xf32>
    %70 = arith.mulf %59, %8 : vector<2x32xf32>
    %71 = arith.addf %69, %70 : vector<2x32xf32>
    %72 = vector.broadcast %46 : vector<2x1xf32> to vector<2x32xf32>
    %73 = arith.mulf %72, %71 : vector<2x32xf32>
    %cst_29 = arith.constant 1.000000e+00 : f32
    %74 = vector.broadcast %cst_29 : f32 to vector<2x1xf32>
    %75 = arith.subf %74, %46 : vector<2x1xf32>
    %76 = vector.broadcast %75 : vector<2x1xf32> to vector<2x32xf32>
    %77 = arith.mulf %76, %8 : vector<2x32xf32>
    %78 = arith.addf %73, %77 : vector<2x32xf32>
    %79 = vector.broadcast %46 : vector<2x1xf32> to vector<2x32xf32>
    %80 = arith.mulf %78, %79 : vector<2x32xf32>
    %c1_30 = arith.constant 1 : index
    %c0_31 = arith.constant 0 : index
    %c0_32 = arith.constant 0 : index
    %81 = vector.load %arg0[%c1_30, %c0_31, %c0_32] : memref<8x2x1xf32, #tpu.memory_space<vmem>>, vector<1x2x1xf32>
    %82 = vector.shape_cast %81 : vector<1x2x1xf32> to vector<2x1xf32>
    %c0_33 = arith.constant 0 : index
    %c1_34 = arith.constant 1 : index
    %c0_35 = arith.constant 0 : index
    %c0_36 = arith.constant 0 : index
    %83 = vector.load %arg2[%c0_33, %c1_34, %c0_35, %c0_36] : memref<2x8x2x96xf32, #tpu.memory_space<vmem>>, vector<1x1x2x96xf32>
    %84 = vector.shape_cast %83 : vector<1x1x2x96xf32> to vector<2x96xf32>
    %cst_37 = arith.constant dense<0.000000e+00> : vector<2x96xf32>
    %85 = tpu.matmul %42, %5, %cst_37 {dimension_numbers = #tpu.dot_dimension_numbers<[1], [0], [0], [1], [0, 0, 1, 1], [], []>} : vector<2x32xf32>, vector<32x96xf32>, vector<2x96xf32> -> vector<2x96xf32>
    %86 = vector.extract_strided_slice %84 {offsets = [0, 0], sizes = [2, 64], strides = [1, 1]} : vector<2x96xf32> to vector<2x64xf32>
    %87 = vector.extract_strided_slice %85 {offsets = [0, 0], sizes = [2, 64], strides = [1, 1]} : vector<2x96xf32> to vector<2x64xf32>
    %88 = arith.addf %86, %87 : vector<2x64xf32>
    %89 = arith.negf %88 : vector<2x64xf32>
    %90 = math.exp %89 : vector<2x64xf32>
    %cst_38 = arith.constant 1.000000e+00 : f32
    %91 = vector.broadcast %cst_38 : f32 to vector<2x64xf32>
    %92 = arith.addf %91, %90 : vector<2x64xf32>
    %93 = arith.divf %91, %92 : vector<2x64xf32>
    %94 = vector.extract_strided_slice %93 {offsets = [0, 0], sizes = [2, 32], strides = [1, 1]} : vector<2x64xf32> to vector<2x32xf32>
    %95 = vector.extract_strided_slice %93 {offsets = [0, 32], sizes = [2, 32], strides = [1, 1]} : vector<2x64xf32> to vector<2x32xf32>
    %96 = vector.extract_strided_slice %84 {offsets = [0, 64], sizes = [2, 32], strides = [1, 1]} : vector<2x96xf32> to vector<2x32xf32>
    %97 = vector.extract_strided_slice %85 {offsets = [0, 64], sizes = [2, 32], strides = [1, 1]} : vector<2x96xf32> to vector<2x32xf32>
    %98 = vector.broadcast %2 : vector<1x32xf32> to vector<2x32xf32>
    %99 = arith.addf %97, %98 : vector<2x32xf32>
    %100 = arith.mulf %94, %99 : vector<2x32xf32>
    %101 = arith.addf %96, %100 : vector<2x32xf32>
    %102 = math.tanh %101 : vector<2x32xf32>
    %cst_39 = arith.constant 1.000000e+00 : f32
    %103 = vector.broadcast %cst_39 : f32 to vector<2x32xf32>
    %104 = arith.subf %103, %95 : vector<2x32xf32>
    %105 = arith.mulf %104, %102 : vector<2x32xf32>
    %106 = arith.mulf %95, %42 : vector<2x32xf32>
    %107 = arith.addf %105, %106 : vector<2x32xf32>
    %108 = vector.broadcast %82 : vector<2x1xf32> to vector<2x32xf32>
    %109 = arith.mulf %108, %107 : vector<2x32xf32>
    %cst_40 = arith.constant 1.000000e+00 : f32
    %110 = vector.broadcast %cst_40 : f32 to vector<2x1xf32>
    %111 = arith.subf %110, %82 : vector<2x1xf32>
    %112 = vector.broadcast %111 : vector<2x1xf32> to vector<2x32xf32>
    %113 = arith.mulf %112, %42 : vector<2x32xf32>
    %114 = arith.addf %109, %113 : vector<2x32xf32>
    %115 = vector.broadcast %82 : vector<2x1xf32> to vector<2x32xf32>
    %116 = arith.mulf %114, %115 : vector<2x32xf32>
    %c6 = arith.constant 6 : index
    %c0_41 = arith.constant 0 : index
    %c0_42 = arith.constant 0 : index
    %117 = vector.load %arg0[%c6, %c0_41, %c0_42] : memref<8x2x1xf32, #tpu.memory_space<vmem>>, vector<1x2x1xf32>
    %118 = vector.shape_cast %117 : vector<1x2x1xf32> to vector<2x1xf32>
    %c1_43 = arith.constant 1 : index
    %c6_44 = arith.constant 6 : index
    %c0_45 = arith.constant 0 : index
    %c0_46 = arith.constant 0 : index
    %119 = vector.load %arg2[%c1_43, %c6_44, %c0_45, %c0_46] : memref<2x8x2x96xf32, #tpu.memory_space<vmem>>, vector<1x1x2x96xf32>
    %120 = vector.shape_cast %119 : vector<1x1x2x96xf32> to vector<2x96xf32>
    %cst_47 = arith.constant dense<0.000000e+00> : vector<2x96xf32>
    %121 = tpu.matmul %78, %6, %cst_47 {dimension_numbers = #tpu.dot_dimension_numbers<[1], [0], [0], [1], [0, 0, 1, 1], [], []>} : vector<2x32xf32>, vector<32x96xf32>, vector<2x96xf32> -> vector<2x96xf32>
    %122 = vector.extract_strided_slice %120 {offsets = [0, 0], sizes = [2, 64], strides = [1, 1]} : vector<2x96xf32> to vector<2x64xf32>
    %123 = vector.extract_strided_slice %121 {offsets = [0, 0], sizes = [2, 64], strides = [1, 1]} : vector<2x96xf32> to vector<2x64xf32>
    %124 = arith.addf %122, %123 : vector<2x64xf32>
    %125 = arith.negf %124 : vector<2x64xf32>
    %126 = math.exp %125 : vector<2x64xf32>
    %cst_48 = arith.constant 1.000000e+00 : f32
    %127 = vector.broadcast %cst_48 : f32 to vector<2x64xf32>
    %128 = arith.addf %127, %126 : vector<2x64xf32>
    %129 = arith.divf %127, %128 : vector<2x64xf32>
    %130 = vector.extract_strided_slice %129 {offsets = [0, 0], sizes = [2, 32], strides = [1, 1]} : vector<2x64xf32> to vector<2x32xf32>
    %131 = vector.extract_strided_slice %129 {offsets = [0, 32], sizes = [2, 32], strides = [1, 1]} : vector<2x64xf32> to vector<2x32xf32>
    %132 = vector.extract_strided_slice %120 {offsets = [0, 64], sizes = [2, 32], strides = [1, 1]} : vector<2x96xf32> to vector<2x32xf32>
    %133 = vector.extract_strided_slice %121 {offsets = [0, 64], sizes = [2, 32], strides = [1, 1]} : vector<2x96xf32> to vector<2x32xf32>
    %134 = vector.broadcast %3 : vector<1x32xf32> to vector<2x32xf32>
    %135 = arith.addf %133, %134 : vector<2x32xf32>
    %136 = arith.mulf %130, %135 : vector<2x32xf32>
    %137 = arith.addf %132, %136 : vector<2x32xf32>
    %138 = math.tanh %137 : vector<2x32xf32>
    %cst_49 = arith.constant 1.000000e+00 : f32
    %139 = vector.broadcast %cst_49 : f32 to vector<2x32xf32>
    %140 = arith.subf %139, %131 : vector<2x32xf32>
    %141 = arith.mulf %140, %138 : vector<2x32xf32>
    %142 = arith.mulf %131, %78 : vector<2x32xf32>
    %143 = arith.addf %141, %142 : vector<2x32xf32>
    %144 = vector.broadcast %118 : vector<2x1xf32> to vector<2x32xf32>
    %145 = arith.mulf %144, %143 : vector<2x32xf32>
    %cst_50 = arith.constant 1.000000e+00 : f32
    %146 = vector.broadcast %cst_50 : f32 to vector<2x1xf32>
    %147 = arith.subf %146, %118 : vector<2x1xf32>
    %148 = vector.broadcast %147 : vector<2x1xf32> to vector<2x32xf32>
    %149 = arith.mulf %148, %78 : vector<2x32xf32>
    %150 = arith.addf %145, %149 : vector<2x32xf32>
    %151 = vector.broadcast %118 : vector<2x1xf32> to vector<2x32xf32>
    %152 = arith.mulf %150, %151 : vector<2x32xf32>
    %c2_51 = arith.constant 2 : index
    %c0_52 = arith.constant 0 : index
    %c0_53 = arith.constant 0 : index
    %153 = vector.load %arg0[%c2_51, %c0_52, %c0_53] : memref<8x2x1xf32, #tpu.memory_space<vmem>>, vector<1x2x1xf32>
    %154 = vector.shape_cast %153 : vector<1x2x1xf32> to vector<2x1xf32>
    %c0_54 = arith.constant 0 : index
    %c2_55 = arith.constant 2 : index
    %c0_56 = arith.constant 0 : index
    %c0_57 = arith.constant 0 : index
    %155 = vector.load %arg2[%c0_54, %c2_55, %c0_56, %c0_57] : memref<2x8x2x96xf32, #tpu.memory_space<vmem>>, vector<1x1x2x96xf32>
    %156 = vector.shape_cast %155 : vector<1x1x2x96xf32> to vector<2x96xf32>
    %cst_58 = arith.constant dense<0.000000e+00> : vector<2x96xf32>
    %157 = tpu.matmul %114, %5, %cst_58 {dimension_numbers = #tpu.dot_dimension_numbers<[1], [0], [0], [1], [0, 0, 1, 1], [], []>} : vector<2x32xf32>, vector<32x96xf32>, vector<2x96xf32> -> vector<2x96xf32>
    %158 = vector.extract_strided_slice %156 {offsets = [0, 0], sizes = [2, 64], strides = [1, 1]} : vector<2x96xf32> to vector<2x64xf32>
    %159 = vector.extract_strided_slice %157 {offsets = [0, 0], sizes = [2, 64], strides = [1, 1]} : vector<2x96xf32> to vector<2x64xf32>
    %160 = arith.addf %158, %159 : vector<2x64xf32>
    %161 = arith.negf %160 : vector<2x64xf32>
    %162 = math.exp %161 : vector<2x64xf32>
    %cst_59 = arith.constant 1.000000e+00 : f32
    %163 = vector.broadcast %cst_59 : f32 to vector<2x64xf32>
    %164 = arith.addf %163, %162 : vector<2x64xf32>
    %165 = arith.divf %163, %164 : vector<2x64xf32>
    %166 = vector.extract_strided_slice %165 {offsets = [0, 0], sizes = [2, 32], strides = [1, 1]} : vector<2x64xf32> to vector<2x32xf32>
    %167 = vector.extract_strided_slice %165 {offsets = [0, 32], sizes = [2, 32], strides = [1, 1]} : vector<2x64xf32> to vector<2x32xf32>
    %168 = vector.extract_strided_slice %156 {offsets = [0, 64], sizes = [2, 32], strides = [1, 1]} : vector<2x96xf32> to vector<2x32xf32>
    %169 = vector.extract_strided_slice %157 {offsets = [0, 64], sizes = [2, 32], strides = [1, 1]} : vector<2x96xf32> to vector<2x32xf32>
    %170 = vector.broadcast %2 : vector<1x32xf32> to vector<2x32xf32>
    %171 = arith.addf %169, %170 : vector<2x32xf32>
    %172 = arith.mulf %166, %171 : vector<2x32xf32>
    %173 = arith.addf %168, %172 : vector<2x32xf32>
    %174 = math.tanh %173 : vector<2x32xf32>
    %cst_60 = arith.constant 1.000000e+00 : f32
    %175 = vector.broadcast %cst_60 : f32 to vector<2x32xf32>
    %176 = arith.subf %175, %167 : vector<2x32xf32>
    %177 = arith.mulf %176, %174 : vector<2x32xf32>
    %178 = arith.mulf %167, %114 : vector<2x32xf32>
    %179 = arith.addf %177, %178 : vector<2x32xf32>
    %180 = vector.broadcast %154 : vector<2x1xf32> to vector<2x32xf32>
    %181 = arith.mulf %180, %179 : vector<2x32xf32>
    %cst_61 = arith.constant 1.000000e+00 : f32
    %182 = vector.broadcast %cst_61 : f32 to vector<2x1xf32>
    %183 = arith.subf %182, %154 : vector<2x1xf32>
    %184 = vector.broadcast %183 : vector<2x1xf32> to vector<2x32xf32>
    %185 = arith.mulf %184, %114 : vector<2x32xf32>
    %186 = arith.addf %181, %185 : vector<2x32xf32>
    %187 = vector.broadcast %154 : vector<2x1xf32> to vector<2x32xf32>
    %188 = arith.mulf %186, %187 : vector<2x32xf32>
    %c5 = arith.constant 5 : index
    %c0_62 = arith.constant 0 : index
    %c0_63 = arith.constant 0 : index
    %189 = vector.load %arg0[%c5, %c0_62, %c0_63] : memref<8x2x1xf32, #tpu.memory_space<vmem>>, vector<1x2x1xf32>
    %190 = vector.shape_cast %189 : vector<1x2x1xf32> to vector<2x1xf32>
    %c1_64 = arith.constant 1 : index
    %c5_65 = arith.constant 5 : index
    %c0_66 = arith.constant 0 : index
    %c0_67 = arith.constant 0 : index
    %191 = vector.load %arg2[%c1_64, %c5_65, %c0_66, %c0_67] : memref<2x8x2x96xf32, #tpu.memory_space<vmem>>, vector<1x1x2x96xf32>
    %192 = vector.shape_cast %191 : vector<1x1x2x96xf32> to vector<2x96xf32>
    %cst_68 = arith.constant dense<0.000000e+00> : vector<2x96xf32>
    %193 = tpu.matmul %150, %6, %cst_68 {dimension_numbers = #tpu.dot_dimension_numbers<[1], [0], [0], [1], [0, 0, 1, 1], [], []>} : vector<2x32xf32>, vector<32x96xf32>, vector<2x96xf32> -> vector<2x96xf32>
    %194 = vector.extract_strided_slice %192 {offsets = [0, 0], sizes = [2, 64], strides = [1, 1]} : vector<2x96xf32> to vector<2x64xf32>
    %195 = vector.extract_strided_slice %193 {offsets = [0, 0], sizes = [2, 64], strides = [1, 1]} : vector<2x96xf32> to vector<2x64xf32>
    %196 = arith.addf %194, %195 : vector<2x64xf32>
    %197 = arith.negf %196 : vector<2x64xf32>
    %198 = math.exp %197 : vector<2x64xf32>
    %cst_69 = arith.constant 1.000000e+00 : f32
    %199 = vector.broadcast %cst_69 : f32 to vector<2x64xf32>
    %200 = arith.addf %199, %198 : vector<2x64xf32>
    %201 = arith.divf %199, %200 : vector<2x64xf32>
    %202 = vector.extract_strided_slice %201 {offsets = [0, 0], sizes = [2, 32], strides = [1, 1]} : vector<2x64xf32> to vector<2x32xf32>
    %203 = vector.extract_strided_slice %201 {offsets = [0, 32], sizes = [2, 32], strides = [1, 1]} : vector<2x64xf32> to vector<2x32xf32>
    %204 = vector.extract_strided_slice %192 {offsets = [0, 64], sizes = [2, 32], strides = [1, 1]} : vector<2x96xf32> to vector<2x32xf32>
    %205 = vector.extract_strided_slice %193 {offsets = [0, 64], sizes = [2, 32], strides = [1, 1]} : vector<2x96xf32> to vector<2x32xf32>
    %206 = vector.broadcast %3 : vector<1x32xf32> to vector<2x32xf32>
    %207 = arith.addf %205, %206 : vector<2x32xf32>
    %208 = arith.mulf %202, %207 : vector<2x32xf32>
    %209 = arith.addf %204, %208 : vector<2x32xf32>
    %210 = math.tanh %209 : vector<2x32xf32>
    %cst_70 = arith.constant 1.000000e+00 : f32
    %211 = vector.broadcast %cst_70 : f32 to vector<2x32xf32>
    %212 = arith.subf %211, %203 : vector<2x32xf32>
    %213 = arith.mulf %212, %210 : vector<2x32xf32>
    %214 = arith.mulf %203, %150 : vector<2x32xf32>
    %215 = arith.addf %213, %214 : vector<2x32xf32>
    %216 = vector.broadcast %190 : vector<2x1xf32> to vector<2x32xf32>
    %217 = arith.mulf %216, %215 : vector<2x32xf32>
    %cst_71 = arith.constant 1.000000e+00 : f32
    %218 = vector.broadcast %cst_71 : f32 to vector<2x1xf32>
    %219 = arith.subf %218, %190 : vector<2x1xf32>
    %220 = vector.broadcast %219 : vector<2x1xf32> to vector<2x32xf32>
    %221 = arith.mulf %220, %150 : vector<2x32xf32>
    %222 = arith.addf %217, %221 : vector<2x32xf32>
    %223 = vector.broadcast %190 : vector<2x1xf32> to vector<2x32xf32>
    %224 = arith.mulf %222, %223 : vector<2x32xf32>
    %c3_72 = arith.constant 3 : index
    %c0_73 = arith.constant 0 : index
    %c0_74 = arith.constant 0 : index
    %225 = vector.load %arg0[%c3_72, %c0_73, %c0_74] : memref<8x2x1xf32, #tpu.memory_space<vmem>>, vector<1x2x1xf32>
    %226 = vector.shape_cast %225 : vector<1x2x1xf32> to vector<2x1xf32>
    %c0_75 = arith.constant 0 : index
    %c3_76 = arith.constant 3 : index
    %c0_77 = arith.constant 0 : index
    %c0_78 = arith.constant 0 : index
    %227 = vector.load %arg2[%c0_75, %c3_76, %c0_77, %c0_78] : memref<2x8x2x96xf32, #tpu.memory_space<vmem>>, vector<1x1x2x96xf32>
    %228 = vector.shape_cast %227 : vector<1x1x2x96xf32> to vector<2x96xf32>
    %cst_79 = arith.constant dense<0.000000e+00> : vector<2x96xf32>
    %229 = tpu.matmul %186, %5, %cst_79 {dimension_numbers = #tpu.dot_dimension_numbers<[1], [0], [0], [1], [0, 0, 1, 1], [], []>} : vector<2x32xf32>, vector<32x96xf32>, vector<2x96xf32> -> vector<2x96xf32>
    %230 = vector.extract_strided_slice %228 {offsets = [0, 0], sizes = [2, 64], strides = [1, 1]} : vector<2x96xf32> to vector<2x64xf32>
    %231 = vector.extract_strided_slice %229 {offsets = [0, 0], sizes = [2, 64], strides = [1, 1]} : vector<2x96xf32> to vector<2x64xf32>
    %232 = arith.addf %230, %231 : vector<2x64xf32>
    %233 = arith.negf %232 : vector<2x64xf32>
    %234 = math.exp %233 : vector<2x64xf32>
    %cst_80 = arith.constant 1.000000e+00 : f32
    %235 = vector.broadcast %cst_80 : f32 to vector<2x64xf32>
    %236 = arith.addf %235, %234 : vector<2x64xf32>
    %237 = arith.divf %235, %236 : vector<2x64xf32>
    %238 = vector.extract_strided_slice %237 {offsets = [0, 0], sizes = [2, 32], strides = [1, 1]} : vector<2x64xf32> to vector<2x32xf32>
    %239 = vector.extract_strided_slice %237 {offsets = [0, 32], sizes = [2, 32], strides = [1, 1]} : vector<2x64xf32> to vector<2x32xf32>
    %240 = vector.extract_strided_slice %228 {offsets = [0, 64], sizes = [2, 32], strides = [1, 1]} : vector<2x96xf32> to vector<2x32xf32>
    %241 = vector.extract_strided_slice %229 {offsets = [0, 64], sizes = [2, 32], strides = [1, 1]} : vector<2x96xf32> to vector<2x32xf32>
    %242 = vector.broadcast %2 : vector<1x32xf32> to vector<2x32xf32>
    %243 = arith.addf %241, %242 : vector<2x32xf32>
    %244 = arith.mulf %238, %243 : vector<2x32xf32>
    %245 = arith.addf %240, %244 : vector<2x32xf32>
    %246 = math.tanh %245 : vector<2x32xf32>
    %cst_81 = arith.constant 1.000000e+00 : f32
    %247 = vector.broadcast %cst_81 : f32 to vector<2x32xf32>
    %248 = arith.subf %247, %239 : vector<2x32xf32>
    %249 = arith.mulf %248, %246 : vector<2x32xf32>
    %250 = arith.mulf %239, %186 : vector<2x32xf32>
    %251 = arith.addf %249, %250 : vector<2x32xf32>
    %252 = vector.broadcast %226 : vector<2x1xf32> to vector<2x32xf32>
    %253 = arith.mulf %252, %251 : vector<2x32xf32>
    %cst_82 = arith.constant 1.000000e+00 : f32
    %254 = vector.broadcast %cst_82 : f32 to vector<2x1xf32>
    %255 = arith.subf %254, %226 : vector<2x1xf32>
    %256 = vector.broadcast %255 : vector<2x1xf32> to vector<2x32xf32>
    %257 = arith.mulf %256, %186 : vector<2x32xf32>
    %258 = arith.addf %253, %257 : vector<2x32xf32>
    %259 = vector.broadcast %226 : vector<2x1xf32> to vector<2x32xf32>
    %260 = arith.mulf %258, %259 : vector<2x32xf32>
    %c4_83 = arith.constant 4 : index
    %c0_84 = arith.constant 0 : index
    %c0_85 = arith.constant 0 : index
    %261 = vector.load %arg0[%c4_83, %c0_84, %c0_85] : memref<8x2x1xf32, #tpu.memory_space<vmem>>, vector<1x2x1xf32>
    %262 = vector.shape_cast %261 : vector<1x2x1xf32> to vector<2x1xf32>
    %c1_86 = arith.constant 1 : index
    %c4_87 = arith.constant 4 : index
    %c0_88 = arith.constant 0 : index
    %c0_89 = arith.constant 0 : index
    %263 = vector.load %arg2[%c1_86, %c4_87, %c0_88, %c0_89] : memref<2x8x2x96xf32, #tpu.memory_space<vmem>>, vector<1x1x2x96xf32>
    %264 = vector.shape_cast %263 : vector<1x1x2x96xf32> to vector<2x96xf32>
    %cst_90 = arith.constant dense<0.000000e+00> : vector<2x96xf32>
    %265 = tpu.matmul %222, %6, %cst_90 {dimension_numbers = #tpu.dot_dimension_numbers<[1], [0], [0], [1], [0, 0, 1, 1], [], []>} : vector<2x32xf32>, vector<32x96xf32>, vector<2x96xf32> -> vector<2x96xf32>
    %266 = vector.extract_strided_slice %264 {offsets = [0, 0], sizes = [2, 64], strides = [1, 1]} : vector<2x96xf32> to vector<2x64xf32>
    %267 = vector.extract_strided_slice %265 {offsets = [0, 0], sizes = [2, 64], strides = [1, 1]} : vector<2x96xf32> to vector<2x64xf32>
    %268 = arith.addf %266, %267 : vector<2x64xf32>
    %269 = arith.negf %268 : vector<2x64xf32>
    %270 = math.exp %269 : vector<2x64xf32>
    %cst_91 = arith.constant 1.000000e+00 : f32
    %271 = vector.broadcast %cst_91 : f32 to vector<2x64xf32>
    %272 = arith.addf %271, %270 : vector<2x64xf32>
    %273 = arith.divf %271, %272 : vector<2x64xf32>
    %274 = vector.extract_strided_slice %273 {offsets = [0, 0], sizes = [2, 32], strides = [1, 1]} : vector<2x64xf32> to vector<2x32xf32>
    %275 = vector.extract_strided_slice %273 {offsets = [0, 32], sizes = [2, 32], strides = [1, 1]} : vector<2x64xf32> to vector<2x32xf32>
    %276 = vector.extract_strided_slice %264 {offsets = [0, 64], sizes = [2, 32], strides = [1, 1]} : vector<2x96xf32> to vector<2x32xf32>
    %277 = vector.extract_strided_slice %265 {offsets = [0, 64], sizes = [2, 32], strides = [1, 1]} : vector<2x96xf32> to vector<2x32xf32>
    %278 = vector.broadcast %3 : vector<1x32xf32> to vector<2x32xf32>
    %279 = arith.addf %277, %278 : vector<2x32xf32>
    %280 = arith.mulf %274, %279 : vector<2x32xf32>
    %281 = arith.addf %276, %280 : vector<2x32xf32>
    %282 = math.tanh %281 : vector<2x32xf32>
    %cst_92 = arith.constant 1.000000e+00 : f32
    %283 = vector.broadcast %cst_92 : f32 to vector<2x32xf32>
    %284 = arith.subf %283, %275 : vector<2x32xf32>
    %285 = arith.mulf %284, %282 : vector<2x32xf32>
    %286 = arith.mulf %275, %222 : vector<2x32xf32>
    %287 = arith.addf %285, %286 : vector<2x32xf32>
    %288 = vector.broadcast %262 : vector<2x1xf32> to vector<2x32xf32>
    %289 = arith.mulf %288, %287 : vector<2x32xf32>
    %cst_93 = arith.constant 1.000000e+00 : f32
    %290 = vector.broadcast %cst_93 : f32 to vector<2x1xf32>
    %291 = arith.subf %290, %262 : vector<2x1xf32>
    %292 = vector.broadcast %291 : vector<2x1xf32> to vector<2x32xf32>
    %293 = arith.mulf %292, %222 : vector<2x32xf32>
    %294 = arith.addf %289, %293 : vector<2x32xf32>
    %295 = vector.broadcast %262 : vector<2x1xf32> to vector<2x32xf32>
    %296 = arith.mulf %294, %295 : vector<2x32xf32>
    %c4_94 = arith.constant 4 : index
    %c0_95 = arith.constant 0 : index
    %c0_96 = arith.constant 0 : index
    %297 = vector.load %arg0[%c4_94, %c0_95, %c0_96] : memref<8x2x1xf32, #tpu.memory_space<vmem>>, vector<1x2x1xf32>
    %298 = vector.shape_cast %297 : vector<1x2x1xf32> to vector<2x1xf32>
    %c0_97 = arith.constant 0 : index
    %c4_98 = arith.constant 4 : index
    %c0_99 = arith.constant 0 : index
    %c0_100 = arith.constant 0 : index
    %299 = vector.load %arg2[%c0_97, %c4_98, %c0_99, %c0_100] : memref<2x8x2x96xf32, #tpu.memory_space<vmem>>, vector<1x1x2x96xf32>
    %300 = vector.shape_cast %299 : vector<1x1x2x96xf32> to vector<2x96xf32>
    %cst_101 = arith.constant dense<0.000000e+00> : vector<2x96xf32>
    %301 = tpu.matmul %258, %5, %cst_101 {dimension_numbers = #tpu.dot_dimension_numbers<[1], [0], [0], [1], [0, 0, 1, 1], [], []>} : vector<2x32xf32>, vector<32x96xf32>, vector<2x96xf32> -> vector<2x96xf32>
    %302 = vector.extract_strided_slice %300 {offsets = [0, 0], sizes = [2, 64], strides = [1, 1]} : vector<2x96xf32> to vector<2x64xf32>
    %303 = vector.extract_strided_slice %301 {offsets = [0, 0], sizes = [2, 64], strides = [1, 1]} : vector<2x96xf32> to vector<2x64xf32>
    %304 = arith.addf %302, %303 : vector<2x64xf32>
    %305 = arith.negf %304 : vector<2x64xf32>
    %306 = math.exp %305 : vector<2x64xf32>
    %cst_102 = arith.constant 1.000000e+00 : f32
    %307 = vector.broadcast %cst_102 : f32 to vector<2x64xf32>
    %308 = arith.addf %307, %306 : vector<2x64xf32>
    %309 = arith.divf %307, %308 : vector<2x64xf32>
    %310 = vector.extract_strided_slice %309 {offsets = [0, 0], sizes = [2, 32], strides = [1, 1]} : vector<2x64xf32> to vector<2x32xf32>
    %311 = vector.extract_strided_slice %309 {offsets = [0, 32], sizes = [2, 32], strides = [1, 1]} : vector<2x64xf32> to vector<2x32xf32>
    %312 = vector.extract_strided_slice %300 {offsets = [0, 64], sizes = [2, 32], strides = [1, 1]} : vector<2x96xf32> to vector<2x32xf32>
    %313 = vector.extract_strided_slice %301 {offsets = [0, 64], sizes = [2, 32], strides = [1, 1]} : vector<2x96xf32> to vector<2x32xf32>
    %314 = vector.broadcast %2 : vector<1x32xf32> to vector<2x32xf32>
    %315 = arith.addf %313, %314 : vector<2x32xf32>
    %316 = arith.mulf %310, %315 : vector<2x32xf32>
    %317 = arith.addf %312, %316 : vector<2x32xf32>
    %318 = math.tanh %317 : vector<2x32xf32>
    %cst_103 = arith.constant 1.000000e+00 : f32
    %319 = vector.broadcast %cst_103 : f32 to vector<2x32xf32>
    %320 = arith.subf %319, %311 : vector<2x32xf32>
    %321 = arith.mulf %320, %318 : vector<2x32xf32>
    %322 = arith.mulf %311, %258 : vector<2x32xf32>
    %323 = arith.addf %321, %322 : vector<2x32xf32>
    %324 = vector.broadcast %298 : vector<2x1xf32> to vector<2x32xf32>
    %325 = arith.mulf %324, %323 : vector<2x32xf32>
    %cst_104 = arith.constant 1.000000e+00 : f32
    %326 = vector.broadcast %cst_104 : f32 to vector<2x1xf32>
    %327 = arith.subf %326, %298 : vector<2x1xf32>
    %328 = vector.broadcast %327 : vector<2x1xf32> to vector<2x32xf32>
    %329 = arith.mulf %328, %258 : vector<2x32xf32>
    %330 = arith.addf %325, %329 : vector<2x32xf32>
    %331 = vector.broadcast %298 : vector<2x1xf32> to vector<2x32xf32>
    %332 = arith.mulf %330, %331 : vector<2x32xf32>
    %c3_105 = arith.constant 3 : index
    %c0_106 = arith.constant 0 : index
    %c0_107 = arith.constant 0 : index
    %333 = vector.load %arg0[%c3_105, %c0_106, %c0_107] : memref<8x2x1xf32, #tpu.memory_space<vmem>>, vector<1x2x1xf32>
    %334 = vector.shape_cast %333 : vector<1x2x1xf32> to vector<2x1xf32>
    %c1_108 = arith.constant 1 : index
    %c3_109 = arith.constant 3 : index
    %c0_110 = arith.constant 0 : index
    %c0_111 = arith.constant 0 : index
    %335 = vector.load %arg2[%c1_108, %c3_109, %c0_110, %c0_111] : memref<2x8x2x96xf32, #tpu.memory_space<vmem>>, vector<1x1x2x96xf32>
    %336 = vector.shape_cast %335 : vector<1x1x2x96xf32> to vector<2x96xf32>
    %cst_112 = arith.constant dense<0.000000e+00> : vector<2x96xf32>
    %337 = tpu.matmul %294, %6, %cst_112 {dimension_numbers = #tpu.dot_dimension_numbers<[1], [0], [0], [1], [0, 0, 1, 1], [], []>} : vector<2x32xf32>, vector<32x96xf32>, vector<2x96xf32> -> vector<2x96xf32>
    %338 = vector.extract_strided_slice %336 {offsets = [0, 0], sizes = [2, 64], strides = [1, 1]} : vector<2x96xf32> to vector<2x64xf32>
    %339 = vector.extract_strided_slice %337 {offsets = [0, 0], sizes = [2, 64], strides = [1, 1]} : vector<2x96xf32> to vector<2x64xf32>
    %340 = arith.addf %338, %339 : vector<2x64xf32>
    %341 = arith.negf %340 : vector<2x64xf32>
    %342 = math.exp %341 : vector<2x64xf32>
    %cst_113 = arith.constant 1.000000e+00 : f32
    %343 = vector.broadcast %cst_113 : f32 to vector<2x64xf32>
    %344 = arith.addf %343, %342 : vector<2x64xf32>
    %345 = arith.divf %343, %344 : vector<2x64xf32>
    %346 = vector.extract_strided_slice %345 {offsets = [0, 0], sizes = [2, 32], strides = [1, 1]} : vector<2x64xf32> to vector<2x32xf32>
    %347 = vector.extract_strided_slice %345 {offsets = [0, 32], sizes = [2, 32], strides = [1, 1]} : vector<2x64xf32> to vector<2x32xf32>
    %348 = vector.extract_strided_slice %336 {offsets = [0, 64], sizes = [2, 32], strides = [1, 1]} : vector<2x96xf32> to vector<2x32xf32>
    %349 = vector.extract_strided_slice %337 {offsets = [0, 64], sizes = [2, 32], strides = [1, 1]} : vector<2x96xf32> to vector<2x32xf32>
    %350 = vector.broadcast %3 : vector<1x32xf32> to vector<2x32xf32>
    %351 = arith.addf %349, %350 : vector<2x32xf32>
    %352 = arith.mulf %346, %351 : vector<2x32xf32>
    %353 = arith.addf %348, %352 : vector<2x32xf32>
    %354 = math.tanh %353 : vector<2x32xf32>
    %cst_114 = arith.constant 1.000000e+00 : f32
    %355 = vector.broadcast %cst_114 : f32 to vector<2x32xf32>
    %356 = arith.subf %355, %347 : vector<2x32xf32>
    %357 = arith.mulf %356, %354 : vector<2x32xf32>
    %358 = arith.mulf %347, %294 : vector<2x32xf32>
    %359 = arith.addf %357, %358 : vector<2x32xf32>
    %360 = vector.broadcast %334 : vector<2x1xf32> to vector<2x32xf32>
    %361 = arith.mulf %360, %359 : vector<2x32xf32>
    %cst_115 = arith.constant 1.000000e+00 : f32
    %362 = vector.broadcast %cst_115 : f32 to vector<2x1xf32>
    %363 = arith.subf %362, %334 : vector<2x1xf32>
    %364 = vector.broadcast %363 : vector<2x1xf32> to vector<2x32xf32>
    %365 = arith.mulf %364, %294 : vector<2x32xf32>
    %366 = arith.addf %361, %365 : vector<2x32xf32>
    %367 = vector.broadcast %334 : vector<2x1xf32> to vector<2x32xf32>
    %368 = arith.mulf %366, %367 : vector<2x32xf32>
    %c5_116 = arith.constant 5 : index
    %c0_117 = arith.constant 0 : index
    %c0_118 = arith.constant 0 : index
    %369 = vector.load %arg0[%c5_116, %c0_117, %c0_118] : memref<8x2x1xf32, #tpu.memory_space<vmem>>, vector<1x2x1xf32>
    %370 = vector.shape_cast %369 : vector<1x2x1xf32> to vector<2x1xf32>
    %c0_119 = arith.constant 0 : index
    %c5_120 = arith.constant 5 : index
    %c0_121 = arith.constant 0 : index
    %c0_122 = arith.constant 0 : index
    %371 = vector.load %arg2[%c0_119, %c5_120, %c0_121, %c0_122] : memref<2x8x2x96xf32, #tpu.memory_space<vmem>>, vector<1x1x2x96xf32>
    %372 = vector.shape_cast %371 : vector<1x1x2x96xf32> to vector<2x96xf32>
    %cst_123 = arith.constant dense<0.000000e+00> : vector<2x96xf32>
    %373 = tpu.matmul %330, %5, %cst_123 {dimension_numbers = #tpu.dot_dimension_numbers<[1], [0], [0], [1], [0, 0, 1, 1], [], []>} : vector<2x32xf32>, vector<32x96xf32>, vector<2x96xf32> -> vector<2x96xf32>
    %374 = vector.extract_strided_slice %372 {offsets = [0, 0], sizes = [2, 64], strides = [1, 1]} : vector<2x96xf32> to vector<2x64xf32>
    %375 = vector.extract_strided_slice %373 {offsets = [0, 0], sizes = [2, 64], strides = [1, 1]} : vector<2x96xf32> to vector<2x64xf32>
    %376 = arith.addf %374, %375 : vector<2x64xf32>
    %377 = arith.negf %376 : vector<2x64xf32>
    %378 = math.exp %377 : vector<2x64xf32>
    %cst_124 = arith.constant 1.000000e+00 : f32
    %379 = vector.broadcast %cst_124 : f32 to vector<2x64xf32>
    %380 = arith.addf %379, %378 : vector<2x64xf32>
    %381 = arith.divf %379, %380 : vector<2x64xf32>
    %382 = vector.extract_strided_slice %381 {offsets = [0, 0], sizes = [2, 32], strides = [1, 1]} : vector<2x64xf32> to vector<2x32xf32>
    %383 = vector.extract_strided_slice %381 {offsets = [0, 32], sizes = [2, 32], strides = [1, 1]} : vector<2x64xf32> to vector<2x32xf32>
    %384 = vector.extract_strided_slice %372 {offsets = [0, 64], sizes = [2, 32], strides = [1, 1]} : vector<2x96xf32> to vector<2x32xf32>
    %385 = vector.extract_strided_slice %373 {offsets = [0, 64], sizes = [2, 32], strides = [1, 1]} : vector<2x96xf32> to vector<2x32xf32>
    %386 = vector.broadcast %2 : vector<1x32xf32> to vector<2x32xf32>
    %387 = arith.addf %385, %386 : vector<2x32xf32>
    %388 = arith.mulf %382, %387 : vector<2x32xf32>
    %389 = arith.addf %384, %388 : vector<2x32xf32>
    %390 = math.tanh %389 : vector<2x32xf32>
    %cst_125 = arith.constant 1.000000e+00 : f32
    %391 = vector.broadcast %cst_125 : f32 to vector<2x32xf32>
    %392 = arith.subf %391, %383 : vector<2x32xf32>
    %393 = arith.mulf %392, %390 : vector<2x32xf32>
    %394 = arith.mulf %383, %330 : vector<2x32xf32>
    %395 = arith.addf %393, %394 : vector<2x32xf32>
    %396 = vector.broadcast %370 : vector<2x1xf32> to vector<2x32xf32>
    %397 = arith.mulf %396, %395 : vector<2x32xf32>
    %cst_126 = arith.constant 1.000000e+00 : f32
    %398 = vector.broadcast %cst_126 : f32 to vector<2x1xf32>
    %399 = arith.subf %398, %370 : vector<2x1xf32>
    %400 = vector.broadcast %399 : vector<2x1xf32> to vector<2x32xf32>
    %401 = arith.mulf %400, %330 : vector<2x32xf32>
    %402 = arith.addf %397, %401 : vector<2x32xf32>
    %403 = vector.broadcast %370 : vector<2x1xf32> to vector<2x32xf32>
    %404 = arith.mulf %402, %403 : vector<2x32xf32>
    %c2_127 = arith.constant 2 : index
    %c0_128 = arith.constant 0 : index
    %c0_129 = arith.constant 0 : index
    %405 = vector.load %arg0[%c2_127, %c0_128, %c0_129] : memref<8x2x1xf32, #tpu.memory_space<vmem>>, vector<1x2x1xf32>
    %406 = vector.shape_cast %405 : vector<1x2x1xf32> to vector<2x1xf32>
    %c1_130 = arith.constant 1 : index
    %c2_131 = arith.constant 2 : index
    %c0_132 = arith.constant 0 : index
    %c0_133 = arith.constant 0 : index
    %407 = vector.load %arg2[%c1_130, %c2_131, %c0_132, %c0_133] : memref<2x8x2x96xf32, #tpu.memory_space<vmem>>, vector<1x1x2x96xf32>
    %408 = vector.shape_cast %407 : vector<1x1x2x96xf32> to vector<2x96xf32>
    %cst_134 = arith.constant dense<0.000000e+00> : vector<2x96xf32>
    %409 = tpu.matmul %366, %6, %cst_134 {dimension_numbers = #tpu.dot_dimension_numbers<[1], [0], [0], [1], [0, 0, 1, 1], [], []>} : vector<2x32xf32>, vector<32x96xf32>, vector<2x96xf32> -> vector<2x96xf32>
    %410 = vector.extract_strided_slice %408 {offsets = [0, 0], sizes = [2, 64], strides = [1, 1]} : vector<2x96xf32> to vector<2x64xf32>
    %411 = vector.extract_strided_slice %409 {offsets = [0, 0], sizes = [2, 64], strides = [1, 1]} : vector<2x96xf32> to vector<2x64xf32>
    %412 = arith.addf %410, %411 : vector<2x64xf32>
    %413 = arith.negf %412 : vector<2x64xf32>
    %414 = math.exp %413 : vector<2x64xf32>
    %cst_135 = arith.constant 1.000000e+00 : f32
    %415 = vector.broadcast %cst_135 : f32 to vector<2x64xf32>
    %416 = arith.addf %415, %414 : vector<2x64xf32>
    %417 = arith.divf %415, %416 : vector<2x64xf32>
    %418 = vector.extract_strided_slice %417 {offsets = [0, 0], sizes = [2, 32], strides = [1, 1]} : vector<2x64xf32> to vector<2x32xf32>
    %419 = vector.extract_strided_slice %417 {offsets = [0, 32], sizes = [2, 32], strides = [1, 1]} : vector<2x64xf32> to vector<2x32xf32>
    %420 = vector.extract_strided_slice %408 {offsets = [0, 64], sizes = [2, 32], strides = [1, 1]} : vector<2x96xf32> to vector<2x32xf32>
    %421 = vector.extract_strided_slice %409 {offsets = [0, 64], sizes = [2, 32], strides = [1, 1]} : vector<2x96xf32> to vector<2x32xf32>
    %422 = vector.broadcast %3 : vector<1x32xf32> to vector<2x32xf32>
    %423 = arith.addf %421, %422 : vector<2x32xf32>
    %424 = arith.mulf %418, %423 : vector<2x32xf32>
    %425 = arith.addf %420, %424 : vector<2x32xf32>
    %426 = math.tanh %425 : vector<2x32xf32>
    %cst_136 = arith.constant 1.000000e+00 : f32
    %427 = vector.broadcast %cst_136 : f32 to vector<2x32xf32>
    %428 = arith.subf %427, %419 : vector<2x32xf32>
    %429 = arith.mulf %428, %426 : vector<2x32xf32>
    %430 = arith.mulf %419, %366 : vector<2x32xf32>
    %431 = arith.addf %429, %430 : vector<2x32xf32>
    %432 = vector.broadcast %406 : vector<2x1xf32> to vector<2x32xf32>
    %433 = arith.mulf %432, %431 : vector<2x32xf32>
    %cst_137 = arith.constant 1.000000e+00 : f32
    %434 = vector.broadcast %cst_137 : f32 to vector<2x1xf32>
    %435 = arith.subf %434, %406 : vector<2x1xf32>
    %436 = vector.broadcast %435 : vector<2x1xf32> to vector<2x32xf32>
    %437 = arith.mulf %436, %366 : vector<2x32xf32>
    %438 = arith.addf %433, %437 : vector<2x32xf32>
    %439 = vector.broadcast %406 : vector<2x1xf32> to vector<2x32xf32>
    %440 = arith.mulf %438, %439 : vector<2x32xf32>
    %c6_138 = arith.constant 6 : index
    %c0_139 = arith.constant 0 : index
    %c0_140 = arith.constant 0 : index
    %441 = vector.load %arg0[%c6_138, %c0_139, %c0_140] : memref<8x2x1xf32, #tpu.memory_space<vmem>>, vector<1x2x1xf32>
    %442 = vector.shape_cast %441 : vector<1x2x1xf32> to vector<2x1xf32>
    %c0_141 = arith.constant 0 : index
    %c6_142 = arith.constant 6 : index
    %c0_143 = arith.constant 0 : index
    %c0_144 = arith.constant 0 : index
    %443 = vector.load %arg2[%c0_141, %c6_142, %c0_143, %c0_144] : memref<2x8x2x96xf32, #tpu.memory_space<vmem>>, vector<1x1x2x96xf32>
    %444 = vector.shape_cast %443 : vector<1x1x2x96xf32> to vector<2x96xf32>
    %cst_145 = arith.constant dense<0.000000e+00> : vector<2x96xf32>
    %445 = tpu.matmul %402, %5, %cst_145 {dimension_numbers = #tpu.dot_dimension_numbers<[1], [0], [0], [1], [0, 0, 1, 1], [], []>} : vector<2x32xf32>, vector<32x96xf32>, vector<2x96xf32> -> vector<2x96xf32>
    %446 = vector.extract_strided_slice %444 {offsets = [0, 0], sizes = [2, 64], strides = [1, 1]} : vector<2x96xf32> to vector<2x64xf32>
    %447 = vector.extract_strided_slice %445 {offsets = [0, 0], sizes = [2, 64], strides = [1, 1]} : vector<2x96xf32> to vector<2x64xf32>
    %448 = arith.addf %446, %447 : vector<2x64xf32>
    %449 = arith.negf %448 : vector<2x64xf32>
    %450 = math.exp %449 : vector<2x64xf32>
    %cst_146 = arith.constant 1.000000e+00 : f32
    %451 = vector.broadcast %cst_146 : f32 to vector<2x64xf32>
    %452 = arith.addf %451, %450 : vector<2x64xf32>
    %453 = arith.divf %451, %452 : vector<2x64xf32>
    %454 = vector.extract_strided_slice %453 {offsets = [0, 0], sizes = [2, 32], strides = [1, 1]} : vector<2x64xf32> to vector<2x32xf32>
    %455 = vector.extract_strided_slice %453 {offsets = [0, 32], sizes = [2, 32], strides = [1, 1]} : vector<2x64xf32> to vector<2x32xf32>
    %456 = vector.extract_strided_slice %444 {offsets = [0, 64], sizes = [2, 32], strides = [1, 1]} : vector<2x96xf32> to vector<2x32xf32>
    %457 = vector.extract_strided_slice %445 {offsets = [0, 64], sizes = [2, 32], strides = [1, 1]} : vector<2x96xf32> to vector<2x32xf32>
    %458 = vector.broadcast %2 : vector<1x32xf32> to vector<2x32xf32>
    %459 = arith.addf %457, %458 : vector<2x32xf32>
    %460 = arith.mulf %454, %459 : vector<2x32xf32>
    %461 = arith.addf %456, %460 : vector<2x32xf32>
    %462 = math.tanh %461 : vector<2x32xf32>
    %cst_147 = arith.constant 1.000000e+00 : f32
    %463 = vector.broadcast %cst_147 : f32 to vector<2x32xf32>
    %464 = arith.subf %463, %455 : vector<2x32xf32>
    %465 = arith.mulf %464, %462 : vector<2x32xf32>
    %466 = arith.mulf %455, %402 : vector<2x32xf32>
    %467 = arith.addf %465, %466 : vector<2x32xf32>
    %468 = vector.broadcast %442 : vector<2x1xf32> to vector<2x32xf32>
    %469 = arith.mulf %468, %467 : vector<2x32xf32>
    %cst_148 = arith.constant 1.000000e+00 : f32
    %470 = vector.broadcast %cst_148 : f32 to vector<2x1xf32>
    %471 = arith.subf %470, %442 : vector<2x1xf32>
    %472 = vector.broadcast %471 : vector<2x1xf32> to vector<2x32xf32>
    %473 = arith.mulf %472, %402 : vector<2x32xf32>
    %474 = arith.addf %469, %473 : vector<2x32xf32>
    %475 = vector.broadcast %442 : vector<2x1xf32> to vector<2x32xf32>
    %476 = arith.mulf %474, %475 : vector<2x32xf32>
    %c1_149 = arith.constant 1 : index
    %c0_150 = arith.constant 0 : index
    %c0_151 = arith.constant 0 : index
    %477 = vector.load %arg0[%c1_149, %c0_150, %c0_151] : memref<8x2x1xf32, #tpu.memory_space<vmem>>, vector<1x2x1xf32>
    %478 = vector.shape_cast %477 : vector<1x2x1xf32> to vector<2x1xf32>
    %c1_152 = arith.constant 1 : index
    %c1_153 = arith.constant 1 : index
    %c0_154 = arith.constant 0 : index
    %c0_155 = arith.constant 0 : index
    %479 = vector.load %arg2[%c1_152, %c1_153, %c0_154, %c0_155] : memref<2x8x2x96xf32, #tpu.memory_space<vmem>>, vector<1x1x2x96xf32>
    %480 = vector.shape_cast %479 : vector<1x1x2x96xf32> to vector<2x96xf32>
    %cst_156 = arith.constant dense<0.000000e+00> : vector<2x96xf32>
    %481 = tpu.matmul %438, %6, %cst_156 {dimension_numbers = #tpu.dot_dimension_numbers<[1], [0], [0], [1], [0, 0, 1, 1], [], []>} : vector<2x32xf32>, vector<32x96xf32>, vector<2x96xf32> -> vector<2x96xf32>
    %482 = vector.extract_strided_slice %480 {offsets = [0, 0], sizes = [2, 64], strides = [1, 1]} : vector<2x96xf32> to vector<2x64xf32>
    %483 = vector.extract_strided_slice %481 {offsets = [0, 0], sizes = [2, 64], strides = [1, 1]} : vector<2x96xf32> to vector<2x64xf32>
    %484 = arith.addf %482, %483 : vector<2x64xf32>
    %485 = arith.negf %484 : vector<2x64xf32>
    %486 = math.exp %485 : vector<2x64xf32>
    %cst_157 = arith.constant 1.000000e+00 : f32
    %487 = vector.broadcast %cst_157 : f32 to vector<2x64xf32>
    %488 = arith.addf %487, %486 : vector<2x64xf32>
    %489 = arith.divf %487, %488 : vector<2x64xf32>
    %490 = vector.extract_strided_slice %489 {offsets = [0, 0], sizes = [2, 32], strides = [1, 1]} : vector<2x64xf32> to vector<2x32xf32>
    %491 = vector.extract_strided_slice %489 {offsets = [0, 32], sizes = [2, 32], strides = [1, 1]} : vector<2x64xf32> to vector<2x32xf32>
    %492 = vector.extract_strided_slice %480 {offsets = [0, 64], sizes = [2, 32], strides = [1, 1]} : vector<2x96xf32> to vector<2x32xf32>
    %493 = vector.extract_strided_slice %481 {offsets = [0, 64], sizes = [2, 32], strides = [1, 1]} : vector<2x96xf32> to vector<2x32xf32>
    %494 = vector.broadcast %3 : vector<1x32xf32> to vector<2x32xf32>
    %495 = arith.addf %493, %494 : vector<2x32xf32>
    %496 = arith.mulf %490, %495 : vector<2x32xf32>
    %497 = arith.addf %492, %496 : vector<2x32xf32>
    %498 = math.tanh %497 : vector<2x32xf32>
    %cst_158 = arith.constant 1.000000e+00 : f32
    %499 = vector.broadcast %cst_158 : f32 to vector<2x32xf32>
    %500 = arith.subf %499, %491 : vector<2x32xf32>
    %501 = arith.mulf %500, %498 : vector<2x32xf32>
    %502 = arith.mulf %491, %438 : vector<2x32xf32>
    %503 = arith.addf %501, %502 : vector<2x32xf32>
    %504 = vector.broadcast %478 : vector<2x1xf32> to vector<2x32xf32>
    %505 = arith.mulf %504, %503 : vector<2x32xf32>
    %cst_159 = arith.constant 1.000000e+00 : f32
    %506 = vector.broadcast %cst_159 : f32 to vector<2x1xf32>
    %507 = arith.subf %506, %478 : vector<2x1xf32>
    %508 = vector.broadcast %507 : vector<2x1xf32> to vector<2x32xf32>
    %509 = arith.mulf %508, %438 : vector<2x32xf32>
    %510 = arith.addf %505, %509 : vector<2x32xf32>
    %511 = vector.broadcast %478 : vector<2x1xf32> to vector<2x32xf32>
    %512 = arith.mulf %510, %511 : vector<2x32xf32>
    %c7_160 = arith.constant 7 : index
    %c0_161 = arith.constant 0 : index
    %c0_162 = arith.constant 0 : index
    %513 = vector.load %arg0[%c7_160, %c0_161, %c0_162] : memref<8x2x1xf32, #tpu.memory_space<vmem>>, vector<1x2x1xf32>
    %514 = vector.shape_cast %513 : vector<1x2x1xf32> to vector<2x1xf32>
    %c0_163 = arith.constant 0 : index
    %c7_164 = arith.constant 7 : index
    %c0_165 = arith.constant 0 : index
    %c0_166 = arith.constant 0 : index
    %515 = vector.load %arg2[%c0_163, %c7_164, %c0_165, %c0_166] : memref<2x8x2x96xf32, #tpu.memory_space<vmem>>, vector<1x1x2x96xf32>
    %516 = vector.shape_cast %515 : vector<1x1x2x96xf32> to vector<2x96xf32>
    %cst_167 = arith.constant dense<0.000000e+00> : vector<2x96xf32>
    %517 = tpu.matmul %474, %5, %cst_167 {dimension_numbers = #tpu.dot_dimension_numbers<[1], [0], [0], [1], [0, 0, 1, 1], [], []>} : vector<2x32xf32>, vector<32x96xf32>, vector<2x96xf32> -> vector<2x96xf32>
    %518 = vector.extract_strided_slice %516 {offsets = [0, 0], sizes = [2, 64], strides = [1, 1]} : vector<2x96xf32> to vector<2x64xf32>
    %519 = vector.extract_strided_slice %517 {offsets = [0, 0], sizes = [2, 64], strides = [1, 1]} : vector<2x96xf32> to vector<2x64xf32>
    %520 = arith.addf %518, %519 : vector<2x64xf32>
    %521 = arith.negf %520 : vector<2x64xf32>
    %522 = math.exp %521 : vector<2x64xf32>
    %cst_168 = arith.constant 1.000000e+00 : f32
    %523 = vector.broadcast %cst_168 : f32 to vector<2x64xf32>
    %524 = arith.addf %523, %522 : vector<2x64xf32>
    %525 = arith.divf %523, %524 : vector<2x64xf32>
    %526 = vector.extract_strided_slice %525 {offsets = [0, 0], sizes = [2, 32], strides = [1, 1]} : vector<2x64xf32> to vector<2x32xf32>
    %527 = vector.extract_strided_slice %525 {offsets = [0, 32], sizes = [2, 32], strides = [1, 1]} : vector<2x64xf32> to vector<2x32xf32>
    %528 = vector.extract_strided_slice %516 {offsets = [0, 64], sizes = [2, 32], strides = [1, 1]} : vector<2x96xf32> to vector<2x32xf32>
    %529 = vector.extract_strided_slice %517 {offsets = [0, 64], sizes = [2, 32], strides = [1, 1]} : vector<2x96xf32> to vector<2x32xf32>
    %530 = vector.broadcast %2 : vector<1x32xf32> to vector<2x32xf32>
    %531 = arith.addf %529, %530 : vector<2x32xf32>
    %532 = arith.mulf %526, %531 : vector<2x32xf32>
    %533 = arith.addf %528, %532 : vector<2x32xf32>
    %534 = math.tanh %533 : vector<2x32xf32>
    %cst_169 = arith.constant 1.000000e+00 : f32
    %535 = vector.broadcast %cst_169 : f32 to vector<2x32xf32>
    %536 = arith.subf %535, %527 : vector<2x32xf32>
    %537 = arith.mulf %536, %534 : vector<2x32xf32>
    %538 = arith.mulf %527, %474 : vector<2x32xf32>
    %539 = arith.addf %537, %538 : vector<2x32xf32>
    %540 = vector.broadcast %514 : vector<2x1xf32> to vector<2x32xf32>
    %541 = arith.mulf %540, %539 : vector<2x32xf32>
    %cst_170 = arith.constant 1.000000e+00 : f32
    %542 = vector.broadcast %cst_170 : f32 to vector<2x1xf32>
    %543 = arith.subf %542, %514 : vector<2x1xf32>
    %544 = vector.broadcast %543 : vector<2x1xf32> to vector<2x32xf32>
    %545 = arith.mulf %544, %474 : vector<2x32xf32>
    %546 = arith.addf %541, %545 : vector<2x32xf32>
    %547 = vector.broadcast %514 : vector<2x1xf32> to vector<2x32xf32>
    %548 = arith.mulf %546, %547 : vector<2x32xf32>
    %c0_171 = arith.constant 0 : index
    %c0_172 = arith.constant 0 : index
    %c0_173 = arith.constant 0 : index
    %549 = vector.load %arg0[%c0_171, %c0_172, %c0_173] : memref<8x2x1xf32, #tpu.memory_space<vmem>>, vector<1x2x1xf32>
    %550 = vector.shape_cast %549 : vector<1x2x1xf32> to vector<2x1xf32>
    %c1_174 = arith.constant 1 : index
    %c0_175 = arith.constant 0 : index
    %c0_176 = arith.constant 0 : index
    %c0_177 = arith.constant 0 : index
    %551 = vector.load %arg2[%c1_174, %c0_175, %c0_176, %c0_177] : memref<2x8x2x96xf32, #tpu.memory_space<vmem>>, vector<1x1x2x96xf32>
    %552 = vector.shape_cast %551 : vector<1x1x2x96xf32> to vector<2x96xf32>
    %cst_178 = arith.constant dense<0.000000e+00> : vector<2x96xf32>
    %553 = tpu.matmul %510, %6, %cst_178 {dimension_numbers = #tpu.dot_dimension_numbers<[1], [0], [0], [1], [0, 0, 1, 1], [], []>} : vector<2x32xf32>, vector<32x96xf32>, vector<2x96xf32> -> vector<2x96xf32>
    %554 = vector.extract_strided_slice %552 {offsets = [0, 0], sizes = [2, 64], strides = [1, 1]} : vector<2x96xf32> to vector<2x64xf32>
    %555 = vector.extract_strided_slice %553 {offsets = [0, 0], sizes = [2, 64], strides = [1, 1]} : vector<2x96xf32> to vector<2x64xf32>
    %556 = arith.addf %554, %555 : vector<2x64xf32>
    %557 = arith.negf %556 : vector<2x64xf32>
    %558 = math.exp %557 : vector<2x64xf32>
    %cst_179 = arith.constant 1.000000e+00 : f32
    %559 = vector.broadcast %cst_179 : f32 to vector<2x64xf32>
    %560 = arith.addf %559, %558 : vector<2x64xf32>
    %561 = arith.divf %559, %560 : vector<2x64xf32>
    %562 = vector.extract_strided_slice %561 {offsets = [0, 0], sizes = [2, 32], strides = [1, 1]} : vector<2x64xf32> to vector<2x32xf32>
    %563 = vector.extract_strided_slice %561 {offsets = [0, 32], sizes = [2, 32], strides = [1, 1]} : vector<2x64xf32> to vector<2x32xf32>
    %564 = vector.extract_strided_slice %552 {offsets = [0, 64], sizes = [2, 32], strides = [1, 1]} : vector<2x96xf32> to vector<2x32xf32>
    %565 = vector.extract_strided_slice %553 {offsets = [0, 64], sizes = [2, 32], strides = [1, 1]} : vector<2x96xf32> to vector<2x32xf32>
    %566 = vector.broadcast %3 : vector<1x32xf32> to vector<2x32xf32>
    %567 = arith.addf %565, %566 : vector<2x32xf32>
    %568 = arith.mulf %562, %567 : vector<2x32xf32>
    %569 = arith.addf %564, %568 : vector<2x32xf32>
    %570 = math.tanh %569 : vector<2x32xf32>
    %cst_180 = arith.constant 1.000000e+00 : f32
    %571 = vector.broadcast %cst_180 : f32 to vector<2x32xf32>
    %572 = arith.subf %571, %563 : vector<2x32xf32>
    %573 = arith.mulf %572, %570 : vector<2x32xf32>
    %574 = arith.mulf %563, %510 : vector<2x32xf32>
    %575 = arith.addf %573, %574 : vector<2x32xf32>
    %576 = vector.broadcast %550 : vector<2x1xf32> to vector<2x32xf32>
    %577 = arith.mulf %576, %575 : vector<2x32xf32>
    %cst_181 = arith.constant 1.000000e+00 : f32
    %578 = vector.broadcast %cst_181 : f32 to vector<2x1xf32>
    %579 = arith.subf %578, %550 : vector<2x1xf32>
    %580 = vector.broadcast %579 : vector<2x1xf32> to vector<2x32xf32>
    %581 = arith.mulf %580, %510 : vector<2x32xf32>
    %582 = arith.addf %577, %581 : vector<2x32xf32>
    %583 = vector.broadcast %550 : vector<2x1xf32> to vector<2x32xf32>
    %584 = arith.mulf %582, %583 : vector<2x32xf32>
    %c0_182 = arith.constant 0 : index
    %c0_183 = arith.constant 0 : index
    %585 = vector.load %arg5[%c0_182, %c0_183] : memref<256x32xf32, #tpu.memory_space<vmem>>, vector<32x32xf32>
    %cst_184 = arith.constant dense<0.000000e+00> : vector<2x32xf32>
    %586 = tpu.matmul %546, %585, %cst_184 {dimension_numbers = #tpu.dot_dimension_numbers<[1], [0], [0], [1], [0, 0, 1, 1], [], []>} : vector<2x32xf32>, vector<32x32xf32>, vector<2x32xf32> -> vector<2x32xf32>
    %c32_185 = arith.constant 32 : index
    %c0_186 = arith.constant 0 : index
    %587 = vector.load %arg5[%c32_185, %c0_186] : memref<256x32xf32, #tpu.memory_space<vmem>>, vector<32x32xf32>
    %cst_187 = arith.constant dense<0.000000e+00> : vector<2x32xf32>
    %588 = tpu.matmul %582, %587, %cst_187 {dimension_numbers = #tpu.dot_dimension_numbers<[1], [0], [0], [1], [0, 0, 1, 1], [], []>} : vector<2x32xf32>, vector<32x32xf32>, vector<2x32xf32> -> vector<2x32xf32>
    %589 = arith.addf %586, %588 : vector<2x32xf32>
    %590 = vector.broadcast %0 : vector<1x32xf32> to vector<2x32xf32>
    %591 = arith.addf %589, %590 : vector<2x32xf32>
    %592 = math.tanh %591 : vector<2x32xf32>
    %593 = vector.extract_strided_slice %44 {offsets = [0, 0], sizes = [1, 32], strides = [1, 1]} : vector<2x32xf32> to vector<1x32xf32>
    %594 = vector.extract_strided_slice %116 {offsets = [0, 0], sizes = [1, 32], strides = [1, 1]} : vector<2x32xf32> to vector<1x32xf32>
    %595 = vector.extract_strided_slice %188 {offsets = [0, 0], sizes = [1, 32], strides = [1, 1]} : vector<2x32xf32> to vector<1x32xf32>
    %596 = vector.extract_strided_slice %260 {offsets = [0, 0], sizes = [1, 32], strides = [1, 1]} : vector<2x32xf32> to vector<1x32xf32>
    %597 = vector.extract_strided_slice %332 {offsets = [0, 0], sizes = [1, 32], strides = [1, 1]} : vector<2x32xf32> to vector<1x32xf32>
    %598 = vector.extract_strided_slice %404 {offsets = [0, 0], sizes = [1, 32], strides = [1, 1]} : vector<2x32xf32> to vector<1x32xf32>
    %599 = vector.extract_strided_slice %476 {offsets = [0, 0], sizes = [1, 32], strides = [1, 1]} : vector<2x32xf32> to vector<1x32xf32>
    %600 = vector.extract_strided_slice %548 {offsets = [0, 0], sizes = [1, 32], strides = [1, 1]} : vector<2x32xf32> to vector<1x32xf32>
    %601 = tpu.concatenate %593, %594, %595, %596, %597, %598, %599, %600 in 0 : vector<1x32xf32>, vector<1x32xf32>, vector<1x32xf32>, vector<1x32xf32>, vector<1x32xf32>, vector<1x32xf32>, vector<1x32xf32>, vector<1x32xf32> -> vector<8x32xf32>
    %602 = vector.extract_strided_slice %44 {offsets = [1, 0], sizes = [1, 32], strides = [1, 1]} : vector<2x32xf32> to vector<1x32xf32>
    %603 = vector.extract_strided_slice %116 {offsets = [1, 0], sizes = [1, 32], strides = [1, 1]} : vector<2x32xf32> to vector<1x32xf32>
    %604 = vector.extract_strided_slice %188 {offsets = [1, 0], sizes = [1, 32], strides = [1, 1]} : vector<2x32xf32> to vector<1x32xf32>
    %605 = vector.extract_strided_slice %260 {offsets = [1, 0], sizes = [1, 32], strides = [1, 1]} : vector<2x32xf32> to vector<1x32xf32>
    %606 = vector.extract_strided_slice %332 {offsets = [1, 0], sizes = [1, 32], strides = [1, 1]} : vector<2x32xf32> to vector<1x32xf32>
    %607 = vector.extract_strided_slice %404 {offsets = [1, 0], sizes = [1, 32], strides = [1, 1]} : vector<2x32xf32> to vector<1x32xf32>
    %608 = vector.extract_strided_slice %476 {offsets = [1, 0], sizes = [1, 32], strides = [1, 1]} : vector<2x32xf32> to vector<1x32xf32>
    %609 = vector.extract_strided_slice %548 {offsets = [1, 0], sizes = [1, 32], strides = [1, 1]} : vector<2x32xf32> to vector<1x32xf32>
    %610 = tpu.concatenate %602, %603, %604, %605, %606, %607, %608, %609 in 0 : vector<1x32xf32>, vector<1x32xf32>, vector<1x32xf32>, vector<1x32xf32>, vector<1x32xf32>, vector<1x32xf32>, vector<1x32xf32>, vector<1x32xf32> -> vector<8x32xf32>
    %611 = vector.extract_strided_slice %584 {offsets = [0, 0], sizes = [1, 32], strides = [1, 1]} : vector<2x32xf32> to vector<1x32xf32>
    %612 = vector.extract_strided_slice %512 {offsets = [0, 0], sizes = [1, 32], strides = [1, 1]} : vector<2x32xf32> to vector<1x32xf32>
    %613 = vector.extract_strided_slice %440 {offsets = [0, 0], sizes = [1, 32], strides = [1, 1]} : vector<2x32xf32> to vector<1x32xf32>
    %614 = vector.extract_strided_slice %368 {offsets = [0, 0], sizes = [1, 32], strides = [1, 1]} : vector<2x32xf32> to vector<1x32xf32>
    %615 = vector.extract_strided_slice %296 {offsets = [0, 0], sizes = [1, 32], strides = [1, 1]} : vector<2x32xf32> to vector<1x32xf32>
    %616 = vector.extract_strided_slice %224 {offsets = [0, 0], sizes = [1, 32], strides = [1, 1]} : vector<2x32xf32> to vector<1x32xf32>
    %617 = vector.extract_strided_slice %152 {offsets = [0, 0], sizes = [1, 32], strides = [1, 1]} : vector<2x32xf32> to vector<1x32xf32>
    %618 = vector.extract_strided_slice %80 {offsets = [0, 0], sizes = [1, 32], strides = [1, 1]} : vector<2x32xf32> to vector<1x32xf32>
    %619 = tpu.concatenate %611, %612, %613, %614, %615, %616, %617, %618 in 0 : vector<1x32xf32>, vector<1x32xf32>, vector<1x32xf32>, vector<1x32xf32>, vector<1x32xf32>, vector<1x32xf32>, vector<1x32xf32>, vector<1x32xf32> -> vector<8x32xf32>
    %620 = vector.extract_strided_slice %584 {offsets = [1, 0], sizes = [1, 32], strides = [1, 1]} : vector<2x32xf32> to vector<1x32xf32>
    %621 = vector.extract_strided_slice %512 {offsets = [1, 0], sizes = [1, 32], strides = [1, 1]} : vector<2x32xf32> to vector<1x32xf32>
    %622 = vector.extract_strided_slice %440 {offsets = [1, 0], sizes = [1, 32], strides = [1, 1]} : vector<2x32xf32> to vector<1x32xf32>
    %623 = vector.extract_strided_slice %368 {offsets = [1, 0], sizes = [1, 32], strides = [1, 1]} : vector<2x32xf32> to vector<1x32xf32>
    %624 = vector.extract_strided_slice %296 {offsets = [1, 0], sizes = [1, 32], strides = [1, 1]} : vector<2x32xf32> to vector<1x32xf32>
    %625 = vector.extract_strided_slice %224 {offsets = [1, 0], sizes = [1, 32], strides = [1, 1]} : vector<2x32xf32> to vector<1x32xf32>
    %626 = vector.extract_strided_slice %152 {offsets = [1, 0], sizes = [1, 32], strides = [1, 1]} : vector<2x32xf32> to vector<1x32xf32>
    %627 = vector.extract_strided_slice %80 {offsets = [1, 0], sizes = [1, 32], strides = [1, 1]} : vector<2x32xf32> to vector<1x32xf32>
    %628 = tpu.concatenate %620, %621, %622, %623, %624, %625, %626, %627 in 0 : vector<1x32xf32>, vector<1x32xf32>, vector<1x32xf32>, vector<1x32xf32>, vector<1x32xf32>, vector<1x32xf32>, vector<1x32xf32>, vector<1x32xf32> -> vector<8x32xf32>
    %c64 = arith.constant 64 : index
    %c0_188 = arith.constant 0 : index
    %629 = vector.load %arg5[%c64, %c0_188] : memref<256x32xf32, #tpu.memory_space<vmem>>, vector<32x32xf32>
    %c96 = arith.constant 96 : index
    %c0_189 = arith.constant 0 : index
    %630 = vector.load %arg5[%c96, %c0_189] : memref<256x32xf32, #tpu.memory_space<vmem>>, vector<32x32xf32>
    %cst_190 = arith.constant dense<0.000000e+00> : vector<8x32xf32>
    %631 = tpu.matmul %601, %629, %cst_190 {dimension_numbers = #tpu.dot_dimension_numbers<[1], [0], [0], [1], [0, 0, 1, 1], [], []>} : vector<8x32xf32>, vector<32x32xf32>, vector<8x32xf32> -> vector<8x32xf32>
    %cst_191 = arith.constant dense<0.000000e+00> : vector<8x32xf32>
    %632 = tpu.matmul %619, %630, %cst_191 {dimension_numbers = #tpu.dot_dimension_numbers<[1], [0], [0], [1], [0, 0, 1, 1], [], []>} : vector<8x32xf32>, vector<32x32xf32>, vector<8x32xf32> -> vector<8x32xf32>
    %633 = arith.addf %631, %632 : vector<8x32xf32>
    %cst_192 = arith.constant dense<0.000000e+00> : vector<8x32xf32>
    %634 = tpu.matmul %610, %629, %cst_192 {dimension_numbers = #tpu.dot_dimension_numbers<[1], [0], [0], [1], [0, 0, 1, 1], [], []>} : vector<8x32xf32>, vector<32x32xf32>, vector<8x32xf32> -> vector<8x32xf32>
    %cst_193 = arith.constant dense<0.000000e+00> : vector<8x32xf32>
    %635 = tpu.matmul %628, %630, %cst_193 {dimension_numbers = #tpu.dot_dimension_numbers<[1], [0], [0], [1], [0, 0, 1, 1], [], []>} : vector<8x32xf32>, vector<32x32xf32>, vector<8x32xf32> -> vector<8x32xf32>
    %636 = arith.addf %634, %635 : vector<8x32xf32>
    %c0_194 = arith.constant 0 : index
    %c0_195 = arith.constant 0 : index
    %c0_196 = arith.constant 0 : index
    %637 = vector.load %arg1[%c0_194, %c0_195, %c0_196] : memref<2x8x1xf32, #tpu.memory_space<vmem>>, vector<1x8x1xf32>
    %638 = vector.shape_cast %637 : vector<1x8x1xf32> to vector<8x1xf32>
    %c1_197 = arith.constant 1 : index
    %c0_198 = arith.constant 0 : index
    %c0_199 = arith.constant 0 : index
    %639 = vector.load %arg1[%c1_197, %c0_198, %c0_199] : memref<2x8x1xf32, #tpu.memory_space<vmem>>, vector<1x8x1xf32>
    %640 = vector.shape_cast %639 : vector<1x8x1xf32> to vector<8x1xf32>
    %641 = vector.shape_cast %1 : vector<1x32xf32> to vector<1x32xf32>
    %642 = vector.broadcast %641 : vector<1x32xf32> to vector<8x32xf32>
    %c64_200 = arith.constant 64 : index
    %c0_201 = arith.constant 0 : index
    %643 = vector.load %arg4[%c64_200, %c0_201] : memref<160x96xf32, #tpu.memory_space<vmem>>, vector<32x96xf32>
    %c96_202 = arith.constant 96 : index
    %c0_203 = arith.constant 0 : index
    %644 = vector.load %arg4[%c96_202, %c0_203] : memref<160x96xf32, #tpu.memory_space<vmem>>, vector<32x96xf32>
    %c128 = arith.constant 128 : index
    %c0_204 = arith.constant 0 : index
    %645 = vector.load %arg4[%c128, %c0_204] : memref<160x96xf32, #tpu.memory_space<vmem>>, vector<32x96xf32>
    %c128_205 = arith.constant 128 : index
    %c0_206 = arith.constant 0 : index
    %646 = vector.load %arg5[%c128_205, %c0_206] : memref<256x32xf32, #tpu.memory_space<vmem>>, vector<32x32xf32>
    %c160 = arith.constant 160 : index
    %c0_207 = arith.constant 0 : index
    %647 = vector.load %arg5[%c160, %c0_207] : memref<256x32xf32, #tpu.memory_space<vmem>>, vector<32x32xf32>
    %c192 = arith.constant 192 : index
    %c0_208 = arith.constant 0 : index
    %648 = vector.load %arg5[%c192, %c0_208] : memref<256x32xf32, #tpu.memory_space<vmem>>, vector<32x32xf32>
    %c224 = arith.constant 224 : index
    %c0_209 = arith.constant 0 : index
    %649 = vector.load %arg5[%c224, %c0_209] : memref<256x32xf32, #tpu.memory_space<vmem>>, vector<32x32xf32>
    %cst_210 = arith.constant dense<0.000000e+00> : vector<2x32xf32>
    %650 = tpu.matmul %592, %646, %cst_210 {dimension_numbers = #tpu.dot_dimension_numbers<[1], [0], [0], [1], [0, 0, 1, 1], [], []>} : vector<2x32xf32>, vector<32x32xf32>, vector<2x32xf32> -> vector<2x32xf32>
    %651 = vector.extract_strided_slice %650 {offsets = [0, 0], sizes = [1, 32], strides = [1, 1]} : vector<2x32xf32> to vector<1x32xf32>
    %652 = vector.broadcast %651 : vector<1x32xf32> to vector<8x32xf32>
    %653 = arith.addf %633, %652 : vector<8x32xf32>
    %654 = math.tanh %653 : vector<8x32xf32>
    %655 = arith.mulf %654, %642 : vector<8x32xf32>
    %cst_211 = arith.constant dense<0.000000e+00> : vector<8xf32>
    %656 = vector.multi_reduction <add>, %655, %cst_211 [1] : vector<8x32xf32> to vector<8xf32>
    %657 = vector.shape_cast %656 : vector<8xf32> to vector<8x1xf32>
    %658 = arith.addf %657, %638 : vector<8x1xf32>
    %cst_212 = arith.constant dense<0xFF800000> : vector<1xf32>
    %659 = vector.multi_reduction <maximumf>, %658, %cst_212 [0] : vector<8x1xf32> to vector<1xf32>
    %660 = vector.shape_cast %659 : vector<1xf32> to vector<1x1xf32>
    %661 = vector.broadcast %660 : vector<1x1xf32> to vector<8x1xf32>
    %662 = arith.subf %658, %661 : vector<8x1xf32>
    %663 = math.exp %662 : vector<8x1xf32>
    %cst_213 = arith.constant dense<0.000000e+00> : vector<1xf32>
    %664 = vector.multi_reduction <add>, %663, %cst_213 [0] : vector<8x1xf32> to vector<1xf32>
    %665 = vector.shape_cast %664 : vector<1xf32> to vector<1x1xf32>
    %666 = tpu.reciprocal %665 {approx = true} : vector<1x1xf32> -> vector<1x1xf32>
    %667 = vector.broadcast %666 : vector<1x1xf32> to vector<8x1xf32>
    %668 = arith.mulf %663, %667 : vector<8x1xf32>
    %669 = vector.broadcast %668 : vector<8x1xf32> to vector<8x32xf32>
    %670 = arith.mulf %669, %601 : vector<8x32xf32>
    %cst_214 = arith.constant dense<0.000000e+00> : vector<32xf32>
    %671 = vector.multi_reduction <add>, %670, %cst_214 [0] : vector<8x32xf32> to vector<32xf32>
    %672 = vector.shape_cast %671 : vector<32xf32> to vector<1x32xf32>
    %673 = vector.broadcast %668 : vector<8x1xf32> to vector<8x32xf32>
    %674 = arith.mulf %673, %619 : vector<8x32xf32>
    %cst_215 = arith.constant dense<0.000000e+00> : vector<32xf32>
    %675 = vector.multi_reduction <add>, %674, %cst_215 [0] : vector<8x32xf32> to vector<32xf32>
    %676 = vector.shape_cast %675 : vector<32xf32> to vector<1x32xf32>
    %677 = vector.extract_strided_slice %650 {offsets = [1, 0], sizes = [1, 32], strides = [1, 1]} : vector<2x32xf32> to vector<1x32xf32>
    %678 = vector.broadcast %677 : vector<1x32xf32> to vector<8x32xf32>
    %679 = arith.addf %636, %678 : vector<8x32xf32>
    %680 = math.tanh %679 : vector<8x32xf32>
    %681 = arith.mulf %680, %642 : vector<8x32xf32>
    %cst_216 = arith.constant dense<0.000000e+00> : vector<8xf32>
    %682 = vector.multi_reduction <add>, %681, %cst_216 [1] : vector<8x32xf32> to vector<8xf32>
    %683 = vector.shape_cast %682 : vector<8xf32> to vector<8x1xf32>
    %684 = arith.addf %683, %640 : vector<8x1xf32>
    %cst_217 = arith.constant dense<0xFF800000> : vector<1xf32>
    %685 = vector.multi_reduction <maximumf>, %684, %cst_217 [0] : vector<8x1xf32> to vector<1xf32>
    %686 = vector.shape_cast %685 : vector<1xf32> to vector<1x1xf32>
    %687 = vector.broadcast %686 : vector<1x1xf32> to vector<8x1xf32>
    %688 = arith.subf %684, %687 : vector<8x1xf32>
    %689 = math.exp %688 : vector<8x1xf32>
    %cst_218 = arith.constant dense<0.000000e+00> : vector<1xf32>
    %690 = vector.multi_reduction <add>, %689, %cst_218 [0] : vector<8x1xf32> to vector<1xf32>
    %691 = vector.shape_cast %690 : vector<1xf32> to vector<1x1xf32>
    %692 = tpu.reciprocal %691 {approx = true} : vector<1x1xf32> -> vector<1x1xf32>
    %693 = vector.broadcast %692 : vector<1x1xf32> to vector<8x1xf32>
    %694 = arith.mulf %689, %693 : vector<8x1xf32>
    %695 = vector.broadcast %694 : vector<8x1xf32> to vector<8x32xf32>
    %696 = arith.mulf %695, %610 : vector<8x32xf32>
    %cst_219 = arith.constant dense<0.000000e+00> : vector<32xf32>
    %697 = vector.multi_reduction <add>, %696, %cst_219 [0] : vector<8x32xf32> to vector<32xf32>
    %698 = vector.shape_cast %697 : vector<32xf32> to vector<1x32xf32>
    %699 = vector.broadcast %694 : vector<8x1xf32> to vector<8x32xf32>
    %700 = arith.mulf %699, %628 : vector<8x32xf32>
    %cst_220 = arith.constant dense<0.000000e+00> : vector<32xf32>
    %701 = vector.multi_reduction <add>, %700, %cst_220 [0] : vector<8x32xf32> to vector<32xf32>
    %702 = vector.shape_cast %701 : vector<32xf32> to vector<1x32xf32>
    %703 = tpu.concatenate %672, %698 in 0 : vector<1x32xf32>, vector<1x32xf32> -> vector<2x32xf32>
    %704 = tpu.concatenate %676, %702 in 0 : vector<1x32xf32>, vector<1x32xf32> -> vector<2x32xf32>
    %c0_221 = arith.constant 0 : index
    %c0_222 = arith.constant 0 : index
    %c0_223 = arith.constant 0 : index
    %705 = vector.load %arg3[%c0_221, %c0_222, %c0_223] : memref<8x2x128xf32, #tpu.memory_space<vmem>>, vector<1x2x96xf32>
    %706 = vector.shape_cast %705 : vector<1x2x96xf32> to vector<2x96xf32>
    %cst_224 = arith.constant dense<0.000000e+00> : vector<2x96xf32>
    %707 = tpu.matmul %703, %644, %cst_224 {dimension_numbers = #tpu.dot_dimension_numbers<[1], [0], [0], [1], [0, 0, 1, 1], [], []>} : vector<2x32xf32>, vector<32x96xf32>, vector<2x96xf32> -> vector<2x96xf32>
    %708 = arith.addf %706, %707 : vector<2x96xf32>
    %cst_225 = arith.constant dense<0.000000e+00> : vector<2x96xf32>
    %709 = tpu.matmul %704, %645, %cst_225 {dimension_numbers = #tpu.dot_dimension_numbers<[1], [0], [0], [1], [0, 0, 1, 1], [], []>} : vector<2x32xf32>, vector<32x96xf32>, vector<2x96xf32> -> vector<2x96xf32>
    %710 = arith.addf %708, %709 : vector<2x96xf32>
    %cst_226 = arith.constant dense<0.000000e+00> : vector<2x96xf32>
    %711 = tpu.matmul %592, %643, %cst_226 {dimension_numbers = #tpu.dot_dimension_numbers<[1], [0], [0], [1], [0, 0, 1, 1], [], []>} : vector<2x32xf32>, vector<32x96xf32>, vector<2x96xf32> -> vector<2x96xf32>
    %712 = vector.extract_strided_slice %710 {offsets = [0, 0], sizes = [2, 64], strides = [1, 1]} : vector<2x96xf32> to vector<2x64xf32>
    %713 = vector.extract_strided_slice %711 {offsets = [0, 0], sizes = [2, 64], strides = [1, 1]} : vector<2x96xf32> to vector<2x64xf32>
    %714 = arith.addf %712, %713 : vector<2x64xf32>
    %715 = arith.negf %714 : vector<2x64xf32>
    %716 = math.exp %715 : vector<2x64xf32>
    %cst_227 = arith.constant 1.000000e+00 : f32
    %717 = vector.broadcast %cst_227 : f32 to vector<2x64xf32>
    %718 = arith.addf %717, %716 : vector<2x64xf32>
    %719 = arith.divf %717, %718 : vector<2x64xf32>
    %720 = vector.extract_strided_slice %719 {offsets = [0, 0], sizes = [2, 32], strides = [1, 1]} : vector<2x64xf32> to vector<2x32xf32>
    %721 = vector.extract_strided_slice %719 {offsets = [0, 32], sizes = [2, 32], strides = [1, 1]} : vector<2x64xf32> to vector<2x32xf32>
    %722 = vector.extract_strided_slice %710 {offsets = [0, 64], sizes = [2, 32], strides = [1, 1]} : vector<2x96xf32> to vector<2x32xf32>
    %723 = vector.extract_strided_slice %711 {offsets = [0, 64], sizes = [2, 32], strides = [1, 1]} : vector<2x96xf32> to vector<2x32xf32>
    %724 = vector.broadcast %4 : vector<1x32xf32> to vector<2x32xf32>
    %725 = arith.addf %723, %724 : vector<2x32xf32>
    %726 = arith.mulf %720, %725 : vector<2x32xf32>
    %727 = arith.addf %722, %726 : vector<2x32xf32>
    %728 = math.tanh %727 : vector<2x32xf32>
    %cst_228 = arith.constant 1.000000e+00 : f32
    %729 = vector.broadcast %cst_228 : f32 to vector<2x32xf32>
    %730 = arith.subf %729, %721 : vector<2x32xf32>
    %731 = arith.mulf %730, %728 : vector<2x32xf32>
    %732 = arith.mulf %721, %592 : vector<2x32xf32>
    %733 = arith.addf %731, %732 : vector<2x32xf32>
    %c0_229 = arith.constant 0 : index
    %c0_230 = arith.constant 0 : index
    %c0_231 = arith.constant 0 : index
    %734 = vector.load %arg7[%c0_229, %c0_230, %c0_231] : memref<2x8x32xf32, #tpu.memory_space<vmem>>, vector<2x1x32xf32>
    %735 = vector.shape_cast %734 : vector<2x1x32xf32> to vector<2x32xf32>
    %736 = vector.shape_cast %733 : vector<2x32xf32> to vector<2x1x32xf32>
    tpu.vector_store %arg7[%c0_229, %c0_230, %c0_231], %736 {strides = array<i32>} : memref<2x8x32xf32, #tpu.memory_space<vmem>>, vector<2x1x32xf32>,
    %c0_232 = arith.constant 0 : index
    %c0_233 = arith.constant 0 : index
    %c96_234 = arith.constant 96 : index
    %737 = vector.load %arg3[%c0_232, %c0_233, %c96_234] : memref<8x2x128xf32, #tpu.memory_space<vmem>>, vector<1x2x32xf32>
    %738 = vector.shape_cast %737 : vector<1x2x32xf32> to vector<2x32xf32>
    %cst_235 = arith.constant dense<0.000000e+00> : vector<2x32xf32>
    %739 = tpu.matmul %733, %647, %cst_235 {dimension_numbers = #tpu.dot_dimension_numbers<[1], [0], [0], [1], [0, 0, 1, 1], [], []>} : vector<2x32xf32>, vector<32x32xf32>, vector<2x32xf32> -> vector<2x32xf32>
    %740 = arith.addf %738, %739 : vector<2x32xf32>
    %cst_236 = arith.constant dense<0.000000e+00> : vector<2x32xf32>
    %741 = tpu.matmul %703, %648, %cst_236 {dimension_numbers = #tpu.dot_dimension_numbers<[1], [0], [0], [1], [0, 0, 1, 1], [], []>} : vector<2x32xf32>, vector<32x32xf32>, vector<2x32xf32> -> vector<2x32xf32>
    %742 = arith.addf %740, %741 : vector<2x32xf32>
    %cst_237 = arith.constant dense<0.000000e+00> : vector<2x32xf32>
    %743 = tpu.matmul %704, %649, %cst_237 {dimension_numbers = #tpu.dot_dimension_numbers<[1], [0], [0], [1], [0, 0, 1, 1], [], []>} : vector<2x32xf32>, vector<32x32xf32>, vector<2x32xf32> -> vector<2x32xf32>
    %744 = arith.addf %742, %743 : vector<2x32xf32>
    %c0_238 = arith.constant 0 : index
    %c0_239 = arith.constant 0 : index
    %c0_240 = arith.constant 0 : index
    %745 = vector.load %arg8[%c0_238, %c0_239, %c0_240] : memref<2x8x32xf32, #tpu.memory_space<vmem>>, vector<2x1x32xf32>
    %746 = vector.shape_cast %745 : vector<2x1x32xf32> to vector<2x32xf32>
    %747 = vector.shape_cast %744 : vector<2x32xf32> to vector<2x1x32xf32>
    tpu.vector_store %arg8[%c0_238, %c0_239, %c0_240], %747 {strides = array<i32>} : memref<2x8x32xf32, #tpu.memory_space<vmem>>, vector<2x1x32xf32>,
    %cst_241 = arith.constant dense<0.000000e+00> : vector<2x32xf32>
    %748 = tpu.matmul %733, %646, %cst_241 {dimension_numbers = #tpu.dot_dimension_numbers<[1], [0], [0], [1], [0, 0, 1, 1], [], []>} : vector<2x32xf32>, vector<32x32xf32>, vector<2x32xf32> -> vector<2x32xf32>
    %749 = vector.extract_strided_slice %748 {offsets = [0, 0], sizes = [1, 32], strides = [1, 1]} : vector<2x32xf32> to vector<1x32xf32>
    %750 = vector.broadcast %749 : vector<1x32xf32> to vector<8x32xf32>
    %751 = arith.addf %633, %750 : vector<8x32xf32>
    %752 = math.tanh %751 : vector<8x32xf32>
    %753 = arith.mulf %752, %642 : vector<8x32xf32>
    %cst_242 = arith.constant dense<0.000000e+00> : vector<8xf32>
    %754 = vector.multi_reduction <add>, %753, %cst_242 [1] : vector<8x32xf32> to vector<8xf32>
    %755 = vector.shape_cast %754 : vector<8xf32> to vector<8x1xf32>
    %756 = arith.addf %755, %638 : vector<8x1xf32>
    %cst_243 = arith.constant dense<0xFF800000> : vector<1xf32>
    %757 = vector.multi_reduction <maximumf>, %756, %cst_243 [0] : vector<8x1xf32> to vector<1xf32>
    %758 = vector.shape_cast %757 : vector<1xf32> to vector<1x1xf32>
    %759 = vector.broadcast %758 : vector<1x1xf32> to vector<8x1xf32>
    %760 = arith.subf %756, %759 : vector<8x1xf32>
    %761 = math.exp %760 : vector<8x1xf32>
    %cst_244 = arith.constant dense<0.000000e+00> : vector<1xf32>
    %762 = vector.multi_reduction <add>, %761, %cst_244 [0] : vector<8x1xf32> to vector<1xf32>
    %763 = vector.shape_cast %762 : vector<1xf32> to vector<1x1xf32>
    %764 = tpu.reciprocal %763 {approx = true} : vector<1x1xf32> -> vector<1x1xf32>
    %765 = vector.broadcast %764 : vector<1x1xf32> to vector<8x1xf32>
    %766 = arith.mulf %761, %765 : vector<8x1xf32>
    %767 = vector.broadcast %766 : vector<8x1xf32> to vector<8x32xf32>
    %768 = arith.mulf %767, %601 : vector<8x32xf32>
    %cst_245 = arith.constant dense<0.000000e+00> : vector<32xf32>
    %769 = vector.multi_reduction <add>, %768, %cst_245 [0] : vector<8x32xf32> to vector<32xf32>
    %770 = vector.shape_cast %769 : vector<32xf32> to vector<1x32xf32>
    %771 = vector.broadcast %766 : vector<8x1xf32> to vector<8x32xf32>
    %772 = arith.mulf %771, %619 : vector<8x32xf32>
    %cst_246 = arith.constant dense<0.000000e+00> : vector<32xf32>
    %773 = vector.multi_reduction <add>, %772, %cst_246 [0] : vector<8x32xf32> to vector<32xf32>
    %774 = vector.shape_cast %773 : vector<32xf32> to vector<1x32xf32>
    %775 = vector.extract_strided_slice %748 {offsets = [1, 0], sizes = [1, 32], strides = [1, 1]} : vector<2x32xf32> to vector<1x32xf32>
    %776 = vector.broadcast %775 : vector<1x32xf32> to vector<8x32xf32>
    %777 = arith.addf %636, %776 : vector<8x32xf32>
    %778 = math.tanh %777 : vector<8x32xf32>
    %779 = arith.mulf %778, %642 : vector<8x32xf32>
    %cst_247 = arith.constant dense<0.000000e+00> : vector<8xf32>
    %780 = vector.multi_reduction <add>, %779, %cst_247 [1] : vector<8x32xf32> to vector<8xf32>
    %781 = vector.shape_cast %780 : vector<8xf32> to vector<8x1xf32>
    %782 = arith.addf %781, %640 : vector<8x1xf32>
    %cst_248 = arith.constant dense<0xFF800000> : vector<1xf32>
    %783 = vector.multi_reduction <maximumf>, %782, %cst_248 [0] : vector<8x1xf32> to vector<1xf32>
    %784 = vector.shape_cast %783 : vector<1xf32> to vector<1x1xf32>
    %785 = vector.broadcast %784 : vector<1x1xf32> to vector<8x1xf32>
    %786 = arith.subf %782, %785 : vector<8x1xf32>
    %787 = math.exp %786 : vector<8x1xf32>
    %cst_249 = arith.constant dense<0.000000e+00> : vector<1xf32>
    %788 = vector.multi_reduction <add>, %787, %cst_249 [0] : vector<8x1xf32> to vector<1xf32>
    %789 = vector.shape_cast %788 : vector<1xf32> to vector<1x1xf32>
    %790 = tpu.reciprocal %789 {approx = true} : vector<1x1xf32> -> vector<1x1xf32>
    %791 = vector.broadcast %790 : vector<1x1xf32> to vector<8x1xf32>
    %792 = arith.mulf %787, %791 : vector<8x1xf32>
    %793 = vector.broadcast %792 : vector<8x1xf32> to vector<8x32xf32>
    %794 = arith.mulf %793, %610 : vector<8x32xf32>
    %cst_250 = arith.constant dense<0.000000e+00> : vector<32xf32>
    %795 = vector.multi_reduction <add>, %794, %cst_250 [0] : vector<8x32xf32> to vector<32xf32>
    %796 = vector.shape_cast %795 : vector<32xf32> to vector<1x32xf32>
    %797 = vector.broadcast %792 : vector<8x1xf32> to vector<8x32xf32>
    %798 = arith.mulf %797, %628 : vector<8x32xf32>
    %cst_251 = arith.constant dense<0.000000e+00> : vector<32xf32>
    %799 = vector.multi_reduction <add>, %798, %cst_251 [0] : vector<8x32xf32> to vector<32xf32>
    %800 = vector.shape_cast %799 : vector<32xf32> to vector<1x32xf32>
    %801 = tpu.concatenate %770, %796 in 0 : vector<1x32xf32>, vector<1x32xf32> -> vector<2x32xf32>
    %802 = tpu.concatenate %774, %800 in 0 : vector<1x32xf32>, vector<1x32xf32> -> vector<2x32xf32>
    %c1_252 = arith.constant 1 : index
    %c0_253 = arith.constant 0 : index
    %c0_254 = arith.constant 0 : index
    %803 = vector.load %arg3[%c1_252, %c0_253, %c0_254] : memref<8x2x128xf32, #tpu.memory_space<vmem>>, vector<1x2x96xf32>
    %804 = vector.shape_cast %803 : vector<1x2x96xf32> to vector<2x96xf32>
    %cst_255 = arith.constant dense<0.000000e+00> : vector<2x96xf32>
    %805 = tpu.matmul %801, %644, %cst_255 {dimension_numbers = #tpu.dot_dimension_numbers<[1], [0], [0], [1], [0, 0, 1, 1], [], []>} : vector<2x32xf32>, vector<32x96xf32>, vector<2x96xf32> -> vector<2x96xf32>
    %806 = arith.addf %804, %805 : vector<2x96xf32>
    %cst_256 = arith.constant dense<0.000000e+00> : vector<2x96xf32>
    %807 = tpu.matmul %802, %645, %cst_256 {dimension_numbers = #tpu.dot_dimension_numbers<[1], [0], [0], [1], [0, 0, 1, 1], [], []>} : vector<2x32xf32>, vector<32x96xf32>, vector<2x96xf32> -> vector<2x96xf32>
    %808 = arith.addf %806, %807 : vector<2x96xf32>
    %cst_257 = arith.constant dense<0.000000e+00> : vector<2x96xf32>
    %809 = tpu.matmul %733, %643, %cst_257 {dimension_numbers = #tpu.dot_dimension_numbers<[1], [0], [0], [1], [0, 0, 1, 1], [], []>} : vector<2x32xf32>, vector<32x96xf32>, vector<2x96xf32> -> vector<2x96xf32>
    %810 = vector.extract_strided_slice %808 {offsets = [0, 0], sizes = [2, 64], strides = [1, 1]} : vector<2x96xf32> to vector<2x64xf32>
    %811 = vector.extract_strided_slice %809 {offsets = [0, 0], sizes = [2, 64], strides = [1, 1]} : vector<2x96xf32> to vector<2x64xf32>
    %812 = arith.addf %810, %811 : vector<2x64xf32>
    %813 = arith.negf %812 : vector<2x64xf32>
    %814 = math.exp %813 : vector<2x64xf32>
    %cst_258 = arith.constant 1.000000e+00 : f32
    %815 = vector.broadcast %cst_258 : f32 to vector<2x64xf32>
    %816 = arith.addf %815, %814 : vector<2x64xf32>
    %817 = arith.divf %815, %816 : vector<2x64xf32>
    %818 = vector.extract_strided_slice %817 {offsets = [0, 0], sizes = [2, 32], strides = [1, 1]} : vector<2x64xf32> to vector<2x32xf32>
    %819 = vector.extract_strided_slice %817 {offsets = [0, 32], sizes = [2, 32], strides = [1, 1]} : vector<2x64xf32> to vector<2x32xf32>
    %820 = vector.extract_strided_slice %808 {offsets = [0, 64], sizes = [2, 32], strides = [1, 1]} : vector<2x96xf32> to vector<2x32xf32>
    %821 = vector.extract_strided_slice %809 {offsets = [0, 64], sizes = [2, 32], strides = [1, 1]} : vector<2x96xf32> to vector<2x32xf32>
    %822 = vector.broadcast %4 : vector<1x32xf32> to vector<2x32xf32>
    %823 = arith.addf %821, %822 : vector<2x32xf32>
    %824 = arith.mulf %818, %823 : vector<2x32xf32>
    %825 = arith.addf %820, %824 : vector<2x32xf32>
    %826 = math.tanh %825 : vector<2x32xf32>
    %cst_259 = arith.constant 1.000000e+00 : f32
    %827 = vector.broadcast %cst_259 : f32 to vector<2x32xf32>
    %828 = arith.subf %827, %819 : vector<2x32xf32>
    %829 = arith.mulf %828, %826 : vector<2x32xf32>
    %830 = arith.mulf %819, %733 : vector<2x32xf32>
    %831 = arith.addf %829, %830 : vector<2x32xf32>
    %c0_260 = arith.constant 0 : index
    %c1_261 = arith.constant 1 : index
    %c0_262 = arith.constant 0 : index
    %832 = vector.load %arg7[%c0_260, %c1_261, %c0_262] : memref<2x8x32xf32, #tpu.memory_space<vmem>>, vector<2x1x32xf32>
    %833 = vector.shape_cast %832 : vector<2x1x32xf32> to vector<2x32xf32>
    %834 = vector.shape_cast %831 : vector<2x32xf32> to vector<2x1x32xf32>
    tpu.vector_store %arg7[%c0_260, %c1_261, %c0_262], %834 {strides = array<i32>} : memref<2x8x32xf32, #tpu.memory_space<vmem>>, vector<2x1x32xf32>,
    %c1_263 = arith.constant 1 : index
    %c0_264 = arith.constant 0 : index
    %c96_265 = arith.constant 96 : index
    %835 = vector.load %arg3[%c1_263, %c0_264, %c96_265] : memref<8x2x128xf32, #tpu.memory_space<vmem>>, vector<1x2x32xf32>
    %836 = vector.shape_cast %835 : vector<1x2x32xf32> to vector<2x32xf32>
    %cst_266 = arith.constant dense<0.000000e+00> : vector<2x32xf32>
    %837 = tpu.matmul %831, %647, %cst_266 {dimension_numbers = #tpu.dot_dimension_numbers<[1], [0], [0], [1], [0, 0, 1, 1], [], []>} : vector<2x32xf32>, vector<32x32xf32>, vector<2x32xf32> -> vector<2x32xf32>
    %838 = arith.addf %836, %837 : vector<2x32xf32>
    %cst_267 = arith.constant dense<0.000000e+00> : vector<2x32xf32>
    %839 = tpu.matmul %801, %648, %cst_267 {dimension_numbers = #tpu.dot_dimension_numbers<[1], [0], [0], [1], [0, 0, 1, 1], [], []>} : vector<2x32xf32>, vector<32x32xf32>, vector<2x32xf32> -> vector<2x32xf32>
    %840 = arith.addf %838, %839 : vector<2x32xf32>
    %cst_268 = arith.constant dense<0.000000e+00> : vector<2x32xf32>
    %841 = tpu.matmul %802, %649, %cst_268 {dimension_numbers = #tpu.dot_dimension_numbers<[1], [0], [0], [1], [0, 0, 1, 1], [], []>} : vector<2x32xf32>, vector<32x32xf32>, vector<2x32xf32> -> vector<2x32xf32>
    %842 = arith.addf %840, %841 : vector<2x32xf32>
    %c0_269 = arith.constant 0 : index
    %c1_270 = arith.constant 1 : index
    %c0_271 = arith.constant 0 : index
    %843 = vector.load %arg8[%c0_269, %c1_270, %c0_271] : memref<2x8x32xf32, #tpu.memory_space<vmem>>, vector<2x1x32xf32>
    %844 = vector.shape_cast %843 : vector<2x1x32xf32> to vector<2x32xf32>
    %845 = vector.shape_cast %842 : vector<2x32xf32> to vector<2x1x32xf32>
    tpu.vector_store %arg8[%c0_269, %c1_270, %c0_271], %845 {strides = array<i32>} : memref<2x8x32xf32, #tpu.memory_space<vmem>>, vector<2x1x32xf32>,
    %cst_272 = arith.constant dense<0.000000e+00> : vector<2x32xf32>
    %846 = tpu.matmul %831, %646, %cst_272 {dimension_numbers = #tpu.dot_dimension_numbers<[1], [0], [0], [1], [0, 0, 1, 1], [], []>} : vector<2x32xf32>, vector<32x32xf32>, vector<2x32xf32> -> vector<2x32xf32>
    %847 = vector.extract_strided_slice %846 {offsets = [0, 0], sizes = [1, 32], strides = [1, 1]} : vector<2x32xf32> to vector<1x32xf32>
    %848 = vector.broadcast %847 : vector<1x32xf32> to vector<8x32xf32>
    %849 = arith.addf %633, %848 : vector<8x32xf32>
    %850 = math.tanh %849 : vector<8x32xf32>
    %851 = arith.mulf %850, %642 : vector<8x32xf32>
    %cst_273 = arith.constant dense<0.000000e+00> : vector<8xf32>
    %852 = vector.multi_reduction <add>, %851, %cst_273 [1] : vector<8x32xf32> to vector<8xf32>
    %853 = vector.shape_cast %852 : vector<8xf32> to vector<8x1xf32>
    %854 = arith.addf %853, %638 : vector<8x1xf32>
    %cst_274 = arith.constant dense<0xFF800000> : vector<1xf32>
    %855 = vector.multi_reduction <maximumf>, %854, %cst_274 [0] : vector<8x1xf32> to vector<1xf32>
    %856 = vector.shape_cast %855 : vector<1xf32> to vector<1x1xf32>
    %857 = vector.broadcast %856 : vector<1x1xf32> to vector<8x1xf32>
    %858 = arith.subf %854, %857 : vector<8x1xf32>
    %859 = math.exp %858 : vector<8x1xf32>
    %cst_275 = arith.constant dense<0.000000e+00> : vector<1xf32>
    %860 = vector.multi_reduction <add>, %859, %cst_275 [0] : vector<8x1xf32> to vector<1xf32>
    %861 = vector.shape_cast %860 : vector<1xf32> to vector<1x1xf32>
    %862 = tpu.reciprocal %861 {approx = true} : vector<1x1xf32> -> vector<1x1xf32>
    %863 = vector.broadcast %862 : vector<1x1xf32> to vector<8x1xf32>
    %864 = arith.mulf %859, %863 : vector<8x1xf32>
    %865 = vector.broadcast %864 : vector<8x1xf32> to vector<8x32xf32>
    %866 = arith.mulf %865, %601 : vector<8x32xf32>
    %cst_276 = arith.constant dense<0.000000e+00> : vector<32xf32>
    %867 = vector.multi_reduction <add>, %866, %cst_276 [0] : vector<8x32xf32> to vector<32xf32>
    %868 = vector.shape_cast %867 : vector<32xf32> to vector<1x32xf32>
    %869 = vector.broadcast %864 : vector<8x1xf32> to vector<8x32xf32>
    %870 = arith.mulf %869, %619 : vector<8x32xf32>
    %cst_277 = arith.constant dense<0.000000e+00> : vector<32xf32>
    %871 = vector.multi_reduction <add>, %870, %cst_277 [0] : vector<8x32xf32> to vector<32xf32>
    %872 = vector.shape_cast %871 : vector<32xf32> to vector<1x32xf32>
    %873 = vector.extract_strided_slice %846 {offsets = [1, 0], sizes = [1, 32], strides = [1, 1]} : vector<2x32xf32> to vector<1x32xf32>
    %874 = vector.broadcast %873 : vector<1x32xf32> to vector<8x32xf32>
    %875 = arith.addf %636, %874 : vector<8x32xf32>
    %876 = math.tanh %875 : vector<8x32xf32>
    %877 = arith.mulf %876, %642 : vector<8x32xf32>
    %cst_278 = arith.constant dense<0.000000e+00> : vector<8xf32>
    %878 = vector.multi_reduction <add>, %877, %cst_278 [1] : vector<8x32xf32> to vector<8xf32>
    %879 = vector.shape_cast %878 : vector<8xf32> to vector<8x1xf32>
    %880 = arith.addf %879, %640 : vector<8x1xf32>
    %cst_279 = arith.constant dense<0xFF800000> : vector<1xf32>
    %881 = vector.multi_reduction <maximumf>, %880, %cst_279 [0] : vector<8x1xf32> to vector<1xf32>
    %882 = vector.shape_cast %881 : vector<1xf32> to vector<1x1xf32>
    %883 = vector.broadcast %882 : vector<1x1xf32> to vector<8x1xf32>
    %884 = arith.subf %880, %883 : vector<8x1xf32>
    %885 = math.exp %884 : vector<8x1xf32>
    %cst_280 = arith.constant dense<0.000000e+00> : vector<1xf32>
    %886 = vector.multi_reduction <add>, %885, %cst_280 [0] : vector<8x1xf32> to vector<1xf32>
    %887 = vector.shape_cast %886 : vector<1xf32> to vector<1x1xf32>
    %888 = tpu.reciprocal %887 {approx = true} : vector<1x1xf32> -> vector<1x1xf32>
    %889 = vector.broadcast %888 : vector<1x1xf32> to vector<8x1xf32>
    %890 = arith.mulf %885, %889 : vector<8x1xf32>
    %891 = vector.broadcast %890 : vector<8x1xf32> to vector<8x32xf32>
    %892 = arith.mulf %891, %610 : vector<8x32xf32>
    %cst_281 = arith.constant dense<0.000000e+00> : vector<32xf32>
    %893 = vector.multi_reduction <add>, %892, %cst_281 [0] : vector<8x32xf32> to vector<32xf32>
    %894 = vector.shape_cast %893 : vector<32xf32> to vector<1x32xf32>
    %895 = vector.broadcast %890 : vector<8x1xf32> to vector<8x32xf32>
    %896 = arith.mulf %895, %628 : vector<8x32xf32>
    %cst_282 = arith.constant dense<0.000000e+00> : vector<32xf32>
    %897 = vector.multi_reduction <add>, %896, %cst_282 [0] : vector<8x32xf32> to vector<32xf32>
    %898 = vector.shape_cast %897 : vector<32xf32> to vector<1x32xf32>
    %899 = tpu.concatenate %868, %894 in 0 : vector<1x32xf32>, vector<1x32xf32> -> vector<2x32xf32>
    %900 = tpu.concatenate %872, %898 in 0 : vector<1x32xf32>, vector<1x32xf32> -> vector<2x32xf32>
    %c2_283 = arith.constant 2 : index
    %c0_284 = arith.constant 0 : index
    %c0_285 = arith.constant 0 : index
    %901 = vector.load %arg3[%c2_283, %c0_284, %c0_285] : memref<8x2x128xf32, #tpu.memory_space<vmem>>, vector<1x2x96xf32>
    %902 = vector.shape_cast %901 : vector<1x2x96xf32> to vector<2x96xf32>
    %cst_286 = arith.constant dense<0.000000e+00> : vector<2x96xf32>
    %903 = tpu.matmul %899, %644, %cst_286 {dimension_numbers = #tpu.dot_dimension_numbers<[1], [0], [0], [1], [0, 0, 1, 1], [], []>} : vector<2x32xf32>, vector<32x96xf32>, vector<2x96xf32> -> vector<2x96xf32>
    %904 = arith.addf %902, %903 : vector<2x96xf32>
    %cst_287 = arith.constant dense<0.000000e+00> : vector<2x96xf32>
    %905 = tpu.matmul %900, %645, %cst_287 {dimension_numbers = #tpu.dot_dimension_numbers<[1], [0], [0], [1], [0, 0, 1, 1], [], []>} : vector<2x32xf32>, vector<32x96xf32>, vector<2x96xf32> -> vector<2x96xf32>
    %906 = arith.addf %904, %905 : vector<2x96xf32>
    %cst_288 = arith.constant dense<0.000000e+00> : vector<2x96xf32>
    %907 = tpu.matmul %831, %643, %cst_288 {dimension_numbers = #tpu.dot_dimension_numbers<[1], [0], [0], [1], [0, 0, 1, 1], [], []>} : vector<2x32xf32>, vector<32x96xf32>, vector<2x96xf32> -> vector<2x96xf32>
    %908 = vector.extract_strided_slice %906 {offsets = [0, 0], sizes = [2, 64], strides = [1, 1]} : vector<2x96xf32> to vector<2x64xf32>
    %909 = vector.extract_strided_slice %907 {offsets = [0, 0], sizes = [2, 64], strides = [1, 1]} : vector<2x96xf32> to vector<2x64xf32>
    %910 = arith.addf %908, %909 : vector<2x64xf32>
    %911 = arith.negf %910 : vector<2x64xf32>
    %912 = math.exp %911 : vector<2x64xf32>
    %cst_289 = arith.constant 1.000000e+00 : f32
    %913 = vector.broadcast %cst_289 : f32 to vector<2x64xf32>
    %914 = arith.addf %913, %912 : vector<2x64xf32>
    %915 = arith.divf %913, %914 : vector<2x64xf32>
    %916 = vector.extract_strided_slice %915 {offsets = [0, 0], sizes = [2, 32], strides = [1, 1]} : vector<2x64xf32> to vector<2x32xf32>
    %917 = vector.extract_strided_slice %915 {offsets = [0, 32], sizes = [2, 32], strides = [1, 1]} : vector<2x64xf32> to vector<2x32xf32>
    %918 = vector.extract_strided_slice %906 {offsets = [0, 64], sizes = [2, 32], strides = [1, 1]} : vector<2x96xf32> to vector<2x32xf32>
    %919 = vector.extract_strided_slice %907 {offsets = [0, 64], sizes = [2, 32], strides = [1, 1]} : vector<2x96xf32> to vector<2x32xf32>
    %920 = vector.broadcast %4 : vector<1x32xf32> to vector<2x32xf32>
    %921 = arith.addf %919, %920 : vector<2x32xf32>
    %922 = arith.mulf %916, %921 : vector<2x32xf32>
    %923 = arith.addf %918, %922 : vector<2x32xf32>
    %924 = math.tanh %923 : vector<2x32xf32>
    %cst_290 = arith.constant 1.000000e+00 : f32
    %925 = vector.broadcast %cst_290 : f32 to vector<2x32xf32>
    %926 = arith.subf %925, %917 : vector<2x32xf32>
    %927 = arith.mulf %926, %924 : vector<2x32xf32>
    %928 = arith.mulf %917, %831 : vector<2x32xf32>
    %929 = arith.addf %927, %928 : vector<2x32xf32>
    %c0_291 = arith.constant 0 : index
    %c2_292 = arith.constant 2 : index
    %c0_293 = arith.constant 0 : index
    %930 = vector.load %arg7[%c0_291, %c2_292, %c0_293] : memref<2x8x32xf32, #tpu.memory_space<vmem>>, vector<2x1x32xf32>
    %931 = vector.shape_cast %930 : vector<2x1x32xf32> to vector<2x32xf32>
    %932 = vector.shape_cast %929 : vector<2x32xf32> to vector<2x1x32xf32>
    tpu.vector_store %arg7[%c0_291, %c2_292, %c0_293], %932 {strides = array<i32>} : memref<2x8x32xf32, #tpu.memory_space<vmem>>, vector<2x1x32xf32>,
    %c2_294 = arith.constant 2 : index
    %c0_295 = arith.constant 0 : index
    %c96_296 = arith.constant 96 : index
    %933 = vector.load %arg3[%c2_294, %c0_295, %c96_296] : memref<8x2x128xf32, #tpu.memory_space<vmem>>, vector<1x2x32xf32>
    %934 = vector.shape_cast %933 : vector<1x2x32xf32> to vector<2x32xf32>
    %cst_297 = arith.constant dense<0.000000e+00> : vector<2x32xf32>
    %935 = tpu.matmul %929, %647, %cst_297 {dimension_numbers = #tpu.dot_dimension_numbers<[1], [0], [0], [1], [0, 0, 1, 1], [], []>} : vector<2x32xf32>, vector<32x32xf32>, vector<2x32xf32> -> vector<2x32xf32>
    %936 = arith.addf %934, %935 : vector<2x32xf32>
    %cst_298 = arith.constant dense<0.000000e+00> : vector<2x32xf32>
    %937 = tpu.matmul %899, %648, %cst_298 {dimension_numbers = #tpu.dot_dimension_numbers<[1], [0], [0], [1], [0, 0, 1, 1], [], []>} : vector<2x32xf32>, vector<32x32xf32>, vector<2x32xf32> -> vector<2x32xf32>
    %938 = arith.addf %936, %937 : vector<2x32xf32>
    %cst_299 = arith.constant dense<0.000000e+00> : vector<2x32xf32>
    %939 = tpu.matmul %900, %649, %cst_299 {dimension_numbers = #tpu.dot_dimension_numbers<[1], [0], [0], [1], [0, 0, 1, 1], [], []>} : vector<2x32xf32>, vector<32x32xf32>, vector<2x32xf32> -> vector<2x32xf32>
    %940 = arith.addf %938, %939 : vector<2x32xf32>
    %c0_300 = arith.constant 0 : index
    %c2_301 = arith.constant 2 : index
    %c0_302 = arith.constant 0 : index
    %941 = vector.load %arg8[%c0_300, %c2_301, %c0_302] : memref<2x8x32xf32, #tpu.memory_space<vmem>>, vector<2x1x32xf32>
    %942 = vector.shape_cast %941 : vector<2x1x32xf32> to vector<2x32xf32>
    %943 = vector.shape_cast %940 : vector<2x32xf32> to vector<2x1x32xf32>
    tpu.vector_store %arg8[%c0_300, %c2_301, %c0_302], %943 {strides = array<i32>} : memref<2x8x32xf32, #tpu.memory_space<vmem>>, vector<2x1x32xf32>,
    %cst_303 = arith.constant dense<0.000000e+00> : vector<2x32xf32>
    %944 = tpu.matmul %929, %646, %cst_303 {dimension_numbers = #tpu.dot_dimension_numbers<[1], [0], [0], [1], [0, 0, 1, 1], [], []>} : vector<2x32xf32>, vector<32x32xf32>, vector<2x32xf32> -> vector<2x32xf32>
    %945 = vector.extract_strided_slice %944 {offsets = [0, 0], sizes = [1, 32], strides = [1, 1]} : vector<2x32xf32> to vector<1x32xf32>
    %946 = vector.broadcast %945 : vector<1x32xf32> to vector<8x32xf32>
    %947 = arith.addf %633, %946 : vector<8x32xf32>
    %948 = math.tanh %947 : vector<8x32xf32>
    %949 = arith.mulf %948, %642 : vector<8x32xf32>
    %cst_304 = arith.constant dense<0.000000e+00> : vector<8xf32>
    %950 = vector.multi_reduction <add>, %949, %cst_304 [1] : vector<8x32xf32> to vector<8xf32>
    %951 = vector.shape_cast %950 : vector<8xf32> to vector<8x1xf32>
    %952 = arith.addf %951, %638 : vector<8x1xf32>
    %cst_305 = arith.constant dense<0xFF800000> : vector<1xf32>
    %953 = vector.multi_reduction <maximumf>, %952, %cst_305 [0] : vector<8x1xf32> to vector<1xf32>
    %954 = vector.shape_cast %953 : vector<1xf32> to vector<1x1xf32>
    %955 = vector.broadcast %954 : vector<1x1xf32> to vector<8x1xf32>
    %956 = arith.subf %952, %955 : vector<8x1xf32>
    %957 = math.exp %956 : vector<8x1xf32>
    %cst_306 = arith.constant dense<0.000000e+00> : vector<1xf32>
    %958 = vector.multi_reduction <add>, %957, %cst_306 [0] : vector<8x1xf32> to vector<1xf32>
    %959 = vector.shape_cast %958 : vector<1xf32> to vector<1x1xf32>
    %960 = tpu.reciprocal %959 {approx = true} : vector<1x1xf32> -> vector<1x1xf32>
    %961 = vector.broadcast %960 : vector<1x1xf32> to vector<8x1xf32>
    %962 = arith.mulf %957, %961 : vector<8x1xf32>
    %963 = vector.broadcast %962 : vector<8x1xf32> to vector<8x32xf32>
    %964 = arith.mulf %963, %601 : vector<8x32xf32>
    %cst_307 = arith.constant dense<0.000000e+00> : vector<32xf32>
    %965 = vector.multi_reduction <add>, %964, %cst_307 [0] : vector<8x32xf32> to vector<32xf32>
    %966 = vector.shape_cast %965 : vector<32xf32> to vector<1x32xf32>
    %967 = vector.broadcast %962 : vector<8x1xf32> to vector<8x32xf32>
    %968 = arith.mulf %967, %619 : vector<8x32xf32>
    %cst_308 = arith.constant dense<0.000000e+00> : vector<32xf32>
    %969 = vector.multi_reduction <add>, %968, %cst_308 [0] : vector<8x32xf32> to vector<32xf32>
    %970 = vector.shape_cast %969 : vector<32xf32> to vector<1x32xf32>
    %971 = vector.extract_strided_slice %944 {offsets = [1, 0], sizes = [1, 32], strides = [1, 1]} : vector<2x32xf32> to vector<1x32xf32>
    %972 = vector.broadcast %971 : vector<1x32xf32> to vector<8x32xf32>
    %973 = arith.addf %636, %972 : vector<8x32xf32>
    %974 = math.tanh %973 : vector<8x32xf32>
    %975 = arith.mulf %974, %642 : vector<8x32xf32>
    %cst_309 = arith.constant dense<0.000000e+00> : vector<8xf32>
    %976 = vector.multi_reduction <add>, %975, %cst_309 [1] : vector<8x32xf32> to vector<8xf32>
    %977 = vector.shape_cast %976 : vector<8xf32> to vector<8x1xf32>
    %978 = arith.addf %977, %640 : vector<8x1xf32>
    %cst_310 = arith.constant dense<0xFF800000> : vector<1xf32>
    %979 = vector.multi_reduction <maximumf>, %978, %cst_310 [0] : vector<8x1xf32> to vector<1xf32>
    %980 = vector.shape_cast %979 : vector<1xf32> to vector<1x1xf32>
    %981 = vector.broadcast %980 : vector<1x1xf32> to vector<8x1xf32>
    %982 = arith.subf %978, %981 : vector<8x1xf32>
    %983 = math.exp %982 : vector<8x1xf32>
    %cst_311 = arith.constant dense<0.000000e+00> : vector<1xf32>
    %984 = vector.multi_reduction <add>, %983, %cst_311 [0] : vector<8x1xf32> to vector<1xf32>
    %985 = vector.shape_cast %984 : vector<1xf32> to vector<1x1xf32>
    %986 = tpu.reciprocal %985 {approx = true} : vector<1x1xf32> -> vector<1x1xf32>
    %987 = vector.broadcast %986 : vector<1x1xf32> to vector<8x1xf32>
    %988 = arith.mulf %983, %987 : vector<8x1xf32>
    %989 = vector.broadcast %988 : vector<8x1xf32> to vector<8x32xf32>
    %990 = arith.mulf %989, %610 : vector<8x32xf32>
    %cst_312 = arith.constant dense<0.000000e+00> : vector<32xf32>
    %991 = vector.multi_reduction <add>, %990, %cst_312 [0] : vector<8x32xf32> to vector<32xf32>
    %992 = vector.shape_cast %991 : vector<32xf32> to vector<1x32xf32>
    %993 = vector.broadcast %988 : vector<8x1xf32> to vector<8x32xf32>
    %994 = arith.mulf %993, %628 : vector<8x32xf32>
    %cst_313 = arith.constant dense<0.000000e+00> : vector<32xf32>
    %995 = vector.multi_reduction <add>, %994, %cst_313 [0] : vector<8x32xf32> to vector<32xf32>
    %996 = vector.shape_cast %995 : vector<32xf32> to vector<1x32xf32>
    %997 = tpu.concatenate %966, %992 in 0 : vector<1x32xf32>, vector<1x32xf32> -> vector<2x32xf32>
    %998 = tpu.concatenate %970, %996 in 0 : vector<1x32xf32>, vector<1x32xf32> -> vector<2x32xf32>
    %c3_314 = arith.constant 3 : index
    %c0_315 = arith.constant 0 : index
    %c0_316 = arith.constant 0 : index
    %999 = vector.load %arg3[%c3_314, %c0_315, %c0_316] : memref<8x2x128xf32, #tpu.memory_space<vmem>>, vector<1x2x96xf32>
    %1000 = vector.shape_cast %999 : vector<1x2x96xf32> to vector<2x96xf32>
    %cst_317 = arith.constant dense<0.000000e+00> : vector<2x96xf32>
    %1001 = tpu.matmul %997, %644, %cst_317 {dimension_numbers = #tpu.dot_dimension_numbers<[1], [0], [0], [1], [0, 0, 1, 1], [], []>} : vector<2x32xf32>, vector<32x96xf32>, vector<2x96xf32> -> vector<2x96xf32>
    %1002 = arith.addf %1000, %1001 : vector<2x96xf32>
    %cst_318 = arith.constant dense<0.000000e+00> : vector<2x96xf32>
    %1003 = tpu.matmul %998, %645, %cst_318 {dimension_numbers = #tpu.dot_dimension_numbers<[1], [0], [0], [1], [0, 0, 1, 1], [], []>} : vector<2x32xf32>, vector<32x96xf32>, vector<2x96xf32> -> vector<2x96xf32>
    %1004 = arith.addf %1002, %1003 : vector<2x96xf32>
    %cst_319 = arith.constant dense<0.000000e+00> : vector<2x96xf32>
    %1005 = tpu.matmul %929, %643, %cst_319 {dimension_numbers = #tpu.dot_dimension_numbers<[1], [0], [0], [1], [0, 0, 1, 1], [], []>} : vector<2x32xf32>, vector<32x96xf32>, vector<2x96xf32> -> vector<2x96xf32>
    %1006 = vector.extract_strided_slice %1004 {offsets = [0, 0], sizes = [2, 64], strides = [1, 1]} : vector<2x96xf32> to vector<2x64xf32>
    %1007 = vector.extract_strided_slice %1005 {offsets = [0, 0], sizes = [2, 64], strides = [1, 1]} : vector<2x96xf32> to vector<2x64xf32>
    %1008 = arith.addf %1006, %1007 : vector<2x64xf32>
    %1009 = arith.negf %1008 : vector<2x64xf32>
    %1010 = math.exp %1009 : vector<2x64xf32>
    %cst_320 = arith.constant 1.000000e+00 : f32
    %1011 = vector.broadcast %cst_320 : f32 to vector<2x64xf32>
    %1012 = arith.addf %1011, %1010 : vector<2x64xf32>
    %1013 = arith.divf %1011, %1012 : vector<2x64xf32>
    %1014 = vector.extract_strided_slice %1013 {offsets = [0, 0], sizes = [2, 32], strides = [1, 1]} : vector<2x64xf32> to vector<2x32xf32>
    %1015 = vector.extract_strided_slice %1013 {offsets = [0, 32], sizes = [2, 32], strides = [1, 1]} : vector<2x64xf32> to vector<2x32xf32>
    %1016 = vector.extract_strided_slice %1004 {offsets = [0, 64], sizes = [2, 32], strides = [1, 1]} : vector<2x96xf32> to vector<2x32xf32>
    %1017 = vector.extract_strided_slice %1005 {offsets = [0, 64], sizes = [2, 32], strides = [1, 1]} : vector<2x96xf32> to vector<2x32xf32>
    %1018 = vector.broadcast %4 : vector<1x32xf32> to vector<2x32xf32>
    %1019 = arith.addf %1017, %1018 : vector<2x32xf32>
    %1020 = arith.mulf %1014, %1019 : vector<2x32xf32>
    %1021 = arith.addf %1016, %1020 : vector<2x32xf32>
    %1022 = math.tanh %1021 : vector<2x32xf32>
    %cst_321 = arith.constant 1.000000e+00 : f32
    %1023 = vector.broadcast %cst_321 : f32 to vector<2x32xf32>
    %1024 = arith.subf %1023, %1015 : vector<2x32xf32>
    %1025 = arith.mulf %1024, %1022 : vector<2x32xf32>
    %1026 = arith.mulf %1015, %929 : vector<2x32xf32>
    %1027 = arith.addf %1025, %1026 : vector<2x32xf32>
    %c0_322 = arith.constant 0 : index
    %c3_323 = arith.constant 3 : index
    %c0_324 = arith.constant 0 : index
    %1028 = vector.load %arg7[%c0_322, %c3_323, %c0_324] : memref<2x8x32xf32, #tpu.memory_space<vmem>>, vector<2x1x32xf32>
    %1029 = vector.shape_cast %1028 : vector<2x1x32xf32> to vector<2x32xf32>
    %1030 = vector.shape_cast %1027 : vector<2x32xf32> to vector<2x1x32xf32>
    tpu.vector_store %arg7[%c0_322, %c3_323, %c0_324], %1030 {strides = array<i32>} : memref<2x8x32xf32, #tpu.memory_space<vmem>>, vector<2x1x32xf32>,
    %c3_325 = arith.constant 3 : index
    %c0_326 = arith.constant 0 : index
    %c96_327 = arith.constant 96 : index
    %1031 = vector.load %arg3[%c3_325, %c0_326, %c96_327] : memref<8x2x128xf32, #tpu.memory_space<vmem>>, vector<1x2x32xf32>
    %1032 = vector.shape_cast %1031 : vector<1x2x32xf32> to vector<2x32xf32>
    %cst_328 = arith.constant dense<0.000000e+00> : vector<2x32xf32>
    %1033 = tpu.matmul %1027, %647, %cst_328 {dimension_numbers = #tpu.dot_dimension_numbers<[1], [0], [0], [1], [0, 0, 1, 1], [], []>} : vector<2x32xf32>, vector<32x32xf32>, vector<2x32xf32> -> vector<2x32xf32>
    %1034 = arith.addf %1032, %1033 : vector<2x32xf32>
    %cst_329 = arith.constant dense<0.000000e+00> : vector<2x32xf32>
    %1035 = tpu.matmul %997, %648, %cst_329 {dimension_numbers = #tpu.dot_dimension_numbers<[1], [0], [0], [1], [0, 0, 1, 1], [], []>} : vector<2x32xf32>, vector<32x32xf32>, vector<2x32xf32> -> vector<2x32xf32>
    %1036 = arith.addf %1034, %1035 : vector<2x32xf32>
    %cst_330 = arith.constant dense<0.000000e+00> : vector<2x32xf32>
    %1037 = tpu.matmul %998, %649, %cst_330 {dimension_numbers = #tpu.dot_dimension_numbers<[1], [0], [0], [1], [0, 0, 1, 1], [], []>} : vector<2x32xf32>, vector<32x32xf32>, vector<2x32xf32> -> vector<2x32xf32>
    %1038 = arith.addf %1036, %1037 : vector<2x32xf32>
    %c0_331 = arith.constant 0 : index
    %c3_332 = arith.constant 3 : index
    %c0_333 = arith.constant 0 : index
    %1039 = vector.load %arg8[%c0_331, %c3_332, %c0_333] : memref<2x8x32xf32, #tpu.memory_space<vmem>>, vector<2x1x32xf32>
    %1040 = vector.shape_cast %1039 : vector<2x1x32xf32> to vector<2x32xf32>
    %1041 = vector.shape_cast %1038 : vector<2x32xf32> to vector<2x1x32xf32>
    tpu.vector_store %arg8[%c0_331, %c3_332, %c0_333], %1041 {strides = array<i32>} : memref<2x8x32xf32, #tpu.memory_space<vmem>>, vector<2x1x32xf32>,
    %cst_334 = arith.constant dense<0.000000e+00> : vector<2x32xf32>
    %1042 = tpu.matmul %1027, %646, %cst_334 {dimension_numbers = #tpu.dot_dimension_numbers<[1], [0], [0], [1], [0, 0, 1, 1], [], []>} : vector<2x32xf32>, vector<32x32xf32>, vector<2x32xf32> -> vector<2x32xf32>
    %1043 = vector.extract_strided_slice %1042 {offsets = [0, 0], sizes = [1, 32], strides = [1, 1]} : vector<2x32xf32> to vector<1x32xf32>
    %1044 = vector.broadcast %1043 : vector<1x32xf32> to vector<8x32xf32>
    %1045 = arith.addf %633, %1044 : vector<8x32xf32>
    %1046 = math.tanh %1045 : vector<8x32xf32>
    %1047 = arith.mulf %1046, %642 : vector<8x32xf32>
    %cst_335 = arith.constant dense<0.000000e+00> : vector<8xf32>
    %1048 = vector.multi_reduction <add>, %1047, %cst_335 [1] : vector<8x32xf32> to vector<8xf32>
    %1049 = vector.shape_cast %1048 : vector<8xf32> to vector<8x1xf32>
    %1050 = arith.addf %1049, %638 : vector<8x1xf32>
    %cst_336 = arith.constant dense<0xFF800000> : vector<1xf32>
    %1051 = vector.multi_reduction <maximumf>, %1050, %cst_336 [0] : vector<8x1xf32> to vector<1xf32>
    %1052 = vector.shape_cast %1051 : vector<1xf32> to vector<1x1xf32>
    %1053 = vector.broadcast %1052 : vector<1x1xf32> to vector<8x1xf32>
    %1054 = arith.subf %1050, %1053 : vector<8x1xf32>
    %1055 = math.exp %1054 : vector<8x1xf32>
    %cst_337 = arith.constant dense<0.000000e+00> : vector<1xf32>
    %1056 = vector.multi_reduction <add>, %1055, %cst_337 [0] : vector<8x1xf32> to vector<1xf32>
    %1057 = vector.shape_cast %1056 : vector<1xf32> to vector<1x1xf32>
    %1058 = tpu.reciprocal %1057 {approx = true} : vector<1x1xf32> -> vector<1x1xf32>
    %1059 = vector.broadcast %1058 : vector<1x1xf32> to vector<8x1xf32>
    %1060 = arith.mulf %1055, %1059 : vector<8x1xf32>
    %1061 = vector.broadcast %1060 : vector<8x1xf32> to vector<8x32xf32>
    %1062 = arith.mulf %1061, %601 : vector<8x32xf32>
    %cst_338 = arith.constant dense<0.000000e+00> : vector<32xf32>
    %1063 = vector.multi_reduction <add>, %1062, %cst_338 [0] : vector<8x32xf32> to vector<32xf32>
    %1064 = vector.shape_cast %1063 : vector<32xf32> to vector<1x32xf32>
    %1065 = vector.broadcast %1060 : vector<8x1xf32> to vector<8x32xf32>
    %1066 = arith.mulf %1065, %619 : vector<8x32xf32>
    %cst_339 = arith.constant dense<0.000000e+00> : vector<32xf32>
    %1067 = vector.multi_reduction <add>, %1066, %cst_339 [0] : vector<8x32xf32> to vector<32xf32>
    %1068 = vector.shape_cast %1067 : vector<32xf32> to vector<1x32xf32>
    %1069 = vector.extract_strided_slice %1042 {offsets = [1, 0], sizes = [1, 32], strides = [1, 1]} : vector<2x32xf32> to vector<1x32xf32>
    %1070 = vector.broadcast %1069 : vector<1x32xf32> to vector<8x32xf32>
    %1071 = arith.addf %636, %1070 : vector<8x32xf32>
    %1072 = math.tanh %1071 : vector<8x32xf32>
    %1073 = arith.mulf %1072, %642 : vector<8x32xf32>
    %cst_340 = arith.constant dense<0.000000e+00> : vector<8xf32>
    %1074 = vector.multi_reduction <add>, %1073, %cst_340 [1] : vector<8x32xf32> to vector<8xf32>
    %1075 = vector.shape_cast %1074 : vector<8xf32> to vector<8x1xf32>
    %1076 = arith.addf %1075, %640 : vector<8x1xf32>
    %cst_341 = arith.constant dense<0xFF800000> : vector<1xf32>
    %1077 = vector.multi_reduction <maximumf>, %1076, %cst_341 [0] : vector<8x1xf32> to vector<1xf32>
    %1078 = vector.shape_cast %1077 : vector<1xf32> to vector<1x1xf32>
    %1079 = vector.broadcast %1078 : vector<1x1xf32> to vector<8x1xf32>
    %1080 = arith.subf %1076, %1079 : vector<8x1xf32>
    %1081 = math.exp %1080 : vector<8x1xf32>
    %cst_342 = arith.constant dense<0.000000e+00> : vector<1xf32>
    %1082 = vector.multi_reduction <add>, %1081, %cst_342 [0] : vector<8x1xf32> to vector<1xf32>
    %1083 = vector.shape_cast %1082 : vector<1xf32> to vector<1x1xf32>
    %1084 = tpu.reciprocal %1083 {approx = true} : vector<1x1xf32> -> vector<1x1xf32>
    %1085 = vector.broadcast %1084 : vector<1x1xf32> to vector<8x1xf32>
    %1086 = arith.mulf %1081, %1085 : vector<8x1xf32>
    %1087 = vector.broadcast %1086 : vector<8x1xf32> to vector<8x32xf32>
    %1088 = arith.mulf %1087, %610 : vector<8x32xf32>
    %cst_343 = arith.constant dense<0.000000e+00> : vector<32xf32>
    %1089 = vector.multi_reduction <add>, %1088, %cst_343 [0] : vector<8x32xf32> to vector<32xf32>
    %1090 = vector.shape_cast %1089 : vector<32xf32> to vector<1x32xf32>
    %1091 = vector.broadcast %1086 : vector<8x1xf32> to vector<8x32xf32>
    %1092 = arith.mulf %1091, %628 : vector<8x32xf32>
    %cst_344 = arith.constant dense<0.000000e+00> : vector<32xf32>
    %1093 = vector.multi_reduction <add>, %1092, %cst_344 [0] : vector<8x32xf32> to vector<32xf32>
    %1094 = vector.shape_cast %1093 : vector<32xf32> to vector<1x32xf32>
    %1095 = tpu.concatenate %1064, %1090 in 0 : vector<1x32xf32>, vector<1x32xf32> -> vector<2x32xf32>
    %1096 = tpu.concatenate %1068, %1094 in 0 : vector<1x32xf32>, vector<1x32xf32> -> vector<2x32xf32>
    %c4_345 = arith.constant 4 : index
    %c0_346 = arith.constant 0 : index
    %c0_347 = arith.constant 0 : index
    %1097 = vector.load %arg3[%c4_345, %c0_346, %c0_347] : memref<8x2x128xf32, #tpu.memory_space<vmem>>, vector<1x2x96xf32>
    %1098 = vector.shape_cast %1097 : vector<1x2x96xf32> to vector<2x96xf32>
    %cst_348 = arith.constant dense<0.000000e+00> : vector<2x96xf32>
    %1099 = tpu.matmul %1095, %644, %cst_348 {dimension_numbers = #tpu.dot_dimension_numbers<[1], [0], [0], [1], [0, 0, 1, 1], [], []>} : vector<2x32xf32>, vector<32x96xf32>, vector<2x96xf32> -> vector<2x96xf32>
    %1100 = arith.addf %1098, %1099 : vector<2x96xf32>
    %cst_349 = arith.constant dense<0.000000e+00> : vector<2x96xf32>
    %1101 = tpu.matmul %1096, %645, %cst_349 {dimension_numbers = #tpu.dot_dimension_numbers<[1], [0], [0], [1], [0, 0, 1, 1], [], []>} : vector<2x32xf32>, vector<32x96xf32>, vector<2x96xf32> -> vector<2x96xf32>
    %1102 = arith.addf %1100, %1101 : vector<2x96xf32>
    %cst_350 = arith.constant dense<0.000000e+00> : vector<2x96xf32>
    %1103 = tpu.matmul %1027, %643, %cst_350 {dimension_numbers = #tpu.dot_dimension_numbers<[1], [0], [0], [1], [0, 0, 1, 1], [], []>} : vector<2x32xf32>, vector<32x96xf32>, vector<2x96xf32> -> vector<2x96xf32>
    %1104 = vector.extract_strided_slice %1102 {offsets = [0, 0], sizes = [2, 64], strides = [1, 1]} : vector<2x96xf32> to vector<2x64xf32>
    %1105 = vector.extract_strided_slice %1103 {offsets = [0, 0], sizes = [2, 64], strides = [1, 1]} : vector<2x96xf32> to vector<2x64xf32>
    %1106 = arith.addf %1104, %1105 : vector<2x64xf32>
    %1107 = arith.negf %1106 : vector<2x64xf32>
    %1108 = math.exp %1107 : vector<2x64xf32>
    %cst_351 = arith.constant 1.000000e+00 : f32
    %1109 = vector.broadcast %cst_351 : f32 to vector<2x64xf32>
    %1110 = arith.addf %1109, %1108 : vector<2x64xf32>
    %1111 = arith.divf %1109, %1110 : vector<2x64xf32>
    %1112 = vector.extract_strided_slice %1111 {offsets = [0, 0], sizes = [2, 32], strides = [1, 1]} : vector<2x64xf32> to vector<2x32xf32>
    %1113 = vector.extract_strided_slice %1111 {offsets = [0, 32], sizes = [2, 32], strides = [1, 1]} : vector<2x64xf32> to vector<2x32xf32>
    %1114 = vector.extract_strided_slice %1102 {offsets = [0, 64], sizes = [2, 32], strides = [1, 1]} : vector<2x96xf32> to vector<2x32xf32>
    %1115 = vector.extract_strided_slice %1103 {offsets = [0, 64], sizes = [2, 32], strides = [1, 1]} : vector<2x96xf32> to vector<2x32xf32>
    %1116 = vector.broadcast %4 : vector<1x32xf32> to vector<2x32xf32>
    %1117 = arith.addf %1115, %1116 : vector<2x32xf32>
    %1118 = arith.mulf %1112, %1117 : vector<2x32xf32>
    %1119 = arith.addf %1114, %1118 : vector<2x32xf32>
    %1120 = math.tanh %1119 : vector<2x32xf32>
    %cst_352 = arith.constant 1.000000e+00 : f32
    %1121 = vector.broadcast %cst_352 : f32 to vector<2x32xf32>
    %1122 = arith.subf %1121, %1113 : vector<2x32xf32>
    %1123 = arith.mulf %1122, %1120 : vector<2x32xf32>
    %1124 = arith.mulf %1113, %1027 : vector<2x32xf32>
    %1125 = arith.addf %1123, %1124 : vector<2x32xf32>
    %c0_353 = arith.constant 0 : index
    %c4_354 = arith.constant 4 : index
    %c0_355 = arith.constant 0 : index
    %1126 = vector.load %arg7[%c0_353, %c4_354, %c0_355] : memref<2x8x32xf32, #tpu.memory_space<vmem>>, vector<2x1x32xf32>
    %1127 = vector.shape_cast %1126 : vector<2x1x32xf32> to vector<2x32xf32>
    %1128 = vector.shape_cast %1125 : vector<2x32xf32> to vector<2x1x32xf32>
    tpu.vector_store %arg7[%c0_353, %c4_354, %c0_355], %1128 {strides = array<i32>} : memref<2x8x32xf32, #tpu.memory_space<vmem>>, vector<2x1x32xf32>,
    %c4_356 = arith.constant 4 : index
    %c0_357 = arith.constant 0 : index
    %c96_358 = arith.constant 96 : index
    %1129 = vector.load %arg3[%c4_356, %c0_357, %c96_358] : memref<8x2x128xf32, #tpu.memory_space<vmem>>, vector<1x2x32xf32>
    %1130 = vector.shape_cast %1129 : vector<1x2x32xf32> to vector<2x32xf32>
    %cst_359 = arith.constant dense<0.000000e+00> : vector<2x32xf32>
    %1131 = tpu.matmul %1125, %647, %cst_359 {dimension_numbers = #tpu.dot_dimension_numbers<[1], [0], [0], [1], [0, 0, 1, 1], [], []>} : vector<2x32xf32>, vector<32x32xf32>, vector<2x32xf32> -> vector<2x32xf32>
    %1132 = arith.addf %1130, %1131 : vector<2x32xf32>
    %cst_360 = arith.constant dense<0.000000e+00> : vector<2x32xf32>
    %1133 = tpu.matmul %1095, %648, %cst_360 {dimension_numbers = #tpu.dot_dimension_numbers<[1], [0], [0], [1], [0, 0, 1, 1], [], []>} : vector<2x32xf32>, vector<32x32xf32>, vector<2x32xf32> -> vector<2x32xf32>
    %1134 = arith.addf %1132, %1133 : vector<2x32xf32>
    %cst_361 = arith.constant dense<0.000000e+00> : vector<2x32xf32>
    %1135 = tpu.matmul %1096, %649, %cst_361 {dimension_numbers = #tpu.dot_dimension_numbers<[1], [0], [0], [1], [0, 0, 1, 1], [], []>} : vector<2x32xf32>, vector<32x32xf32>, vector<2x32xf32> -> vector<2x32xf32>
    %1136 = arith.addf %1134, %1135 : vector<2x32xf32>
    %c0_362 = arith.constant 0 : index
    %c4_363 = arith.constant 4 : index
    %c0_364 = arith.constant 0 : index
    %1137 = vector.load %arg8[%c0_362, %c4_363, %c0_364] : memref<2x8x32xf32, #tpu.memory_space<vmem>>, vector<2x1x32xf32>
    %1138 = vector.shape_cast %1137 : vector<2x1x32xf32> to vector<2x32xf32>
    %1139 = vector.shape_cast %1136 : vector<2x32xf32> to vector<2x1x32xf32>
    tpu.vector_store %arg8[%c0_362, %c4_363, %c0_364], %1139 {strides = array<i32>} : memref<2x8x32xf32, #tpu.memory_space<vmem>>, vector<2x1x32xf32>,
    %cst_365 = arith.constant dense<0.000000e+00> : vector<2x32xf32>
    %1140 = tpu.matmul %1125, %646, %cst_365 {dimension_numbers = #tpu.dot_dimension_numbers<[1], [0], [0], [1], [0, 0, 1, 1], [], []>} : vector<2x32xf32>, vector<32x32xf32>, vector<2x32xf32> -> vector<2x32xf32>
    %1141 = vector.extract_strided_slice %1140 {offsets = [0, 0], sizes = [1, 32], strides = [1, 1]} : vector<2x32xf32> to vector<1x32xf32>
    %1142 = vector.broadcast %1141 : vector<1x32xf32> to vector<8x32xf32>
    %1143 = arith.addf %633, %1142 : vector<8x32xf32>
    %1144 = math.tanh %1143 : vector<8x32xf32>
    %1145 = arith.mulf %1144, %642 : vector<8x32xf32>
    %cst_366 = arith.constant dense<0.000000e+00> : vector<8xf32>
    %1146 = vector.multi_reduction <add>, %1145, %cst_366 [1] : vector<8x32xf32> to vector<8xf32>
    %1147 = vector.shape_cast %1146 : vector<8xf32> to vector<8x1xf32>
    %1148 = arith.addf %1147, %638 : vector<8x1xf32>
    %cst_367 = arith.constant dense<0xFF800000> : vector<1xf32>
    %1149 = vector.multi_reduction <maximumf>, %1148, %cst_367 [0] : vector<8x1xf32> to vector<1xf32>
    %1150 = vector.shape_cast %1149 : vector<1xf32> to vector<1x1xf32>
    %1151 = vector.broadcast %1150 : vector<1x1xf32> to vector<8x1xf32>
    %1152 = arith.subf %1148, %1151 : vector<8x1xf32>
    %1153 = math.exp %1152 : vector<8x1xf32>
    %cst_368 = arith.constant dense<0.000000e+00> : vector<1xf32>
    %1154 = vector.multi_reduction <add>, %1153, %cst_368 [0] : vector<8x1xf32> to vector<1xf32>
    %1155 = vector.shape_cast %1154 : vector<1xf32> to vector<1x1xf32>
    %1156 = tpu.reciprocal %1155 {approx = true} : vector<1x1xf32> -> vector<1x1xf32>
    %1157 = vector.broadcast %1156 : vector<1x1xf32> to vector<8x1xf32>
    %1158 = arith.mulf %1153, %1157 : vector<8x1xf32>
    %1159 = vector.broadcast %1158 : vector<8x1xf32> to vector<8x32xf32>
    %1160 = arith.mulf %1159, %601 : vector<8x32xf32>
    %cst_369 = arith.constant dense<0.000000e+00> : vector<32xf32>
    %1161 = vector.multi_reduction <add>, %1160, %cst_369 [0] : vector<8x32xf32> to vector<32xf32>
    %1162 = vector.shape_cast %1161 : vector<32xf32> to vector<1x32xf32>
    %1163 = vector.broadcast %1158 : vector<8x1xf32> to vector<8x32xf32>
    %1164 = arith.mulf %1163, %619 : vector<8x32xf32>
    %cst_370 = arith.constant dense<0.000000e+00> : vector<32xf32>
    %1165 = vector.multi_reduction <add>, %1164, %cst_370 [0] : vector<8x32xf32> to vector<32xf32>
    %1166 = vector.shape_cast %1165 : vector<32xf32> to vector<1x32xf32>
    %1167 = vector.extract_strided_slice %1140 {offsets = [1, 0], sizes = [1, 32], strides = [1, 1]} : vector<2x32xf32> to vector<1x32xf32>
    %1168 = vector.broadcast %1167 : vector<1x32xf32> to vector<8x32xf32>
    %1169 = arith.addf %636, %1168 : vector<8x32xf32>
    %1170 = math.tanh %1169 : vector<8x32xf32>
    %1171 = arith.mulf %1170, %642 : vector<8x32xf32>
    %cst_371 = arith.constant dense<0.000000e+00> : vector<8xf32>
    %1172 = vector.multi_reduction <add>, %1171, %cst_371 [1] : vector<8x32xf32> to vector<8xf32>
    %1173 = vector.shape_cast %1172 : vector<8xf32> to vector<8x1xf32>
    %1174 = arith.addf %1173, %640 : vector<8x1xf32>
    %cst_372 = arith.constant dense<0xFF800000> : vector<1xf32>
    %1175 = vector.multi_reduction <maximumf>, %1174, %cst_372 [0] : vector<8x1xf32> to vector<1xf32>
    %1176 = vector.shape_cast %1175 : vector<1xf32> to vector<1x1xf32>
    %1177 = vector.broadcast %1176 : vector<1x1xf32> to vector<8x1xf32>
    %1178 = arith.subf %1174, %1177 : vector<8x1xf32>
    %1179 = math.exp %1178 : vector<8x1xf32>
    %cst_373 = arith.constant dense<0.000000e+00> : vector<1xf32>
    %1180 = vector.multi_reduction <add>, %1179, %cst_373 [0] : vector<8x1xf32> to vector<1xf32>
    %1181 = vector.shape_cast %1180 : vector<1xf32> to vector<1x1xf32>
    %1182 = tpu.reciprocal %1181 {approx = true} : vector<1x1xf32> -> vector<1x1xf32>
    %1183 = vector.broadcast %1182 : vector<1x1xf32> to vector<8x1xf32>
    %1184 = arith.mulf %1179, %1183 : vector<8x1xf32>
    %1185 = vector.broadcast %1184 : vector<8x1xf32> to vector<8x32xf32>
    %1186 = arith.mulf %1185, %610 : vector<8x32xf32>
    %cst_374 = arith.constant dense<0.000000e+00> : vector<32xf32>
    %1187 = vector.multi_reduction <add>, %1186, %cst_374 [0] : vector<8x32xf32> to vector<32xf32>
    %1188 = vector.shape_cast %1187 : vector<32xf32> to vector<1x32xf32>
    %1189 = vector.broadcast %1184 : vector<8x1xf32> to vector<8x32xf32>
    %1190 = arith.mulf %1189, %628 : vector<8x32xf32>
    %cst_375 = arith.constant dense<0.000000e+00> : vector<32xf32>
    %1191 = vector.multi_reduction <add>, %1190, %cst_375 [0] : vector<8x32xf32> to vector<32xf32>
    %1192 = vector.shape_cast %1191 : vector<32xf32> to vector<1x32xf32>
    %1193 = tpu.concatenate %1162, %1188 in 0 : vector<1x32xf32>, vector<1x32xf32> -> vector<2x32xf32>
    %1194 = tpu.concatenate %1166, %1192 in 0 : vector<1x32xf32>, vector<1x32xf32> -> vector<2x32xf32>
    %c5_376 = arith.constant 5 : index
    %c0_377 = arith.constant 0 : index
    %c0_378 = arith.constant 0 : index
    %1195 = vector.load %arg3[%c5_376, %c0_377, %c0_378] : memref<8x2x128xf32, #tpu.memory_space<vmem>>, vector<1x2x96xf32>
    %1196 = vector.shape_cast %1195 : vector<1x2x96xf32> to vector<2x96xf32>
    %cst_379 = arith.constant dense<0.000000e+00> : vector<2x96xf32>
    %1197 = tpu.matmul %1193, %644, %cst_379 {dimension_numbers = #tpu.dot_dimension_numbers<[1], [0], [0], [1], [0, 0, 1, 1], [], []>} : vector<2x32xf32>, vector<32x96xf32>, vector<2x96xf32> -> vector<2x96xf32>
    %1198 = arith.addf %1196, %1197 : vector<2x96xf32>
    %cst_380 = arith.constant dense<0.000000e+00> : vector<2x96xf32>
    %1199 = tpu.matmul %1194, %645, %cst_380 {dimension_numbers = #tpu.dot_dimension_numbers<[1], [0], [0], [1], [0, 0, 1, 1], [], []>} : vector<2x32xf32>, vector<32x96xf32>, vector<2x96xf32> -> vector<2x96xf32>
    %1200 = arith.addf %1198, %1199 : vector<2x96xf32>
    %cst_381 = arith.constant dense<0.000000e+00> : vector<2x96xf32>
    %1201 = tpu.matmul %1125, %643, %cst_381 {dimension_numbers = #tpu.dot_dimension_numbers<[1], [0], [0], [1], [0, 0, 1, 1], [], []>} : vector<2x32xf32>, vector<32x96xf32>, vector<2x96xf32> -> vector<2x96xf32>
    %1202 = vector.extract_strided_slice %1200 {offsets = [0, 0], sizes = [2, 64], strides = [1, 1]} : vector<2x96xf32> to vector<2x64xf32>
    %1203 = vector.extract_strided_slice %1201 {offsets = [0, 0], sizes = [2, 64], strides = [1, 1]} : vector<2x96xf32> to vector<2x64xf32>
    %1204 = arith.addf %1202, %1203 : vector<2x64xf32>
    %1205 = arith.negf %1204 : vector<2x64xf32>
    %1206 = math.exp %1205 : vector<2x64xf32>
    %cst_382 = arith.constant 1.000000e+00 : f32
    %1207 = vector.broadcast %cst_382 : f32 to vector<2x64xf32>
    %1208 = arith.addf %1207, %1206 : vector<2x64xf32>
    %1209 = arith.divf %1207, %1208 : vector<2x64xf32>
    %1210 = vector.extract_strided_slice %1209 {offsets = [0, 0], sizes = [2, 32], strides = [1, 1]} : vector<2x64xf32> to vector<2x32xf32>
    %1211 = vector.extract_strided_slice %1209 {offsets = [0, 32], sizes = [2, 32], strides = [1, 1]} : vector<2x64xf32> to vector<2x32xf32>
    %1212 = vector.extract_strided_slice %1200 {offsets = [0, 64], sizes = [2, 32], strides = [1, 1]} : vector<2x96xf32> to vector<2x32xf32>
    %1213 = vector.extract_strided_slice %1201 {offsets = [0, 64], sizes = [2, 32], strides = [1, 1]} : vector<2x96xf32> to vector<2x32xf32>
    %1214 = vector.broadcast %4 : vector<1x32xf32> to vector<2x32xf32>
    %1215 = arith.addf %1213, %1214 : vector<2x32xf32>
    %1216 = arith.mulf %1210, %1215 : vector<2x32xf32>
    %1217 = arith.addf %1212, %1216 : vector<2x32xf32>
    %1218 = math.tanh %1217 : vector<2x32xf32>
    %cst_383 = arith.constant 1.000000e+00 : f32
    %1219 = vector.broadcast %cst_383 : f32 to vector<2x32xf32>
    %1220 = arith.subf %1219, %1211 : vector<2x32xf32>
    %1221 = arith.mulf %1220, %1218 : vector<2x32xf32>
    %1222 = arith.mulf %1211, %1125 : vector<2x32xf32>
    %1223 = arith.addf %1221, %1222 : vector<2x32xf32>
    %c0_384 = arith.constant 0 : index
    %c5_385 = arith.constant 5 : index
    %c0_386 = arith.constant 0 : index
    %1224 = vector.load %arg7[%c0_384, %c5_385, %c0_386] : memref<2x8x32xf32, #tpu.memory_space<vmem>>, vector<2x1x32xf32>
    %1225 = vector.shape_cast %1224 : vector<2x1x32xf32> to vector<2x32xf32>
    %1226 = vector.shape_cast %1223 : vector<2x32xf32> to vector<2x1x32xf32>
    tpu.vector_store %arg7[%c0_384, %c5_385, %c0_386], %1226 {strides = array<i32>} : memref<2x8x32xf32, #tpu.memory_space<vmem>>, vector<2x1x32xf32>,
    %c5_387 = arith.constant 5 : index
    %c0_388 = arith.constant 0 : index
    %c96_389 = arith.constant 96 : index
    %1227 = vector.load %arg3[%c5_387, %c0_388, %c96_389] : memref<8x2x128xf32, #tpu.memory_space<vmem>>, vector<1x2x32xf32>
    %1228 = vector.shape_cast %1227 : vector<1x2x32xf32> to vector<2x32xf32>
    %cst_390 = arith.constant dense<0.000000e+00> : vector<2x32xf32>
    %1229 = tpu.matmul %1223, %647, %cst_390 {dimension_numbers = #tpu.dot_dimension_numbers<[1], [0], [0], [1], [0, 0, 1, 1], [], []>} : vector<2x32xf32>, vector<32x32xf32>, vector<2x32xf32> -> vector<2x32xf32>
    %1230 = arith.addf %1228, %1229 : vector<2x32xf32>
    %cst_391 = arith.constant dense<0.000000e+00> : vector<2x32xf32>
    %1231 = tpu.matmul %1193, %648, %cst_391 {dimension_numbers = #tpu.dot_dimension_numbers<[1], [0], [0], [1], [0, 0, 1, 1], [], []>} : vector<2x32xf32>, vector<32x32xf32>, vector<2x32xf32> -> vector<2x32xf32>
    %1232 = arith.addf %1230, %1231 : vector<2x32xf32>
    %cst_392 = arith.constant dense<0.000000e+00> : vector<2x32xf32>
    %1233 = tpu.matmul %1194, %649, %cst_392 {dimension_numbers = #tpu.dot_dimension_numbers<[1], [0], [0], [1], [0, 0, 1, 1], [], []>} : vector<2x32xf32>, vector<32x32xf32>, vector<2x32xf32> -> vector<2x32xf32>
    %1234 = arith.addf %1232, %1233 : vector<2x32xf32>
    %c0_393 = arith.constant 0 : index
    %c5_394 = arith.constant 5 : index
    %c0_395 = arith.constant 0 : index
    %1235 = vector.load %arg8[%c0_393, %c5_394, %c0_395] : memref<2x8x32xf32, #tpu.memory_space<vmem>>, vector<2x1x32xf32>
    %1236 = vector.shape_cast %1235 : vector<2x1x32xf32> to vector<2x32xf32>
    %1237 = vector.shape_cast %1234 : vector<2x32xf32> to vector<2x1x32xf32>
    tpu.vector_store %arg8[%c0_393, %c5_394, %c0_395], %1237 {strides = array<i32>} : memref<2x8x32xf32, #tpu.memory_space<vmem>>, vector<2x1x32xf32>,
    %cst_396 = arith.constant dense<0.000000e+00> : vector<2x32xf32>
    %1238 = tpu.matmul %1223, %646, %cst_396 {dimension_numbers = #tpu.dot_dimension_numbers<[1], [0], [0], [1], [0, 0, 1, 1], [], []>} : vector<2x32xf32>, vector<32x32xf32>, vector<2x32xf32> -> vector<2x32xf32>
    %1239 = vector.extract_strided_slice %1238 {offsets = [0, 0], sizes = [1, 32], strides = [1, 1]} : vector<2x32xf32> to vector<1x32xf32>
    %1240 = vector.broadcast %1239 : vector<1x32xf32> to vector<8x32xf32>
    %1241 = arith.addf %633, %1240 : vector<8x32xf32>
    %1242 = math.tanh %1241 : vector<8x32xf32>
    %1243 = arith.mulf %1242, %642 : vector<8x32xf32>
    %cst_397 = arith.constant dense<0.000000e+00> : vector<8xf32>
    %1244 = vector.multi_reduction <add>, %1243, %cst_397 [1] : vector<8x32xf32> to vector<8xf32>
    %1245 = vector.shape_cast %1244 : vector<8xf32> to vector<8x1xf32>
    %1246 = arith.addf %1245, %638 : vector<8x1xf32>
    %cst_398 = arith.constant dense<0xFF800000> : vector<1xf32>
    %1247 = vector.multi_reduction <maximumf>, %1246, %cst_398 [0] : vector<8x1xf32> to vector<1xf32>
    %1248 = vector.shape_cast %1247 : vector<1xf32> to vector<1x1xf32>
    %1249 = vector.broadcast %1248 : vector<1x1xf32> to vector<8x1xf32>
    %1250 = arith.subf %1246, %1249 : vector<8x1xf32>
    %1251 = math.exp %1250 : vector<8x1xf32>
    %cst_399 = arith.constant dense<0.000000e+00> : vector<1xf32>
    %1252 = vector.multi_reduction <add>, %1251, %cst_399 [0] : vector<8x1xf32> to vector<1xf32>
    %1253 = vector.shape_cast %1252 : vector<1xf32> to vector<1x1xf32>
    %1254 = tpu.reciprocal %1253 {approx = true} : vector<1x1xf32> -> vector<1x1xf32>
    %1255 = vector.broadcast %1254 : vector<1x1xf32> to vector<8x1xf32>
    %1256 = arith.mulf %1251, %1255 : vector<8x1xf32>
    %1257 = vector.broadcast %1256 : vector<8x1xf32> to vector<8x32xf32>
    %1258 = arith.mulf %1257, %601 : vector<8x32xf32>
    %cst_400 = arith.constant dense<0.000000e+00> : vector<32xf32>
    %1259 = vector.multi_reduction <add>, %1258, %cst_400 [0] : vector<8x32xf32> to vector<32xf32>
    %1260 = vector.shape_cast %1259 : vector<32xf32> to vector<1x32xf32>
    %1261 = vector.broadcast %1256 : vector<8x1xf32> to vector<8x32xf32>
    %1262 = arith.mulf %1261, %619 : vector<8x32xf32>
    %cst_401 = arith.constant dense<0.000000e+00> : vector<32xf32>
    %1263 = vector.multi_reduction <add>, %1262, %cst_401 [0] : vector<8x32xf32> to vector<32xf32>
    %1264 = vector.shape_cast %1263 : vector<32xf32> to vector<1x32xf32>
    %1265 = vector.extract_strided_slice %1238 {offsets = [1, 0], sizes = [1, 32], strides = [1, 1]} : vector<2x32xf32> to vector<1x32xf32>
    %1266 = vector.broadcast %1265 : vector<1x32xf32> to vector<8x32xf32>
    %1267 = arith.addf %636, %1266 : vector<8x32xf32>
    %1268 = math.tanh %1267 : vector<8x32xf32>
    %1269 = arith.mulf %1268, %642 : vector<8x32xf32>
    %cst_402 = arith.constant dense<0.000000e+00> : vector<8xf32>
    %1270 = vector.multi_reduction <add>, %1269, %cst_402 [1] : vector<8x32xf32> to vector<8xf32>
    %1271 = vector.shape_cast %1270 : vector<8xf32> to vector<8x1xf32>
    %1272 = arith.addf %1271, %640 : vector<8x1xf32>
    %cst_403 = arith.constant dense<0xFF800000> : vector<1xf32>
    %1273 = vector.multi_reduction <maximumf>, %1272, %cst_403 [0] : vector<8x1xf32> to vector<1xf32>
    %1274 = vector.shape_cast %1273 : vector<1xf32> to vector<1x1xf32>
    %1275 = vector.broadcast %1274 : vector<1x1xf32> to vector<8x1xf32>
    %1276 = arith.subf %1272, %1275 : vector<8x1xf32>
    %1277 = math.exp %1276 : vector<8x1xf32>
    %cst_404 = arith.constant dense<0.000000e+00> : vector<1xf32>
    %1278 = vector.multi_reduction <add>, %1277, %cst_404 [0] : vector<8x1xf32> to vector<1xf32>
    %1279 = vector.shape_cast %1278 : vector<1xf32> to vector<1x1xf32>
    %1280 = tpu.reciprocal %1279 {approx = true} : vector<1x1xf32> -> vector<1x1xf32>
    %1281 = vector.broadcast %1280 : vector<1x1xf32> to vector<8x1xf32>
    %1282 = arith.mulf %1277, %1281 : vector<8x1xf32>
    %1283 = vector.broadcast %1282 : vector<8x1xf32> to vector<8x32xf32>
    %1284 = arith.mulf %1283, %610 : vector<8x32xf32>
    %cst_405 = arith.constant dense<0.000000e+00> : vector<32xf32>
    %1285 = vector.multi_reduction <add>, %1284, %cst_405 [0] : vector<8x32xf32> to vector<32xf32>
    %1286 = vector.shape_cast %1285 : vector<32xf32> to vector<1x32xf32>
    %1287 = vector.broadcast %1282 : vector<8x1xf32> to vector<8x32xf32>
    %1288 = arith.mulf %1287, %628 : vector<8x32xf32>
    %cst_406 = arith.constant dense<0.000000e+00> : vector<32xf32>
    %1289 = vector.multi_reduction <add>, %1288, %cst_406 [0] : vector<8x32xf32> to vector<32xf32>
    %1290 = vector.shape_cast %1289 : vector<32xf32> to vector<1x32xf32>
    %1291 = tpu.concatenate %1260, %1286 in 0 : vector<1x32xf32>, vector<1x32xf32> -> vector<2x32xf32>
    %1292 = tpu.concatenate %1264, %1290 in 0 : vector<1x32xf32>, vector<1x32xf32> -> vector<2x32xf32>
    %c6_407 = arith.constant 6 : index
    %c0_408 = arith.constant 0 : index
    %c0_409 = arith.constant 0 : index
    %1293 = vector.load %arg3[%c6_407, %c0_408, %c0_409] : memref<8x2x128xf32, #tpu.memory_space<vmem>>, vector<1x2x96xf32>
    %1294 = vector.shape_cast %1293 : vector<1x2x96xf32> to vector<2x96xf32>
    %cst_410 = arith.constant dense<0.000000e+00> : vector<2x96xf32>
    %1295 = tpu.matmul %1291, %644, %cst_410 {dimension_numbers = #tpu.dot_dimension_numbers<[1], [0], [0], [1], [0, 0, 1, 1], [], []>} : vector<2x32xf32>, vector<32x96xf32>, vector<2x96xf32> -> vector<2x96xf32>
    %1296 = arith.addf %1294, %1295 : vector<2x96xf32>
    %cst_411 = arith.constant dense<0.000000e+00> : vector<2x96xf32>
    %1297 = tpu.matmul %1292, %645, %cst_411 {dimension_numbers = #tpu.dot_dimension_numbers<[1], [0], [0], [1], [0, 0, 1, 1], [], []>} : vector<2x32xf32>, vector<32x96xf32>, vector<2x96xf32> -> vector<2x96xf32>
    %1298 = arith.addf %1296, %1297 : vector<2x96xf32>
    %cst_412 = arith.constant dense<0.000000e+00> : vector<2x96xf32>
    %1299 = tpu.matmul %1223, %643, %cst_412 {dimension_numbers = #tpu.dot_dimension_numbers<[1], [0], [0], [1], [0, 0, 1, 1], [], []>} : vector<2x32xf32>, vector<32x96xf32>, vector<2x96xf32> -> vector<2x96xf32>
    %1300 = vector.extract_strided_slice %1298 {offsets = [0, 0], sizes = [2, 64], strides = [1, 1]} : vector<2x96xf32> to vector<2x64xf32>
    %1301 = vector.extract_strided_slice %1299 {offsets = [0, 0], sizes = [2, 64], strides = [1, 1]} : vector<2x96xf32> to vector<2x64xf32>
    %1302 = arith.addf %1300, %1301 : vector<2x64xf32>
    %1303 = arith.negf %1302 : vector<2x64xf32>
    %1304 = math.exp %1303 : vector<2x64xf32>
    %cst_413 = arith.constant 1.000000e+00 : f32
    %1305 = vector.broadcast %cst_413 : f32 to vector<2x64xf32>
    %1306 = arith.addf %1305, %1304 : vector<2x64xf32>
    %1307 = arith.divf %1305, %1306 : vector<2x64xf32>
    %1308 = vector.extract_strided_slice %1307 {offsets = [0, 0], sizes = [2, 32], strides = [1, 1]} : vector<2x64xf32> to vector<2x32xf32>
    %1309 = vector.extract_strided_slice %1307 {offsets = [0, 32], sizes = [2, 32], strides = [1, 1]} : vector<2x64xf32> to vector<2x32xf32>
    %1310 = vector.extract_strided_slice %1298 {offsets = [0, 64], sizes = [2, 32], strides = [1, 1]} : vector<2x96xf32> to vector<2x32xf32>
    %1311 = vector.extract_strided_slice %1299 {offsets = [0, 64], sizes = [2, 32], strides = [1, 1]} : vector<2x96xf32> to vector<2x32xf32>
    %1312 = vector.broadcast %4 : vector<1x32xf32> to vector<2x32xf32>
    %1313 = arith.addf %1311, %1312 : vector<2x32xf32>
    %1314 = arith.mulf %1308, %1313 : vector<2x32xf32>
    %1315 = arith.addf %1310, %1314 : vector<2x32xf32>
    %1316 = math.tanh %1315 : vector<2x32xf32>
    %cst_414 = arith.constant 1.000000e+00 : f32
    %1317 = vector.broadcast %cst_414 : f32 to vector<2x32xf32>
    %1318 = arith.subf %1317, %1309 : vector<2x32xf32>
    %1319 = arith.mulf %1318, %1316 : vector<2x32xf32>
    %1320 = arith.mulf %1309, %1223 : vector<2x32xf32>
    %1321 = arith.addf %1319, %1320 : vector<2x32xf32>
    %c0_415 = arith.constant 0 : index
    %c6_416 = arith.constant 6 : index
    %c0_417 = arith.constant 0 : index
    %1322 = vector.load %arg7[%c0_415, %c6_416, %c0_417] : memref<2x8x32xf32, #tpu.memory_space<vmem>>, vector<2x1x32xf32>
    %1323 = vector.shape_cast %1322 : vector<2x1x32xf32> to vector<2x32xf32>
    %1324 = vector.shape_cast %1321 : vector<2x32xf32> to vector<2x1x32xf32>
    tpu.vector_store %arg7[%c0_415, %c6_416, %c0_417], %1324 {strides = array<i32>} : memref<2x8x32xf32, #tpu.memory_space<vmem>>, vector<2x1x32xf32>,
    %c6_418 = arith.constant 6 : index
    %c0_419 = arith.constant 0 : index
    %c96_420 = arith.constant 96 : index
    %1325 = vector.load %arg3[%c6_418, %c0_419, %c96_420] : memref<8x2x128xf32, #tpu.memory_space<vmem>>, vector<1x2x32xf32>
    %1326 = vector.shape_cast %1325 : vector<1x2x32xf32> to vector<2x32xf32>
    %cst_421 = arith.constant dense<0.000000e+00> : vector<2x32xf32>
    %1327 = tpu.matmul %1321, %647, %cst_421 {dimension_numbers = #tpu.dot_dimension_numbers<[1], [0], [0], [1], [0, 0, 1, 1], [], []>} : vector<2x32xf32>, vector<32x32xf32>, vector<2x32xf32> -> vector<2x32xf32>
    %1328 = arith.addf %1326, %1327 : vector<2x32xf32>
    %cst_422 = arith.constant dense<0.000000e+00> : vector<2x32xf32>
    %1329 = tpu.matmul %1291, %648, %cst_422 {dimension_numbers = #tpu.dot_dimension_numbers<[1], [0], [0], [1], [0, 0, 1, 1], [], []>} : vector<2x32xf32>, vector<32x32xf32>, vector<2x32xf32> -> vector<2x32xf32>
    %1330 = arith.addf %1328, %1329 : vector<2x32xf32>
    %cst_423 = arith.constant dense<0.000000e+00> : vector<2x32xf32>
    %1331 = tpu.matmul %1292, %649, %cst_423 {dimension_numbers = #tpu.dot_dimension_numbers<[1], [0], [0], [1], [0, 0, 1, 1], [], []>} : vector<2x32xf32>, vector<32x32xf32>, vector<2x32xf32> -> vector<2x32xf32>
    %1332 = arith.addf %1330, %1331 : vector<2x32xf32>
    %c0_424 = arith.constant 0 : index
    %c6_425 = arith.constant 6 : index
    %c0_426 = arith.constant 0 : index
    %1333 = vector.load %arg8[%c0_424, %c6_425, %c0_426] : memref<2x8x32xf32, #tpu.memory_space<vmem>>, vector<2x1x32xf32>
    %1334 = vector.shape_cast %1333 : vector<2x1x32xf32> to vector<2x32xf32>
    %1335 = vector.shape_cast %1332 : vector<2x32xf32> to vector<2x1x32xf32>
    tpu.vector_store %arg8[%c0_424, %c6_425, %c0_426], %1335 {strides = array<i32>} : memref<2x8x32xf32, #tpu.memory_space<vmem>>, vector<2x1x32xf32>,
    %cst_427 = arith.constant dense<0.000000e+00> : vector<2x32xf32>
    %1336 = tpu.matmul %1321, %646, %cst_427 {dimension_numbers = #tpu.dot_dimension_numbers<[1], [0], [0], [1], [0, 0, 1, 1], [], []>} : vector<2x32xf32>, vector<32x32xf32>, vector<2x32xf32> -> vector<2x32xf32>
    %1337 = vector.extract_strided_slice %1336 {offsets = [0, 0], sizes = [1, 32], strides = [1, 1]} : vector<2x32xf32> to vector<1x32xf32>
    %1338 = vector.broadcast %1337 : vector<1x32xf32> to vector<8x32xf32>
    %1339 = arith.addf %633, %1338 : vector<8x32xf32>
    %1340 = math.tanh %1339 : vector<8x32xf32>
    %1341 = arith.mulf %1340, %642 : vector<8x32xf32>
    %cst_428 = arith.constant dense<0.000000e+00> : vector<8xf32>
    %1342 = vector.multi_reduction <add>, %1341, %cst_428 [1] : vector<8x32xf32> to vector<8xf32>
    %1343 = vector.shape_cast %1342 : vector<8xf32> to vector<8x1xf32>
    %1344 = arith.addf %1343, %638 : vector<8x1xf32>
    %cst_429 = arith.constant dense<0xFF800000> : vector<1xf32>
    %1345 = vector.multi_reduction <maximumf>, %1344, %cst_429 [0] : vector<8x1xf32> to vector<1xf32>
    %1346 = vector.shape_cast %1345 : vector<1xf32> to vector<1x1xf32>
    %1347 = vector.broadcast %1346 : vector<1x1xf32> to vector<8x1xf32>
    %1348 = arith.subf %1344, %1347 : vector<8x1xf32>
    %1349 = math.exp %1348 : vector<8x1xf32>
    %cst_430 = arith.constant dense<0.000000e+00> : vector<1xf32>
    %1350 = vector.multi_reduction <add>, %1349, %cst_430 [0] : vector<8x1xf32> to vector<1xf32>
    %1351 = vector.shape_cast %1350 : vector<1xf32> to vector<1x1xf32>
    %1352 = tpu.reciprocal %1351 {approx = true} : vector<1x1xf32> -> vector<1x1xf32>
    %1353 = vector.broadcast %1352 : vector<1x1xf32> to vector<8x1xf32>
    %1354 = arith.mulf %1349, %1353 : vector<8x1xf32>
    %1355 = vector.broadcast %1354 : vector<8x1xf32> to vector<8x32xf32>
    %1356 = arith.mulf %1355, %601 : vector<8x32xf32>
    %cst_431 = arith.constant dense<0.000000e+00> : vector<32xf32>
    %1357 = vector.multi_reduction <add>, %1356, %cst_431 [0] : vector<8x32xf32> to vector<32xf32>
    %1358 = vector.shape_cast %1357 : vector<32xf32> to vector<1x32xf32>
    %1359 = vector.broadcast %1354 : vector<8x1xf32> to vector<8x32xf32>
    %1360 = arith.mulf %1359, %619 : vector<8x32xf32>
    %cst_432 = arith.constant dense<0.000000e+00> : vector<32xf32>
    %1361 = vector.multi_reduction <add>, %1360, %cst_432 [0] : vector<8x32xf32> to vector<32xf32>
    %1362 = vector.shape_cast %1361 : vector<32xf32> to vector<1x32xf32>
    %1363 = vector.extract_strided_slice %1336 {offsets = [1, 0], sizes = [1, 32], strides = [1, 1]} : vector<2x32xf32> to vector<1x32xf32>
    %1364 = vector.broadcast %1363 : vector<1x32xf32> to vector<8x32xf32>
    %1365 = arith.addf %636, %1364 : vector<8x32xf32>
    %1366 = math.tanh %1365 : vector<8x32xf32>
    %1367 = arith.mulf %1366, %642 : vector<8x32xf32>
    %cst_433 = arith.constant dense<0.000000e+00> : vector<8xf32>
    %1368 = vector.multi_reduction <add>, %1367, %cst_433 [1] : vector<8x32xf32> to vector<8xf32>
    %1369 = vector.shape_cast %1368 : vector<8xf32> to vector<8x1xf32>
    %1370 = arith.addf %1369, %640 : vector<8x1xf32>
    %cst_434 = arith.constant dense<0xFF800000> : vector<1xf32>
    %1371 = vector.multi_reduction <maximumf>, %1370, %cst_434 [0] : vector<8x1xf32> to vector<1xf32>
    %1372 = vector.shape_cast %1371 : vector<1xf32> to vector<1x1xf32>
    %1373 = vector.broadcast %1372 : vector<1x1xf32> to vector<8x1xf32>
    %1374 = arith.subf %1370, %1373 : vector<8x1xf32>
    %1375 = math.exp %1374 : vector<8x1xf32>
    %cst_435 = arith.constant dense<0.000000e+00> : vector<1xf32>
    %1376 = vector.multi_reduction <add>, %1375, %cst_435 [0] : vector<8x1xf32> to vector<1xf32>
    %1377 = vector.shape_cast %1376 : vector<1xf32> to vector<1x1xf32>
    %1378 = tpu.reciprocal %1377 {approx = true} : vector<1x1xf32> -> vector<1x1xf32>
    %1379 = vector.broadcast %1378 : vector<1x1xf32> to vector<8x1xf32>
    %1380 = arith.mulf %1375, %1379 : vector<8x1xf32>
    %1381 = vector.broadcast %1380 : vector<8x1xf32> to vector<8x32xf32>
    %1382 = arith.mulf %1381, %610 : vector<8x32xf32>
    %cst_436 = arith.constant dense<0.000000e+00> : vector<32xf32>
    %1383 = vector.multi_reduction <add>, %1382, %cst_436 [0] : vector<8x32xf32> to vector<32xf32>
    %1384 = vector.shape_cast %1383 : vector<32xf32> to vector<1x32xf32>
    %1385 = vector.broadcast %1380 : vector<8x1xf32> to vector<8x32xf32>
    %1386 = arith.mulf %1385, %628 : vector<8x32xf32>
    %cst_437 = arith.constant dense<0.000000e+00> : vector<32xf32>
    %1387 = vector.multi_reduction <add>, %1386, %cst_437 [0] : vector<8x32xf32> to vector<32xf32>
    %1388 = vector.shape_cast %1387 : vector<32xf32> to vector<1x32xf32>
    %1389 = tpu.concatenate %1358, %1384 in 0 : vector<1x32xf32>, vector<1x32xf32> -> vector<2x32xf32>
    %1390 = tpu.concatenate %1362, %1388 in 0 : vector<1x32xf32>, vector<1x32xf32> -> vector<2x32xf32>
    %c7_438 = arith.constant 7 : index
    %c0_439 = arith.constant 0 : index
    %c0_440 = arith.constant 0 : index
    %1391 = vector.load %arg3[%c7_438, %c0_439, %c0_440] : memref<8x2x128xf32, #tpu.memory_space<vmem>>, vector<1x2x96xf32>
    %1392 = vector.shape_cast %1391 : vector<1x2x96xf32> to vector<2x96xf32>
    %cst_441 = arith.constant dense<0.000000e+00> : vector<2x96xf32>
    %1393 = tpu.matmul %1389, %644, %cst_441 {dimension_numbers = #tpu.dot_dimension_numbers<[1], [0], [0], [1], [0, 0, 1, 1], [], []>} : vector<2x32xf32>, vector<32x96xf32>, vector<2x96xf32> -> vector<2x96xf32>
    %1394 = arith.addf %1392, %1393 : vector<2x96xf32>
    %cst_442 = arith.constant dense<0.000000e+00> : vector<2x96xf32>
    %1395 = tpu.matmul %1390, %645, %cst_442 {dimension_numbers = #tpu.dot_dimension_numbers<[1], [0], [0], [1], [0, 0, 1, 1], [], []>} : vector<2x32xf32>, vector<32x96xf32>, vector<2x96xf32> -> vector<2x96xf32>
    %1396 = arith.addf %1394, %1395 : vector<2x96xf32>
    %cst_443 = arith.constant dense<0.000000e+00> : vector<2x96xf32>
    %1397 = tpu.matmul %1321, %643, %cst_443 {dimension_numbers = #tpu.dot_dimension_numbers<[1], [0], [0], [1], [0, 0, 1, 1], [], []>} : vector<2x32xf32>, vector<32x96xf32>, vector<2x96xf32> -> vector<2x96xf32>
    %1398 = vector.extract_strided_slice %1396 {offsets = [0, 0], sizes = [2, 64], strides = [1, 1]} : vector<2x96xf32> to vector<2x64xf32>
    %1399 = vector.extract_strided_slice %1397 {offsets = [0, 0], sizes = [2, 64], strides = [1, 1]} : vector<2x96xf32> to vector<2x64xf32>
    %1400 = arith.addf %1398, %1399 : vector<2x64xf32>
    %1401 = arith.negf %1400 : vector<2x64xf32>
    %1402 = math.exp %1401 : vector<2x64xf32>
    %cst_444 = arith.constant 1.000000e+00 : f32
    %1403 = vector.broadcast %cst_444 : f32 to vector<2x64xf32>
    %1404 = arith.addf %1403, %1402 : vector<2x64xf32>
    %1405 = arith.divf %1403, %1404 : vector<2x64xf32>
    %1406 = vector.extract_strided_slice %1405 {offsets = [0, 0], sizes = [2, 32], strides = [1, 1]} : vector<2x64xf32> to vector<2x32xf32>
    %1407 = vector.extract_strided_slice %1405 {offsets = [0, 32], sizes = [2, 32], strides = [1, 1]} : vector<2x64xf32> to vector<2x32xf32>
    %1408 = vector.extract_strided_slice %1396 {offsets = [0, 64], sizes = [2, 32], strides = [1, 1]} : vector<2x96xf32> to vector<2x32xf32>
    %1409 = vector.extract_strided_slice %1397 {offsets = [0, 64], sizes = [2, 32], strides = [1, 1]} : vector<2x96xf32> to vector<2x32xf32>
    %1410 = vector.broadcast %4 : vector<1x32xf32> to vector<2x32xf32>
    %1411 = arith.addf %1409, %1410 : vector<2x32xf32>
    %1412 = arith.mulf %1406, %1411 : vector<2x32xf32>
    %1413 = arith.addf %1408, %1412 : vector<2x32xf32>
    %1414 = math.tanh %1413 : vector<2x32xf32>
    %cst_445 = arith.constant 1.000000e+00 : f32
    %1415 = vector.broadcast %cst_445 : f32 to vector<2x32xf32>
    %1416 = arith.subf %1415, %1407 : vector<2x32xf32>
    %1417 = arith.mulf %1416, %1414 : vector<2x32xf32>
    %1418 = arith.mulf %1407, %1321 : vector<2x32xf32>
    %1419 = arith.addf %1417, %1418 : vector<2x32xf32>
    %c0_446 = arith.constant 0 : index
    %c7_447 = arith.constant 7 : index
    %c0_448 = arith.constant 0 : index
    %1420 = vector.load %arg7[%c0_446, %c7_447, %c0_448] : memref<2x8x32xf32, #tpu.memory_space<vmem>>, vector<2x1x32xf32>
    %1421 = vector.shape_cast %1420 : vector<2x1x32xf32> to vector<2x32xf32>
    %1422 = vector.shape_cast %1419 : vector<2x32xf32> to vector<2x1x32xf32>
    tpu.vector_store %arg7[%c0_446, %c7_447, %c0_448], %1422 {strides = array<i32>} : memref<2x8x32xf32, #tpu.memory_space<vmem>>, vector<2x1x32xf32>,
    %c7_449 = arith.constant 7 : index
    %c0_450 = arith.constant 0 : index
    %c96_451 = arith.constant 96 : index
    %1423 = vector.load %arg3[%c7_449, %c0_450, %c96_451] : memref<8x2x128xf32, #tpu.memory_space<vmem>>, vector<1x2x32xf32>
    %1424 = vector.shape_cast %1423 : vector<1x2x32xf32> to vector<2x32xf32>
    %cst_452 = arith.constant dense<0.000000e+00> : vector<2x32xf32>
    %1425 = tpu.matmul %1419, %647, %cst_452 {dimension_numbers = #tpu.dot_dimension_numbers<[1], [0], [0], [1], [0, 0, 1, 1], [], []>} : vector<2x32xf32>, vector<32x32xf32>, vector<2x32xf32> -> vector<2x32xf32>
    %1426 = arith.addf %1424, %1425 : vector<2x32xf32>
    %cst_453 = arith.constant dense<0.000000e+00> : vector<2x32xf32>
    %1427 = tpu.matmul %1389, %648, %cst_453 {dimension_numbers = #tpu.dot_dimension_numbers<[1], [0], [0], [1], [0, 0, 1, 1], [], []>} : vector<2x32xf32>, vector<32x32xf32>, vector<2x32xf32> -> vector<2x32xf32>
    %1428 = arith.addf %1426, %1427 : vector<2x32xf32>
    %cst_454 = arith.constant dense<0.000000e+00> : vector<2x32xf32>
    %1429 = tpu.matmul %1390, %649, %cst_454 {dimension_numbers = #tpu.dot_dimension_numbers<[1], [0], [0], [1], [0, 0, 1, 1], [], []>} : vector<2x32xf32>, vector<32x32xf32>, vector<2x32xf32> -> vector<2x32xf32>
    %1430 = arith.addf %1428, %1429 : vector<2x32xf32>
    %c0_455 = arith.constant 0 : index
    %c7_456 = arith.constant 7 : index
    %c0_457 = arith.constant 0 : index
    %1431 = vector.load %arg8[%c0_455, %c7_456, %c0_457] : memref<2x8x32xf32, #tpu.memory_space<vmem>>, vector<2x1x32xf32>
    %1432 = vector.shape_cast %1431 : vector<2x1x32xf32> to vector<2x32xf32>
    %1433 = vector.shape_cast %1430 : vector<2x32xf32> to vector<2x1x32xf32>
    tpu.vector_store %arg8[%c0_455, %c7_456, %c0_457], %1433 {strides = array<i32>} : memref<2x8x32xf32, #tpu.memory_space<vmem>>, vector<2x1x32xf32>,
    %c0_458 = arith.constant 0 : index
    %c0_459 = arith.constant 0 : index
    %c0_460 = arith.constant 0 : index
    %1434 = vector.load %arg9[%c0_458, %c0_459, %c0_460] : memref<1x2x32xf32, #tpu.memory_space<vmem>>, vector<1x2x32xf32>
    %1435 = vector.shape_cast %1434 : vector<1x2x32xf32> to vector<2x32xf32>
    %1436 = vector.shape_cast %1419 : vector<2x32xf32> to vector<1x2x32xf32>
    tpu.vector_store %arg9[%c0_458, %c0_459, %c0_460], %1436 {strides = array<i32>} : memref<1x2x32xf32, #tpu.memory_space<vmem>>, vector<1x2x32xf32>,
    return
  }
}

</mosaic_0001>

<llo_original>
// kernel: encoder_decoder_forward.1
$region0: #{encoder_decoder_forward.1}
  #allocation0 [shape = 'u32[]', space=smem, size = 0x4, offset = 0x4, fixed_abs, tag = 'smem constant byte address 0x4 - core index']
  #allocation1 [shape = 'u32[144,128]{1,0:T(1,128)}', space=vmem, size = 0x12000, scoped, tag = 'internal scratch']
  %s0 = inlined_call_operand.vmem [shape: f32[8,2,1], index: 0, kind: input, shape index: {}]
  %s1 = inlined_call_operand.vmem [shape: f32[2,8,1], index: 1, kind: input, shape index: {}]
  %s2 = inlined_call_operand.vmem [shape: f32[2,8,2,96], index: 2, kind: input, shape index: {}]
  %s3 = inlined_call_operand.vmem [shape: f32[8,2,128], index: 3, kind: input, shape index: {}]
  %s4 = inlined_call_operand.vmem [shape: f32[160,96], index: 4, kind: input, shape index: {}]
  %s5 = inlined_call_operand.vmem [shape: f32[256,32], index: 5, kind: input, shape index: {}]
  %s6 = inlined_call_operand.vmem [shape: f32[8,32], index: 6, kind: input, shape index: {}]
  %s7 = inlined_call_operand.hbm [shape: f32[2,8,32], index: 7, kind: output, shape index: {0}]
  %s8 = inlined_call_operand.hbm [shape: f32[2,8,32], index: 8, kind: output, shape index: {1}]
  %s9 = inlined_call_operand.hbm [shape: f32[1,2,32], index: 9, kind: output, shape index: {2}]
  %10 = xla_tuple %s7, %s8, %s9
  %s11 = sld [smem:[#allocation0]]
  $region54: #{encoder_decoder_forward.1} parent=0
    _
  %s13 = ssub.s32 1, %s11
  %s14 = scalar_select 0, %s13, %s11
  $region1: #{encoder_decoder_forward.1} parent=0
    #allocation2 [shape = 'u8[8192]{0}', space=vmem, size = 0x2000, scoped, tag = 'output window, operand 0, single buffered']
    #allocation3 [shape = 's32[1]{0}', space=sflag, size = 0x4, scoped, tag = 'scoped memory for encoder_decoder_forward.1']
    #allocation4 [shape = 'u8[8192]{0}', space=vmem, size = 0x2000, scoped, tag = 'output window, operand 1, single buffered']
    #allocation5 [shape = 's32[1]{0}', space=sflag, size = 0x4, scoped, tag = 'scoped memory for encoder_decoder_forward.1']
    #allocation6 [shape = 'u8[1024]{0}', space=vmem, size = 0x400, scoped, tag = 'output window, operand 2, single buffered']
    %15 = vsyncpa [#allocation3], 0
    %16 = vsyncpa [#allocation5], 0
    // Predicated region
    $region2: #{encoder_decoder_forward.1} parent=1 // pred_check
      _
    $region3: #{encoder_decoder_forward.1} parent=1 // pred_check_branch
      %18 = sbr.rel (0) target = $region5
    $region4: #{encoder_decoder_forward.1} parent=1 // pred_region
      _
    $region5: #{encoder_decoder_forward.1} parent=1 // pred_fallthru
      _
    // Predicated region
    $region6: #{encoder_decoder_forward.1} parent=1 // pred_check
      _
    $region7: #{encoder_decoder_forward.1} parent=1 // pred_check_branch
      %20 = sbr.rel (0) target = $region9
    $region8: #{encoder_decoder_forward.1} parent=1 // pred_region
      _
    $region9: #{encoder_decoder_forward.1} parent=1 // pred_fallthru
      _
    // Predicated region
    $region10: #{encoder_decoder_forward.1} parent=1 // pred_check
      _
    $region11: #{encoder_decoder_forward.1} parent=1 // pred_check_branch
      %22 = sbr.rel (0) target = $region13
    $region12: #{encoder_decoder_forward.1} parent=1 // pred_region
      _
    $region13: #{encoder_decoder_forward.1} parent=1 // pred_fallthru
      _
    // Predicated region
    $region14: #{encoder_decoder_forward.1} parent=1 // pred_check
      _
    $region15: #{encoder_decoder_forward.1} parent=1 // pred_check_branch
      %24 = sbr.rel (0) target = $region17
    $region16: #{encoder_decoder_forward.1} parent=1 // pred_region
      _
    $region17: #{encoder_decoder_forward.1} parent=1 // pred_fallthru
      _
    // Predicated region
    $region18: #{encoder_decoder_forward.1} parent=1 // pred_check
      _
    $region19: #{encoder_decoder_forward.1} parent=1 // pred_check_branch
      %26 = sbr.rel (0) target = $region21
    $region20: #{encoder_decoder_forward.1} parent=1 // pred_region
      _
    $region21: #{encoder_decoder_forward.1} parent=1 // pred_fallthru
      _
    // Predicated region
    $region22: #{encoder_decoder_forward.1} parent=1 // pred_check
      _
    $region23: #{encoder_decoder_forward.1} parent=1 // pred_check_branch
      %28 = sbr.rel (0) target = $region25
    $region24: #{encoder_decoder_forward.1} parent=1 // pred_region
      _
    $region25: #{encoder_decoder_forward.1} parent=1 // pred_fallthru
      _
    // Predicated region
    $region26: #{encoder_decoder_forward.1} parent=1 // pred_check
      _
    $region27: #{encoder_decoder_forward.1} parent=1 // pred_check_branch
      %30 = sbr.rel (0) target = $region29
    $region28: #{encoder_decoder_forward.1} parent=1 // pred_region
      _
    $region29: #{encoder_decoder_forward.1} parent=1 // pred_fallthru
      _
    %v31 = vld [vmem:[%s6] sm:$0x1]
    %v32 = vld [vmem:[%s6 + $0x1] sm:$0x1]
    %v33 = vld [vmem:[%s6 + $0x2] sm:$0x1]
    %v34 = vld [vmem:[%s6 + $0x3] sm:$0x1]
    %v35 = vld [vmem:[%s6 + $0x4] sm:$0x1]
    %v36 = vld [vmem:[%s4] sm:$0xff]
    %v37 = vld [vmem:[%s4 + $0x8] sm:$0xff]
    %v38 = vld [vmem:[%s4 + $0x10] sm:$0xff]
    %v39 = vld [vmem:[%s4 + $0x18] sm:$0xff]
    %v40 = vld [vmem:[%s4 + $0x20] sm:$0xff]
    %v41 = vld [vmem:[%s4 + $0x28] sm:$0xff]
    %v42 = vld [vmem:[%s4 + $0x30] sm:$0xff]
    %v43 = vld [vmem:[%s4 + $0x38] sm:$0xff]
    %v44 = vld [vmem:[%s0] sm:$0x3]
    %v45 = vld [vmem:[%s2] sm:$0x3]
    %vm46 = vcmask 261120
    %v48 = vsel %vm46, 0.0, 0
    %50 = vmatprep.subr.mxu0 0.0
    %51 = vmatpush1.msra.mxu0 %v36
    %52 = vmatprep.subr.mxu0 0.0
    %53 = vmatpush1.msra.mxu0 %v37
    %54 = vmatprep.subr.mxu0 0.0
    %55 = vmatpush1.msra.mxu0 %v38
    %56 = vmatprep.subr.mxu0 0.0
    %57 = vmatpush1.msra.mxu0 %v39
    %58 = vmatprep.subr.mxu0 0.0
    %59 = vmatpush1.msra.mxu0 0.0
    %60 = vmatprep.subr.mxu0 0.0
    %61 = vmatpush1.msra.mxu0 0.0
    %62 = vmatprep.subr.mxu0 0.0
    %63 = vmatpush1.msra.mxu0 0.0
    %64 = vmatprep.subr.mxu0 0.0
    %65 = vmatpush1.msra.mxu0 0.0
    %66 = vmatprep.subr.mxu0 0.0
    %67 = vmatpush1.msra.mxu0 0.0
    %68 = vmatprep.subr.mxu0 0.0
    %69 = vmatpush1.msra.mxu0 0.0
    %70 = vmatprep.subr.mxu0 0.0
    %71 = vmatpush1.msra.mxu0 0.0
    %72 = vmatprep.subr.mxu0 0.0
    %73 = vmatpush1.msra.mxu0 0.0
    %74 = vmatprep.subr.mxu0 0.0
    %75 = vmatpush1.msra.mxu0 0.0
    %76 = vmatprep.subr.mxu0 0.0
    %77 = vmatpush1.msra.mxu0 0.0
    %78 = vmatprep.subr.mxu0 0.0
    %79 = vmatpush1.msra.mxu0 0.0
    %80 = vmatprep.subr.mxu0 0.0
    %81 = vmatpush1.msra.mxu0 0.0
    %82 = vmatprep.subr.mxu0 0.0
    %83 = vmatpush1.msra.mxu0 0.0
    %84 = vmatprep.subr.mxu0 0.0
    %85 = vmatpush1.msra.mxu0 0.0
    %86 = vmatprep.subr.mxu0 0.0
    %87 = vmatpush1.msra.mxu0 0.0
    %88 = vmatprep.subr.mxu0 0.0
    %89 = vmatpush1.msra.mxu0 0.0
    %90 = vmatprep.subr.mxu0 0.0
    %91 = vmatpush1.msra.mxu0 0.0
    %92 = vmatprep.subr.mxu0 0.0
    %93 = vmatpush1.msra.mxu0 0.0
    %94 = vmatprep.subr.mxu0 0.0
    %95 = vmatpush1.msra.mxu0 0.0
    %96 = vmatprep.subr.mxu0 0.0
    %97 = vmatpush1.msra.mxu0 0.0
    %98 = vmatprep.subr.mxu0 0.0
    %99 = vmatpush1.msra.mxu0 0.0
    %100 = vmatprep.subr.mxu0 0.0
    %101 = vmatpush1.msra.mxu0 0.0
    %102 = vmatprep.subr.mxu0 0.0
    %103 = vmatpush1.msra.mxu0 0.0
    %104 = vmatprep.subr.mxu0 0.0
    %105 = vmatpush1.msra.mxu0 0.0
    %106 = vmatprep.subr.mxu0 0.0
    %107 = vmatpush1.msra.mxu0 0.0
    %108 = vmatprep.subr.mxu0 0.0
    %109 = vmatpush1.msra.mxu0 0.0
    %110 = vmatprep.subr.mxu0 0.0
    %111 = vmatpush1.msra.mxu0 0.0
    %112 = vmatprep.subr.mxu0 0.0
    %113 = vmatpush1.msra.mxu0 0.0
    %114 = vmatprep.mubr.f32.mxu0 0.0
    %115 = vmatmul.mubr.f32.gmra.mrb[0].mxu0 %v48
    %v116 = vpop.f32.mrb[0].mxu0
    %v117 = vadd.f32 0.0, %v116
    %v118 = vpop.f32.mrb[0].mxu0
    %119 = vdwg.mxu0
    %v120 = vadd.f32 %v45, %v117
    %v121 = vxor.u32 %v120, 2147483648
    %v122 = vmul.f32 %v121, 1.442695
    %v123 = vpow.pop %v122
    %v124 = vadd.f32 %v123, 1.0
    %v125 = vrcp.pop %v124
    %v126 = vmul.f32 1.0, %v125
    %v127 = vlaneseq
    %v128 = vshrl.u32 %v127, 7
    %v129 = vsub.s32 0, %v128
    %v130 = vrot.slane %v33, %v129
    %132 = vrot.lane.b32.xlu0 %v130, 64
    %v133 = vpop.permute.xlu0 %132
    %v135 = vadd.f32 %v117, %v133
    %137 = vrot.lane.b32.xlu0 %v135, 64
    %v138 = vpop.permute.xlu0 %137
    %v140 = vmul.f32 %v126, %v138
    %142 = vrot.lane.b32.xlu0 %v140, 64
    %v143 = vpop.permute.xlu0 %142
    %v145 = vadd.f32 %v45, %v143
    %v146 = vtanh.pop %v145
    %v147 = vsub.f32 1.0, %v126
    %149 = vrot.lane.b32.xlu0 %v146, 96
    %v150 = vpop.permute.xlu0 %149
    %v152 = vmul.f32 %v147, %v150
    %v153 = vmul.f32 %v126, 0.0
    %v154 = vadd.f32 %v152, %v153
    %156 = vset.pattern.permute.xlu0 0
    %157 = vperm.xlu0 %156, %v44
    %v158 = vpop.permute.xlu0 %157
    %v160 = vmul.f32 %v158, %v154
    %v161 = vsub.f32 1.0, %v44
    %163 = vset.pattern.permute.xlu0 0
    %164 = vperm.xlu0 %163, %v161
    %v165 = vpop.permute.xlu0 %164
    %v167 = vmul.f32 %v165, 0.0
    %v168 = vadd.f32 %v160, %v167
    %v169 = vmul.f32 %v168, %v158
    %s170 = scalar_lea.vmem %s0, 14
    %v171 = vld [vmem:[%s170] sm:$0x3]
    %s172 = scalar_lea.vmem %s2, 30
    %v173 = vld [vmem:[%s172] sm:$0x3]
    %174 = vmatprep.subr.mxu0 0.0
    %175 = vmatpush1.msra.mxu0 %v40
    %176 = vmatprep.subr.mxu0 0.0
    %177 = vmatpush1.msra.mxu0 %v41
    %178 = vmatprep.subr.mxu0 0.0
    %179 = vmatpush1.msra.mxu0 %v42
    %180 = vmatprep.subr.mxu0 0.0
    %181 = vmatpush1.msra.mxu0 %v43
    %182 = vmatprep.subr.mxu0 0.0
    %183 = vmatpush1.msra.mxu0 0.0
    %184 = vmatprep.subr.mxu0 0.0
    %185 = vmatpush1.msra.mxu0 0.0
    %186 = vmatprep.subr.mxu0 0.0
    %187 = vmatpush1.msra.mxu0 0.0
    %188 = vmatprep.subr.mxu0 0.0
    %189 = vmatpush1.msra.mxu0 0.0
    %190 = vmatprep.subr.mxu0 0.0
    %191 = vmatpush1.msra.mxu0 0.0
    %192 = vmatprep.subr.mxu0 0.0
    %193 = vmatpush1.msra.mxu0 0.0
    %194 = vmatprep.subr.mxu0 0.0
    %195 = vmatpush1.msra.mxu0 0.0
    %196 = vmatprep.subr.mxu0 0.0
    %197 = vmatpush1.msra.mxu0 0.0
    %198 = vmatprep.subr.mxu0 0.0
    %199 = vmatpush1.msra.mxu0 0.0
    %200 = vmatprep.subr.mxu0 0.0
    %201 = vmatpush1.msra.mxu0 0.0
    %202 = vmatprep.subr.mxu0 0.0
    %203 = vmatpush1.msra.mxu0 0.0
    %204 = vmatprep.subr.mxu0 0.0
    %205 = vmatpush1.msra.mxu0 0.0
    %206 = vmatprep.subr.mxu0 0.0
    %207 = vmatpush1.msra.mxu0 0.0
    %208 = vmatprep.subr.mxu0 0.0
    %209 = vmatpush1.msra.mxu0 0.0
    %210 = vmatprep.subr.mxu0 0.0
    %211 = vmatpush1.msra.mxu0 0.0
    %212 = vmatprep.subr.mxu0 0.0
    %213 = vmatpush1.msra.mxu0 0.0
    %214 = vmatprep.subr.mxu0 0.0
    %215 = vmatpush1.msra.mxu0 0.0
    %216 = vmatprep.subr.mxu0 0.0
    %217 = vmatpush1.msra.mxu0 0.0
    %218 = vmatprep.subr.mxu0 0.0
    %219 = vmatpush1.msra.mxu0 0.0
    %220 = vmatprep.subr.mxu0 0.0
    %221 = vmatpush1.msra.mxu0 0.0
    %222 = vmatprep.subr.mxu0 0.0
    %223 = vmatpush1.msra.mxu0 0.0
    %224 = vmatprep.subr.mxu0 0.0
    %225 = vmatpush1.msra.mxu0 0.0
    %226 = vmatprep.subr.mxu0 0.0
    %227 = vmatpush1.msra.mxu0 0.0
    %228 = vmatprep.subr.mxu0 0.0
    %229 = vmatpush1.msra.mxu0 0.0
    %230 = vmatprep.subr.mxu0 0.0
    %231 = vmatpush1.msra.mxu0 0.0
    %232 = vmatprep.subr.mxu0 0.0
    %233 = vmatpush1.msra.mxu0 0.0
    %234 = vmatprep.subr.mxu0 0.0
    %235 = vmatpush1.msra.mxu0 0.0
    %236 = vmatprep.subr.mxu0 0.0
    %237 = vmatpush1.msra.mxu0 0.0
    %238 = vmatprep.mubr.f32.mxu0 0.0
    %239 = vmatmul.mubr.f32.gmra.mrb[0].mxu0 %v48
    %v240 = vpop.f32.mrb[0].mxu0
    %v241 = vadd.f32 0.0, %v240
    %v242 = vpop.f32.mrb[0].mxu0
    %243 = vdwg.mxu0
    %v244 = vadd.f32 %v173, %v241
    %v245 = vxor.u32 %v244, 2147483648
    %v246 = vmul.f32 %v245, 1.442695
    %v247 = vpow.pop %v246
    %v248 = vadd.f32 %v247, 1.0
    %v249 = vrcp.pop %v248
    %v250 = vmul.f32 1.0, %v249
    %v251 = vlaneseq
    %v252 = vshrl.u32 %v251, 7
    %v253 = vsub.s32 0, %v252
    %v254 = vrot.slane %v34, %v253
    %256 = vrot.lane.b32.xlu0 %v254, 64
    %v257 = vpop.permute.xlu0 %256
    %v259 = vadd.f32 %v241, %v257
    %261 = vrot.lane.b32.xlu0 %v259, 64
    %v262 = vpop.permute.xlu0 %261
    %v264 = vmul.f32 %v250, %v262
    %266 = vrot.lane.b32.xlu0 %v264, 64
    %v267 = vpop.permute.xlu0 %266
    %v269 = vadd.f32 %v173, %v267
    %v270 = vtanh.pop %v269
    %v271 = vsub.f32 1.0, %v250
    %273 = vrot.lane.b32.xlu0 %v270, 96
    %v274 = vpop.permute.xlu0 %273
    %v276 = vmul.f32 %v271, %v274
    %v277 = vmul.f32 %v250, 0.0
    %v278 = vadd.f32 %v276, %v277
    %280 = vset.pattern.permute.xlu0 0
    %281 = vperm.xlu0 %280, %v171
    %v282 = vpop.permute.xlu0 %281
    %v284 = vmul.f32 %v282, %v278
    %v285 = vsub.f32 1.0, %v171
    %287 = vset.pattern.permute.xlu0 0
    %288 = vperm.xlu0 %287, %v285
    %v289 = vpop.permute.xlu0 %288
    %v291 = vmul.f32 %v289, 0.0
    %v292 = vadd.f32 %v284, %v291
    %v293 = vmul.f32 %v292, %v282
    %s294 = scalar_lea.vmem %s0, 2
    %v295 = vld [vmem:[%s294] sm:$0x3]
    %s296 = scalar_lea.vmem %s2, 2
    %v297 = vld [vmem:[%s296] sm:$0x3]
    %299 = vrot.lane.b32.xlu0 %v168, 96
    %v300 = vpop.permute.xlu0 %299
    %v301 = vsel %vm46, %v300, 0
    %303 = vmatprep.subr.mxu0 0.0
    %304 = vmatpush1.msra.mxu0 %v36
    %305 = vmatprep.subr.mxu0 0.0
    %306 = vmatpush1.msra.mxu0 %v37
    %307 = vmatprep.subr.mxu0 0.0
    %308 = vmatpush1.msra.mxu0 %v38
    %309 = vmatprep.subr.mxu0 0.0
    %310 = vmatpush1.msra.mxu0 %v39
    %311 = vmatprep.subr.mxu0 0.0
    %312 = vmatpush1.msra.mxu0 0.0
    %313 = vmatprep.subr.mxu0 0.0
    %314 = vmatpush1.msra.mxu0 0.0
    %315 = vmatprep.subr.mxu0 0.0
    %316 = vmatpush1.msra.mxu0 0.0
    %317 = vmatprep.subr.mxu0 0.0
    %318 = vmatpush1.msra.mxu0 0.0
    %319 = vmatprep.subr.mxu0 0.0
    %320 = vmatpush1.msra.mxu0 0.0
    %321 = vmatprep.subr.mxu0 0.0
    %322 = vmatpush1.msra.mxu0 0.0
    %323 = vmatprep.subr.mxu0 0.0
    %324 = vmatpush1.msra.mxu0 0.0
    %325 = vmatprep.subr.mxu0 0.0
    %326 = vmatpush1.msra.mxu0 0.0
    %327 = vmatprep.subr.mxu0 0.0
    %328 = vmatpush1.msra.mxu0 0.0
    %329 = vmatprep.subr.mxu0 0.0
    %330 = vmatpush1.msra.mxu0 0.0
    %331 = vmatprep.subr.mxu0 0.0
    %332 = vmatpush1.msra.mxu0 0.0
    %333 = vmatprep.subr.mxu0 0.0
    %334 = vmatpush1.msra.mxu0 0.0
    %335 = vmatprep.subr.mxu0 0.0
    %336 = vmatpush1.msra.mxu0 0.0
    %337 = vmatprep.subr.mxu0 0.0
    %338 = vmatpush1.msra.mxu0 0.0
    %339 = vmatprep.subr.mxu0 0.0
    %340 = vmatpush1.msra.mxu0 0.0
    %341 = vmatprep.subr.mxu0 0.0
    %342 = vmatpush1.msra.mxu0 0.0
    %343 = vmatprep.subr.mxu0 0.0
    %344 = vmatpush1.msra.mxu0 0.0
    %345 = vmatprep.subr.mxu0 0.0
    %346 = vmatpush1.msra.mxu0 0.0
    %347 = vmatprep.subr.mxu0 0.0
    %348 = vmatpush1.msra.mxu0 0.0
    %349 = vmatprep.subr.mxu0 0.0
    %350 = vmatpush1.msra.mxu0 0.0
    %351 = vmatprep.subr.mxu0 0.0
    %352 = vmatpush1.msra.mxu0 0.0
    %353 = vmatprep.subr.mxu0 0.0
    %354 = vmatpush1.msra.mxu0 0.0
    %355 = vmatprep.subr.mxu0 0.0
    %356 = vmatpush1.msra.mxu0 0.0
    %357 = vmatprep.subr.mxu0 0.0
    %358 = vmatpush1.msra.mxu0 0.0
    %359 = vmatprep.subr.mxu0 0.0
    %360 = vmatpush1.msra.mxu0 0.0
    %361 = vmatprep.subr.mxu0 0.0
    %362 = vmatpush1.msra.mxu0 0.0
    %363 = vmatprep.subr.mxu0 0.0
    %364 = vmatpush1.msra.mxu0 0.0
    %365 = vmatprep.subr.mxu0 0.0
    %366 = vmatpush1.msra.mxu0 0.0
    %367 = vmatprep.mubr.f32.mxu0 0.0
    %368 = vmatmul.mubr.f32.gmra.mrb[0].mxu0 %v301
    %v369 = vpop.f32.mrb[0].mxu0
    %v370 = vadd.f32 0.0, %v369
    %v371 = vpop.f32.mrb[0].mxu0
    %372 = vdwg.mxu0
    %v373 = vadd.f32 %v297, %v370
    %v374 = vxor.u32 %v373, 2147483648
    %v375 = vmul.f32 %v374, 1.442695
    %v376 = vpow.pop %v375
    %v377 = vadd.f32 %v376, 1.0
    %v378 = vrcp.pop %v377
    %v379 = vmul.f32 1.0, %v378
    %v380 = vadd.f32 %v370, %v133
    %382 = vrot.lane.b32.xlu0 %v380, 64
    %v383 = vpop.permute.xlu0 %382
    %v385 = vmul.f32 %v379, %v383
    %387 = vrot.lane.b32.xlu0 %v385, 64
    %v388 = vpop.permute.xlu0 %387
    %v390 = vadd.f32 %v297, %v388
    %v391 = vtanh.pop %v390
    %v392 = vsub.f32 1.0, %v379
    %394 = vrot.lane.b32.xlu0 %v391, 96
    %v395 = vpop.permute.xlu0 %394
    %v397 = vmul.f32 %v392, %v395
    %v398 = vmul.f32 %v379, %v168
    %v399 = vadd.f32 %v397, %v398
    %401 = vset.pattern.permute.xlu0 0
    %402 = vperm.xlu0 %401, %v295
    %v403 = vpop.permute.xlu0 %402
    %v405 = vmul.f32 %v403, %v399
    %v406 = vsub.f32 1.0, %v295
    %408 = vset.pattern.permute.xlu0 0
    %409 = vperm.xlu0 %408, %v406
    %v410 = vpop.permute.xlu0 %409
    %v412 = vmul.f32 %v410, %v168
    %v413 = vadd.f32 %v405, %v412
    %v414 = vmul.f32 %v413, %v403
    %s415 = scalar_lea.vmem %s0, 12
    %v416 = vld [vmem:[%s415] sm:$0x3]
    %s417 = scalar_lea.vmem %s2, 28
    %v418 = vld [vmem:[%s417] sm:$0x3]
    %420 = vrot.lane.b32.xlu0 %v292, 96
    %v421 = vpop.permute.xlu0 %420
    %v422 = vsel %vm46, %v421, 0
    %424 = vmatprep.subr.mxu0 0.0
    %425 = vmatpush1.msra.mxu0 %v40
    %426 = vmatprep.subr.mxu0 0.0
    %427 = vmatpush1.msra.mxu0 %v41
    %428 = vmatprep.subr.mxu0 0.0
    %429 = vmatpush1.msra.mxu0 %v42
    %430 = vmatprep.subr.mxu0 0.0
    %431 = vmatpush1.msra.mxu0 %v43
    %432 = vmatprep.subr.mxu0 0.0
    %433 = vmatpush1.msra.mxu0 0.0
    %434 = vmatprep.subr.mxu0 0.0
    %435 = vmatpush1.msra.mxu0 0.0
    %436 = vmatprep.subr.mxu0 0.0
    %437 = vmatpush1.msra.mxu0 0.0
    %438 = vmatprep.subr.mxu0 0.0
    %439 = vmatpush1.msra.mxu0 0.0
    %440 = vmatprep.subr.mxu0 0.0
    %441 = vmatpush1.msra.mxu0 0.0
    %442 = vmatprep.subr.mxu0 0.0
    %443 = vmatpush1.msra.mxu0 0.0
    %444 = vmatprep.subr.mxu0 0.0
    %445 = vmatpush1.msra.mxu0 0.0
    %446 = vmatprep.subr.mxu0 0.0
    %447 = vmatpush1.msra.mxu0 0.0
    %448 = vmatprep.subr.mxu0 0.0
    %449 = vmatpush1.msra.mxu0 0.0
    %450 = vmatprep.subr.mxu0 0.0
    %451 = vmatpush1.msra.mxu0 0.0
    %452 = vmatprep.subr.mxu0 0.0
    %453 = vmatpush1.msra.mxu0 0.0
    %454 = vmatprep.subr.mxu0 0.0
    %455 = vmatpush1.msra.mxu0 0.0
    %456 = vmatprep.subr.mxu0 0.0
    %457 = vmatpush1.msra.mxu0 0.0
    %458 = vmatprep.subr.mxu0 0.0
    %459 = vmatpush1.msra.mxu0 0.0
    %460 = vmatprep.subr.mxu0 0.0
    %461 = vmatpush1.msra.mxu0 0.0
    %462 = vmatprep.subr.mxu0 0.0
    %463 = vmatpush1.msra.mxu0 0.0
    %464 = vmatprep.subr.mxu0 0.0
    %465 = vmatpush1.msra.mxu0 0.0
    %466 = vmatprep.subr.mxu0 0.0
    %467 = vmatpush1.msra.mxu0 0.0
    %468 = vmatprep.subr.mxu0 0.0
    %469 = vmatpush1.msra.mxu0 0.0
    %470 = vmatprep.subr.mxu0 0.0
    %471 = vmatpush1.msra.mxu0 0.0
    %472 = vmatprep.subr.mxu0 0.0
    %473 = vmatpush1.msra.mxu0 0.0
    %474 = vmatprep.subr.mxu0 0.0
    %475 = vmatpush1.msra.mxu0 0.0
    %476 = vmatprep.subr.mxu0 0.0
    %477 = vmatpush1.msra.mxu0 0.0
    %478 = vmatprep.subr.mxu0 0.0
    %479 = vmatpush1.msra.mxu0 0.0
    %480 = vmatprep.subr.mxu0 0.0
    %481 = vmatpush1.msra.mxu0 0.0
    %482 = vmatprep.subr.mxu0 0.0
    %483 = vmatpush1.msra.mxu0 0.0
    %484 = vmatprep.subr.mxu0 0.0
    %485 = vmatpush1.msra.mxu0 0.0
    %486 = vmatprep.subr.mxu0 0.0
    %487 = vmatpush1.msra.mxu0 0.0
    %488 = vmatprep.mubr.f32.mxu0 0.0
    %489 = vmatmul.mubr.f32.gmra.mrb[0].mxu0 %v422
    %v490 = vpop.f32.mrb[0].mxu0
    %v491 = vadd.f32 0.0, %v490
    %v492 = vpop.f32.mrb[0].mxu0
    %493 = vdwg.mxu0
    %v494 = vadd.f32 %v418, %v491
    %v495 = vxor.u32 %v494, 2147483648
    %v496 = vmul.f32 %v495, 1.442695
    %v497 = vpow.pop %v496
    %v498 = vadd.f32 %v497, 1.0
    %v499 = vrcp.pop %v498
    %v500 = vmul.f32 1.0, %v499
    %v501 = vadd.f32 %v491, %v257
    %503 = vrot.lane.b32.xlu0 %v501, 64
    %v504 = vpop.permute.xlu0 %503
    %v506 = vmul.f32 %v500, %v504
    %508 = vrot.lane.b32.xlu0 %v506, 64
    %v509 = vpop.permute.xlu0 %508
    %v511 = vadd.f32 %v418, %v509
    %v512 = vtanh.pop %v511
    %v513 = vsub.f32 1.0, %v500
    %515 = vrot.lane.b32.xlu0 %v512, 96
    %v516 = vpop.permute.xlu0 %515
    %v518 = vmul.f32 %v513, %v516
    %v519 = vmul.f32 %v500, %v292
    %v520 = vadd.f32 %v518, %v519
    %522 = vset.pattern.permute.xlu0 0
    %523 = vperm.xlu0 %522, %v416
    %v524 = vpop.permute.xlu0 %523
    %v526 = vmul.f32 %v524, %v520
    %v527 = vsub.f32 1.0, %v416
    %529 = vset.pattern.permute.xlu0 0
    %530 = vperm.xlu0 %529, %v527
    %v531 = vpop.permute.xlu0 %530
    %v533 = vmul.f32 %v531, %v292
    %v534 = vadd.f32 %v526, %v533
    %v535 = vmul.f32 %v534, %v524
    %s536 = scalar_lea.vmem %s0, 4
    %v537 = vld [vmem:[%s536] sm:$0x3]
    %s538 = scalar_lea.vmem %s2, 4
    %v539 = vld [vmem:[%s538] sm:$0x3]
    %541 = vrot.lane.b32.xlu0 %v413, 96
    %v542 = vpop.permute.xlu0 %541
    %v543 = vsel %vm46, %v542, 0
    %545 = vmatprep.subr.mxu0 0.0
    %546 = vmatpush1.msra.mxu0 %v36
    %547 = vmatprep.subr.mxu0 0.0
    %548 = vmatpush1.msra.mxu0 %v37
    %549 = vmatprep.subr.mxu0 0.0
    %550 = vmatpush1.msra.mxu0 %v38
    %551 = vmatprep.subr.mxu0 0.0
    %552 = vmatpush1.msra.mxu0 %v39
    %553 = vmatprep.subr.mxu0 0.0
    %554 = vmatpush1.msra.mxu0 0.0
    %555 = vmatprep.subr.mxu0 0.0
    %556 = vmatpush1.msra.mxu0 0.0
    %557 = vmatprep.subr.mxu0 0.0
    %558 = vmatpush1.msra.mxu0 0.0
    %559 = vmatprep.subr.mxu0 0.0
    %560 = vmatpush1.msra.mxu0 0.0
    %561 = vmatprep.subr.mxu0 0.0
    %562 = vmatpush1.msra.mxu0 0.0
    %563 = vmatprep.subr.mxu0 0.0
    %564 = vmatpush1.msra.mxu0 0.0
    %565 = vmatprep.subr.mxu0 0.0
    %566 = vmatpush1.msra.mxu0 0.0
    %567 = vmatprep.subr.mxu0 0.0
    %568 = vmatpush1.msra.mxu0 0.0
    %569 = vmatprep.subr.mxu0 0.0
    %570 = vmatpush1.msra.mxu0 0.0
    %571 = vmatprep.subr.mxu0 0.0
    %572 = vmatpush1.msra.mxu0 0.0
    %573 = vmatprep.subr.mxu0 0.0
    %574 = vmatpush1.msra.mxu0 0.0
    %575 = vmatprep.subr.mxu0 0.0
    %576 = vmatpush1.msra.mxu0 0.0
    %577 = vmatprep.subr.mxu0 0.0
    %578 = vmatpush1.msra.mxu0 0.0
    %579 = vmatprep.subr.mxu0 0.0
    %580 = vmatpush1.msra.mxu0 0.0
    %581 = vmatprep.subr.mxu0 0.0
    %582 = vmatpush1.msra.mxu0 0.0
    %583 = vmatprep.subr.mxu0 0.0
    %584 = vmatpush1.msra.mxu0 0.0
    %585 = vmatprep.subr.mxu0 0.0
    %586 = vmatpush1.msra.mxu0 0.0
    %587 = vmatprep.subr.mxu0 0.0
    %588 = vmatpush1.msra.mxu0 0.0
    %589 = vmatprep.subr.mxu0 0.0
    %590 = vmatpush1.msra.mxu0 0.0
    %591 = vmatprep.subr.mxu0 0.0
    %592 = vmatpush1.msra.mxu0 0.0
    %593 = vmatprep.subr.mxu0 0.0
    %594 = vmatpush1.msra.mxu0 0.0
    %595 = vmatprep.subr.mxu0 0.0
    %596 = vmatpush1.msra.mxu0 0.0
    %597 = vmatprep.subr.mxu0 0.0
    %598 = vmatpush1.msra.mxu0 0.0
    %599 = vmatprep.subr.mxu0 0.0
    %600 = vmatpush1.msra.mxu0 0.0
    %601 = vmatprep.subr.mxu0 0.0
    %602 = vmatpush1.msra.mxu0 0.0
    %603 = vmatprep.subr.mxu0 0.0
    %604 = vmatpush1.msra.mxu0 0.0
    %605 = vmatprep.subr.mxu0 0.0
    %606 = vmatpush1.msra.mxu0 0.0
    %607 = vmatprep.subr.mxu0 0.0
    %608 = vmatpush1.msra.mxu0 0.0
    %609 = vmatprep.mubr.f32.mxu0 0.0
    %610 = vmatmul.mubr.f32.gmra.mrb[0].mxu0 %v543
    %v611 = vpop.f32.mrb[0].mxu0
    %v612 = vadd.f32 0.0, %v611
    %v613 = vpop.f32.mrb[0].mxu0
    %614 = vdwg.mxu0
    %v615 = vadd.f32 %v539, %v612
    %v616 = vxor.u32 %v615, 2147483648
    %v617 = vmul.f32 %v616, 1.442695
    %v618 = vpow.pop %v617
    %v619 = vadd.f32 %v618, 1.0
    %v620 = vrcp.pop %v619
    %v621 = vmul.f32 1.0, %v620
    %v622 = vadd.f32 %v612, %v133
    %624 = vrot.lane.b32.xlu0 %v622, 64
    %v625 = vpop.permute.xlu0 %624
    %v627 = vmul.f32 %v621, %v625
    %629 = vrot.lane.b32.xlu0 %v627, 64
    %v630 = vpop.permute.xlu0 %629
    %v632 = vadd.f32 %v539, %v630
    %v633 = vtanh.pop %v632
    %v634 = vsub.f32 1.0, %v621
    %636 = vrot.lane.b32.xlu0 %v633, 96
    %v637 = vpop.permute.xlu0 %636
    %v639 = vmul.f32 %v634, %v637
    %v640 = vmul.f32 %v621, %v413
    %v641 = vadd.f32 %v639, %v640
    %643 = vset.pattern.permute.xlu0 0
    %644 = vperm.xlu0 %643, %v537
    %v645 = vpop.permute.xlu0 %644
    %v647 = vmul.f32 %v645, %v641
    %v648 = vsub.f32 1.0, %v537
    %650 = vset.pattern.permute.xlu0 0
    %651 = vperm.xlu0 %650, %v648
    %v652 = vpop.permute.xlu0 %651
    %v654 = vmul.f32 %v652, %v413
    %v655 = vadd.f32 %v647, %v654
    %v656 = vmul.f32 %v655, %v645
    %s657 = scalar_lea.vmem %s0, 10
    %v658 = vld [vmem:[%s657] sm:$0x3]
    %s659 = scalar_lea.vmem %s2, 26
    %v660 = vld [vmem:[%s659] sm:$0x3]
    %662 = vrot.lane.b32.xlu0 %v534, 96
    %v663 = vpop.permute.xlu0 %662
    %v664 = vsel %vm46, %v663, 0
    %666 = vmatprep.subr.mxu0 0.0
    %667 = vmatpush1.msra.mxu0 %v40
    %668 = vmatprep.subr.mxu0 0.0
    %669 = vmatpush1.msra.mxu0 %v41
    %670 = vmatprep.subr.mxu0 0.0
    %671 = vmatpush1.msra.mxu0 %v42
    %672 = vmatprep.subr.mxu0 0.0
    %673 = vmatpush1.msra.mxu0 %v43
    %674 = vmatprep.subr.mxu0 0.0
    %675 = vmatpush1.msra.mxu0 0.0
    %676 = vmatprep.subr.mxu0 0.0
    %677 = vmatpush1.msra.mxu0 0.0
    %678 = vmatprep.subr.mxu0 0.0
    %679 = vmatpush1.msra.mxu0 0.0
    %680 = vmatprep.subr.mxu0 0.0
    %681 = vmatpush1.msra.mxu0 0.0
    %682 = vmatprep.subr.mxu0 0.0
    %683 = vmatpush1.msra.mxu0 0.0
    %684 = vmatprep.subr.mxu0 0.0
    %685 = vmatpush1.msra.mxu0 0.0
    %686 = vmatprep.subr.mxu0 0.0
    %687 = vmatpush1.msra.mxu0 0.0
    %688 = vmatprep.subr.mxu0 0.0
    %689 = vmatpush1.msra.mxu0 0.0
    %690 = vmatprep.subr.mxu0 0.0
    %691 = vmatpush1.msra.mxu0 0.0
    %692 = vmatprep.subr.mxu0 0.0
    %693 = vmatpush1.msra.mxu0 0.0
    %694 = vmatprep.subr.mxu0 0.0
    %695 = vmatpush1.msra.mxu0 0.0
    %696 = vmatprep.subr.mxu0 0.0
    %697 = vmatpush1.msra.mxu0 0.0
    %698 = vmatprep.subr.mxu0 0.0
    %699 = vmatpush1.msra.mxu0 0.0
    %700 = vmatprep.subr.mxu0 0.0
    %701 = vmatpush1.msra.mxu0 0.0
    %702 = vmatprep.subr.mxu0 0.0
    %703 = vmatpush1.msra.mxu0 0.0
    %704 = vmatprep.subr.mxu0 0.0
    %705 = vmatpush1.msra.mxu0 0.0
    %706 = vmatprep.subr.mxu0 0.0
    %707 = vmatpush1.msra.mxu0 0.0
    %708 = vmatprep.subr.mxu0 0.0
    %709 = vmatpush1.msra.mxu0 0.0
    %710 = vmatprep.subr.mxu0 0.0
    %711 = vmatpush1.msra.mxu0 0.0
    %712 = vmatprep.subr.mxu0 0.0
    %713 = vmatpush1.msra.mxu0 0.0
    %714 = vmatprep.subr.mxu0 0.0
    %715 = vmatpush1.msra.mxu0 0.0
    %716 = vmatprep.subr.mxu0 0.0
    %717 = vmatpush1.msra.mxu0 0.0
    %718 = vmatprep.subr.mxu0 0.0
    %719 = vmatpush1.msra.mxu0 0.0
    %720 = vmatprep.subr.mxu0 0.0
    %721 = vmatpush1.msra.mxu0 0.0
    %722 = vmatprep.subr.mxu0 0.0
    %723 = vmatpush1.msra.mxu0 0.0
    %724 = vmatprep.subr.mxu0 0.0
    %725 = vmatpush1.msra.mxu0 0.0
    %726 = vmatprep.subr.mxu0 0.0
    %727 = vmatpush1.msra.mxu0 0.0
    %728 = vmatprep.subr.mxu0 0.0
    %729 = vmatpush1.msra.mxu0 0.0
    %730 = vmatprep.mubr.f32.mxu0 0.0
    %731 = vmatmul.mubr.f32.gmra.mrb[0].mxu0 %v664
    %v732 = vpop.f32.mrb[0].mxu0
    %v733 = vadd.f32 0.0, %v732
    %v734 = vpop.f32.mrb[0].mxu0
    %735 = vdwg.mxu0
    %v736 = vadd.f32 %v660, %v733
    %v737 = vxor.u32 %v736, 2147483648
    %v738 = vmul.f32 %v737, 1.442695
    %v739 = vpow.pop %v738
    %v740 = vadd.f32 %v739, 1.0
    %v741 = vrcp.pop %v740
    %v742 = vmul.f32 1.0, %v741
    %v743 = vadd.f32 %v733, %v257
    %745 = vrot.lane.b32.xlu0 %v743, 64
    %v746 = vpop.permute.xlu0 %745
    %v748 = vmul.f32 %v742, %v746
    %750 = vrot.lane.b32.xlu0 %v748, 64
    %v751 = vpop.permute.xlu0 %750
    %v753 = vadd.f32 %v660, %v751
    %v754 = vtanh.pop %v753
    %v755 = vsub.f32 1.0, %v742
    %757 = vrot.lane.b32.xlu0 %v754, 96
    %v758 = vpop.permute.xlu0 %757
    %v760 = vmul.f32 %v755, %v758
    %v761 = vmul.f32 %v742, %v534
    %v762 = vadd.f32 %v760, %v761
    %764 = vset.pattern.permute.xlu0 0
    %765 = vperm.xlu0 %764, %v658
    %v766 = vpop.permute.xlu0 %765
    %v768 = vmul.f32 %v766, %v762
    %v769 = vsub.f32 1.0, %v658
    %771 = vset.pattern.permute.xlu0 0
    %772 = vperm.xlu0 %771, %v769
    %v773 = vpop.permute.xlu0 %772
    %v775 = vmul.f32 %v773, %v534
    %v776 = vadd.f32 %v768, %v775
    %v777 = vmul.f32 %v776, %v766
    %s778 = scalar_lea.vmem %s0, 6
    %v779 = vld [vmem:[%s778] sm:$0x3]
    %s780 = scalar_lea.vmem %s2, 6
    %v781 = vld [vmem:[%s780] sm:$0x3]
    %783 = vrot.lane.b32.xlu0 %v655, 96
    %v784 = vpop.permute.xlu0 %783
    %v785 = vsel %vm46, %v784, 0
    %787 = vmatprep.subr.mxu0 0.0
    %788 = vmatpush1.msra.mxu0 %v36
    %789 = vmatprep.subr.mxu0 0.0
    %790 = vmatpush1.msra.mxu0 %v37
    %791 = vmatprep.subr.mxu0 0.0
    %792 = vmatpush1.msra.mxu0 %v38
    %793 = vmatprep.subr.mxu0 0.0
    %794 = vmatpush1.msra.mxu0 %v39
    %795 = vmatprep.subr.mxu0 0.0
    %796 = vmatpush1.msra.mxu0 0.0
    %797 = vmatprep.subr.mxu0 0.0
    %798 = vmatpush1.msra.mxu0 0.0
    %799 = vmatprep.subr.mxu0 0.0
    %800 = vmatpush1.msra.mxu0 0.0
    %801 = vmatprep.subr.mxu0 0.0
    %802 = vmatpush1.msra.mxu0 0.0
    %803 = vmatprep.subr.mxu0 0.0
    %804 = vmatpush1.msra.mxu0 0.0
    %805 = vmatprep.subr.mxu0 0.0
    %806 = vmatpush1.msra.mxu0 0.0
    %807 = vmatprep.subr.mxu0 0.0
    %808 = vmatpush1.msra.mxu0 0.0
    %809 = vmatprep.subr.mxu0 0.0
    %810 = vmatpush1.msra.mxu0 0.0
    %811 = vmatprep.subr.mxu0 0.0
    %812 = vmatpush1.msra.mxu0 0.0
    %813 = vmatprep.subr.mxu0 0.0
    %814 = vmatpush1.msra.mxu0 0.0
    %815 = vmatprep.subr.mxu0 0.0
    %816 = vmatpush1.msra.mxu0 0.0
    %817 = vmatprep.subr.mxu0 0.0
    %818 = vmatpush1.msra.mxu0 0.0
    %819 = vmatprep.subr.mxu0 0.0
    %820 = vmatpush1.msra.mxu0 0.0
    %821 = vmatprep.subr.mxu0 0.0
    %822 = vmatpush1.msra.mxu0 0.0
    %823 = vmatprep.subr.mxu0 0.0
    %824 = vmatpush1.msra.mxu0 0.0
    %825 = vmatprep.subr.mxu0 0.0
    %826 = vmatpush1.msra.mxu0 0.0
    %827 = vmatprep.subr.mxu0 0.0
    %828 = vmatpush1.msra.mxu0 0.0
    %829 = vmatprep.subr.mxu0 0.0
    %830 = vmatpush1.msra.mxu0 0.0
    %831 = vmatprep.subr.mxu0 0.0
    %832 = vmatpush1.msra.mxu0 0.0
    %833 = vmatprep.subr.mxu0 0.0
    %834 = vmatpush1.msra.mxu0 0.0
    %835 = vmatprep.subr.mxu0 0.0
    %836 = vmatpush1.msra.mxu0 0.0
    %837 = vmatprep.subr.mxu0 0.0
    %838 = vmatpush1.msra.mxu0 0.0
    %839 = vmatprep.subr.mxu0 0.0
    %840 = vmatpush1.msra.mxu0 0.0
    %841 = vmatprep.subr.mxu0 0.0
    %842 = vmatpush1.msra.mxu0 0.0
    %843 = vmatprep.subr.mxu0 0.0
    %844 = vmatpush1.msra.mxu0 0.0
    %845 = vmatprep.subr.mxu0 0.0
    %846 = vmatpush1.msra.mxu0 0.0
    %847 = vmatprep.subr.mxu0 0.0
    %848 = vmatpush1.msra.mxu0 0.0
    %849 = vmatprep.subr.mxu0 0.0
    %850 = vmatpush1.msra.mxu0 0.0
    %851 = vmatprep.mubr.f32.mxu0 0.0
    %852 = vmatmul.mubr.f32.gmra.mrb[0].mxu0 %v785
    %v853 = vpop.f32.mrb[0].mxu0
    %v854 = vadd.f32 0.0, %v853
    %v855 = vpop.f32.mrb[0].mxu0
    %856 = vdwg.mxu0
    %v857 = vadd.f32 %v781, %v854
    %v858 = vxor.u32 %v857, 2147483648
    %v859 = vmul.f32 %v858, 1.442695
    %v860 = vpow.pop %v859
    %v861 = vadd.f32 %v860, 1.0
    %v862 = vrcp.pop %v861
    %v863 = vmul.f32 1.0, %v862
    %v864 = vadd.f32 %v854, %v133
    %866 = vrot.lane.b32.xlu0 %v864, 64
    %v867 = vpop.permute.xlu0 %866
    %v869 = vmul.f32 %v863, %v867
    %871 = vrot.lane.b32.xlu0 %v869, 64
    %v872 = vpop.permute.xlu0 %871
    %v874 = vadd.f32 %v781, %v872
    %v875 = vtanh.pop %v874
    %v876 = vsub.f32 1.0, %v863
    %878 = vrot.lane.b32.xlu0 %v875, 96
    %v879 = vpop.permute.xlu0 %878
    %v881 = vmul.f32 %v876, %v879
    %v882 = vmul.f32 %v863, %v655
    %v883 = vadd.f32 %v881, %v882
    %885 = vset.pattern.permute.xlu0 0
    %886 = vperm.xlu0 %885, %v779
    %v887 = vpop.permute.xlu0 %886
    %v889 = vmul.f32 %v887, %v883
    %v890 = vsub.f32 1.0, %v779
    %892 = vset.pattern.permute.xlu0 0
    %893 = vperm.xlu0 %892, %v890
    %v894 = vpop.permute.xlu0 %893
    %v896 = vmul.f32 %v894, %v655
    %v897 = vadd.f32 %v889, %v896
    %v898 = vmul.f32 %v897, %v887
    %s899 = scalar_lea.vmem %s0, 8
    %v900 = vld [vmem:[%s899] sm:$0x3]
    %s901 = scalar_lea.vmem %s2, 24
    %v902 = vld [vmem:[%s901] sm:$0x3]
    %904 = vrot.lane.b32.xlu0 %v776, 96
    %v905 = vpop.permute.xlu0 %904
    %v906 = vsel %vm46, %v905, 0
    %908 = vmatprep.subr.mxu0 0.0
    %909 = vmatpush1.msra.mxu0 %v40
    %910 = vmatprep.subr.mxu0 0.0
    %911 = vmatpush1.msra.mxu0 %v41
    %912 = vmatprep.subr.mxu0 0.0
    %913 = vmatpush1.msra.mxu0 %v42
    %914 = vmatprep.subr.mxu0 0.0
    %915 = vmatpush1.msra.mxu0 %v43
    %916 = vmatprep.subr.mxu0 0.0
    %917 = vmatpush1.msra.mxu0 0.0
    %918 = vmatprep.subr.mxu0 0.0
    %919 = vmatpush1.msra.mxu0 0.0
    %920 = vmatprep.subr.mxu0 0.0
    %921 = vmatpush1.msra.mxu0 0.0
    %922 = vmatprep.subr.mxu0 0.0
    %923 = vmatpush1.msra.mxu0 0.0
    %924 = vmatprep.subr.mxu0 0.0
    %925 = vmatpush1.msra.mxu0 0.0
    %926 = vmatprep.subr.mxu0 0.0
    %927 = vmatpush1.msra.mxu0 0.0
    %928 = vmatprep.subr.mxu0 0.0
    %929 = vmatpush1.msra.mxu0 0.0
    %930 = vmatprep.subr.mxu0 0.0
    %931 = vmatpush1.msra.mxu0 0.0
    %932 = vmatprep.subr.mxu0 0.0
    %933 = vmatpush1.msra.mxu0 0.0
    %934 = vmatprep.subr.mxu0 0.0
    %935 = vmatpush1.msra.mxu0 0.0
    %936 = vmatprep.subr.mxu0 0.0
    %937 = vmatpush1.msra.mxu0 0.0
    %938 = vmatprep.subr.mxu0 0.0
    %939 = vmatpush1.msra.mxu0 0.0
    %940 = vmatprep.subr.mxu0 0.0
    %941 = vmatpush1.msra.mxu0 0.0
    %942 = vmatprep.subr.mxu0 0.0
    %943 = vmatpush1.msra.mxu0 0.0
    %944 = vmatprep.subr.mxu0 0.0
    %945 = vmatpush1.msra.mxu0 0.0
    %946 = vmatprep.subr.mxu0 0.0
    %947 = vmatpush1.msra.mxu0 0.0
    %948 = vmatprep.subr.mxu0 0.0
    %949 = vmatpush1.msra.mxu0 0.0
    %950 = vmatprep.subr.mxu0 0.0
    %951 = vmatpush1.msra.mxu0 0.0
    %952 = vmatprep.subr.mxu0 0.0
    %953 = vmatpush1.msra.mxu0 0.0
    %954 = vmatprep.subr.mxu0 0.0
    %955 = vmatpush1.msra.mxu0 0.0
    %956 = vmatprep.subr.mxu0 0.0
    %957 = vmatpush1.msra.mxu0 0.0
    %958 = vmatprep.subr.mxu0 0.0
    %959 = vmatpush1.msra.mxu0 0.0
    %960 = vmatprep.subr.mxu0 0.0
    %961 = vmatpush1.msra.mxu0 0.0
    %962 = vmatprep.subr.mxu0 0.0
    %963 = vmatpush1.msra.mxu0 0.0
    %964 = vmatprep.subr.mxu0 0.0
    %965 = vmatpush1.msra.mxu0 0.0
    %966 = vmatprep.subr.mxu0 0.0
    %967 = vmatpush1.msra.mxu0 0.0
    %968 = vmatprep.subr.mxu0 0.0
    %969 = vmatpush1.msra.mxu0 0.0
    %970 = vmatprep.subr.mxu0 0.0
    %971 = vmatpush1.msra.mxu0 0.0
    %972 = vmatprep.mubr.f32.mxu0 0.0
    %973 = vmatmul.mubr.f32.gmra.mrb[0].mxu0 %v906
    %v974 = vpop.f32.mrb[0].mxu0
    %v975 = vadd.f32 0.0, %v974
    %v976 = vpop.f32.mrb[0].mxu0
    %977 = vdwg.mxu0
    %v978 = vadd.f32 %v902, %v975
    %v979 = vxor.u32 %v978, 2147483648
    %v980 = vmul.f32 %v979, 1.442695
    %v981 = vpow.pop %v980
    %v982 = vadd.f32 %v981, 1.0
    %v983 = vrcp.pop %v982
    %v984 = vmul.f32 1.0, %v983
    %v985 = vadd.f32 %v975, %v257
    %987 = vrot.lane.b32.xlu0 %v985, 64
    %v988 = vpop.permute.xlu0 %987
    %v990 = vmul.f32 %v984, %v988
    %992 = vrot.lane.b32.xlu0 %v990, 64
    %v993 = vpop.permute.xlu0 %992
    %v995 = vadd.f32 %v902, %v993
    %v996 = vtanh.pop %v995
    %v997 = vsub.f32 1.0, %v984
    %999 = vrot.lane.b32.xlu0 %v996, 96
    %v1000 = vpop.permute.xlu0 %999
    %v1002 = vmul.f32 %v997, %v1000
    %v1003 = vmul.f32 %v984, %v776
    %v1004 = vadd.f32 %v1002, %v1003
    %1006 = vset.pattern.permute.xlu0 0
    %1007 = vperm.xlu0 %1006, %v900
    %v1008 = vpop.permute.xlu0 %1007
    %v1010 = vmul.f32 %v1008, %v1004
    %v1011 = vsub.f32 1.0, %v900
    %1013 = vset.pattern.permute.xlu0 0
    %1014 = vperm.xlu0 %1013, %v1011
    %v1015 = vpop.permute.xlu0 %1014
    %v1017 = vmul.f32 %v1015, %v776
    %v1018 = vadd.f32 %v1010, %v1017
    %v1019 = vmul.f32 %v1018, %v1008
    %s1020 = scalar_lea.vmem %s2, 8
    %v1021 = vld [vmem:[%s1020] sm:$0x3]
    %1023 = vrot.lane.b32.xlu0 %v897, 96
    %v1024 = vpop.permute.xlu0 %1023
    %v1025 = vsel %vm46, %v1024, 0
    %1027 = vmatprep.subr.mxu0 0.0
    %1028 = vmatpush1.msra.mxu0 %v36
    %1029 = vmatprep.subr.mxu0 0.0
    %1030 = vmatpush1.msra.mxu0 %v37
    %1031 = vmatprep.subr.mxu0 0.0
    %1032 = vmatpush1.msra.mxu0 %v38
    %1033 = vmatprep.subr.mxu0 0.0
    %1034 = vmatpush1.msra.mxu0 %v39
    %1035 = vmatprep.subr.mxu0 0.0
    %1036 = vmatpush1.msra.mxu0 0.0
    %1037 = vmatprep.subr.mxu0 0.0
    %1038 = vmatpush1.msra.mxu0 0.0
    %1039 = vmatprep.subr.mxu0 0.0
    %1040 = vmatpush1.msra.mxu0 0.0
    %1041 = vmatprep.subr.mxu0 0.0
    %1042 = vmatpush1.msra.mxu0 0.0
    %1043 = vmatprep.subr.mxu0 0.0
    %1044 = vmatpush1.msra.mxu0 0.0
    %1045 = vmatprep.subr.mxu0 0.0
    %1046 = vmatpush1.msra.mxu0 0.0
    %1047 = vmatprep.subr.mxu0 0.0
    %1048 = vmatpush1.msra.mxu0 0.0
    %1049 = vmatprep.subr.mxu0 0.0
    %1050 = vmatpush1.msra.mxu0 0.0
    %1051 = vmatprep.subr.mxu0 0.0
    %1052 = vmatpush1.msra.mxu0 0.0
    %1053 = vmatprep.subr.mxu0 0.0
    %1054 = vmatpush1.msra.mxu0 0.0
    %1055 = vmatprep.subr.mxu0 0.0
    %1056 = vmatpush1.msra.mxu0 0.0
    %1057 = vmatprep.subr.mxu0 0.0
    %1058 = vmatpush1.msra.mxu0 0.0
    %1059 = vmatprep.subr.mxu0 0.0
    %1060 = vmatpush1.msra.mxu0 0.0
    %1061 = vmatprep.subr.mxu0 0.0
    %1062 = vmatpush1.msra.mxu0 0.0
    %1063 = vmatprep.subr.mxu0 0.0
    %1064 = vmatpush1.msra.mxu0 0.0
    %1065 = vmatprep.subr.mxu0 0.0
    %1066 = vmatpush1.msra.mxu0 0.0
    %1067 = vmatprep.subr.mxu0 0.0
    %1068 = vmatpush1.msra.mxu0 0.0
    %1069 = vmatprep.subr.mxu0 0.0
    %1070 = vmatpush1.msra.mxu0 0.0
    %1071 = vmatprep.subr.mxu0 0.0
    %1072 = vmatpush1.msra.mxu0 0.0
    %1073 = vmatprep.subr.mxu0 0.0
    %1074 = vmatpush1.msra.mxu0 0.0
    %1075 = vmatprep.subr.mxu0 0.0
    %1076 = vmatpush1.msra.mxu0 0.0
    %1077 = vmatprep.subr.mxu0 0.0
    %1078 = vmatpush1.msra.mxu0 0.0
    %1079 = vmatprep.subr.mxu0 0.0
    %1080 = vmatpush1.msra.mxu0 0.0
    %1081 = vmatprep.subr.mxu0 0.0
    %1082 = vmatpush1.msra.mxu0 0.0
    %1083 = vmatprep.subr.mxu0 0.0
    %1084 = vmatpush1.msra.mxu0 0.0
    %1085 = vmatprep.subr.mxu0 0.0
    %1086 = vmatpush1.msra.mxu0 0.0
    %1087 = vmatprep.subr.mxu0 0.0
    %1088 = vmatpush1.msra.mxu0 0.0
    %1089 = vmatprep.subr.mxu0 0.0
    %1090 = vmatpush1.msra.mxu0 0.0
    %1091 = vmatprep.mubr.f32.mxu0 0.0
    %1092 = vmatmul.mubr.f32.gmra.mrb[0].mxu0 %v1025
    %v1093 = vpop.f32.mrb[0].mxu0
    %v1094 = vadd.f32 0.0, %v1093
    %v1095 = vpop.f32.mrb[0].mxu0
    %1096 = vdwg.mxu0
    %v1097 = vadd.f32 %v1021, %v1094
    %v1098 = vxor.u32 %v1097, 2147483648
    %v1099 = vmul.f32 %v1098, 1.442695
    %v1100 = vpow.pop %v1099
    %v1101 = vadd.f32 %v1100, 1.0
    %v1102 = vrcp.pop %v1101
    %v1103 = vmul.f32 1.0, %v1102
    %v1104 = vadd.f32 %v1094, %v133
    %1106 = vrot.lane.b32.xlu0 %v1104, 64
    %v1107 = vpop.permute.xlu0 %1106
    %v1109 = vmul.f32 %v1103, %v1107
    %1111 = vrot.lane.b32.xlu0 %v1109, 64
    %v1112 = vpop.permute.xlu0 %1111
    %v1114 = vadd.f32 %v1021, %v1112
    %v1115 = vtanh.pop %v1114
    %v1116 = vsub.f32 1.0, %v1103
    %1118 = vrot.lane.b32.xlu0 %v1115, 96
    %v1119 = vpop.permute.xlu0 %1118
    %v1121 = vmul.f32 %v1116, %v1119
    %v1122 = vmul.f32 %v1103, %v897
    %v1123 = vadd.f32 %v1121, %v1122
    %v1124 = vmul.f32 %v1008, %v1123
    %v1125 = vmul.f32 %v1015, %v897
    %v1126 = vadd.f32 %v1124, %v1125
    %v1127 = vmul.f32 %v1126, %v1008
    %s1128 = scalar_lea.vmem %s2, 22
    %v1129 = vld [vmem:[%s1128] sm:$0x3]
    %1131 = vrot.lane.b32.xlu0 %v1018, 96
    %v1132 = vpop.permute.xlu0 %1131
    %v1133 = vsel %vm46, %v1132, 0
    %1135 = vmatprep.subr.mxu0 0.0
    %1136 = vmatpush1.msra.mxu0 %v40
    %1137 = vmatprep.subr.mxu0 0.0
    %1138 = vmatpush1.msra.mxu0 %v41
    %1139 = vmatprep.subr.mxu0 0.0
    %1140 = vmatpush1.msra.mxu0 %v42
    %1141 = vmatprep.subr.mxu0 0.0
    %1142 = vmatpush1.msra.mxu0 %v43
    %1143 = vmatprep.subr.mxu0 0.0
    %1144 = vmatpush1.msra.mxu0 0.0
    %1145 = vmatprep.subr.mxu0 0.0
    %1146 = vmatpush1.msra.mxu0 0.0
    %1147 = vmatprep.subr.mxu0 0.0
    %1148 = vmatpush1.msra.mxu0 0.0
    %1149 = vmatprep.subr.mxu0 0.0
    %1150 = vmatpush1.msra.mxu0 0.0
    %1151 = vmatprep.subr.mxu0 0.0
    %1152 = vmatpush1.msra.mxu0 0.0
    %1153 = vmatprep.subr.mxu0 0.0
    %1154 = vmatpush1.msra.mxu0 0.0
    %1155 = vmatprep.subr.mxu0 0.0
    %1156 = vmatpush1.msra.mxu0 0.0
    %1157 = vmatprep.subr.mxu0 0.0
    %1158 = vmatpush1.msra.mxu0 0.0
    %1159 = vmatprep.subr.mxu0 0.0
    %1160 = vmatpush1.msra.mxu0 0.0
    %1161 = vmatprep.subr.mxu0 0.0
    %1162 = vmatpush1.msra.mxu0 0.0
    %1163 = vmatprep.subr.mxu0 0.0
    %1164 = vmatpush1.msra.mxu0 0.0
    %1165 = vmatprep.subr.mxu0 0.0
    %1166 = vmatpush1.msra.mxu0 0.0
    %1167 = vmatprep.subr.mxu0 0.0
    %1168 = vmatpush1.msra.mxu0 0.0
    %1169 = vmatprep.subr.mxu0 0.0
    %1170 = vmatpush1.msra.mxu0 0.0
    %1171 = vmatprep.subr.mxu0 0.0
    %1172 = vmatpush1.msra.mxu0 0.0
    %1173 = vmatprep.subr.mxu0 0.0
    %1174 = vmatpush1.msra.mxu0 0.0
    %1175 = vmatprep.subr.mxu0 0.0
    %1176 = vmatpush1.msra.mxu0 0.0
    %1177 = vmatprep.subr.mxu0 0.0
    %1178 = vmatpush1.msra.mxu0 0.0
    %1179 = vmatprep.subr.mxu0 0.0
    %1180 = vmatpush1.msra.mxu0 0.0
    %1181 = vmatprep.subr.mxu0 0.0
    %1182 = vmatpush1.msra.mxu0 0.0
    %1183 = vmatprep.subr.mxu0 0.0
    %1184 = vmatpush1.msra.mxu0 0.0
    %1185 = vmatprep.subr.mxu0 0.0
    %1186 = vmatpush1.msra.mxu0 0.0
    %1187 = vmatprep.subr.mxu0 0.0
    %1188 = vmatpush1.msra.mxu0 0.0
    %1189 = vmatprep.subr.mxu0 0.0
    %1190 = vmatpush1.msra.mxu0 0.0
    %1191 = vmatprep.subr.mxu0 0.0
    %1192 = vmatpush1.msra.mxu0 0.0
    %1193 = vmatprep.subr.mxu0 0.0
    %1194 = vmatpush1.msra.mxu0 0.0
    %1195 = vmatprep.subr.mxu0 0.0
    %1196 = vmatpush1.msra.mxu0 0.0
    %1197 = vmatprep.subr.mxu0 0.0
    %1198 = vmatpush1.msra.mxu0 0.0
    %1199 = vmatprep.mubr.f32.mxu0 0.0
    %1200 = vmatmul.mubr.f32.gmra.mrb[0].mxu0 %v1133
    %v1201 = vpop.f32.mrb[0].mxu0
    %v1202 = vadd.f32 0.0, %v1201
    %v1203 = vpop.f32.mrb[0].mxu0
    %1204 = vdwg.mxu0
    %v1205 = vadd.f32 %v1129, %v1202
    %v1206 = vxor.u32 %v1205, 2147483648
    %v1207 = vmul.f32 %v1206, 1.442695
    %v1208 = vpow.pop %v1207
    %v1209 = vadd.f32 %v1208, 1.0
    %v1210 = vrcp.pop %v1209
    %v1211 = vmul.f32 1.0, %v1210
    %v1212 = vadd.f32 %v1202, %v257
    %1214 = vrot.lane.b32.xlu0 %v1212, 64
    %v1215 = vpop.permute.xlu0 %1214
    %v1217 = vmul.f32 %v1211, %v1215
    %1219 = vrot.lane.b32.xlu0 %v1217, 64
    %v1220 = vpop.permute.xlu0 %1219
    %v1222 = vadd.f32 %v1129, %v1220
    %v1223 = vtanh.pop %v1222
    %v1224 = vsub.f32 1.0, %v1211
    %1226 = vrot.lane.b32.xlu0 %v1223, 96
    %v1227 = vpop.permute.xlu0 %1226
    %v1229 = vmul.f32 %v1224, %v1227
    %v1230 = vmul.f32 %v1211, %v1018
    %v1231 = vadd.f32 %v1229, %v1230
    %v1232 = vmul.f32 %v887, %v1231
    %v1233 = vmul.f32 %v894, %v1018
    %v1234 = vadd.f32 %v1232, %v1233
    %v1235 = vmul.f32 %v1234, %v887
    %s1236 = scalar_lea.vmem %s2, 10
    %v1237 = vld [vmem:[%s1236] sm:$0x3]
    %1239 = vrot.lane.b32.xlu0 %v1126, 96
    %v1240 = vpop.permute.xlu0 %1239
    %v1241 = vsel %vm46, %v1240, 0
    %1243 = vmatprep.subr.mxu0 0.0
    %1244 = vmatpush1.msra.mxu0 %v36
    %1245 = vmatprep.subr.mxu0 0.0
    %1246 = vmatpush1.msra.mxu0 %v37
    %1247 = vmatprep.subr.mxu0 0.0
    %1248 = vmatpush1.msra.mxu0 %v38
    %1249 = vmatprep.subr.mxu0 0.0
    %1250 = vmatpush1.msra.mxu0 %v39
    %1251 = vmatprep.subr.mxu0 0.0
    %1252 = vmatpush1.msra.mxu0 0.0
    %1253 = vmatprep.subr.mxu0 0.0
    %1254 = vmatpush1.msra.mxu0 0.0
    %1255 = vmatprep.subr.mxu0 0.0
    %1256 = vmatpush1.msra.mxu0 0.0
    %1257 = vmatprep.subr.mxu0 0.0
    %1258 = vmatpush1.msra.mxu0 0.0
    %1259 = vmatprep.subr.mxu0 0.0
    %1260 = vmatpush1.msra.mxu0 0.0
    %1261 = vmatprep.subr.mxu0 0.0
    %1262 = vmatpush1.msra.mxu0 0.0
    %1263 = vmatprep.subr.mxu0 0.0
    %1264 = vmatpush1.msra.mxu0 0.0
    %1265 = vmatprep.subr.mxu0 0.0
    %1266 = vmatpush1.msra.mxu0 0.0
    %1267 = vmatprep.subr.mxu0 0.0
    %1268 = vmatpush1.msra.mxu0 0.0
    %1269 = vmatprep.subr.mxu0 0.0
    %1270 = vmatpush1.msra.mxu0 0.0
    %1271 = vmatprep.subr.mxu0 0.0
    %1272 = vmatpush1.msra.mxu0 0.0
    %1273 = vmatprep.subr.mxu0 0.0
    %1274 = vmatpush1.msra.mxu0 0.0
    %1275 = vmatprep.subr.mxu0 0.0
    %1276 = vmatpush1.msra.mxu0 0.0
    %1277 = vmatprep.subr.mxu0 0.0
    %1278 = vmatpush1.msra.mxu0 0.0
    %1279 = vmatprep.subr.mxu0 0.0
    %1280 = vmatpush1.msra.mxu0 0.0
    %1281 = vmatprep.subr.mxu0 0.0
    %1282 = vmatpush1.msra.mxu0 0.0
    %1283 = vmatprep.subr.mxu0 0.0
    %1284 = vmatpush1.msra.mxu0 0.0
    %1285 = vmatprep.subr.mxu0 0.0
    %1286 = vmatpush1.msra.mxu0 0.0
    %1287 = vmatprep.subr.mxu0 0.0
    %1288 = vmatpush1.msra.mxu0 0.0
    %1289 = vmatprep.subr.mxu0 0.0
    %1290 = vmatpush1.msra.mxu0 0.0
    %1291 = vmatprep.subr.mxu0 0.0
    %1292 = vmatpush1.msra.mxu0 0.0
    %1293 = vmatprep.subr.mxu0 0.0
    %1294 = vmatpush1.msra.mxu0 0.0
    %1295 = vmatprep.subr.mxu0 0.0
    %1296 = vmatpush1.msra.mxu0 0.0
    %1297 = vmatprep.subr.mxu0 0.0
    %1298 = vmatpush1.msra.mxu0 0.0
    %1299 = vmatprep.subr.mxu0 0.0
    %1300 = vmatpush1.msra.mxu0 0.0
    %1301 = vmatprep.subr.mxu0 0.0
    %1302 = vmatpush1.msra.mxu0 0.0
    %1303 = vmatprep.subr.mxu0 0.0
    %1304 = vmatpush1.msra.mxu0 0.0
    %1305 = vmatprep.subr.mxu0 0.0
    %1306 = vmatpush1.msra.mxu0 0.0
    %1307 = vmatprep.mubr.f32.mxu0 0.0
    %1308 = vmatmul.mubr.f32.gmra.mrb[0].mxu0 %v1241
    %v1309 = vpop.f32.mrb[0].mxu0
    %v1310 = vadd.f32 0.0, %v1309
    %v1311 = vpop.f32.mrb[0].mxu0
    %1312 = vdwg.mxu0
    %v1313 = vadd.f32 %v1237, %v1310
    %v1314 = vxor.u32 %v1313, 2147483648
    %v1315 = vmul.f32 %v1314, 1.442695
    %v1316 = vpow.pop %v1315
    %v1317 = vadd.f32 %v1316, 1.0
    %v1318 = vrcp.pop %v1317
    %v1319 = vmul.f32 1.0, %v1318
    %v1320 = vadd.f32 %v1310, %v133
    %1322 = vrot.lane.b32.xlu0 %v1320, 64
    %v1323 = vpop.permute.xlu0 %1322
    %v1325 = vmul.f32 %v1319, %v1323
    %1327 = vrot.lane.b32.xlu0 %v1325, 64
    %v1328 = vpop.permute.xlu0 %1327
    %v1330 = vadd.f32 %v1237, %v1328
    %v1331 = vtanh.pop %v1330
    %v1332 = vsub.f32 1.0, %v1319
    %1334 = vrot.lane.b32.xlu0 %v1331, 96
    %v1335 = vpop.permute.xlu0 %1334
    %v1337 = vmul.f32 %v1332, %v1335
    %v1338 = vmul.f32 %v1319, %v1126
    %v1339 = vadd.f32 %v1337, %v1338
    %v1340 = vmul.f32 %v766, %v1339
    %v1341 = vmul.f32 %v773, %v1126
    %v1342 = vadd.f32 %v1340, %v1341
    %v1343 = vmul.f32 %v1342, %v766
    %s1344 = scalar_lea.vmem %s2, 20
    %v1345 = vld [vmem:[%s1344] sm:$0x3]
    %1347 = vrot.lane.b32.xlu0 %v1234, 96
    %v1348 = vpop.permute.xlu0 %1347
    %v1349 = vsel %vm46, %v1348, 0
    %1351 = vmatprep.subr.mxu0 0.0
    %1352 = vmatpush1.msra.mxu0 %v40
    %1353 = vmatprep.subr.mxu0 0.0
    %1354 = vmatpush1.msra.mxu0 %v41
    %1355 = vmatprep.subr.mxu0 0.0
    %1356 = vmatpush1.msra.mxu0 %v42
    %1357 = vmatprep.subr.mxu0 0.0
    %1358 = vmatpush1.msra.mxu0 %v43
    %1359 = vmatprep.subr.mxu0 0.0
    %1360 = vmatpush1.msra.mxu0 0.0
    %1361 = vmatprep.subr.mxu0 0.0
    %1362 = vmatpush1.msra.mxu0 0.0
    %1363 = vmatprep.subr.mxu0 0.0
    %1364 = vmatpush1.msra.mxu0 0.0
    %1365 = vmatprep.subr.mxu0 0.0
    %1366 = vmatpush1.msra.mxu0 0.0
    %1367 = vmatprep.subr.mxu0 0.0
    %1368 = vmatpush1.msra.mxu0 0.0
    %1369 = vmatprep.subr.mxu0 0.0
    %1370 = vmatpush1.msra.mxu0 0.0
    %1371 = vmatprep.subr.mxu0 0.0
    %1372 = vmatpush1.msra.mxu0 0.0
    %1373 = vmatprep.subr.mxu0 0.0
    %1374 = vmatpush1.msra.mxu0 0.0
    %1375 = vmatprep.subr.mxu0 0.0
    %1376 = vmatpush1.msra.mxu0 0.0
    %1377 = vmatprep.subr.mxu0 0.0
    %1378 = vmatpush1.msra.mxu0 0.0
    %1379 = vmatprep.subr.mxu0 0.0
    %1380 = vmatpush1.msra.mxu0 0.0
    %1381 = vmatprep.subr.mxu0 0.0
    %1382 = vmatpush1.msra.mxu0 0.0
    %1383 = vmatprep.subr.mxu0 0.0
    %1384 = vmatpush1.msra.mxu0 0.0
    %1385 = vmatprep.subr.mxu0 0.0
    %1386 = vmatpush1.msra.mxu0 0.0
    %1387 = vmatprep.subr.mxu0 0.0
    %1388 = vmatpush1.msra.mxu0 0.0
    %1389 = vmatprep.subr.mxu0 0.0
    %1390 = vmatpush1.msra.mxu0 0.0
    %1391 = vmatprep.subr.mxu0 0.0
    %1392 = vmatpush1.msra.mxu0 0.0
    %1393 = vmatprep.subr.mxu0 0.0
    %1394 = vmatpush1.msra.mxu0 0.0
    %1395 = vmatprep.subr.mxu0 0.0
    %1396 = vmatpush1.msra.mxu0 0.0
    %1397 = vmatprep.subr.mxu0 0.0
    %1398 = vmatpush1.msra.mxu0 0.0
    %1399 = vmatprep.subr.mxu0 0.0
    %1400 = vmatpush1.msra.mxu0 0.0
    %1401 = vmatprep.subr.mxu0 0.0
    %1402 = vmatpush1.msra.mxu0 0.0
    %1403 = vmatprep.subr.mxu0 0.0
    %1404 = vmatpush1.msra.mxu0 0.0
    %1405 = vmatprep.subr.mxu0 0.0
    %1406 = vmatpush1.msra.mxu0 0.0
    %1407 = vmatprep.subr.mxu0 0.0
    %1408 = vmatpush1.msra.mxu0 0.0
    %1409 = vmatprep.subr.mxu0 0.0
    %1410 = vmatpush1.msra.mxu0 0.0
    %1411 = vmatprep.subr.mxu0 0.0
    %1412 = vmatpush1.msra.mxu0 0.0
    %1413 = vmatprep.subr.mxu0 0.0
    %1414 = vmatpush1.msra.mxu0 0.0
    %1415 = vmatprep.mubr.f32.mxu0 0.0
    %1416 = vmatmul.mubr.f32.gmra.mrb[0].mxu0 %v1349
    %v1417 = vpop.f32.mrb[0].mxu0
    %v1418 = vadd.f32 0.0, %v1417
    %v1419 = vpop.f32.mrb[0].mxu0
    %1420 = vdwg.mxu0
    %v1421 = vadd.f32 %v1345, %v1418
    %v1422 = vxor.u32 %v1421, 2147483648
    %v1423 = vmul.f32 %v1422, 1.442695
    %v1424 = vpow.pop %v1423
    %v1425 = vadd.f32 %v1424, 1.0
    %v1426 = vrcp.pop %v1425
    %v1427 = vmul.f32 1.0, %v1426
    %v1428 = vadd.f32 %v1418, %v257
    %1430 = vrot.lane.b32.xlu0 %v1428, 64
    %v1431 = vpop.permute.xlu0 %1430
    %v1433 = vmul.f32 %v1427, %v1431
    %1435 = vrot.lane.b32.xlu0 %v1433, 64
    %v1436 = vpop.permute.xlu0 %1435
    %v1438 = vadd.f32 %v1345, %v1436
    %v1439 = vtanh.pop %v1438
    %v1440 = vsub.f32 1.0, %v1427
    %1442 = vrot.lane.b32.xlu0 %v1439, 96
    %v1443 = vpop.permute.xlu0 %1442
    %v1445 = vmul.f32 %v1440, %v1443
    %v1446 = vmul.f32 %v1427, %v1234
    %v1447 = vadd.f32 %v1445, %v1446
    %v1448 = vmul.f32 %v645, %v1447
    %v1449 = vmul.f32 %v652, %v1234
    %v1450 = vadd.f32 %v1448, %v1449
    %v1451 = vmul.f32 %v1450, %v645
    %s1452 = scalar_lea.vmem %s2, 12
    %v1453 = vld [vmem:[%s1452] sm:$0x3]
    %1455 = vrot.lane.b32.xlu0 %v1342, 96
    %v1456 = vpop.permute.xlu0 %1455
    %v1457 = vsel %vm46, %v1456, 0
    %1459 = vmatprep.subr.mxu0 0.0
    %1460 = vmatpush1.msra.mxu0 %v36
    %1461 = vmatprep.subr.mxu0 0.0
    %1462 = vmatpush1.msra.mxu0 %v37
    %1463 = vmatprep.subr.mxu0 0.0
    %1464 = vmatpush1.msra.mxu0 %v38
    %1465 = vmatprep.subr.mxu0 0.0
    %1466 = vmatpush1.msra.mxu0 %v39
    %1467 = vmatprep.subr.mxu0 0.0
    %1468 = vmatpush1.msra.mxu0 0.0
    %1469 = vmatprep.subr.mxu0 0.0
    %1470 = vmatpush1.msra.mxu0 0.0
    %1471 = vmatprep.subr.mxu0 0.0
    %1472 = vmatpush1.msra.mxu0 0.0
    %1473 = vmatprep.subr.mxu0 0.0
    %1474 = vmatpush1.msra.mxu0 0.0
    %1475 = vmatprep.subr.mxu0 0.0
    %1476 = vmatpush1.msra.mxu0 0.0
    %1477 = vmatprep.subr.mxu0 0.0
    %1478 = vmatpush1.msra.mxu0 0.0
    %1479 = vmatprep.subr.mxu0 0.0
    %1480 = vmatpush1.msra.mxu0 0.0
    %1481 = vmatprep.subr.mxu0 0.0
    %1482 = vmatpush1.msra.mxu0 0.0
    %1483 = vmatprep.subr.mxu0 0.0
    %1484 = vmatpush1.msra.mxu0 0.0
    %1485 = vmatprep.subr.mxu0 0.0
    %1486 = vmatpush1.msra.mxu0 0.0
    %1487 = vmatprep.subr.mxu0 0.0
    %1488 = vmatpush1.msra.mxu0 0.0
    %1489 = vmatprep.subr.mxu0 0.0
    %1490 = vmatpush1.msra.mxu0 0.0
    %1491 = vmatprep.subr.mxu0 0.0
    %1492 = vmatpush1.msra.mxu0 0.0
    %1493 = vmatprep.subr.mxu0 0.0
    %1494 = vmatpush1.msra.mxu0 0.0
    %1495 = vmatprep.subr.mxu0 0.0
    %1496 = vmatpush1.msra.mxu0 0.0
    %1497 = vmatprep.subr.mxu0 0.0
    %1498 = vmatpush1.msra.mxu0 0.0
    %1499 = vmatprep.subr.mxu0 0.0
    %1500 = vmatpush1.msra.mxu0 0.0
    %1501 = vmatprep.subr.mxu0 0.0
    %1502 = vmatpush1.msra.mxu0 0.0
    %1503 = vmatprep.subr.mxu0 0.0
    %1504 = vmatpush1.msra.mxu0 0.0
    %1505 = vmatprep.subr.mxu0 0.0
    %1506 = vmatpush1.msra.mxu0 0.0
    %1507 = vmatprep.subr.mxu0 0.0
    %1508 = vmatpush1.msra.mxu0 0.0
    %1509 = vmatprep.subr.mxu0 0.0
    %1510 = vmatpush1.msra.mxu0 0.0
    %1511 = vmatprep.subr.mxu0 0.0
    %1512 = vmatpush1.msra.mxu0 0.0
    %1513 = vmatprep.subr.mxu0 0.0
    %1514 = vmatpush1.msra.mxu0 0.0
    %1515 = vmatprep.subr.mxu0 0.0
    %1516 = vmatpush1.msra.mxu0 0.0
    %1517 = vmatprep.subr.mxu0 0.0
    %1518 = vmatpush1.msra.mxu0 0.0
    %1519 = vmatprep.subr.mxu0 0.0
    %1520 = vmatpush1.msra.mxu0 0.0
    %1521 = vmatprep.subr.mxu0 0.0
    %1522 = vmatpush1.msra.mxu0 0.0
    %1523 = vmatprep.mubr.f32.mxu0 0.0
    %1524 = vmatmul.mubr.f32.gmra.mrb[0].mxu0 %v1457
    %v1525 = vpop.f32.mrb[0].mxu0
    %v1526 = vadd.f32 0.0, %v1525
    %v1527 = vpop.f32.mrb[0].mxu0
    %1528 = vdwg.mxu0
    %v1529 = vadd.f32 %v1453, %v1526
    %v1530 = vxor.u32 %v1529, 2147483648
    %v1531 = vmul.f32 %v1530, 1.442695
    %v1532 = vpow.pop %v1531
    %v1533 = vadd.f32 %v1532, 1.0
    %v1534 = vrcp.pop %v1533
    %v1535 = vmul.f32 1.0, %v1534
    %v1536 = vadd.f32 %v1526, %v133
    %1538 = vrot.lane.b32.xlu0 %v1536, 64
    %v1539 = vpop.permute.xlu0 %1538
    %v1541 = vmul.f32 %v1535, %v1539
    %1543 = vrot.lane.b32.xlu0 %v1541, 64
    %v1544 = vpop.permute.xlu0 %1543
    %v1546 = vadd.f32 %v1453, %v1544
    %v1547 = vtanh.pop %v1546
    %v1548 = vsub.f32 1.0, %v1535
    %1550 = vrot.lane.b32.xlu0 %v1547, 96
    %v1551 = vpop.permute.xlu0 %1550
    %v1553 = vmul.f32 %v1548, %v1551
    %v1554 = vmul.f32 %v1535, %v1342
    %v1555 = vadd.f32 %v1553, %v1554
    %v1556 = vmul.f32 %v524, %v1555
    %v1557 = vmul.f32 %v531, %v1342
    %v1558 = vadd.f32 %v1556, %v1557
    %v1559 = vmul.f32 %v1558, %v524
    %s1560 = scalar_lea.vmem %s2, 18
    %v1561 = vld [vmem:[%s1560] sm:$0x3]
    %1563 = vrot.lane.b32.xlu0 %v1450, 96
    %v1564 = vpop.permute.xlu0 %1563
    %v1565 = vsel %vm46, %v1564, 0
    %1567 = vmatprep.subr.mxu0 0.0
    %1568 = vmatpush1.msra.mxu0 %v40
    %1569 = vmatprep.subr.mxu0 0.0
    %1570 = vmatpush1.msra.mxu0 %v41
    %1571 = vmatprep.subr.mxu0 0.0
    %1572 = vmatpush1.msra.mxu0 %v42
    %1573 = vmatprep.subr.mxu0 0.0
    %1574 = vmatpush1.msra.mxu0 %v43
    %1575 = vmatprep.subr.mxu0 0.0
    %1576 = vmatpush1.msra.mxu0 0.0
    %1577 = vmatprep.subr.mxu0 0.0
    %1578 = vmatpush1.msra.mxu0 0.0
    %1579 = vmatprep.subr.mxu0 0.0
    %1580 = vmatpush1.msra.mxu0 0.0
    %1581 = vmatprep.subr.mxu0 0.0
    %1582 = vmatpush1.msra.mxu0 0.0
    %1583 = vmatprep.subr.mxu0 0.0
    %1584 = vmatpush1.msra.mxu0 0.0
    %1585 = vmatprep.subr.mxu0 0.0
    %1586 = vmatpush1.msra.mxu0 0.0
    %1587 = vmatprep.subr.mxu0 0.0
    %1588 = vmatpush1.msra.mxu0 0.0
    %1589 = vmatprep.subr.mxu0 0.0
    %1590 = vmatpush1.msra.mxu0 0.0
    %1591 = vmatprep.subr.mxu0 0.0
    %1592 = vmatpush1.msra.mxu0 0.0
    %1593 = vmatprep.subr.mxu0 0.0
    %1594 = vmatpush1.msra.mxu0 0.0
    %1595 = vmatprep.subr.mxu0 0.0
    %1596 = vmatpush1.msra.mxu0 0.0
    %1597 = vmatprep.subr.mxu0 0.0
    %1598 = vmatpush1.msra.mxu0 0.0
    %1599 = vmatprep.subr.mxu0 0.0
    %1600 = vmatpush1.msra.mxu0 0.0
    %1601 = vmatprep.subr.mxu0 0.0
    %1602 = vmatpush1.msra.mxu0 0.0
    %1603 = vmatprep.subr.mxu0 0.0
    %1604 = vmatpush1.msra.mxu0 0.0
    %1605 = vmatprep.subr.mxu0 0.0
    %1606 = vmatpush1.msra.mxu0 0.0
    %1607 = vmatprep.subr.mxu0 0.0
    %1608 = vmatpush1.msra.mxu0 0.0
    %1609 = vmatprep.subr.mxu0 0.0
    %1610 = vmatpush1.msra.mxu0 0.0
    %1611 = vmatprep.subr.mxu0 0.0
    %1612 = vmatpush1.msra.mxu0 0.0
    %1613 = vmatprep.subr.mxu0 0.0
    %1614 = vmatpush1.msra.mxu0 0.0
    %1615 = vmatprep.subr.mxu0 0.0
    %1616 = vmatpush1.msra.mxu0 0.0
    %1617 = vmatprep.subr.mxu0 0.0
    %1618 = vmatpush1.msra.mxu0 0.0
    %1619 = vmatprep.subr.mxu0 0.0
    %1620 = vmatpush1.msra.mxu0 0.0
    %1621 = vmatprep.subr.mxu0 0.0
    %1622 = vmatpush1.msra.mxu0 0.0
    %1623 = vmatprep.subr.mxu0 0.0
    %1624 = vmatpush1.msra.mxu0 0.0
    %1625 = vmatprep.subr.mxu0 0.0
    %1626 = vmatpush1.msra.mxu0 0.0
    %1627 = vmatprep.subr.mxu0 0.0
    %1628 = vmatpush1.msra.mxu0 0.0
    %1629 = vmatprep.subr.mxu0 0.0
    %1630 = vmatpush1.msra.mxu0 0.0
    %1631 = vmatprep.mubr.f32.mxu0 0.0
    %1632 = vmatmul.mubr.f32.gmra.mrb[0].mxu0 %v1565
    %v1633 = vpop.f32.mrb[0].mxu0
    %v1634 = vadd.f32 0.0, %v1633
    %v1635 = vpop.f32.mrb[0].mxu0
    %1636 = vdwg.mxu0
    %v1637 = vadd.f32 %v1561, %v1634
    %v1638 = vxor.u32 %v1637, 2147483648
    %v1639 = vmul.f32 %v1638, 1.442695
    %v1640 = vpow.pop %v1639
    %v1641 = vadd.f32 %v1640, 1.0
    %v1642 = vrcp.pop %v1641
    %v1643 = vmul.f32 1.0, %v1642
    %v1644 = vadd.f32 %v1634, %v257
    %1646 = vrot.lane.b32.xlu0 %v1644, 64
    %v1647 = vpop.permute.xlu0 %1646
    %v1649 = vmul.f32 %v1643, %v1647
    %1651 = vrot.lane.b32.xlu0 %v1649, 64
    %v1652 = vpop.permute.xlu0 %1651
    %v1654 = vadd.f32 %v1561, %v1652
    %v1655 = vtanh.pop %v1654
    %v1656 = vsub.f32 1.0, %v1643
    %1658 = vrot.lane.b32.xlu0 %v1655, 96
    %v1659 = vpop.permute.xlu0 %1658
    %v1661 = vmul.f32 %v1656, %v1659
    %v1662 = vmul.f32 %v1643, %v1450
    %v1663 = vadd.f32 %v1661, %v1662
    %v1664 = vmul.f32 %v403, %v1663
    %v1665 = vmul.f32 %v410, %v1450
    %v1666 = vadd.f32 %v1664, %v1665
    %v1667 = vmul.f32 %v1666, %v403
    %s1668 = scalar_lea.vmem %s2, 14
    %v1669 = vld [vmem:[%s1668] sm:$0x3]
    %1671 = vrot.lane.b32.xlu0 %v1558, 96
    %v1672 = vpop.permute.xlu0 %1671
    %v1673 = vsel %vm46, %v1672, 0
    %1675 = vmatprep.subr.mxu0 0.0
    %1676 = vmatpush1.msra.mxu0 %v36
    %1677 = vmatprep.subr.mxu0 0.0
    %1678 = vmatpush1.msra.mxu0 %v37
    %1679 = vmatprep.subr.mxu0 0.0
    %1680 = vmatpush1.msra.mxu0 %v38
    %1681 = vmatprep.subr.mxu0 0.0
    %1682 = vmatpush1.msra.mxu0 %v39
    %1683 = vmatprep.subr.mxu0 0.0
    %1684 = vmatpush1.msra.mxu0 0.0
    %1685 = vmatprep.subr.mxu0 0.0
    %1686 = vmatpush1.msra.mxu0 0.0
    %1687 = vmatprep.subr.mxu0 0.0
    %1688 = vmatpush1.msra.mxu0 0.0
    %1689 = vmatprep.subr.mxu0 0.0
    %1690 = vmatpush1.msra.mxu0 0.0
    %1691 = vmatprep.subr.mxu0 0.0
    %1692 = vmatpush1.msra.mxu0 0.0
    %1693 = vmatprep.subr.mxu0 0.0
    %1694 = vmatpush1.msra.mxu0 0.0
    %1695 = vmatprep.subr.mxu0 0.0
    %1696 = vmatpush1.msra.mxu0 0.0
    %1697 = vmatprep.subr.mxu0 0.0
    %1698 = vmatpush1.msra.mxu0 0.0
    %1699 = vmatprep.subr.mxu0 0.0
    %1700 = vmatpush1.msra.mxu0 0.0
    %1701 = vmatprep.subr.mxu0 0.0
    %1702 = vmatpush1.msra.mxu0 0.0
    %1703 = vmatprep.subr.mxu0 0.0
    %1704 = vmatpush1.msra.mxu0 0.0
    %1705 = vmatprep.subr.mxu0 0.0
    %1706 = vmatpush1.msra.mxu0 0.0
    %1707 = vmatprep.subr.mxu0 0.0
    %1708 = vmatpush1.msra.mxu0 0.0
    %1709 = vmatprep.subr.mxu0 0.0
    %1710 = vmatpush1.msra.mxu0 0.0
    %1711 = vmatprep.subr.mxu0 0.0
    %1712 = vmatpush1.msra.mxu0 0.0
    %1713 = vmatprep.subr.mxu0 0.0
    %1714 = vmatpush1.msra.mxu0 0.0
    %1715 = vmatprep.subr.mxu0 0.0
    %1716 = vmatpush1.msra.mxu0 0.0
    %1717 = vmatprep.subr.mxu0 0.0
    %1718 = vmatpush1.msra.mxu0 0.0
    %1719 = vmatprep.subr.mxu0 0.0
    %1720 = vmatpush1.msra.mxu0 0.0
    %1721 = vmatprep.subr.mxu0 0.0
    %1722 = vmatpush1.msra.mxu0 0.0
    %1723 = vmatprep.subr.mxu0 0.0
    %1724 = vmatpush1.msra.mxu0 0.0
    %1725 = vmatprep.subr.mxu0 0.0
    %1726 = vmatpush1.msra.mxu0 0.0
    %1727 = vmatprep.subr.mxu0 0.0
    %1728 = vmatpush1.msra.mxu0 0.0
    %1729 = vmatprep.subr.mxu0 0.0
    %1730 = vmatpush1.msra.mxu0 0.0
    %1731 = vmatprep.subr.mxu0 0.0
    %1732 = vmatpush1.msra.mxu0 0.0
    %1733 = vmatprep.subr.mxu0 0.0
    %1734 = vmatpush1.msra.mxu0 0.0
    %1735 = vmatprep.subr.mxu0 0.0
    %1736 = vmatpush1.msra.mxu0 0.0
    %1737 = vmatprep.subr.mxu0 0.0
    %1738 = vmatpush1.msra.mxu0 0.0
    %1739 = vmatprep.mubr.f32.mxu0 0.0
    %1740 = vmatmul.mubr.f32.gmra.mrb[0].mxu0 %v1673
    %v1741 = vpop.f32.mrb[0].mxu0
    %v1742 = vadd.f32 0.0, %v1741
    %v1743 = vpop.f32.mrb[0].mxu0
    %1744 = vdwg.mxu0
    %v1745 = vadd.f32 %v1669, %v1742
    %v1746 = vxor.u32 %v1745, 2147483648
    %v1747 = vmul.f32 %v1746, 1.442695
    %v1748 = vpow.pop %v1747
    %v1749 = vadd.f32 %v1748, 1.0
    %v1750 = vrcp.pop %v1749
    %v1751 = vmul.f32 1.0, %v1750
    %v1752 = vadd.f32 %v1742, %v133
    %1754 = vrot.lane.b32.xlu0 %v1752, 64
    %v1755 = vpop.permute.xlu0 %1754
    %v1757 = vmul.f32 %v1751, %v1755
    %1759 = vrot.lane.b32.xlu0 %v1757, 64
    %v1760 = vpop.permute.xlu0 %1759
    %v1762 = vadd.f32 %v1669, %v1760
    %v1763 = vtanh.pop %v1762
    %v1764 = vsub.f32 1.0, %v1751
    %1766 = vrot.lane.b32.xlu0 %v1763, 96
    %v1767 = vpop.permute.xlu0 %1766
    %v1769 = vmul.f32 %v1764, %v1767
    %v1770 = vmul.f32 %v1751, %v1558
    %v1771 = vadd.f32 %v1769, %v1770
    %v1772 = vmul.f32 %v282, %v1771
    %v1773 = vmul.f32 %v289, %v1558
    %v1774 = vadd.f32 %v1772, %v1773
    %v1775 = vmul.f32 %v1774, %v282
    %s1776 = scalar_lea.vmem %s2, 16
    %v1777 = vld [vmem:[%s1776] sm:$0x3]
    %1779 = vrot.lane.b32.xlu0 %v1666, 96
    %v1780 = vpop.permute.xlu0 %1779
    %v1781 = vsel %vm46, %v1780, 0
    %1783 = vmatprep.subr.mxu0 0.0
    %1784 = vmatpush1.msra.mxu0 %v40
    %1785 = vmatprep.subr.mxu0 0.0
    %1786 = vmatpush1.msra.mxu0 %v41
    %1787 = vmatprep.subr.mxu0 0.0
    %1788 = vmatpush1.msra.mxu0 %v42
    %1789 = vmatprep.subr.mxu0 0.0
    %1790 = vmatpush1.msra.mxu0 %v43
    %1791 = vmatprep.subr.mxu0 0.0
    %1792 = vmatpush1.msra.mxu0 0.0
    %1793 = vmatprep.subr.mxu0 0.0
    %1794 = vmatpush1.msra.mxu0 0.0
    %1795 = vmatprep.subr.mxu0 0.0
    %1796 = vmatpush1.msra.mxu0 0.0
    %1797 = vmatprep.subr.mxu0 0.0
    %1798 = vmatpush1.msra.mxu0 0.0
    %1799 = vmatprep.subr.mxu0 0.0
    %1800 = vmatpush1.msra.mxu0 0.0
    %1801 = vmatprep.subr.mxu0 0.0
    %1802 = vmatpush1.msra.mxu0 0.0
    %1803 = vmatprep.subr.mxu0 0.0
    %1804 = vmatpush1.msra.mxu0 0.0
    %1805 = vmatprep.subr.mxu0 0.0
    %1806 = vmatpush1.msra.mxu0 0.0
    %1807 = vmatprep.subr.mxu0 0.0
    %1808 = vmatpush1.msra.mxu0 0.0
    %1809 = vmatprep.subr.mxu0 0.0
    %1810 = vmatpush1.msra.mxu0 0.0
    %1811 = vmatprep.subr.mxu0 0.0
    %1812 = vmatpush1.msra.mxu0 0.0
    %1813 = vmatprep.subr.mxu0 0.0
    %1814 = vmatpush1.msra.mxu0 0.0
    %1815 = vmatprep.subr.mxu0 0.0
    %1816 = vmatpush1.msra.mxu0 0.0
    %1817 = vmatprep.subr.mxu0 0.0
    %1818 = vmatpush1.msra.mxu0 0.0
    %1819 = vmatprep.subr.mxu0 0.0
    %1820 = vmatpush1.msra.mxu0 0.0
    %1821 = vmatprep.subr.mxu0 0.0
    %1822 = vmatpush1.msra.mxu0 0.0
    %1823 = vmatprep.subr.mxu0 0.0
    %1824 = vmatpush1.msra.mxu0 0.0
    %1825 = vmatprep.subr.mxu0 0.0
    %1826 = vmatpush1.msra.mxu0 0.0
    %1827 = vmatprep.subr.mxu0 0.0
    %1828 = vmatpush1.msra.mxu0 0.0
    %1829 = vmatprep.subr.mxu0 0.0
    %1830 = vmatpush1.msra.mxu0 0.0
    %1831 = vmatprep.subr.mxu0 0.0
    %1832 = vmatpush1.msra.mxu0 0.0
    %1833 = vmatprep.subr.mxu0 0.0
    %1834 = vmatpush1.msra.mxu0 0.0
    %1835 = vmatprep.subr.mxu0 0.0
    %1836 = vmatpush1.msra.mxu0 0.0
    %1837 = vmatprep.subr.mxu0 0.0
    %1838 = vmatpush1.msra.mxu0 0.0
    %1839 = vmatprep.subr.mxu0 0.0
    %1840 = vmatpush1.msra.mxu0 0.0
    %1841 = vmatprep.subr.mxu0 0.0
    %1842 = vmatpush1.msra.mxu0 0.0
    %1843 = vmatprep.subr.mxu0 0.0
    %1844 = vmatpush1.msra.mxu0 0.0
    %1845 = vmatprep.subr.mxu0 0.0
    %1846 = vmatpush1.msra.mxu0 0.0
    %1847 = vmatprep.mubr.f32.mxu0 0.0
    %1848 = vmatmul.mubr.f32.gmra.mrb[0].mxu0 %v1781
    %v1849 = vpop.f32.mrb[0].mxu0
    %v1850 = vadd.f32 0.0, %v1849
    %v1851 = vpop.f32.mrb[0].mxu0
    %1852 = vdwg.mxu0
    %v1853 = vadd.f32 %v1777, %v1850
    %v1854 = vxor.u32 %v1853, 2147483648
    %v1855 = vmul.f32 %v1854, 1.442695
    %v1856 = vpow.pop %v1855
    %v1857 = vadd.f32 %v1856, 1.0
    %v1858 = vrcp.pop %v1857
    %v1859 = vmul.f32 1.0, %v1858
    %v1860 = vadd.f32 %v1850, %v257
    %1862 = vrot.lane.b32.xlu0 %v1860, 64
    %v1863 = vpop.permute.xlu0 %1862
    %v1865 = vmul.f32 %v1859, %v1863
    %1867 = vrot.lane.b32.xlu0 %v1865, 64
    %v1868 = vpop.permute.xlu0 %1867
    %v1870 = vadd.f32 %v1777, %v1868
    %v1871 = vtanh.pop %v1870
    %v1872 = vsub.f32 1.0, %v1859
    %1874 = vrot.lane.b32.xlu0 %v1871, 96
    %v1875 = vpop.permute.xlu0 %1874
    %v1877 = vmul.f32 %v1872, %v1875
    %v1878 = vmul.f32 %v1859, %v1666
    %v1879 = vadd.f32 %v1877, %v1878
    %v1880 = vmul.f32 %v158, %v1879
    %v1881 = vmul.f32 %v165, %v1666
    %v1882 = vadd.f32 %v1880, %v1881
    %v1883 = vmul.f32 %v1882, %v158
    %v1884 = vld [vmem:[%s5] sm:$0xff]
    %v1885 = vld [vmem:[%s5 + $0x8] sm:$0xff]
    %v1886 = vld [vmem:[%s5 + $0x10] sm:$0xff]
    %v1887 = vld [vmem:[%s5 + $0x18] sm:$0xff]
    %v1888 = vld [vmem:[%s5 + $0x20] sm:$0xff]
    %v1889 = vld [vmem:[%s5 + $0x28] sm:$0xff]
    %v1890 = vld [vmem:[%s5 + $0x30] sm:$0xff]
    %v1891 = vld [vmem:[%s5 + $0x38] sm:$0xff]
    %1893 = vrot.lane.b32.xlu0 %v1882, 96
    %v1894 = vpop.permute.xlu0 %1893
    %v1895 = vsel %vm46, %v1894, 0
    %1897 = vmatprep.subr.mxu0 0.0
    %1898 = vmatpush1.msra.mxu0 %v1888
    %1899 = vmatprep.subr.mxu0 0.0
    %1900 = vmatpush1.msra.mxu0 %v1889
    %1901 = vmatprep.subr.mxu0 0.0
    %1902 = vmatpush1.msra.mxu0 %v1890
    %1903 = vmatprep.subr.mxu0 0.0
    %1904 = vmatpush1.msra.mxu0 %v1891
    %1905 = vmatprep.subr.mxu0 0.0
    %1906 = vmatpush1.msra.mxu0 0.0
    %1907 = vmatprep.subr.mxu0 0.0
    %1908 = vmatpush1.msra.mxu0 0.0
    %1909 = vmatprep.subr.mxu0 0.0
    %1910 = vmatpush1.msra.mxu0 0.0
    %1911 = vmatprep.subr.mxu0 0.0
    %1912 = vmatpush1.msra.mxu0 0.0
    %1913 = vmatprep.subr.mxu0 0.0
    %1914 = vmatpush1.msra.mxu0 0.0
    %1915 = vmatprep.subr.mxu0 0.0
    %1916 = vmatpush1.msra.mxu0 0.0
    %1917 = vmatprep.subr.mxu0 0.0
    %1918 = vmatpush1.msra.mxu0 0.0
    %1919 = vmatprep.subr.mxu0 0.0
    %1920 = vmatpush1.msra.mxu0 0.0
    %1921 = vmatprep.subr.mxu0 0.0
    %1922 = vmatpush1.msra.mxu0 0.0
    %1923 = vmatprep.subr.mxu0 0.0
    %1924 = vmatpush1.msra.mxu0 0.0
    %1925 = vmatprep.subr.mxu0 0.0
    %1926 = vmatpush1.msra.mxu0 0.0
    %1927 = vmatprep.subr.mxu0 0.0
    %1928 = vmatpush1.msra.mxu0 0.0
    %1929 = vmatprep.subr.mxu0 0.0
    %1930 = vmatpush1.msra.mxu0 0.0
    %1931 = vmatprep.subr.mxu0 0.0
    %1932 = vmatpush1.msra.mxu0 0.0
    %1933 = vmatprep.subr.mxu0 0.0
    %1934 = vmatpush1.msra.mxu0 0.0
    %1935 = vmatprep.subr.mxu0 0.0
    %1936 = vmatpush1.msra.mxu0 0.0
    %1937 = vmatprep.subr.mxu0 0.0
    %1938 = vmatpush1.msra.mxu0 0.0
    %1939 = vmatprep.subr.mxu0 0.0
    %1940 = vmatpush1.msra.mxu0 0.0
    %1941 = vmatprep.subr.mxu0 0.0
    %1942 = vmatpush1.msra.mxu0 0.0
    %1943 = vmatprep.subr.mxu0 0.0
    %1944 = vmatpush1.msra.mxu0 0.0
    %1945 = vmatprep.subr.mxu0 0.0
    %1946 = vmatpush1.msra.mxu0 0.0
    %1947 = vmatprep.subr.mxu0 0.0
    %1948 = vmatpush1.msra.mxu0 0.0
    %1949 = vmatprep.subr.mxu0 0.0
    %1950 = vmatpush1.msra.mxu0 0.0
    %1951 = vmatprep.subr.mxu0 0.0
    %1952 = vmatpush1.msra.mxu0 0.0
    %1953 = vmatprep.subr.mxu0 0.0
    %1954 = vmatpush1.msra.mxu0 0.0
    %1955 = vmatprep.subr.mxu0 0.0
    %1956 = vmatpush1.msra.mxu0 0.0
    %1957 = vmatprep.subr.mxu0 0.0
    %1958 = vmatpush1.msra.mxu0 0.0
    %1959 = vmatprep.subr.mxu0 0.0
    %1960 = vmatpush1.msra.mxu0 0.0
    %1961 = vmatprep.mubr.f32.mxu0 0.0
    %1962 = vmatmul.mubr.f32.gmra.mrb[0].mxu0 %v1895
    %v1963 = vpop.f32.mrb[0].mxu0
    %v1964 = vadd.f32 0.0, %v1963
    %v1965 = vpop.f32.mrb[0].mxu0
    %1966 = vdwg.mxu0
    %1968 = vrot.lane.b32.xlu0 %v1774, 96
    %v1969 = vpop.permute.xlu0 %1968
    %v1970 = vsel %vm46, %v1969, 0
    %1972 = vmatprep.subr.mxu0 0.0
    %1973 = vmatpush1.msra.mxu0 %v1884
    %1974 = vmatprep.subr.mxu0 0.0
    %1975 = vmatpush1.msra.mxu0 %v1885
    %1976 = vmatprep.subr.mxu0 0.0
    %1977 = vmatpush1.msra.mxu0 %v1886
    %1978 = vmatprep.subr.mxu0 0.0
    %1979 = vmatpush1.msra.mxu0 %v1887
    %1980 = vmatprep.subr.mxu0 0.0
    %1981 = vmatpush1.msra.mxu0 0.0
    %1982 = vmatprep.subr.mxu0 0.0
    %1983 = vmatpush1.msra.mxu0 0.0
    %1984 = vmatprep.subr.mxu0 0.0
    %1985 = vmatpush1.msra.mxu0 0.0
    %1986 = vmatprep.subr.mxu0 0.0
    %1987 = vmatpush1.msra.mxu0 0.0
    %1988 = vmatprep.subr.mxu0 0.0
    %1989 = vmatpush1.msra.mxu0 0.0
    %1990 = vmatprep.subr.mxu0 0.0
    %1991 = vmatpush1.msra.mxu0 0.0
    %1992 = vmatprep.subr.mxu0 0.0
    %1993 = vmatpush1.msra.mxu0 0.0
    %1994 = vmatprep.subr.mxu0 0.0
    %1995 = vmatpush1.msra.mxu0 0.0
    %1996 = vmatprep.subr.mxu0 0.0
    %1997 = vmatpush1.msra.mxu0 0.0
    %1998 = vmatprep.subr.mxu0 0.0
    %1999 = vmatpush1.msra.mxu0 0.0
    %2000 = vmatprep.subr.mxu0 0.0
    %2001 = vmatpush1.msra.mxu0 0.0
    %2002 = vmatprep.subr.mxu0 0.0
    %2003 = vmatpush1.msra.mxu0 0.0
    %2004 = vmatprep.subr.mxu0 0.0
    %2005 = vmatpush1.msra.mxu0 0.0
    %2006 = vmatprep.subr.mxu0 0.0
    %2007 = vmatpush1.msra.mxu0 0.0
    %2008 = vmatprep.subr.mxu0 0.0
    %2009 = vmatpush1.msra.mxu0 0.0
    %2010 = vmatprep.subr.mxu0 0.0
    %2011 = vmatpush1.msra.mxu0 0.0
    %2012 = vmatprep.subr.mxu0 0.0
    %2013 = vmatpush1.msra.mxu0 0.0
    %2014 = vmatprep.subr.mxu0 0.0
    %2015 = vmatpush1.msra.mxu0 0.0
    %2016 = vmatprep.subr.mxu0 0.0
    %2017 = vmatpush1.msra.mxu0 0.0
    %2018 = vmatprep.subr.mxu0 0.0
    %2019 = vmatpush1.msra.mxu0 0.0
    %2020 = vmatprep.subr.mxu0 0.0
    %2021 = vmatpush1.msra.mxu0 0.0
    %2022 = vmatprep.subr.mxu0 0.0
    %2023 = vmatpush1.msra.mxu0 0.0
    %2024 = vmatprep.subr.mxu0 0.0
    %2025 = vmatpush1.msra.mxu0 0.0
    %2026 = vmatprep.subr.mxu0 0.0
    %2027 = vmatpush1.msra.mxu0 0.0
    %2028 = vmatprep.subr.mxu0 0.0
    %2029 = vmatpush1.msra.mxu0 0.0
    %2030 = vmatprep.subr.mxu0 0.0
    %2031 = vmatpush1.msra.mxu0 0.0
    %2032 = vmatprep.subr.mxu0 0.0
    %2033 = vmatpush1.msra.mxu0 0.0
    %2034 = vmatprep.subr.mxu0 0.0
    %2035 = vmatpush1.msra.mxu0 0.0
    %2036 = vmatprep.mubr.f32.mxu0 0.0
    %2037 = vmatmul.mubr.f32.gmra.mrb[0].mxu0 %v1970
    %v2038 = vpop.f32.mrb[0].mxu0
    %v2039 = vadd.f32 %v1964, %v2038
    %v2040 = vpop.f32.mrb[0].mxu0
    %2041 = vdwg.mxu0
    %v2042 = vlaneseq
    %v2043 = vshrl.u32 %v2042, 7
    %v2044 = vsub.s32 0, %v2043
    %v2045 = vrot.slane %v31, %v2044
    %v2046 = vadd.f32 %v2039, %v2045
    %v2047 = vtanh.pop %v2046
    %v2049 = vrot.slane %v414, 7
    %v2052 = vrot.slane %v656, 6
    %v2055 = vrot.slane %v898, 5
    %v2058 = vrot.slane %v1127, 4
    %v2061 = vrot.slane %v1343, 3
    %v2064 = vrot.slane %v1559, 2
    %v2067 = vrot.slane %v1775, 1
    %vm2069 = vcmask 1040384
    %v2070 = vsel %vm2069, %v169, %v2049
    %vm2071 = vcmask 1041408
    %v2072 = vsel %vm2071, %v2070, %v2052
    %vm2073 = vcmask 1042432
    %v2074 = vsel %vm2073, %v2072, %v2055
    %vm2075 = vcmask 1043456
    %v2076 = vsel %vm2075, %v2074, %v2058
    %vm2077 = vcmask 1044480
    %v2078 = vsel %vm2077, %v2076, %v2061
    %vm2079 = vcmask 1045504
    %v2080 = vsel %vm2079, %v2078, %v2064
    %vm2081 = vcmask 1046528
    %v2082 = vsel %vm2081, %v2080, %v2067
    %v2084 = vrot.slane %v169, 1
    %v2086 = vrot.slane %v656, 7
    %v2088 = vrot.slane %v898, 6
    %v2090 = vrot.slane %v1127, 5
    %v2092 = vrot.slane %v1343, 4
    %v2094 = vrot.slane %v1559, 3
    %v2096 = vrot.slane %v1775, 2
    %v2098 = vsel %vm2069, %v2084, %v414
    %v2099 = vsel %vm2071, %v2098, %v2086
    %v2100 = vsel %vm2073, %v2099, %v2088
    %v2101 = vsel %vm2075, %v2100, %v2090
    %v2102 = vsel %vm2077, %v2101, %v2092
    %v2103 = vsel %vm2079, %v2102, %v2094
    %v2104 = vsel %vm2081, %v2103, %v2096
    %v2106 = vrot.slane %v1667, 7
    %v2109 = vrot.slane %v1451, 6
    %v2112 = vrot.slane %v1235, 5
    %v2115 = vrot.slane %v1019, 4
    %v2118 = vrot.slane %v777, 3
    %v2121 = vrot.slane %v535, 2
    %v2124 = vrot.slane %v293, 1
    %v2126 = vsel %vm2069, %v1883, %v2106
    %v2127 = vsel %vm2071, %v2126, %v2109
    %v2128 = vsel %vm2073, %v2127, %v2112
    %v2129 = vsel %vm2075, %v2128, %v2115
    %v2130 = vsel %vm2077, %v2129, %v2118
    %v2131 = vsel %vm2079, %v2130, %v2121
    %v2132 = vsel %vm2081, %v2131, %v2124
    %v2134 = vrot.slane %v1883, 1
    %v2136 = vrot.slane %v1451, 7
    %v2138 = vrot.slane %v1235, 6
    %v2140 = vrot.slane %v1019, 5
    %v2142 = vrot.slane %v777, 4
    %v2144 = vrot.slane %v535, 3
    %v2146 = vrot.slane %v293, 2
    %v2148 = vsel %vm2069, %v2134, %v1667
    %v2149 = vsel %vm2071, %v2148, %v2136
    %v2150 = vsel %vm2073, %v2149, %v2138
    %v2151 = vsel %vm2075, %v2150, %v2140
    %v2152 = vsel %vm2077, %v2151, %v2142
    %v2153 = vsel %vm2079, %v2152, %v2144
    %v2154 = vsel %vm2081, %v2153, %v2146
    %v2155 = vld [vmem:[%s5 + $0x40] sm:$0xff]
    %v2156 = vld [vmem:[%s5 + $0x48] sm:$0xff]
    %v2157 = vld [vmem:[%s5 + $0x50] sm:$0xff]
    %v2158 = vld [vmem:[%s5 + $0x58] sm:$0xff]
    %v2159 = vld [vmem:[%s5 + $0x60] sm:$0xff]
    %v2160 = vld [vmem:[%s5 + $0x68] sm:$0xff]
    %v2161 = vld [vmem:[%s5 + $0x70] sm:$0xff]
    %v2162 = vld [vmem:[%s5 + $0x78] sm:$0xff]
    %2164 = vrot.lane.b32.xlu0 %v2132, 96
    %v2165 = vpop.permute.xlu0 %2164
    %v2166 = vsel %vm46, %v2165, 0
    %2168 = vmatprep.subr.mxu0 0.0
    %2169 = vmatpush1.msra.mxu0 %v2159
    %2170 = vmatprep.subr.mxu0 0.0
    %2171 = vmatpush1.msra.mxu0 %v2160
    %2172 = vmatprep.subr.mxu0 0.0
    %2173 = vmatpush1.msra.mxu0 %v2161
    %2174 = vmatprep.subr.mxu0 0.0
    %2175 = vmatpush1.msra.mxu0 %v2162
    %2176 = vmatprep.subr.mxu0 0.0
    %2177 = vmatpush1.msra.mxu0 0.0
    %2178 = vmatprep.subr.mxu0 0.0
    %2179 = vmatpush1.msra.mxu0 0.0
    %2180 = vmatprep.subr.mxu0 0.0
    %2181 = vmatpush1.msra.mxu0 0.0
    %2182 = vmatprep.subr.mxu0 0.0
    %2183 = vmatpush1.msra.mxu0 0.0
    %2184 = vmatprep.subr.mxu0 0.0
    %2185 = vmatpush1.msra.mxu0 0.0
    %2186 = vmatprep.subr.mxu0 0.0
    %2187 = vmatpush1.msra.mxu0 0.0
    %2188 = vmatprep.subr.mxu0 0.0
    %2189 = vmatpush1.msra.mxu0 0.0
    %2190 = vmatprep.subr.mxu0 0.0
    %2191 = vmatpush1.msra.mxu0 0.0
    %2192 = vmatprep.subr.mxu0 0.0
    %2193 = vmatpush1.msra.mxu0 0.0
    %2194 = vmatprep.subr.mxu0 0.0
    %2195 = vmatpush1.msra.mxu0 0.0
    %2196 = vmatprep.subr.mxu0 0.0
    %2197 = vmatpush1.msra.mxu0 0.0
    %2198 = vmatprep.subr.mxu0 0.0
    %2199 = vmatpush1.msra.mxu0 0.0
    %2200 = vmatprep.subr.mxu0 0.0
    %2201 = vmatpush1.msra.mxu0 0.0
    %2202 = vmatprep.subr.mxu0 0.0
    %2203 = vmatpush1.msra.mxu0 0.0
    %2204 = vmatprep.subr.mxu0 0.0
    %2205 = vmatpush1.msra.mxu0 0.0
    %2206 = vmatprep.subr.mxu0 0.0
    %2207 = vmatpush1.msra.mxu0 0.0
    %2208 = vmatprep.subr.mxu0 0.0
    %2209 = vmatpush1.msra.mxu0 0.0
    %2210 = vmatprep.subr.mxu0 0.0
    %2211 = vmatpush1.msra.mxu0 0.0
    %2212 = vmatprep.subr.mxu0 0.0
    %2213 = vmatpush1.msra.mxu0 0.0
    %2214 = vmatprep.subr.mxu0 0.0
    %2215 = vmatpush1.msra.mxu0 0.0
    %2216 = vmatprep.subr.mxu0 0.0
    %2217 = vmatpush1.msra.mxu0 0.0
    %2218 = vmatprep.subr.mxu0 0.0
    %2219 = vmatpush1.msra.mxu0 0.0
    %2220 = vmatprep.subr.mxu0 0.0
    %2221 = vmatpush1.msra.mxu0 0.0
    %2222 = vmatprep.subr.mxu0 0.0
    %2223 = vmatpush1.msra.mxu0 0.0
    %2224 = vmatprep.subr.mxu0 0.0
    %2225 = vmatpush1.msra.mxu0 0.0
    %2226 = vmatprep.subr.mxu0 0.0
    %2227 = vmatpush1.msra.mxu0 0.0
    %2228 = vmatprep.subr.mxu0 0.0
    %2229 = vmatpush1.msra.mxu0 0.0
    %2230 = vmatprep.subr.mxu0 0.0
    %2231 = vmatpush1.msra.mxu0 0.0
    %2232 = vmatprep.mubr.f32.mxu0 0.0
    %2233 = vmatmul.mubr.f32.gmra.mrb[0].mxu0 %v2166
    %v2234 = vpop.f32.mrb[0].mxu0
    %v2235 = vadd.f32 0.0, %v2234
    %v2236 = vpop.f32.mrb[0].mxu0
    %2237 = vdwg.mxu0
    %2239 = vrot.lane.b32.xlu0 %v2082, 96
    %v2240 = vpop.permute.xlu0 %2239
    %v2241 = vsel %vm46, %v2240, 0
    %2243 = vmatprep.subr.mxu0 0.0
    %2244 = vmatpush1.msra.mxu0 %v2155
    %2245 = vmatprep.subr.mxu0 0.0
    %2246 = vmatpush1.msra.mxu0 %v2156
    %2247 = vmatprep.subr.mxu0 0.0
    %2248 = vmatpush1.msra.mxu0 %v2157
    %2249 = vmatprep.subr.mxu0 0.0
    %2250 = vmatpush1.msra.mxu0 %v2158
    %2251 = vmatprep.subr.mxu0 0.0
    %2252 = vmatpush1.msra.mxu0 0.0
    %2253 = vmatprep.subr.mxu0 0.0
    %2254 = vmatpush1.msra.mxu0 0.0
    %2255 = vmatprep.subr.mxu0 0.0
    %2256 = vmatpush1.msra.mxu0 0.0
    %2257 = vmatprep.subr.mxu0 0.0
    %2258 = vmatpush1.msra.mxu0 0.0
    %2259 = vmatprep.subr.mxu0 0.0
    %2260 = vmatpush1.msra.mxu0 0.0
    %2261 = vmatprep.subr.mxu0 0.0
    %2262 = vmatpush1.msra.mxu0 0.0
    %2263 = vmatprep.subr.mxu0 0.0
    %2264 = vmatpush1.msra.mxu0 0.0
    %2265 = vmatprep.subr.mxu0 0.0
    %2266 = vmatpush1.msra.mxu0 0.0
    %2267 = vmatprep.subr.mxu0 0.0
    %2268 = vmatpush1.msra.mxu0 0.0
    %2269 = vmatprep.subr.mxu0 0.0
    %2270 = vmatpush1.msra.mxu0 0.0
    %2271 = vmatprep.subr.mxu0 0.0
    %2272 = vmatpush1.msra.mxu0 0.0
    %2273 = vmatprep.subr.mxu0 0.0
    %2274 = vmatpush1.msra.mxu0 0.0
    %2275 = vmatprep.subr.mxu0 0.0
    %2276 = vmatpush1.msra.mxu0 0.0
    %2277 = vmatprep.subr.mxu0 0.0
    %2278 = vmatpush1.msra.mxu0 0.0
    %2279 = vmatprep.subr.mxu0 0.0
    %2280 = vmatpush1.msra.mxu0 0.0
    %2281 = vmatprep.subr.mxu0 0.0
    %2282 = vmatpush1.msra.mxu0 0.0
    %2283 = vmatprep.subr.mxu0 0.0
    %2284 = vmatpush1.msra.mxu0 0.0
    %2285 = vmatprep.subr.mxu0 0.0
    %2286 = vmatpush1.msra.mxu0 0.0
    %2287 = vmatprep.subr.mxu0 0.0
    %2288 = vmatpush1.msra.mxu0 0.0
    %2289 = vmatprep.subr.mxu0 0.0
    %2290 = vmatpush1.msra.mxu0 0.0
    %2291 = vmatprep.subr.mxu0 0.0
    %2292 = vmatpush1.msra.mxu0 0.0
    %2293 = vmatprep.subr.mxu0 0.0
    %2294 = vmatpush1.msra.mxu0 0.0
    %2295 = vmatprep.subr.mxu0 0.0
    %2296 = vmatpush1.msra.mxu0 0.0
    %2297 = vmatprep.subr.mxu0 0.0
    %2298 = vmatpush1.msra.mxu0 0.0
    %2299 = vmatprep.subr.mxu0 0.0
    %2300 = vmatpush1.msra.mxu0 0.0
    %2301 = vmatprep.subr.mxu0 0.0
    %2302 = vmatpush1.msra.mxu0 0.0
    %2303 = vmatprep.subr.mxu0 0.0
    %2304 = vmatpush1.msra.mxu0 0.0
    %2305 = vmatprep.subr.mxu0 0.0
    %2306 = vmatpush1.msra.mxu0 0.0
    %2307 = vmatprep.mubr.f32.mxu0 0.0
    %2308 = vmatmul.mubr.f32.gmra.mrb[0].mxu0 %v2241
    %v2309 = vpop.f32.mrb[0].mxu0
    %v2310 = vadd.f32 %v2235, %v2309
    %v2311 = vpop.f32.mrb[0].mxu0
    %2312 = vdwg.mxu0
    %2314 = vrot.lane.b32.xlu0 %v2154, 96
    %v2315 = vpop.permute.xlu0 %2314
    %v2316 = vsel %vm46, %v2315, 0
    %2318 = vmatprep.subr.mxu0 0.0
    %2319 = vmatpush1.msra.mxu0 %v2159
    %2320 = vmatprep.subr.mxu0 0.0
    %2321 = vmatpush1.msra.mxu0 %v2160
    %2322 = vmatprep.subr.mxu0 0.0
    %2323 = vmatpush1.msra.mxu0 %v2161
    %2324 = vmatprep.subr.mxu0 0.0
    %2325 = vmatpush1.msra.mxu0 %v2162
    %2326 = vmatprep.subr.mxu0 0.0
    %2327 = vmatpush1.msra.mxu0 0.0
    %2328 = vmatprep.subr.mxu0 0.0
    %2329 = vmatpush1.msra.mxu0 0.0
    %2330 = vmatprep.subr.mxu0 0.0
    %2331 = vmatpush1.msra.mxu0 0.0
    %2332 = vmatprep.subr.mxu0 0.0
    %2333 = vmatpush1.msra.mxu0 0.0
    %2334 = vmatprep.subr.mxu0 0.0
    %2335 = vmatpush1.msra.mxu0 0.0
    %2336 = vmatprep.subr.mxu0 0.0
    %2337 = vmatpush1.msra.mxu0 0.0
    %2338 = vmatprep.subr.mxu0 0.0
    %2339 = vmatpush1.msra.mxu0 0.0
    %2340 = vmatprep.subr.mxu0 0.0
    %2341 = vmatpush1.msra.mxu0 0.0
    %2342 = vmatprep.subr.mxu0 0.0
    %2343 = vmatpush1.msra.mxu0 0.0
    %2344 = vmatprep.subr.mxu0 0.0
    %2345 = vmatpush1.msra.mxu0 0.0
    %2346 = vmatprep.subr.mxu0 0.0
    %2347 = vmatpush1.msra.mxu0 0.0
    %2348 = vmatprep.subr.mxu0 0.0
    %2349 = vmatpush1.msra.mxu0 0.0
    %2350 = vmatprep.subr.mxu0 0.0
    %2351 = vmatpush1.msra.mxu0 0.0
    %2352 = vmatprep.subr.mxu0 0.0
    %2353 = vmatpush1.msra.mxu0 0.0
    %2354 = vmatprep.subr.mxu0 0.0
    %2355 = vmatpush1.msra.mxu0 0.0
    %2356 = vmatprep.subr.mxu0 0.0
    %2357 = vmatpush1.msra.mxu0 0.0
    %2358 = vmatprep.subr.mxu0 0.0
    %2359 = vmatpush1.msra.mxu0 0.0
    %2360 = vmatprep.subr.mxu0 0.0
    %2361 = vmatpush1.msra.mxu0 0.0
    %2362 = vmatprep.subr.mxu0 0.0
    %2363 = vmatpush1.msra.mxu0 0.0
    %2364 = vmatprep.subr.mxu0 0.0
    %2365 = vmatpush1.msra.mxu0 0.0
    %2366 = vmatprep.subr.mxu0 0.0
    %2367 = vmatpush1.msra.mxu0 0.0
    %2368 = vmatprep.subr.mxu0 0.0
    %2369 = vmatpush1.msra.mxu0 0.0
    %2370 = vmatprep.subr.mxu0 0.0
    %2371 = vmatpush1.msra.mxu0 0.0
    %2372 = vmatprep.subr.mxu0 0.0
    %2373 = vmatpush1.msra.mxu0 0.0
    %2374 = vmatprep.subr.mxu0 0.0
    %2375 = vmatpush1.msra.mxu0 0.0
    %2376 = vmatprep.subr.mxu0 0.0
    %2377 = vmatpush1.msra.mxu0 0.0
    %2378 = vmatprep.subr.mxu0 0.0
    %2379 = vmatpush1.msra.mxu0 0.0
    %2380 = vmatprep.subr.mxu0 0.0
    %2381 = vmatpush1.msra.mxu0 0.0
    %2382 = vmatprep.mubr.f32.mxu0 0.0
    %2383 = vmatmul.mubr.f32.gmra.mrb[0].mxu0 %v2316
    %v2384 = vpop.f32.mrb[0].mxu0
    %v2385 = vadd.f32 0.0, %v2384
    %v2386 = vpop.f32.mrb[0].mxu0
    %2387 = vdwg.mxu0
    %2389 = vrot.lane.b32.xlu0 %v2104, 96
    %v2390 = vpop.permute.xlu0 %2389
    %v2391 = vsel %vm46, %v2390, 0
    %2393 = vmatprep.subr.mxu0 0.0
    %2394 = vmatpush1.msra.mxu0 %v2155
    %2395 = vmatprep.subr.mxu0 0.0
    %2396 = vmatpush1.msra.mxu0 %v2156
    %2397 = vmatprep.subr.mxu0 0.0
    %2398 = vmatpush1.msra.mxu0 %v2157
    %2399 = vmatprep.subr.mxu0 0.0
    %2400 = vmatpush1.msra.mxu0 %v2158
    %2401 = vmatprep.subr.mxu0 0.0
    %2402 = vmatpush1.msra.mxu0 0.0
    %2403 = vmatprep.subr.mxu0 0.0
    %2404 = vmatpush1.msra.mxu0 0.0
    %2405 = vmatprep.subr.mxu0 0.0
    %2406 = vmatpush1.msra.mxu0 0.0
    %2407 = vmatprep.subr.mxu0 0.0
    %2408 = vmatpush1.msra.mxu0 0.0
    %2409 = vmatprep.subr.mxu0 0.0
    %2410 = vmatpush1.msra.mxu0 0.0
    %2411 = vmatprep.subr.mxu0 0.0
    %2412 = vmatpush1.msra.mxu0 0.0
    %2413 = vmatprep.subr.mxu0 0.0
    %2414 = vmatpush1.msra.mxu0 0.0
    %2415 = vmatprep.subr.mxu0 0.0
    %2416 = vmatpush1.msra.mxu0 0.0
    %2417 = vmatprep.subr.mxu0 0.0
    %2418 = vmatpush1.msra.mxu0 0.0
    %2419 = vmatprep.subr.mxu0 0.0
    %2420 = vmatpush1.msra.mxu0 0.0
    %2421 = vmatprep.subr.mxu0 0.0
    %2422 = vmatpush1.msra.mxu0 0.0
    %2423 = vmatprep.subr.mxu0 0.0
    %2424 = vmatpush1.msra.mxu0 0.0
    %2425 = vmatprep.subr.mxu0 0.0
    %2426 = vmatpush1.msra.mxu0 0.0
    %2427 = vmatprep.subr.mxu0 0.0
    %2428 = vmatpush1.msra.mxu0 0.0
    %2429 = vmatprep.subr.mxu0 0.0
    %2430 = vmatpush1.msra.mxu0 0.0
    %2431 = vmatprep.subr.mxu0 0.0
    %2432 = vmatpush1.msra.mxu0 0.0
    %2433 = vmatprep.subr.mxu0 0.0
    %2434 = vmatpush1.msra.mxu0 0.0
    %2435 = vmatprep.subr.mxu0 0.0
    %2436 = vmatpush1.msra.mxu0 0.0
    %2437 = vmatprep.subr.mxu0 0.0
    %2438 = vmatpush1.msra.mxu0 0.0
    %2439 = vmatprep.subr.mxu0 0.0
    %2440 = vmatpush1.msra.mxu0 0.0
    %2441 = vmatprep.subr.mxu0 0.0
    %2442 = vmatpush1.msra.mxu0 0.0
    %2443 = vmatprep.subr.mxu0 0.0
    %2444 = vmatpush1.msra.mxu0 0.0
    %2445 = vmatprep.subr.mxu0 0.0
    %2446 = vmatpush1.msra.mxu0 0.0
    %2447 = vmatprep.subr.mxu0 0.0
    %2448 = vmatpush1.msra.mxu0 0.0
    %2449 = vmatprep.subr.mxu0 0.0
    %2450 = vmatpush1.msra.mxu0 0.0
    %2451 = vmatprep.subr.mxu0 0.0
    %2452 = vmatpush1.msra.mxu0 0.0
    %2453 = vmatprep.subr.mxu0 0.0
    %2454 = vmatpush1.msra.mxu0 0.0
    %2455 = vmatprep.subr.mxu0 0.0
    %2456 = vmatpush1.msra.mxu0 0.0
    %2457 = vmatprep.mubr.f32.mxu0 0.0
    %2458 = vmatmul.mubr.f32.gmra.mrb[0].mxu0 %v2391
    %v2459 = vpop.f32.mrb[0].mxu0
    %v2460 = vadd.f32 %v2385, %v2459
    %v2461 = vpop.f32.mrb[0].mxu0
    %2462 = vdwg.mxu0
    %v2463 = vld [vmem:[%s1] sm:$0xff]
    %s2464 = scalar_lea.vmem %s1, 8
    %v2465 = vld [vmem:[%s2464] sm:$0xff]
    %v2466 = vlaneseq
    %v2467 = vshrl.u32 %v2466, 7
    %v2468 = vsub.s32 0, %v2467
    %v2469 = vrot.slane %v32, %v2468
    %v2470 = vld [vmem:[%s4 + $0x40] sm:$0xff]
    %v2471 = vld [vmem:[%s4 + $0x48] sm:$0xff]
    %v2472 = vld [vmem:[%s4 + $0x50] sm:$0xff]
    %v2473 = vld [vmem:[%s4 + $0x58] sm:$0xff]
    %v2474 = vld [vmem:[%s4 + $0x60] sm:$0xff]
    %v2475 = vld [vmem:[%s4 + $0x68] sm:$0xff]
    %v2476 = vld [vmem:[%s4 + $0x70] sm:$0xff]
    %v2477 = vld [vmem:[%s4 + $0x78] sm:$0xff]
    %v2478 = vld [vmem:[%s4 + $0x80] sm:$0xff]
    %v2479 = vld [vmem:[%s4 + $0x88] sm:$0xff]
    %v2480 = vld [vmem:[%s4 + $0x90] sm:$0xff]
    %v2481 = vld [vmem:[%s4 + $0x98] sm:$0xff]
    %v2482 = vld [vmem:[%s5 + $0x80] sm:$0xff]
    %v2483 = vld [vmem:[%s5 + $0x88] sm:$0xff]
    %v2484 = vld [vmem:[%s5 + $0x90] sm:$0xff]
    %v2485 = vld [vmem:[%s5 + $0x98] sm:$0xff]
    %v2486 = vld [vmem:[%s5 + $0xa0] sm:$0xff]
    %v2487 = vld [vmem:[%s5 + $0xa8] sm:$0xff]
    %v2488 = vld [vmem:[%s5 + $0xb0] sm:$0xff]
    %v2489 = vld [vmem:[%s5 + $0xb8] sm:$0xff]
    %v2490 = vld [vmem:[%s5 + $0xc0] sm:$0xff]
    %v2491 = vld [vmem:[%s5 + $0xc8] sm:$0xff]
    %v2492 = vld [vmem:[%s5 + $0xd0] sm:$0xff]
    %v2493 = vld [vmem:[%s5 + $0xd8] sm:$0xff]
    %v2494 = vld [vmem:[%s5 + $0xe0] sm:$0xff]
    %v2495 = vld [vmem:[%s5 + $0xe8] sm:$0xff]
    %v2496 = vld [vmem:[%s5 + $0xf0] sm:$0xff]
    %v2497 = vld [vmem:[%s5 + $0xf8] sm:$0xff]
    %v2499 = vsel %vm46, %v2047, 0
    %2501 = vmatprep.subr.mxu0 0.0
    %2502 = vmatpush1.msra.mxu0 %v2482
    %2503 = vmatprep.subr.mxu0 0.0
    %2504 = vmatpush1.msra.mxu0 %v2483
    %2505 = vmatprep.subr.mxu0 0.0
    %2506 = vmatpush1.msra.mxu0 %v2484
    %2507 = vmatprep.subr.mxu0 0.0
    %2508 = vmatpush1.msra.mxu0 %v2485
    %2509 = vmatprep.subr.mxu0 0.0
    %2510 = vmatpush1.msra.mxu0 0.0
    %2511 = vmatprep.subr.mxu0 0.0
    %2512 = vmatpush1.msra.mxu0 0.0
    %2513 = vmatprep.subr.mxu0 0.0
    %2514 = vmatpush1.msra.mxu0 0.0
    %2515 = vmatprep.subr.mxu0 0.0
    %2516 = vmatpush1.msra.mxu0 0.0
    %2517 = vmatprep.subr.mxu0 0.0
    %2518 = vmatpush1.msra.mxu0 0.0
    %2519 = vmatprep.subr.mxu0 0.0
    %2520 = vmatpush1.msra.mxu0 0.0
    %2521 = vmatprep.subr.mxu0 0.0
    %2522 = vmatpush1.msra.mxu0 0.0
    %2523 = vmatprep.subr.mxu0 0.0
    %2524 = vmatpush1.msra.mxu0 0.0
    %2525 = vmatprep.subr.mxu0 0.0
    %2526 = vmatpush1.msra.mxu0 0.0
    %2527 = vmatprep.subr.mxu0 0.0
    %2528 = vmatpush1.msra.mxu0 0.0
    %2529 = vmatprep.subr.mxu0 0.0
    %2530 = vmatpush1.msra.mxu0 0.0
    %2531 = vmatprep.subr.mxu0 0.0
    %2532 = vmatpush1.msra.mxu0 0.0
    %2533 = vmatprep.subr.mxu0 0.0
    %2534 = vmatpush1.msra.mxu0 0.0
    %2535 = vmatprep.subr.mxu0 0.0
    %2536 = vmatpush1.msra.mxu0 0.0
    %2537 = vmatprep.subr.mxu0 0.0
    %2538 = vmatpush1.msra.mxu0 0.0
    %2539 = vmatprep.subr.mxu0 0.0
    %2540 = vmatpush1.msra.mxu0 0.0
    %2541 = vmatprep.subr.mxu0 0.0
    %2542 = vmatpush1.msra.mxu0 0.0
    %2543 = vmatprep.subr.mxu0 0.0
    %2544 = vmatpush1.msra.mxu0 0.0
    %2545 = vmatprep.subr.mxu0 0.0
    %2546 = vmatpush1.msra.mxu0 0.0
    %2547 = vmatprep.subr.mxu0 0.0
    %2548 = vmatpush1.msra.mxu0 0.0
    %2549 = vmatprep.subr.mxu0 0.0
    %2550 = vmatpush1.msra.mxu0 0.0
    %2551 = vmatprep.subr.mxu0 0.0
    %2552 = vmatpush1.msra.mxu0 0.0
    %2553 = vmatprep.subr.mxu0 0.0
    %2554 = vmatpush1.msra.mxu0 0.0
    %2555 = vmatprep.subr.mxu0 0.0
    %2556 = vmatpush1.msra.mxu0 0.0
    %2557 = vmatprep.subr.mxu0 0.0
    %2558 = vmatpush1.msra.mxu0 0.0
    %2559 = vmatprep.subr.mxu0 0.0
    %2560 = vmatpush1.msra.mxu0 0.0
    %2561 = vmatprep.subr.mxu0 0.0
    %2562 = vmatpush1.msra.mxu0 0.0
    %2563 = vmatprep.subr.mxu0 0.0
    %2564 = vmatpush1.msra.mxu0 0.0
    %2565 = vmatprep.mubr.f32.mxu0 0.0
    %2566 = vmatmul.mubr.f32.gmra.mrb[0].mxu0 %v2499
    %v2567 = vpop.f32.mrb[0].mxu0
    %v2568 = vadd.f32 0.0, %v2567
    %v2569 = vpop.f32.mrb[0].mxu0
    %2570 = vdwg.mxu0
    %v2571 = vlaneseq
    %v2572 = vshrl.u32 %v2571, 7
    %v2573 = vsub.s32 0, %v2572
    %v2574 = vrot.slane %v2568, %v2573
    %v2575 = vadd.f32 %v2310, %v2574
    %v2576 = vtanh.pop %v2575
    %v2577 = vmul.f32 %v2576, %v2469
    %v2578 = vsel %vm46, %v2577, 0.0
    %2579 = vadd.xlane.f32.xlu0 %v2578
    %v2580 = vpop.xlane.xlu0 %2579
    %v2581 = vadd.f32 %v2580, %v2463
    %vm2582 = vcmask 7168
    %v2583 = vsel %vm2582, %v2581, -inf
    %v2584 = vrot.slane %v2583, 4
    %v2585 = vmax.f32 %v2583, %v2584
    %v2586 = vrot.slane %v2585, 2
    %v2587 = vmax.f32 %v2585, %v2586
    %v2588 = vrot.slane %v2587, 1
    %v2589 = vmax.f32 %v2587, %v2588
    %v2590 = vsub.f32 %v2581, %v2589
    %v2591 = vmul.f32 %v2590, 1.442695
    %v2592 = vpow.pop %v2591
    %v2593 = vsel %vm2582, %v2592, 0.0
    %v2594 = vrot.slane %v2593, 4
    %v2595 = vadd.f32 %v2593, %v2594
    %v2596 = vrot.slane %v2595, 2
    %v2597 = vadd.f32 %v2595, %v2596
    %v2598 = vrot.slane %v2597, 1
    %v2599 = vadd.f32 %v2597, %v2598
    %v2600 = vrcp.pop %v2599
    %v2601 = vmul.f32 %v2592, %v2600
    %2603 = vset.pattern.permute.xlu0 0
    %2604 = vperm.xlu0 %2603, %v2601
    %v2605 = vpop.permute.xlu0 %2604
    %v2607 = vmul.f32 %v2605, %v2082
    %vm2608 = vcmask 523520
    %v2609 = vsel %vm2608, %v2607, 0.0
    %v2610 = vrot.slane %v2609, 4
    %v2611 = vadd.f32 %v2609, %v2610
    %v2612 = vrot.slane %v2611, 2
    %v2613 = vadd.f32 %v2611, %v2612
    %v2614 = vrot.slane %v2613, 1
    %v2615 = vadd.f32 %v2613, %v2614
    %v2616 = vmul.f32 %v2605, %v2132
    %v2617 = vsel %vm2608, %v2616, 0.0
    %v2618 = vrot.slane %v2617, 4
    %v2619 = vadd.f32 %v2617, %v2618
    %v2620 = vrot.slane %v2619, 2
    %v2621 = vadd.f32 %v2619, %v2620
    %v2622 = vrot.slane %v2621, 1
    %v2623 = vadd.f32 %v2621, %v2622
    %v2624 = vlaneseq
    %v2625 = vshrl.u32 %v2624, 7
    %v2626 = vsub.s32 1, %v2625
    %v2627 = vrot.slane %v2568, %v2626
    %v2628 = vadd.f32 %v2460, %v2627
    %v2629 = vtanh.pop %v2628
    %v2630 = vmul.f32 %v2629, %v2469
    %v2631 = vsel %vm46, %v2630, 0.0
    %2632 = vadd.xlane.f32.xlu0 %v2631
    %v2633 = vpop.xlane.xlu0 %2632
    %v2634 = vadd.f32 %v2633, %v2465
    %v2635 = vsel %vm2582, %v2634, -inf
    %v2636 = vrot.slane %v2635, 4
    %v2637 = vmax.f32 %v2635, %v2636
    %v2638 = vrot.slane %v2637, 2
    %v2639 = vmax.f32 %v2637, %v2638
    %v2640 = vrot.slane %v2639, 1
    %v2641 = vmax.f32 %v2639, %v2640
    %v2642 = vsub.f32 %v2634, %v2641
    %v2643 = vmul.f32 %v2642, 1.442695
    %v2644 = vpow.pop %v2643
    %v2645 = vsel %vm2582, %v2644, 0.0
    %v2646 = vrot.slane %v2645, 4
    %v2647 = vadd.f32 %v2645, %v2646
    %v2648 = vrot.slane %v2647, 2
    %v2649 = vadd.f32 %v2647, %v2648
    %v2650 = vrot.slane %v2649, 1
    %v2651 = vadd.f32 %v2649, %v2650
    %v2652 = vrcp.pop %v2651
    %v2653 = vmul.f32 %v2644, %v2652
    %2655 = vset.pattern.permute.xlu0 0
    %2656 = vperm.xlu0 %2655, %v2653
    %v2657 = vpop.permute.xlu0 %2656
    %v2659 = vmul.f32 %v2657, %v2104
    %v2660 = vsel %vm2608, %v2659, 0.0
    %v2661 = vrot.slane %v2660, 4
    %v2662 = vadd.f32 %v2660, %v2661
    %v2663 = vrot.slane %v2662, 2
    %v2664 = vadd.f32 %v2662, %v2663
    %v2665 = vrot.slane %v2664, 1
    %v2666 = vadd.f32 %v2664, %v2665
    %v2667 = vmul.f32 %v2657, %v2154
    %v2668 = vsel %vm2608, %v2667, 0.0
    %v2669 = vrot.slane %v2668, 4
    %v2670 = vadd.f32 %v2668, %v2669
    %v2671 = vrot.slane %v2670, 2
    %v2672 = vadd.f32 %v2670, %v2671
    %v2673 = vrot.slane %v2672, 1
    %v2674 = vadd.f32 %v2672, %v2673
    %v2675 = vsel %vm2069, %v2615, %v2666
    %v2676 = vsel %vm2069, %v2623, %v2674
    %v2677 = vld [vmem:[%s3] sm:$0x3]
    %2679 = vrot.lane.b32.xlu0 %v2675, 96
    %v2680 = vpop.permute.xlu0 %2679
    %v2681 = vsel %vm46, %v2680, 0
    %2683 = vmatprep.subr.mxu0 0.0
    %2684 = vmatpush1.msra.mxu0 %v2474
    %2685 = vmatprep.subr.mxu0 0.0
    %2686 = vmatpush1.msra.mxu0 %v2475
    %2687 = vmatprep.subr.mxu0 0.0
    %2688 = vmatpush1.msra.mxu0 %v2476
    %2689 = vmatprep.subr.mxu0 0.0
    %2690 = vmatpush1.msra.mxu0 %v2477
    %2691 = vmatprep.subr.mxu0 0.0
    %2692 = vmatpush1.msra.mxu0 0.0
    %2693 = vmatprep.subr.mxu0 0.0
    %2694 = vmatpush1.msra.mxu0 0.0
    %2695 = vmatprep.subr.mxu0 0.0
    %2696 = vmatpush1.msra.mxu0 0.0
    %2697 = vmatprep.subr.mxu0 0.0
    %2698 = vmatpush1.msra.mxu0 0.0
    %2699 = vmatprep.subr.mxu0 0.0
    %2700 = vmatpush1.msra.mxu0 0.0
    %2701 = vmatprep.subr.mxu0 0.0
    %2702 = vmatpush1.msra.mxu0 0.0
    %2703 = vmatprep.subr.mxu0 0.0
    %2704 = vmatpush1.msra.mxu0 0.0
    %2705 = vmatprep.subr.mxu0 0.0
    %2706 = vmatpush1.msra.mxu0 0.0
    %2707 = vmatprep.subr.mxu0 0.0
    %2708 = vmatpush1.msra.mxu0 0.0
    %2709 = vmatprep.subr.mxu0 0.0
    %2710 = vmatpush1.msra.mxu0 0.0
    %2711 = vmatprep.subr.mxu0 0.0
    %2712 = vmatpush1.msra.mxu0 0.0
    %2713 = vmatprep.subr.mxu0 0.0
    %2714 = vmatpush1.msra.mxu0 0.0
    %2715 = vmatprep.subr.mxu0 0.0
    %2716 = vmatpush1.msra.mxu0 0.0
    %2717 = vmatprep.subr.mxu0 0.0
    %2718 = vmatpush1.msra.mxu0 0.0
    %2719 = vmatprep.subr.mxu0 0.0
    %2720 = vmatpush1.msra.mxu0 0.0
    %2721 = vmatprep.subr.mxu0 0.0
    %2722 = vmatpush1.msra.mxu0 0.0
    %2723 = vmatprep.subr.mxu0 0.0
    %2724 = vmatpush1.msra.mxu0 0.0
    %2725 = vmatprep.subr.mxu0 0.0
    %2726 = vmatpush1.msra.mxu0 0.0
    %2727 = vmatprep.subr.mxu0 0.0
    %2728 = vmatpush1.msra.mxu0 0.0
    %2729 = vmatprep.subr.mxu0 0.0
    %2730 = vmatpush1.msra.mxu0 0.0
    %2731 = vmatprep.subr.mxu0 0.0
    %2732 = vmatpush1.msra.mxu0 0.0
    %2733 = vmatprep.subr.mxu0 0.0
    %2734 = vmatpush1.msra.mxu0 0.0
    %2735 = vmatprep.subr.mxu0 0.0
    %2736 = vmatpush1.msra.mxu0 0.0
    %2737 = vmatprep.subr.mxu0 0.0
    %2738 = vmatpush1.msra.mxu0 0.0
    %2739 = vmatprep.subr.mxu0 0.0
    %2740 = vmatpush1.msra.mxu0 0.0
    %2741 = vmatprep.subr.mxu0 0.0
    %2742 = vmatpush1.msra.mxu0 0.0
    %2743 = vmatprep.subr.mxu0 0.0
    %2744 = vmatpush1.msra.mxu0 0.0
    %2745 = vmatprep.subr.mxu0 0.0
    %2746 = vmatpush1.msra.mxu0 0.0
    %2747 = vmatprep.mubr.f32.mxu0 0.0
    %2748 = vmatmul.mubr.f32.gmra.mrb[0].mxu0 %v2681
    %v2749 = vpop.f32.mrb[0].mxu0
    %v2750 = vadd.f32 0.0, %v2749
    %v2751 = vpop.f32.mrb[0].mxu0
    %2752 = vdwg.mxu0
    %v2753 = vadd.f32 %v2677, %v2750
    %2755 = vrot.lane.b32.xlu0 %v2676, 96
    %v2756 = vpop.permute.xlu0 %2755
    %v2757 = vsel %vm46, %v2756, 0
    %2759 = vmatprep.subr.mxu0 0.0
    %2760 = vmatpush1.msra.mxu0 %v2478
    %2761 = vmatprep.subr.mxu0 0.0
    %2762 = vmatpush1.msra.mxu0 %v2479
    %2763 = vmatprep.subr.mxu0 0.0
    %2764 = vmatpush1.msra.mxu0 %v2480
    %2765 = vmatprep.subr.mxu0 0.0
    %2766 = vmatpush1.msra.mxu0 %v2481
    %2767 = vmatprep.subr.mxu0 0.0
    %2768 = vmatpush1.msra.mxu0 0.0
    %2769 = vmatprep.subr.mxu0 0.0
    %2770 = vmatpush1.msra.mxu0 0.0
    %2771 = vmatprep.subr.mxu0 0.0
    %2772 = vmatpush1.msra.mxu0 0.0
    %2773 = vmatprep.subr.mxu0 0.0
    %2774 = vmatpush1.msra.mxu0 0.0
    %2775 = vmatprep.subr.mxu0 0.0
    %2776 = vmatpush1.msra.mxu0 0.0
    %2777 = vmatprep.subr.mxu0 0.0
    %2778 = vmatpush1.msra.mxu0 0.0
    %2779 = vmatprep.subr.mxu0 0.0
    %2780 = vmatpush1.msra.mxu0 0.0
    %2781 = vmatprep.subr.mxu0 0.0
    %2782 = vmatpush1.msra.mxu0 0.0
    %2783 = vmatprep.subr.mxu0 0.0
    %2784 = vmatpush1.msra.mxu0 0.0
    %2785 = vmatprep.subr.mxu0 0.0
    %2786 = vmatpush1.msra.mxu0 0.0
    %2787 = vmatprep.subr.mxu0 0.0
    %2788 = vmatpush1.msra.mxu0 0.0
    %2789 = vmatprep.subr.mxu0 0.0
    %2790 = vmatpush1.msra.mxu0 0.0
    %2791 = vmatprep.subr.mxu0 0.0
    %2792 = vmatpush1.msra.mxu0 0.0
    %2793 = vmatprep.subr.mxu0 0.0
    %2794 = vmatpush1.msra.mxu0 0.0
    %2795 = vmatprep.subr.mxu0 0.0
    %2796 = vmatpush1.msra.mxu0 0.0
    %2797 = vmatprep.subr.mxu0 0.0
    %2798 = vmatpush1.msra.mxu0 0.0
    %2799 = vmatprep.subr.mxu0 0.0
    %2800 = vmatpush1.msra.mxu0 0.0
    %2801 = vmatprep.subr.mxu0 0.0
    %2802 = vmatpush1.msra.mxu0 0.0
    %2803 = vmatprep.subr.mxu0 0.0
    %2804 = vmatpush1.msra.mxu0 0.0
    %2805 = vmatprep.subr.mxu0 0.0
    %2806 = vmatpush1.msra.mxu0 0.0
    %2807 = vmatprep.subr.mxu0 0.0
    %2808 = vmatpush1.msra.mxu0 0.0
    %2809 = vmatprep.subr.mxu0 0.0
    %2810 = vmatpush1.msra.mxu0 0.0
    %2811 = vmatprep.subr.mxu0 0.0
    %2812 = vmatpush1.msra.mxu0 0.0
    %2813 = vmatprep.subr.mxu0 0.0
    %2814 = vmatpush1.msra.mxu0 0.0
    %2815 = vmatprep.subr.mxu0 0.0
    %2816 = vmatpush1.msra.mxu0 0.0
    %2817 = vmatprep.subr.mxu0 0.0
    %2818 = vmatpush1.msra.mxu0 0.0
    %2819 = vmatprep.subr.mxu0 0.0
    %2820 = vmatpush1.msra.mxu0 0.0
    %2821 = vmatprep.subr.mxu0 0.0
    %2822 = vmatpush1.msra.mxu0 0.0
    %2823 = vmatprep.mubr.f32.mxu0 0.0
    %2824 = vmatmul.mubr.f32.gmra.mrb[0].mxu0 %v2757
    %v2825 = vpop.f32.mrb[0].mxu0
    %v2826 = vadd.f32 0.0, %v2825
    %v2827 = vpop.f32.mrb[0].mxu0
    %2828 = vdwg.mxu0
    %v2829 = vadd.f32 %v2753, %v2826
    %2830 = vmatprep.subr.mxu0 0.0
    %2831 = vmatpush1.msra.mxu0 %v2470
    %2832 = vmatprep.subr.mxu0 0.0
    %2833 = vmatpush1.msra.mxu0 %v2471
    %2834 = vmatprep.subr.mxu0 0.0
    %2835 = vmatpush1.msra.mxu0 %v2472
    %2836 = vmatprep.subr.mxu0 0.0
    %2837 = vmatpush1.msra.mxu0 %v2473
    %2838 = vmatprep.subr.mxu0 0.0
    %2839 = vmatpush1.msra.mxu0 0.0
    %2840 = vmatprep.subr.mxu0 0.0
    %2841 = vmatpush1.msra.mxu0 0.0
    %2842 = vmatprep.subr.mxu0 0.0
    %2843 = vmatpush1.msra.mxu0 0.0
    %2844 = vmatprep.subr.mxu0 0.0
    %2845 = vmatpush1.msra.mxu0 0.0
    %2846 = vmatprep.subr.mxu0 0.0
    %2847 = vmatpush1.msra.mxu0 0.0
    %2848 = vmatprep.subr.mxu0 0.0
    %2849 = vmatpush1.msra.mxu0 0.0
    %2850 = vmatprep.subr.mxu0 0.0
    %2851 = vmatpush1.msra.mxu0 0.0
    %2852 = vmatprep.subr.mxu0 0.0
    %2853 = vmatpush1.msra.mxu0 0.0
    %2854 = vmatprep.subr.mxu0 0.0
    %2855 = vmatpush1.msra.mxu0 0.0
    %2856 = vmatprep.subr.mxu0 0.0
    %2857 = vmatpush1.msra.mxu0 0.0
    %2858 = vmatprep.subr.mxu0 0.0
    %2859 = vmatpush1.msra.mxu0 0.0
    %2860 = vmatprep.subr.mxu0 0.0
    %2861 = vmatpush1.msra.mxu0 0.0
    %2862 = vmatprep.subr.mxu0 0.0
    %2863 = vmatpush1.msra.mxu0 0.0
    %2864 = vmatprep.subr.mxu0 0.0
    %2865 = vmatpush1.msra.mxu0 0.0
    %2866 = vmatprep.subr.mxu0 0.0
    %2867 = vmatpush1.msra.mxu0 0.0
    %2868 = vmatprep.subr.mxu0 0.0
    %2869 = vmatpush1.msra.mxu0 0.0
    %2870 = vmatprep.subr.mxu0 0.0
    %2871 = vmatpush1.msra.mxu0 0.0
    %2872 = vmatprep.subr.mxu0 0.0
    %2873 = vmatpush1.msra.mxu0 0.0
    %2874 = vmatprep.subr.mxu0 0.0
    %2875 = vmatpush1.msra.mxu0 0.0
    %2876 = vmatprep.subr.mxu0 0.0
    %2877 = vmatpush1.msra.mxu0 0.0
    %2878 = vmatprep.subr.mxu0 0.0
    %2879 = vmatpush1.msra.mxu0 0.0
    %2880 = vmatprep.subr.mxu0 0.0
    %2881 = vmatpush1.msra.mxu0 0.0
    %2882 = vmatprep.subr.mxu0 0.0
    %2883 = vmatpush1.msra.mxu0 0.0
    %2884 = vmatprep.subr.mxu0 0.0
    %2885 = vmatpush1.msra.mxu0 0.0
    %2886 = vmatprep.subr.mxu0 0.0
    %2887 = vmatpush1.msra.mxu0 0.0
    %2888 = vmatprep.subr.mxu0 0.0
    %2889 = vmatpush1.msra.mxu0 0.0
    %2890 = vmatprep.subr.mxu0 0.0
    %2891 = vmatpush1.msra.mxu0 0.0
    %2892 = vmatprep.subr.mxu0 0.0
    %2893 = vmatpush1.msra.mxu0 0.0
    %2894 = vmatprep.mubr.f32.mxu0 0.0
    %2895 = vmatmul.mubr.f32.gmra.mrb[0].mxu0 %v2499
    %v2896 = vpop.f32.mrb[0].mxu0
    %v2897 = vadd.f32 0.0, %v2896
    %v2898 = vpop.f32.mrb[0].mxu0
    %2899 = vdwg.mxu0
    %v2900 = vadd.f32 %v2829, %v2897
    %v2901 = vxor.u32 %v2900, 2147483648
    %v2902 = vmul.f32 %v2901, 1.442695
    %v2903 = vpow.pop %v2902
    %v2904 = vadd.f32 %v2903, 1.0
    %v2905 = vrcp.pop %v2904
    %v2906 = vmul.f32 1.0, %v2905
    %v2907 = vlaneseq
    %v2908 = vshrl.u32 %v2907, 7
    %v2909 = vsub.s32 0, %v2908
    %v2910 = vrot.slane %v35, %v2909
    %2912 = vrot.lane.b32.xlu0 %v2910, 64
    %v2913 = vpop.permute.xlu0 %2912
    %v2915 = vadd.f32 %v2897, %v2913
    %2917 = vrot.lane.b32.xlu0 %v2915, 64
    %v2918 = vpop.permute.xlu0 %2917
    %v2920 = vmul.f32 %v2906, %v2918
    %2922 = vrot.lane.b32.xlu0 %v2920, 64
    %v2923 = vpop.permute.xlu0 %2922
    %v2925 = vadd.f32 %v2829, %v2923
    %v2926 = vtanh.pop %v2925
    %v2927 = vsub.f32 1.0, %v2906
    %2929 = vrot.lane.b32.xlu0 %v2926, 96
    %v2930 = vpop.permute.xlu0 %2929
    %v2932 = vmul.f32 %v2927, %v2930
    %2933 = vrot.lane.b32.xlu0 %v2047, 32
    %v2934 = vpop.permute.xlu0 %2933
    %v2936 = vmul.f32 %v2906, %v2934
    %v2937 = vadd.f32 %v2932, %v2936
    %v2940 = vunpack.c.l.s4 1966171168
    %v2941 = vunpack.c.0.s8 %v2940
    %v2942 = vlaneseq
    %v2943 = vshrl.u32 %v2942, 7
    %v2944 = vsub.s32 %v2941, %v2943
    %v2945 = vrot.slane %v2937, %v2944
    %v2946 = vcombine.high %v2945, %v2945
    %v2948 = vunpack.c.l.s4 1966171168
    %v2949 = vunpack.c.0.s8 %v2948
    %v2950 = vlaneseq
    %v2951 = vshrl.u32 %v2950, 7
    %v2952 = vsub.s32 %v2949, %v2951
    %v2953 = vrot.slane %v2945, %v2952
    %v2955 = vunpack.c.l.s4 1966171168
    %v2956 = vunpack.c.0.s8 %v2955
    %v2957 = vlaneseq
    %v2958 = vshrl.u32 %v2957, 7
    %v2959 = vsub.s32 %v2956, %v2958
    %v2960 = vrot.slane %v2946, %v2959
    %v2961 = vlaneseq
    %v2962 = vshrl.u32 %v2961, 7
    %v2963 = vsub.s32 0, %v2962
    %v2964 = vrot.slane %v2953, %v2963
    %v2965 = vlaneseq
    %v2966 = vshrl.u32 %v2965, 7
    %v2967 = vsub.s32 0, %v2966
    %v2968 = vrot.slane %v2960, %v2967
    %2969 = vrot.lane.b32.xlu0 %v2964, 96
    %v2970 = vpop.permute.xlu0 %2969
    %2971 = vrot.lane.b32.xlu0 %v2968, 96
    %v2972 = vpop.permute.xlu0 %2971
    %vm2975 = vcmask 253952
    %2976 = vst.msk [vmem:[#allocation2] sm:$0x1] %vm2975, %v2970
    %2977 = vst.msk [vmem:[#allocation2 + $0x8] sm:$0x1] %vm2975, %v2972
    %v2978 = vld [vmem:[%s3] sm:$0x3]
    %2979 = vrot.lane.b32.xlu0 %v2937, 96
    %v2980 = vpop.permute.xlu0 %2979
    %v2981 = vsel %vm46, %v2980, 0
    %2983 = vmatprep.subr.mxu0 0.0
    %2984 = vmatpush1.msra.mxu0 %v2486
    %2985 = vmatprep.subr.mxu0 0.0
    %2986 = vmatpush1.msra.mxu0 %v2487
    %2987 = vmatprep.subr.mxu0 0.0
    %2988 = vmatpush1.msra.mxu0 %v2488
    %2989 = vmatprep.subr.mxu0 0.0
    %2990 = vmatpush1.msra.mxu0 %v2489
    %2991 = vmatprep.subr.mxu0 0.0
    %2992 = vmatpush1.msra.mxu0 0.0
    %2993 = vmatprep.subr.mxu0 0.0
    %2994 = vmatpush1.msra.mxu0 0.0
    %2995 = vmatprep.subr.mxu0 0.0
    %2996 = vmatpush1.msra.mxu0 0.0
    %2997 = vmatprep.subr.mxu0 0.0
    %2998 = vmatpush1.msra.mxu0 0.0
    %2999 = vmatprep.subr.mxu0 0.0
    %3000 = vmatpush1.msra.mxu0 0.0
    %3001 = vmatprep.subr.mxu0 0.0
    %3002 = vmatpush1.msra.mxu0 0.0
    %3003 = vmatprep.subr.mxu0 0.0
    %3004 = vmatpush1.msra.mxu0 0.0
    %3005 = vmatprep.subr.mxu0 0.0
    %3006 = vmatpush1.msra.mxu0 0.0
    %3007 = vmatprep.subr.mxu0 0.0
    %3008 = vmatpush1.msra.mxu0 0.0
    %3009 = vmatprep.subr.mxu0 0.0
    %3010 = vmatpush1.msra.mxu0 0.0
    %3011 = vmatprep.subr.mxu0 0.0
    %3012 = vmatpush1.msra.mxu0 0.0
    %3013 = vmatprep.subr.mxu0 0.0
    %3014 = vmatpush1.msra.mxu0 0.0
    %3015 = vmatprep.subr.mxu0 0.0
    %3016 = vmatpush1.msra.mxu0 0.0
    %3017 = vmatprep.subr.mxu0 0.0
    %3018 = vmatpush1.msra.mxu0 0.0
    %3019 = vmatprep.subr.mxu0 0.0
    %3020 = vmatpush1.msra.mxu0 0.0
    %3021 = vmatprep.subr.mxu0 0.0
    %3022 = vmatpush1.msra.mxu0 0.0
    %3023 = vmatprep.subr.mxu0 0.0
    %3024 = vmatpush1.msra.mxu0 0.0
    %3025 = vmatprep.subr.mxu0 0.0
    %3026 = vmatpush1.msra.mxu0 0.0
    %3027 = vmatprep.subr.mxu0 0.0
    %3028 = vmatpush1.msra.mxu0 0.0
    %3029 = vmatprep.subr.mxu0 0.0
    %3030 = vmatpush1.msra.mxu0 0.0
    %3031 = vmatprep.subr.mxu0 0.0
    %3032 = vmatpush1.msra.mxu0 0.0
    %3033 = vmatprep.subr.mxu0 0.0
    %3034 = vmatpush1.msra.mxu0 0.0
    %3035 = vmatprep.subr.mxu0 0.0
    %3036 = vmatpush1.msra.mxu0 0.0
    %3037 = vmatprep.subr.mxu0 0.0
    %3038 = vmatpush1.msra.mxu0 0.0
    %3039 = vmatprep.subr.mxu0 0.0
    %3040 = vmatpush1.msra.mxu0 0.0
    %3041 = vmatprep.subr.mxu0 0.0
    %3042 = vmatpush1.msra.mxu0 0.0
    %3043 = vmatprep.subr.mxu0 0.0
    %3044 = vmatpush1.msra.mxu0 0.0
    %3045 = vmatprep.subr.mxu0 0.0
    %3046 = vmatpush1.msra.mxu0 0.0
    %3047 = vmatprep.mubr.f32.mxu0 0.0
    %3048 = vmatmul.mubr.f32.gmra.mrb[0].mxu0 %v2981
    %v3049 = vpop.f32.mrb[0].mxu0
    %v3050 = vadd.f32 0.0, %v3049
    %v3051 = vpop.f32.mrb[0].mxu0
    %3052 = vdwg.mxu0
    %3054 = vrot.lane.b32.xlu0 %v3050, 96
    %v3055 = vpop.permute.xlu0 %3054
    %v3057 = vadd.f32 %v2978, %v3055
    %3058 = vmatprep.subr.mxu0 0.0
    %3059 = vmatpush1.msra.mxu0 %v2490
    %3060 = vmatprep.subr.mxu0 0.0
    %3061 = vmatpush1.msra.mxu0 %v2491
    %3062 = vmatprep.subr.mxu0 0.0
    %3063 = vmatpush1.msra.mxu0 %v2492
    %3064 = vmatprep.subr.mxu0 0.0
    %3065 = vmatpush1.msra.mxu0 %v2493
    %3066 = vmatprep.subr.mxu0 0.0
    %3067 = vmatpush1.msra.mxu0 0.0
    %3068 = vmatprep.subr.mxu0 0.0
    %3069 = vmatpush1.msra.mxu0 0.0
    %3070 = vmatprep.subr.mxu0 0.0
    %3071 = vmatpush1.msra.mxu0 0.0
    %3072 = vmatprep.subr.mxu0 0.0
    %3073 = vmatpush1.msra.mxu0 0.0
    %3074 = vmatprep.subr.mxu0 0.0
    %3075 = vmatpush1.msra.mxu0 0.0
    %3076 = vmatprep.subr.mxu0 0.0
    %3077 = vmatpush1.msra.mxu0 0.0
    %3078 = vmatprep.subr.mxu0 0.0
    %3079 = vmatpush1.msra.mxu0 0.0
    %3080 = vmatprep.subr.mxu0 0.0
    %3081 = vmatpush1.msra.mxu0 0.0
    %3082 = vmatprep.subr.mxu0 0.0
    %3083 = vmatpush1.msra.mxu0 0.0
    %3084 = vmatprep.subr.mxu0 0.0
    %3085 = vmatpush1.msra.mxu0 0.0
    %3086 = vmatprep.subr.mxu0 0.0
    %3087 = vmatpush1.msra.mxu0 0.0
    %3088 = vmatprep.subr.mxu0 0.0
    %3089 = vmatpush1.msra.mxu0 0.0
    %3090 = vmatprep.subr.mxu0 0.0
    %3091 = vmatpush1.msra.mxu0 0.0
    %3092 = vmatprep.subr.mxu0 0.0
    %3093 = vmatpush1.msra.mxu0 0.0
    %3094 = vmatprep.subr.mxu0 0.0
    %3095 = vmatpush1.msra.mxu0 0.0
    %3096 = vmatprep.subr.mxu0 0.0
    %3097 = vmatpush1.msra.mxu0 0.0
    %3098 = vmatprep.subr.mxu0 0.0
    %3099 = vmatpush1.msra.mxu0 0.0
    %3100 = vmatprep.subr.mxu0 0.0
    %3101 = vmatpush1.msra.mxu0 0.0
    %3102 = vmatprep.subr.mxu0 0.0
    %3103 = vmatpush1.msra.mxu0 0.0
    %3104 = vmatprep.subr.mxu0 0.0
    %3105 = vmatpush1.msra.mxu0 0.0
    %3106 = vmatprep.subr.mxu0 0.0
    %3107 = vmatpush1.msra.mxu0 0.0
    %3108 = vmatprep.subr.mxu0 0.0
    %3109 = vmatpush1.msra.mxu0 0.0
    %3110 = vmatprep.subr.mxu0 0.0
    %3111 = vmatpush1.msra.mxu0 0.0
    %3112 = vmatprep.subr.mxu0 0.0
    %3113 = vmatpush1.msra.mxu0 0.0
    %3114 = vmatprep.subr.mxu0 0.0
    %3115 = vmatpush1.msra.mxu0 0.0
    %3116 = vmatprep.subr.mxu0 0.0
    %3117 = vmatpush1.msra.mxu0 0.0
    %3118 = vmatprep.subr.mxu0 0.0
    %3119 = vmatpush1.msra.mxu0 0.0
    %3120 = vmatprep.subr.mxu0 0.0
    %3121 = vmatpush1.msra.mxu0 0.0
    %3122 = vmatprep.mubr.f32.mxu0 0.0
    %3123 = vmatmul.mubr.f32.gmra.mrb[0].mxu0 %v2681
    %v3124 = vpop.f32.mrb[0].mxu0
    %v3125 = vadd.f32 0.0, %v3124
    %v3126 = vpop.f32.mrb[0].mxu0
    %3127 = vdwg.mxu0
    %3129 = vrot.lane.b32.xlu0 %v3125, 96
    %v3130 = vpop.permute.xlu0 %3129
    %v3132 = vadd.f32 %v3057, %v3130
    %3133 = vmatprep.subr.mxu0 0.0
    %3134 = vmatpush1.msra.mxu0 %v2494
    %3135 = vmatprep.subr.mxu0 0.0
    %3136 = vmatpush1.msra.mxu0 %v2495
    %3137 = vmatprep.subr.mxu0 0.0
    %3138 = vmatpush1.msra.mxu0 %v2496
    %3139 = vmatprep.subr.mxu0 0.0
    %3140 = vmatpush1.msra.mxu0 %v2497
    %3141 = vmatprep.subr.mxu0 0.0
    %3142 = vmatpush1.msra.mxu0 0.0
    %3143 = vmatprep.subr.mxu0 0.0
    %3144 = vmatpush1.msra.mxu0 0.0
    %3145 = vmatprep.subr.mxu0 0.0
    %3146 = vmatpush1.msra.mxu0 0.0
    %3147 = vmatprep.subr.mxu0 0.0
    %3148 = vmatpush1.msra.mxu0 0.0
    %3149 = vmatprep.subr.mxu0 0.0
    %3150 = vmatpush1.msra.mxu0 0.0
    %3151 = vmatprep.subr.mxu0 0.0
    %3152 = vmatpush1.msra.mxu0 0.0
    %3153 = vmatprep.subr.mxu0 0.0
    %3154 = vmatpush1.msra.mxu0 0.0
    %3155 = vmatprep.subr.mxu0 0.0
    %3156 = vmatpush1.msra.mxu0 0.0
    %3157 = vmatprep.subr.mxu0 0.0
    %3158 = vmatpush1.msra.mxu0 0.0
    %3159 = vmatprep.subr.mxu0 0.0
    %3160 = vmatpush1.msra.mxu0 0.0
    %3161 = vmatprep.subr.mxu0 0.0
    %3162 = vmatpush1.msra.mxu0 0.0
    %3163 = vmatprep.subr.mxu0 0.0
    %3164 = vmatpush1.msra.mxu0 0.0
    %3165 = vmatprep.subr.mxu0 0.0
    %3166 = vmatpush1.msra.mxu0 0.0
    %3167 = vmatprep.subr.mxu0 0.0
    %3168 = vmatpush1.msra.mxu0 0.0
    %3169 = vmatprep.subr.mxu0 0.0
    %3170 = vmatpush1.msra.mxu0 0.0
    %3171 = vmatprep.subr.mxu0 0.0
    %3172 = vmatpush1.msra.mxu0 0.0
    %3173 = vmatprep.subr.mxu0 0.0
    %3174 = vmatpush1.msra.mxu0 0.0
    %3175 = vmatprep.subr.mxu0 0.0
    %3176 = vmatpush1.msra.mxu0 0.0
    %3177 = vmatprep.subr.mxu0 0.0
    %3178 = vmatpush1.msra.mxu0 0.0
    %3179 = vmatprep.subr.mxu0 0.0
    %3180 = vmatpush1.msra.mxu0 0.0
    %3181 = vmatprep.subr.mxu0 0.0
    %3182 = vmatpush1.msra.mxu0 0.0
    %3183 = vmatprep.subr.mxu0 0.0
    %3184 = vmatpush1.msra.mxu0 0.0
    %3185 = vmatprep.subr.mxu0 0.0
    %3186 = vmatpush1.msra.mxu0 0.0
    %3187 = vmatprep.subr.mxu0 0.0
    %3188 = vmatpush1.msra.mxu0 0.0
    %3189 = vmatprep.subr.mxu0 0.0
    %3190 = vmatpush1.msra.mxu0 0.0
    %3191 = vmatprep.subr.mxu0 0.0
    %3192 = vmatpush1.msra.mxu0 0.0
    %3193 = vmatprep.subr.mxu0 0.0
    %3194 = vmatpush1.msra.mxu0 0.0
    %3195 = vmatprep.subr.mxu0 0.0
    %3196 = vmatpush1.msra.mxu0 0.0
    %3197 = vmatprep.mubr.f32.mxu0 0.0
    %3198 = vmatmul.mubr.f32.gmra.mrb[0].mxu0 %v2757
    %v3199 = vpop.f32.mrb[0].mxu0
    %v3200 = vadd.f32 0.0, %v3199
    %v3201 = vpop.f32.mrb[0].mxu0
    %3202 = vdwg.mxu0
    %3204 = vrot.lane.b32.xlu0 %v3200, 96
    %v3205 = vpop.permute.xlu0 %3204
    %v3207 = vadd.f32 %v3132, %v3205
    %v3210 = vunpack.c.l.s4 1966171168
    %v3211 = vunpack.c.0.s8 %v3210
    %v3212 = vlaneseq
    %v3213 = vshrl.u32 %v3212, 7
    %v3214 = vsub.s32 %v3211, %v3213
    %v3215 = vrot.slane %v3207, %v3214
    %v3216 = vcombine.high %v3215, %v3215
    %v3218 = vunpack.c.l.s4 1966171168
    %v3219 = vunpack.c.0.s8 %v3218
    %v3220 = vlaneseq
    %v3221 = vshrl.u32 %v3220, 7
    %v3222 = vsub.s32 %v3219, %v3221
    %v3223 = vrot.slane %v3215, %v3222
    %v3225 = vunpack.c.l.s4 1966171168
    %v3226 = vunpack.c.0.s8 %v3225
    %v3227 = vlaneseq
    %v3228 = vshrl.u32 %v3227, 7
    %v3229 = vsub.s32 %v3226, %v3228
    %v3230 = vrot.slane %v3216, %v3229
    %v3231 = vlaneseq
    %v3232 = vshrl.u32 %v3231, 7
    %v3233 = vsub.s32 0, %v3232
    %v3234 = vrot.slane %v3223, %v3233
    %v3235 = vlaneseq
    %v3236 = vshrl.u32 %v3235, 7
    %v3237 = vsub.s32 0, %v3236
    %v3238 = vrot.slane %v3230, %v3237
    %3239 = vrot.lane.b32.xlu0 %v3234, 32
    %v3240 = vpop.permute.xlu0 %3239
    %3241 = vrot.lane.b32.xlu0 %v3238, 32
    %v3242 = vpop.permute.xlu0 %3241
    %3245 = vst.msk [vmem:[#allocation4] sm:$0x1] %vm2975, %v3240
    %3246 = vst.msk [vmem:[#allocation4 + $0x8] sm:$0x1] %vm2975, %v3242
    %3247 = vmatprep.subr.mxu0 0.0
    %3248 = vmatpush1.msra.mxu0 %v2482
    %3249 = vmatprep.subr.mxu0 0.0
    %3250 = vmatpush1.msra.mxu0 %v2483
    %3251 = vmatprep.subr.mxu0 0.0
    %3252 = vmatpush1.msra.mxu0 %v2484
    %3253 = vmatprep.subr.mxu0 0.0
    %3254 = vmatpush1.msra.mxu0 %v2485
    %3255 = vmatprep.subr.mxu0 0.0
    %3256 = vmatpush1.msra.mxu0 0.0
    %3257 = vmatprep.subr.mxu0 0.0
    %3258 = vmatpush1.msra.mxu0 0.0
    %3259 = vmatprep.subr.mxu0 0.0
    %3260 = vmatpush1.msra.mxu0 0.0
    %3261 = vmatprep.subr.mxu0 0.0
    %3262 = vmatpush1.msra.mxu0 0.0
    %3263 = vmatprep.subr.mxu0 0.0
    %3264 = vmatpush1.msra.mxu0 0.0
    %3265 = vmatprep.subr.mxu0 0.0
    %3266 = vmatpush1.msra.mxu0 0.0
    %3267 = vmatprep.subr.mxu0 0.0
    %3268 = vmatpush1.msra.mxu0 0.0
    %3269 = vmatprep.subr.mxu0 0.0
    %3270 = vmatpush1.msra.mxu0 0.0
    %3271 = vmatprep.subr.mxu0 0.0
    %3272 = vmatpush1.msra.mxu0 0.0
    %3273 = vmatprep.subr.mxu0 0.0
    %3274 = vmatpush1.msra.mxu0 0.0
    %3275 = vmatprep.subr.mxu0 0.0
    %3276 = vmatpush1.msra.mxu0 0.0
    %3277 = vmatprep.subr.mxu0 0.0
    %3278 = vmatpush1.msra.mxu0 0.0
    %3279 = vmatprep.subr.mxu0 0.0
    %3280 = vmatpush1.msra.mxu0 0.0
    %3281 = vmatprep.subr.mxu0 0.0
    %3282 = vmatpush1.msra.mxu0 0.0
    %3283 = vmatprep.subr.mxu0 0.0
    %3284 = vmatpush1.msra.mxu0 0.0
    %3285 = vmatprep.subr.mxu0 0.0
    %3286 = vmatpush1.msra.mxu0 0.0
    %3287 = vmatprep.subr.mxu0 0.0
    %3288 = vmatpush1.msra.mxu0 0.0
    %3289 = vmatprep.subr.mxu0 0.0
    %3290 = vmatpush1.msra.mxu0 0.0
    %3291 = vmatprep.subr.mxu0 0.0
    %3292 = vmatpush1.msra.mxu0 0.0
    %3293 = vmatprep.subr.mxu0 0.0
    %3294 = vmatpush1.msra.mxu0 0.0
    %3295 = vmatprep.subr.mxu0 0.0
    %3296 = vmatpush1.msra.mxu0 0.0
    %3297 = vmatprep.subr.mxu0 0.0
    %3298 = vmatpush1.msra.mxu0 0.0
    %3299 = vmatprep.subr.mxu0 0.0
    %3300 = vmatpush1.msra.mxu0 0.0
    %3301 = vmatprep.subr.mxu0 0.0
    %3302 = vmatpush1.msra.mxu0 0.0
    %3303 = vmatprep.subr.mxu0 0.0
    %3304 = vmatpush1.msra.mxu0 0.0
    %3305 = vmatprep.subr.mxu0 0.0
    %3306 = vmatpush1.msra.mxu0 0.0
    %3307 = vmatprep.subr.mxu0 0.0
    %3308 = vmatpush1.msra.mxu0 0.0
    %3309 = vmatprep.subr.mxu0 0.0
    %3310 = vmatpush1.msra.mxu0 0.0
    %3311 = vmatprep.mubr.f32.mxu0 0.0
    %3312 = vmatmul.mubr.f32.gmra.mrb[0].mxu0 %v2981
    %v3313 = vpop.f32.mrb[0].mxu0
    %v3314 = vadd.f32 0.0, %v3313
    %v3315 = vpop.f32.mrb[0].mxu0
    %3316 = vdwg.mxu0
    %v3317 = vlaneseq
    %v3318 = vshrl.u32 %v3317, 7
    %v3319 = vsub.s32 0, %v3318
    %v3320 = vrot.slane %v3314, %v3319
    %v3321 = vadd.f32 %v2310, %v3320
    %v3322 = vtanh.pop %v3321
    %v3323 = vmul.f32 %v3322, %v2469
    %v3324 = vsel %vm46, %v3323, 0.0
    %3325 = vadd.xlane.f32.xlu0 %v3324
    %v3326 = vpop.xlane.xlu0 %3325
    %v3327 = vadd.f32 %v3326, %v2463
    %v3328 = vsel %vm2582, %v3327, -inf
    %v3329 = vrot.slane %v3328, 4
    %v3330 = vmax.f32 %v3328, %v3329
    %v3331 = vrot.slane %v3330, 2
    %v3332 = vmax.f32 %v3330, %v3331
    %v3333 = vrot.slane %v3332, 1
    %v3334 = vmax.f32 %v3332, %v3333
    %v3335 = vsub.f32 %v3327, %v3334
    %v3336 = vmul.f32 %v3335, 1.442695
    %v3337 = vpow.pop %v3336
    %v3338 = vsel %vm2582, %v3337, 0.0
    %v3339 = vrot.slane %v3338, 4
    %v3340 = vadd.f32 %v3338, %v3339
    %v3341 = vrot.slane %v3340, 2
    %v3342 = vadd.f32 %v3340, %v3341
    %v3343 = vrot.slane %v3342, 1
    %v3344 = vadd.f32 %v3342, %v3343
    %v3345 = vrcp.pop %v3344
    %v3346 = vmul.f32 %v3337, %v3345
    %3348 = vset.pattern.permute.xlu0 0
    %3349 = vperm.xlu0 %3348, %v3346
    %v3350 = vpop.permute.xlu0 %3349
    %v3352 = vmul.f32 %v3350, %v2082
    %v3353 = vsel %vm2608, %v3352, 0.0
    %v3354 = vrot.slane %v3353, 4
    %v3355 = vadd.f32 %v3353, %v3354
    %v3356 = vrot.slane %v3355, 2
    %v3357 = vadd.f32 %v3355, %v3356
    %v3358 = vrot.slane %v3357, 1
    %v3359 = vadd.f32 %v3357, %v3358
    %v3360 = vmul.f32 %v3350, %v2132
    %v3361 = vsel %vm2608, %v3360, 0.0
    %v3362 = vrot.slane %v3361, 4
    %v3363 = vadd.f32 %v3361, %v3362
    %v3364 = vrot.slane %v3363, 2
    %v3365 = vadd.f32 %v3363, %v3364
    %v3366 = vrot.slane %v3365, 1
    %v3367 = vadd.f32 %v3365, %v3366
    %v3368 = vlaneseq
    %v3369 = vshrl.u32 %v3368, 7
    %v3370 = vsub.s32 1, %v3369
    %v3371 = vrot.slane %v3314, %v3370
    %v3372 = vadd.f32 %v2460, %v3371
    %v3373 = vtanh.pop %v3372
    %v3374 = vmul.f32 %v3373, %v2469
    %v3375 = vsel %vm46, %v3374, 0.0
    %3376 = vadd.xlane.f32.xlu0 %v3375
    %v3377 = vpop.xlane.xlu0 %3376
    %v3378 = vadd.f32 %v3377, %v2465
    %v3379 = vsel %vm2582, %v3378, -inf
    %v3380 = vrot.slane %v3379, 4
    %v3381 = vmax.f32 %v3379, %v3380
    %v3382 = vrot.slane %v3381, 2
    %v3383 = vmax.f32 %v3381, %v3382
    %v3384 = vrot.slane %v3383, 1
    %v3385 = vmax.f32 %v3383, %v3384
    %v3386 = vsub.f32 %v3378, %v3385
    %v3387 = vmul.f32 %v3386, 1.442695
    %v3388 = vpow.pop %v3387
    %v3389 = vsel %vm2582, %v3388, 0.0
    %v3390 = vrot.slane %v3389, 4
    %v3391 = vadd.f32 %v3389, %v3390
    %v3392 = vrot.slane %v3391, 2
    %v3393 = vadd.f32 %v3391, %v3392
    %v3394 = vrot.slane %v3393, 1
    %v3395 = vadd.f32 %v3393, %v3394
    %v3396 = vrcp.pop %v3395
    %v3397 = vmul.f32 %v3388, %v3396
    %3399 = vset.pattern.permute.xlu0 0
    %3400 = vperm.xlu0 %3399, %v3397
    %v3401 = vpop.permute.xlu0 %3400
    %v3403 = vmul.f32 %v3401, %v2104
    %v3404 = vsel %vm2608, %v3403, 0.0
    %v3405 = vrot.slane %v3404, 4
    %v3406 = vadd.f32 %v3404, %v3405
    %v3407 = vrot.slane %v3406, 2
    %v3408 = vadd.f32 %v3406, %v3407
    %v3409 = vrot.slane %v3408, 1
    %v3410 = vadd.f32 %v3408, %v3409
    %v3411 = vmul.f32 %v3401, %v2154
    %v3412 = vsel %vm2608, %v3411, 0.0
    %v3413 = vrot.slane %v3412, 4
    %v3414 = vadd.f32 %v3412, %v3413
    %v3415 = vrot.slane %v3414, 2
    %v3416 = vadd.f32 %v3414, %v3415
    %v3417 = vrot.slane %v3416, 1
    %v3418 = vadd.f32 %v3416, %v3417
    %v3419 = vsel %vm2069, %v3359, %v3410
    %v3420 = vsel %vm2069, %v3367, %v3418
    %s3421 = scalar_lea.vmem %s3, 2
    %v3422 = vld [vmem:[%s3421] sm:$0x3]
    %3424 = vrot.lane.b32.xlu0 %v3419, 96
    %v3425 = vpop.permute.xlu0 %3424
    %v3426 = vsel %vm46, %v3425, 0
    %3428 = vmatprep.subr.mxu0 0.0
    %3429 = vmatpush1.msra.mxu0 %v2474
    %3430 = vmatprep.subr.mxu0 0.0
    %3431 = vmatpush1.msra.mxu0 %v2475
    %3432 = vmatprep.subr.mxu0 0.0
    %3433 = vmatpush1.msra.mxu0 %v2476
    %3434 = vmatprep.subr.mxu0 0.0
    %3435 = vmatpush1.msra.mxu0 %v2477
    %3436 = vmatprep.subr.mxu0 0.0
    %3437 = vmatpush1.msra.mxu0 0.0
    %3438 = vmatprep.subr.mxu0 0.0
    %3439 = vmatpush1.msra.mxu0 0.0
    %3440 = vmatprep.subr.mxu0 0.0
    %3441 = vmatpush1.msra.mxu0 0.0
    %3442 = vmatprep.subr.mxu0 0.0
    %3443 = vmatpush1.msra.mxu0 0.0
    %3444 = vmatprep.subr.mxu0 0.0
    %3445 = vmatpush1.msra.mxu0 0.0
    %3446 = vmatprep.subr.mxu0 0.0
    %3447 = vmatpush1.msra.mxu0 0.0
    %3448 = vmatprep.subr.mxu0 0.0
    %3449 = vmatpush1.msra.mxu0 0.0
    %3450 = vmatprep.subr.mxu0 0.0
    %3451 = vmatpush1.msra.mxu0 0.0
    %3452 = vmatprep.subr.mxu0 0.0
    %3453 = vmatpush1.msra.mxu0 0.0
    %3454 = vmatprep.subr.mxu0 0.0
    %3455 = vmatpush1.msra.mxu0 0.0
    %3456 = vmatprep.subr.mxu0 0.0
    %3457 = vmatpush1.msra.mxu0 0.0
    %3458 = vmatprep.subr.mxu0 0.0
    %3459 = vmatpush1.msra.mxu0 0.0
    %3460 = vmatprep.subr.mxu0 0.0
    %3461 = vmatpush1.msra.mxu0 0.0
    %3462 = vmatprep.subr.mxu0 0.0
    %3463 = vmatpush1.msra.mxu0 0.0
    %3464 = vmatprep.subr.mxu0 0.0
    %3465 = vmatpush1.msra.mxu0 0.0
    %3466 = vmatprep.subr.mxu0 0.0
    %3467 = vmatpush1.msra.mxu0 0.0
    %3468 = vmatprep.subr.mxu0 0.0
    %3469 = vmatpush1.msra.mxu0 0.0
    %3470 = vmatprep.subr.mxu0 0.0
    %3471 = vmatpush1.msra.mxu0 0.0
    %3472 = vmatprep.subr.mxu0 0.0
    %3473 = vmatpush1.msra.mxu0 0.0
    %3474 = vmatprep.subr.mxu0 0.0
    %3475 = vmatpush1.msra.mxu0 0.0
    %3476 = vmatprep.subr.mxu0 0.0
    %3477 = vmatpush1.msra.mxu0 0.0
    %3478 = vmatprep.subr.mxu0 0.0
    %3479 = vmatpush1.msra.mxu0 0.0
    %3480 = vmatprep.subr.mxu0 0.0
    %3481 = vmatpush1.msra.mxu0 0.0
    %3482 = vmatprep.subr.mxu0 0.0
    %3483 = vmatpush1.msra.mxu0 0.0
    %3484 = vmatprep.subr.mxu0 0.0
    %3485 = vmatpush1.msra.mxu0 0.0
    %3486 = vmatprep.subr.mxu0 0.0
    %3487 = vmatpush1.msra.mxu0 0.0
    %3488 = vmatprep.subr.mxu0 0.0
    %3489 = vmatpush1.msra.mxu0 0.0
    %3490 = vmatprep.subr.mxu0 0.0
    %3491 = vmatpush1.msra.mxu0 0.0
    %3492 = vmatprep.mubr.f32.mxu0 0.0
    %3493 = vmatmul.mubr.f32.gmra.mrb[0].mxu0 %v3426
    %v3494 = vpop.f32.mrb[0].mxu0
    %v3495 = vadd.f32 0.0, %v3494
    %v3496 = vpop.f32.mrb[0].mxu0
    %3497 = vdwg.mxu0
    %v3498 = vadd.f32 %v3422, %v3495
    %3500 = vrot.lane.b32.xlu0 %v3420, 96
    %v3501 = vpop.permute.xlu0 %3500
    %v3502 = vsel %vm46, %v3501, 0
    %3504 = vmatprep.subr.mxu0 0.0
    %3505 = vmatpush1.msra.mxu0 %v2478
    %3506 = vmatprep.subr.mxu0 0.0
    %3507 = vmatpush1.msra.mxu0 %v2479
    %3508 = vmatprep.subr.mxu0 0.0
    %3509 = vmatpush1.msra.mxu0 %v2480
    %3510 = vmatprep.subr.mxu0 0.0
    %3511 = vmatpush1.msra.mxu0 %v2481
    %3512 = vmatprep.subr.mxu0 0.0
    %3513 = vmatpush1.msra.mxu0 0.0
    %3514 = vmatprep.subr.mxu0 0.0
    %3515 = vmatpush1.msra.mxu0 0.0
    %3516 = vmatprep.subr.mxu0 0.0
    %3517 = vmatpush1.msra.mxu0 0.0
    %3518 = vmatprep.subr.mxu0 0.0
    %3519 = vmatpush1.msra.mxu0 0.0
    %3520 = vmatprep.subr.mxu0 0.0
    %3521 = vmatpush1.msra.mxu0 0.0
    %3522 = vmatprep.subr.mxu0 0.0
    %3523 = vmatpush1.msra.mxu0 0.0
    %3524 = vmatprep.subr.mxu0 0.0
    %3525 = vmatpush1.msra.mxu0 0.0
    %3526 = vmatprep.subr.mxu0 0.0
    %3527 = vmatpush1.msra.mxu0 0.0
    %3528 = vmatprep.subr.mxu0 0.0
    %3529 = vmatpush1.msra.mxu0 0.0
    %3530 = vmatprep.subr.mxu0 0.0
    %3531 = vmatpush1.msra.mxu0 0.0
    %3532 = vmatprep.subr.mxu0 0.0
    %3533 = vmatpush1.msra.mxu0 0.0
    %3534 = vmatprep.subr.mxu0 0.0
    %3535 = vmatpush1.msra.mxu0 0.0
    %3536 = vmatprep.subr.mxu0 0.0
    %3537 = vmatpush1.msra.mxu0 0.0
    %3538 = vmatprep.subr.mxu0 0.0
    %3539 = vmatpush1.msra.mxu0 0.0
    %3540 = vmatprep.subr.mxu0 0.0
    %3541 = vmatpush1.msra.mxu0 0.0
    %3542 = vmatprep.subr.mxu0 0.0
    %3543 = vmatpush1.msra.mxu0 0.0
    %3544 = vmatprep.subr.mxu0 0.0
    %3545 = vmatpush1.msra.mxu0 0.0
    %3546 = vmatprep.subr.mxu0 0.0
    %3547 = vmatpush1.msra.mxu0 0.0
    %3548 = vmatprep.subr.mxu0 0.0
    %3549 = vmatpush1.msra.mxu0 0.0
    %3550 = vmatprep.subr.mxu0 0.0
    %3551 = vmatpush1.msra.mxu0 0.0
    %3552 = vmatprep.subr.mxu0 0.0
    %3553 = vmatpush1.msra.mxu0 0.0
    %3554 = vmatprep.subr.mxu0 0.0
    %3555 = vmatpush1.msra.mxu0 0.0
    %3556 = vmatprep.subr.mxu0 0.0
    %3557 = vmatpush1.msra.mxu0 0.0
    %3558 = vmatprep.subr.mxu0 0.0
    %3559 = vmatpush1.msra.mxu0 0.0
    %3560 = vmatprep.subr.mxu0 0.0
    %3561 = vmatpush1.msra.mxu0 0.0
    %3562 = vmatprep.subr.mxu0 0.0
    %3563 = vmatpush1.msra.mxu0 0.0
    %3564 = vmatprep.subr.mxu0 0.0
    %3565 = vmatpush1.msra.mxu0 0.0
    %3566 = vmatprep.subr.mxu0 0.0
    %3567 = vmatpush1.msra.mxu0 0.0
    %3568 = vmatprep.mubr.f32.mxu0 0.0
    %3569 = vmatmul.mubr.f32.gmra.mrb[0].mxu0 %v3502
    %v3570 = vpop.f32.mrb[0].mxu0
    %v3571 = vadd.f32 0.0, %v3570
    %v3572 = vpop.f32.mrb[0].mxu0
    %3573 = vdwg.mxu0
    %v3574 = vadd.f32 %v3498, %v3571
    %3575 = vmatprep.subr.mxu0 0.0
    %3576 = vmatpush1.msra.mxu0 %v2470
    %3577 = vmatprep.subr.mxu0 0.0
    %3578 = vmatpush1.msra.mxu0 %v2471
    %3579 = vmatprep.subr.mxu0 0.0
    %3580 = vmatpush1.msra.mxu0 %v2472
    %3581 = vmatprep.subr.mxu0 0.0
    %3582 = vmatpush1.msra.mxu0 %v2473
    %3583 = vmatprep.subr.mxu0 0.0
    %3584 = vmatpush1.msra.mxu0 0.0
    %3585 = vmatprep.subr.mxu0 0.0
    %3586 = vmatpush1.msra.mxu0 0.0
    %3587 = vmatprep.subr.mxu0 0.0
    %3588 = vmatpush1.msra.mxu0 0.0
    %3589 = vmatprep.subr.mxu0 0.0
    %3590 = vmatpush1.msra.mxu0 0.0
    %3591 = vmatprep.subr.mxu0 0.0
    %3592 = vmatpush1.msra.mxu0 0.0
    %3593 = vmatprep.subr.mxu0 0.0
    %3594 = vmatpush1.msra.mxu0 0.0
    %3595 = vmatprep.subr.mxu0 0.0
    %3596 = vmatpush1.msra.mxu0 0.0
    %3597 = vmatprep.subr.mxu0 0.0
    %3598 = vmatpush1.msra.mxu0 0.0
    %3599 = vmatprep.subr.mxu0 0.0
    %3600 = vmatpush1.msra.mxu0 0.0
    %3601 = vmatprep.subr.mxu0 0.0
    %3602 = vmatpush1.msra.mxu0 0.0
    %3603 = vmatprep.subr.mxu0 0.0
    %3604 = vmatpush1.msra.mxu0 0.0
    %3605 = vmatprep.subr.mxu0 0.0
    %3606 = vmatpush1.msra.mxu0 0.0
    %3607 = vmatprep.subr.mxu0 0.0
    %3608 = vmatpush1.msra.mxu0 0.0
    %3609 = vmatprep.subr.mxu0 0.0
    %3610 = vmatpush1.msra.mxu0 0.0
    %3611 = vmatprep.subr.mxu0 0.0
    %3612 = vmatpush1.msra.mxu0 0.0
    %3613 = vmatprep.subr.mxu0 0.0
    %3614 = vmatpush1.msra.mxu0 0.0
    %3615 = vmatprep.subr.mxu0 0.0
    %3616 = vmatpush1.msra.mxu0 0.0
    %3617 = vmatprep.subr.mxu0 0.0
    %3618 = vmatpush1.msra.mxu0 0.0
    %3619 = vmatprep.subr.mxu0 0.0
    %3620 = vmatpush1.msra.mxu0 0.0
    %3621 = vmatprep.subr.mxu0 0.0
    %3622 = vmatpush1.msra.mxu0 0.0
    %3623 = vmatprep.subr.mxu0 0.0
    %3624 = vmatpush1.msra.mxu0 0.0
    %3625 = vmatprep.subr.mxu0 0.0
    %3626 = vmatpush1.msra.mxu0 0.0
    %3627 = vmatprep.subr.mxu0 0.0
    %3628 = vmatpush1.msra.mxu0 0.0
    %3629 = vmatprep.subr.mxu0 0.0
    %3630 = vmatpush1.msra.mxu0 0.0
    %3631 = vmatprep.subr.mxu0 0.0
    %3632 = vmatpush1.msra.mxu0 0.0
    %3633 = vmatprep.subr.mxu0 0.0
    %3634 = vmatpush1.msra.mxu0 0.0
    %3635 = vmatprep.subr.mxu0 0.0
    %3636 = vmatpush1.msra.mxu0 0.0
    %3637 = vmatprep.subr.mxu0 0.0
    %3638 = vmatpush1.msra.mxu0 0.0
    %3639 = vmatprep.mubr.f32.mxu0 0.0
    %3640 = vmatmul.mubr.f32.gmra.mrb[0].mxu0 %v2981
    %v3641 = vpop.f32.mrb[0].mxu0
    %v3642 = vadd.f32 0.0, %v3641
    %v3643 = vpop.f32.mrb[0].mxu0
    %3644 = vdwg.mxu0
    %v3645 = vadd.f32 %v3574, %v3642
    %v3646 = vxor.u32 %v3645, 2147483648
    %v3647 = vmul.f32 %v3646, 1.442695
    %v3648 = vpow.pop %v3647
    %v3649 = vadd.f32 %v3648, 1.0
    %v3650 = vrcp.pop %v3649
    %v3651 = vmul.f32 1.0, %v3650
    %v3652 = vadd.f32 %v3642, %v2913
    %3654 = vrot.lane.b32.xlu0 %v3652, 64
    %v3655 = vpop.permute.xlu0 %3654
    %v3657 = vmul.f32 %v3651, %v3655
    %3659 = vrot.lane.b32.xlu0 %v3657, 64
    %v3660 = vpop.permute.xlu0 %3659
    %v3662 = vadd.f32 %v3574, %v3660
    %v3663 = vtanh.pop %v3662
    %v3664 = vsub.f32 1.0, %v3651
    %3666 = vrot.lane.b32.xlu0 %v3663, 96
    %v3667 = vpop.permute.xlu0 %3666
    %v3669 = vmul.f32 %v3664, %v3667
    %v3670 = vmul.f32 %v3651, %v2937
    %v3671 = vadd.f32 %v3669, %v3670
    %v3674 = vunpack.c.l.s4 1966171168
    %v3675 = vunpack.c.0.s8 %v3674
    %v3676 = vlaneseq
    %v3677 = vshrl.u32 %v3676, 7
    %v3678 = vsub.s32 %v3675, %v3677
    %v3679 = vrot.slane %v3671, %v3678
    %v3680 = vcombine.high %v3679, %v3679
    %v3682 = vunpack.c.l.s4 1966171168
    %v3683 = vunpack.c.0.s8 %v3682
    %v3684 = vlaneseq
    %v3685 = vshrl.u32 %v3684, 7
    %v3686 = vsub.s32 %v3683, %v3685
    %v3687 = vrot.slane %v3679, %v3686
    %v3689 = vunpack.c.l.s4 1966171168
    %v3690 = vunpack.c.0.s8 %v3689
    %v3691 = vlaneseq
    %v3692 = vshrl.u32 %v3691, 7
    %v3693 = vsub.s32 %v3690, %v3692
    %v3694 = vrot.slane %v3680, %v3693
    %v3695 = vlaneseq
    %v3696 = vshrl.u32 %v3695, 7
    %v3697 = vsub.s32 0, %v3696
    %v3698 = vrot.slane %v3687, %v3697
    %v3699 = vlaneseq
    %v3700 = vshrl.u32 %v3699, 7
    %v3701 = vsub.s32 0, %v3700
    %v3702 = vrot.slane %v3694, %v3701
    %3703 = vrot.lane.b32.xlu0 %v3698, 96
    %v3704 = vpop.permute.xlu0 %3703
    %3705 = vrot.lane.b32.xlu0 %v3702, 96
    %v3706 = vpop.permute.xlu0 %3705
    %3709 = vst.msk [vmem:[#allocation2 + $0x1] sm:$0x1] %vm2975, %v3704
    %3710 = vst.msk [vmem:[#allocation2 + $0x9] sm:$0x1] %vm2975, %v3706
    %v3711 = vld [vmem:[%s3421] sm:$0x3]
    %3712 = vrot.lane.b32.xlu0 %v3671, 96
    %v3713 = vpop.permute.xlu0 %3712
    %v3714 = vsel %vm46, %v3713, 0
    %3716 = vmatprep.subr.mxu0 0.0
    %3717 = vmatpush1.msra.mxu0 %v2486
    %3718 = vmatprep.subr.mxu0 0.0
    %3719 = vmatpush1.msra.mxu0 %v2487
    %3720 = vmatprep.subr.mxu0 0.0
    %3721 = vmatpush1.msra.mxu0 %v2488
    %3722 = vmatprep.subr.mxu0 0.0
    %3723 = vmatpush1.msra.mxu0 %v2489
    %3724 = vmatprep.subr.mxu0 0.0
    %3725 = vmatpush1.msra.mxu0 0.0
    %3726 = vmatprep.subr.mxu0 0.0
    %3727 = vmatpush1.msra.mxu0 0.0
    %3728 = vmatprep.subr.mxu0 0.0
    %3729 = vmatpush1.msra.mxu0 0.0
    %3730 = vmatprep.subr.mxu0 0.0
    %3731 = vmatpush1.msra.mxu0 0.0
    %3732 = vmatprep.subr.mxu0 0.0
    %3733 = vmatpush1.msra.mxu0 0.0
    %3734 = vmatprep.subr.mxu0 0.0
    %3735 = vmatpush1.msra.mxu0 0.0
    %3736 = vmatprep.subr.mxu0 0.0
    %3737 = vmatpush1.msra.mxu0 0.0
    %3738 = vmatprep.subr.mxu0 0.0
    %3739 = vmatpush1.msra.mxu0 0.0
    %3740 = vmatprep.subr.mxu0 0.0
    %3741 = vmatpush1.msra.mxu0 0.0
    %3742 = vmatprep.subr.mxu0 0.0
    %3743 = vmatpush1.msra.mxu0 0.0
    %3744 = vmatprep.subr.mxu0 0.0
    %3745 = vmatpush1.msra.mxu0 0.0
    %3746 = vmatprep.subr.mxu0 0.0
    %3747 = vmatpush1.msra.mxu0 0.0
    %3748 = vmatprep.subr.mxu0 0.0
    %3749 = vmatpush1.msra.mxu0 0.0
    %3750 = vmatprep.subr.mxu0 0.0
    %3751 = vmatpush1.msra.mxu0 0.0
    %3752 = vmatprep.subr.mxu0 0.0
    %3753 = vmatpush1.msra.mxu0 0.0
    %3754 = vmatprep.subr.mxu0 0.0
    %3755 = vmatpush1.msra.mxu0 0.0
    %3756 = vmatprep.subr.mxu0 0.0
    %3757 = vmatpush1.msra.mxu0 0.0
    %3758 = vmatprep.subr.mxu0 0.0
    %3759 = vmatpush1.msra.mxu0 0.0
    %3760 = vmatprep.subr.mxu0 0.0
    %3761 = vmatpush1.msra.mxu0 0.0
    %3762 = vmatprep.subr.mxu0 0.0
    %3763 = vmatpush1.msra.mxu0 0.0
    %3764 = vmatprep.subr.mxu0 0.0
    %3765 = vmatpush1.msra.mxu0 0.0
    %3766 = vmatprep.subr.mxu0 0.0
    %3767 = vmatpush1.msra.mxu0 0.0
    %3768 = vmatprep.subr.mxu0 0.0
    %3769 = vmatpush1.msra.mxu0 0.0
    %3770 = vmatprep.subr.mxu0 0.0
    %3771 = vmatpush1.msra.mxu0 0.0
    %3772 = vmatprep.subr.mxu0 0.0
    %3773 = vmatpush1.msra.mxu0 0.0
    %3774 = vmatprep.subr.mxu0 0.0
    %3775 = vmatpush1.msra.mxu0 0.0
    %3776 = vmatprep.subr.mxu0 0.0
    %3777 = vmatpush1.msra.mxu0 0.0
    %3778 = vmatprep.subr.mxu0 0.0
    %3779 = vmatpush1.msra.mxu0 0.0
    %3780 = vmatprep.mubr.f32.mxu0 0.0
    %3781 = vmatmul.mubr.f32.gmra.mrb[0].mxu0 %v3714
    %v3782 = vpop.f32.mrb[0].mxu0
    %v3783 = vadd.f32 0.0, %v3782
    %v3784 = vpop.f32.mrb[0].mxu0
    %3785 = vdwg.mxu0
    %3787 = vrot.lane.b32.xlu0 %v3783, 96
    %v3788 = vpop.permute.xlu0 %3787
    %v3790 = vadd.f32 %v3711, %v3788
    %3791 = vmatprep.subr.mxu0 0.0
    %3792 = vmatpush1.msra.mxu0 %v2490
    %3793 = vmatprep.subr.mxu0 0.0
    %3794 = vmatpush1.msra.mxu0 %v2491
    %3795 = vmatprep.subr.mxu0 0.0
    %3796 = vmatpush1.msra.mxu0 %v2492
    %3797 = vmatprep.subr.mxu0 0.0
    %3798 = vmatpush1.msra.mxu0 %v2493
    %3799 = vmatprep.subr.mxu0 0.0
    %3800 = vmatpush1.msra.mxu0 0.0
    %3801 = vmatprep.subr.mxu0 0.0
    %3802 = vmatpush1.msra.mxu0 0.0
    %3803 = vmatprep.subr.mxu0 0.0
    %3804 = vmatpush1.msra.mxu0 0.0
    %3805 = vmatprep.subr.mxu0 0.0
    %3806 = vmatpush1.msra.mxu0 0.0
    %3807 = vmatprep.subr.mxu0 0.0
    %3808 = vmatpush1.msra.mxu0 0.0
    %3809 = vmatprep.subr.mxu0 0.0
    %3810 = vmatpush1.msra.mxu0 0.0
    %3811 = vmatprep.subr.mxu0 0.0
    %3812 = vmatpush1.msra.mxu0 0.0
    %3813 = vmatprep.subr.mxu0 0.0
    %3814 = vmatpush1.msra.mxu0 0.0
    %3815 = vmatprep.subr.mxu0 0.0
    %3816 = vmatpush1.msra.mxu0 0.0
    %3817 = vmatprep.subr.mxu0 0.0
    %3818 = vmatpush1.msra.mxu0 0.0
    %3819 = vmatprep.subr.mxu0 0.0
    %3820 = vmatpush1.msra.mxu0 0.0
    %3821 = vmatprep.subr.mxu0 0.0
    %3822 = vmatpush1.msra.mxu0 0.0
    %3823 = vmatprep.subr.mxu0 0.0
    %3824 = vmatpush1.msra.mxu0 0.0
    %3825 = vmatprep.subr.mxu0 0.0
    %3826 = vmatpush1.msra.mxu0 0.0
    %3827 = vmatprep.subr.mxu0 0.0
    %3828 = vmatpush1.msra.mxu0 0.0
    %3829 = vmatprep.subr.mxu0 0.0
    %3830 = vmatpush1.msra.mxu0 0.0
    %3831 = vmatprep.subr.mxu0 0.0
    %3832 = vmatpush1.msra.mxu0 0.0
    %3833 = vmatprep.subr.mxu0 0.0
    %3834 = vmatpush1.msra.mxu0 0.0
    %3835 = vmatprep.subr.mxu0 0.0
    %3836 = vmatpush1.msra.mxu0 0.0
    %3837 = vmatprep.subr.mxu0 0.0
    %3838 = vmatpush1.msra.mxu0 0.0
    %3839 = vmatprep.subr.mxu0 0.0
    %3840 = vmatpush1.msra.mxu0 0.0
    %3841 = vmatprep.subr.mxu0 0.0
    %3842 = vmatpush1.msra.mxu0 0.0
    %3843 = vmatprep.subr.mxu0 0.0
    %3844 = vmatpush1.msra.mxu0 0.0
    %3845 = vmatprep.subr.mxu0 0.0
    %3846 = vmatpush1.msra.mxu0 0.0
    %3847 = vmatprep.subr.mxu0 0.0
    %3848 = vmatpush1.msra.mxu0 0.0
    %3849 = vmatprep.subr.mxu0 0.0
    %3850 = vmatpush1.msra.mxu0 0.0
    %3851 = vmatprep.subr.mxu0 0.0
    %3852 = vmatpush1.msra.mxu0 0.0
    %3853 = vmatprep.subr.mxu0 0.0
    %3854 = vmatpush1.msra.mxu0 0.0
    %3855 = vmatprep.mubr.f32.mxu0 0.0
    %3856 = vmatmul.mubr.f32.gmra.mrb[0].mxu0 %v3426
    %v3857 = vpop.f32.mrb[0].mxu0
    %v3858 = vadd.f32 0.0, %v3857
    %v3859 = vpop.f32.mrb[0].mxu0
    %3860 = vdwg.mxu0
    %3862 = vrot.lane.b32.xlu0 %v3858, 96
    %v3863 = vpop.permute.xlu0 %3862
    %v3865 = vadd.f32 %v3790, %v3863
    %3866 = vmatprep.subr.mxu0 0.0
    %3867 = vmatpush1.msra.mxu0 %v2494
    %3868 = vmatprep.subr.mxu0 0.0
    %3869 = vmatpush1.msra.mxu0 %v2495
    %3870 = vmatprep.subr.mxu0 0.0
    %3871 = vmatpush1.msra.mxu0 %v2496
    %3872 = vmatprep.subr.mxu0 0.0
    %3873 = vmatpush1.msra.mxu0 %v2497
    %3874 = vmatprep.subr.mxu0 0.0
    %3875 = vmatpush1.msra.mxu0 0.0
    %3876 = vmatprep.subr.mxu0 0.0
    %3877 = vmatpush1.msra.mxu0 0.0
    %3878 = vmatprep.subr.mxu0 0.0
    %3879 = vmatpush1.msra.mxu0 0.0
    %3880 = vmatprep.subr.mxu0 0.0
    %3881 = vmatpush1.msra.mxu0 0.0
    %3882 = vmatprep.subr.mxu0 0.0
    %3883 = vmatpush1.msra.mxu0 0.0
    %3884 = vmatprep.subr.mxu0 0.0
    %3885 = vmatpush1.msra.mxu0 0.0
    %3886 = vmatprep.subr.mxu0 0.0
    %3887 = vmatpush1.msra.mxu0 0.0
    %3888 = vmatprep.subr.mxu0 0.0
    %3889 = vmatpush1.msra.mxu0 0.0
    %3890 = vmatprep.subr.mxu0 0.0
    %3891 = vmatpush1.msra.mxu0 0.0
    %3892 = vmatprep.subr.mxu0 0.0
    %3893 = vmatpush1.msra.mxu0 0.0
    %3894 = vmatprep.subr.mxu0 0.0
    %3895 = vmatpush1.msra.mxu0 0.0
    %3896 = vmatprep.subr.mxu0 0.0
    %3897 = vmatpush1.msra.mxu0 0.0
    %3898 = vmatprep.subr.mxu0 0.0
    %3899 = vmatpush1.msra.mxu0 0.0
    %3900 = vmatprep.subr.mxu0 0.0
    %3901 = vmatpush1.msra.mxu0 0.0
    %3902 = vmatprep.subr.mxu0 0.0
    %3903 = vmatpush1.msra.mxu0 0.0
    %3904 = vmatprep.subr.mxu0 0.0
    %3905 = vmatpush1.msra.mxu0 0.0
    %3906 = vmatprep.subr.mxu0 0.0
    %3907 = vmatpush1.msra.mxu0 0.0
    %3908 = vmatprep.subr.mxu0 0.0
    %3909 = vmatpush1.msra.mxu0 0.0
    %3910 = vmatprep.subr.mxu0 0.0
    %3911 = vmatpush1.msra.mxu0 0.0
    %3912 = vmatprep.subr.mxu0 0.0
    %3913 = vmatpush1.msra.mxu0 0.0
    %3914 = vmatprep.subr.mxu0 0.0
    %3915 = vmatpush1.msra.mxu0 0.0
    %3916 = vmatprep.subr.mxu0 0.0
    %3917 = vmatpush1.msra.mxu0 0.0
    %3918 = vmatprep.subr.mxu0 0.0
    %3919 = vmatpush1.msra.mxu0 0.0
    %3920 = vmatprep.subr.mxu0 0.0
    %3921 = vmatpush1.msra.mxu0 0.0
    %3922 = vmatprep.subr.mxu0 0.0
    %3923 = vmatpush1.msra.mxu0 0.0
    %3924 = vmatprep.subr.mxu0 0.0
    %3925 = vmatpush1.msra.mxu0 0.0
    %3926 = vmatprep.subr.mxu0 0.0
    %3927 = vmatpush1.msra.mxu0 0.0
    %3928 = vmatprep.subr.mxu0 0.0
    %3929 = vmatpush1.msra.mxu0 0.0
    %3930 = vmatprep.mubr.f32.mxu0 0.0
    %3931 = vmatmul.mubr.f32.gmra.mrb[0].mxu0 %v3502
    %v3932 = vpop.f32.mrb[0].mxu0
    %v3933 = vadd.f32 0.0, %v3932
    %v3934 = vpop.f32.mrb[0].mxu0
    %3935 = vdwg.mxu0
    %3937 = vrot.lane.b32.xlu0 %v3933, 96
    %v3938 = vpop.permute.xlu0 %3937
    %v3940 = vadd.f32 %v3865, %v3938
    %v3943 = vunpack.c.l.s4 1966171168
    %v3944 = vunpack.c.0.s8 %v3943
    %v3945 = vlaneseq
    %v3946 = vshrl.u32 %v3945, 7
    %v3947 = vsub.s32 %v3944, %v3946
    %v3948 = vrot.slane %v3940, %v3947
    %v3949 = vcombine.high %v3948, %v3948
    %v3951 = vunpack.c.l.s4 1966171168
    %v3952 = vunpack.c.0.s8 %v3951
    %v3953 = vlaneseq
    %v3954 = vshrl.u32 %v3953, 7
    %v3955 = vsub.s32 %v3952, %v3954
    %v3956 = vrot.slane %v3948, %v3955
    %v3958 = vunpack.c.l.s4 1966171168
    %v3959 = vunpack.c.0.s8 %v3958
    %v3960 = vlaneseq
    %v3961 = vshrl.u32 %v3960, 7
    %v3962 = vsub.s32 %v3959, %v3961
    %v3963 = vrot.slane %v3949, %v3962
    %v3964 = vlaneseq
    %v3965 = vshrl.u32 %v3964, 7
    %v3966 = vsub.s32 0, %v3965
    %v3967 = vrot.slane %v3956, %v3966
    %v3968 = vlaneseq
    %v3969 = vshrl.u32 %v3968, 7
    %v3970 = vsub.s32 0, %v3969
    %v3971 = vrot.slane %v3963, %v3970
    %3972 = vrot.lane.b32.xlu0 %v3967, 32
    %v3973 = vpop.permute.xlu0 %3972
    %3974 = vrot.lane.b32.xlu0 %v3971, 32
    %v3975 = vpop.permute.xlu0 %3974
    %3978 = vst.msk [vmem:[#allocation4 + $0x1] sm:$0x1] %vm2975, %v3973
    %3979 = vst.msk [vmem:[#allocation4 + $0x9] sm:$0x1] %vm2975, %v3975
    %3980 = vmatprep.subr.mxu0 0.0
    %3981 = vmatpush1.msra.mxu0 %v2482
    %3982 = vmatprep.subr.mxu0 0.0
    %3983 = vmatpush1.msra.mxu0 %v2483
    %3984 = vmatprep.subr.mxu0 0.0
    %3985 = vmatpush1.msra.mxu0 %v2484
    %3986 = vmatprep.subr.mxu0 0.0
    %3987 = vmatpush1.msra.mxu0 %v2485
    %3988 = vmatprep.subr.mxu0 0.0
    %3989 = vmatpush1.msra.mxu0 0.0
    %3990 = vmatprep.subr.mxu0 0.0
    %3991 = vmatpush1.msra.mxu0 0.0
    %3992 = vmatprep.subr.mxu0 0.0
    %3993 = vmatpush1.msra.mxu0 0.0
    %3994 = vmatprep.subr.mxu0 0.0
    %3995 = vmatpush1.msra.mxu0 0.0
    %3996 = vmatprep.subr.mxu0 0.0
    %3997 = vmatpush1.msra.mxu0 0.0
    %3998 = vmatprep.subr.mxu0 0.0
    %3999 = vmatpush1.msra.mxu0 0.0
    %4000 = vmatprep.subr.mxu0 0.0
    %4001 = vmatpush1.msra.mxu0 0.0
    %4002 = vmatprep.subr.mxu0 0.0
    %4003 = vmatpush1.msra.mxu0 0.0
    %4004 = vmatprep.subr.mxu0 0.0
    %4005 = vmatpush1.msra.mxu0 0.0
    %4006 = vmatprep.subr.mxu0 0.0
    %4007 = vmatpush1.msra.mxu0 0.0
    %4008 = vmatprep.subr.mxu0 0.0
    %4009 = vmatpush1.msra.mxu0 0.0
    %4010 = vmatprep.subr.mxu0 0.0
    %4011 = vmatpush1.msra.mxu0 0.0
    %4012 = vmatprep.subr.mxu0 0.0
    %4013 = vmatpush1.msra.mxu0 0.0
    %4014 = vmatprep.subr.mxu0 0.0
    %4015 = vmatpush1.msra.mxu0 0.0
    %4016 = vmatprep.subr.mxu0 0.0
    %4017 = vmatpush1.msra.mxu0 0.0
    %4018 = vmatprep.subr.mxu0 0.0
    %4019 = vmatpush1.msra.mxu0 0.0
    %4020 = vmatprep.subr.mxu0 0.0
    %4021 = vmatpush1.msra.mxu0 0.0
    %4022 = vmatprep.subr.mxu0 0.0
    %4023 = vmatpush1.msra.mxu0 0.0
    %4024 = vmatprep.subr.mxu0 0.0
    %4025 = vmatpush1.msra.mxu0 0.0
    %4026 = vmatprep.subr.mxu0 0.0
    %4027 = vmatpush1.msra.mxu0 0.0
    %4028 = vmatprep.subr.mxu0 0.0
    %4029 = vmatpush1.msra.mxu0 0.0
    %4030 = vmatprep.subr.mxu0 0.0
    %4031 = vmatpush1.msra.mxu0 0.0
    %4032 = vmatprep.subr.mxu0 0.0
    %4033 = vmatpush1.msra.mxu0 0.0
    %4034 = vmatprep.subr.mxu0 0.0
    %4035 = vmatpush1.msra.mxu0 0.0
    %4036 = vmatprep.subr.mxu0 0.0
    %4037 = vmatpush1.msra.mxu0 0.0
    %4038 = vmatprep.subr.mxu0 0.0
    %4039 = vmatpush1.msra.mxu0 0.0
    %4040 = vmatprep.subr.mxu0 0.0
    %4041 = vmatpush1.msra.mxu0 0.0
    %4042 = vmatprep.subr.mxu0 0.0
    %4043 = vmatpush1.msra.mxu0 0.0
    %4044 = vmatprep.mubr.f32.mxu0 0.0
    %4045 = vmatmul.mubr.f32.gmra.mrb[0].mxu0 %v3714
    %v4046 = vpop.f32.mrb[0].mxu0
    %v4047 = vadd.f32 0.0, %v4046
    %v4048 = vpop.f32.mrb[0].mxu0
    %4049 = vdwg.mxu0
    %v4050 = vlaneseq
    %v4051 = vshrl.u32 %v4050, 7
    %v4052 = vsub.s32 0, %v4051
    %v4053 = vrot.slane %v4047, %v4052
    %v4054 = vadd.f32 %v2310, %v4053
    %v4055 = vtanh.pop %v4054
    %v4056 = vmul.f32 %v4055, %v2469
    %v4057 = vsel %vm46, %v4056, 0.0
    %4058 = vadd.xlane.f32.xlu0 %v4057
    %v4059 = vpop.xlane.xlu0 %4058
    %v4060 = vadd.f32 %v4059, %v2463
    %v4061 = vsel %vm2582, %v4060, -inf
    %v4062 = vrot.slane %v4061, 4
    %v4063 = vmax.f32 %v4061, %v4062
    %v4064 = vrot.slane %v4063, 2
    %v4065 = vmax.f32 %v4063, %v4064
    %v4066 = vrot.slane %v4065, 1
    %v4067 = vmax.f32 %v4065, %v4066
    %v4068 = vsub.f32 %v4060, %v4067
    %v4069 = vmul.f32 %v4068, 1.442695
    %v4070 = vpow.pop %v4069
    %v4071 = vsel %vm2582, %v4070, 0.0
    %v4072 = vrot.slane %v4071, 4
    %v4073 = vadd.f32 %v4071, %v4072
    %v4074 = vrot.slane %v4073, 2
    %v4075 = vadd.f32 %v4073, %v4074
    %v4076 = vrot.slane %v4075, 1
    %v4077 = vadd.f32 %v4075, %v4076
    %v4078 = vrcp.pop %v4077
    %v4079 = vmul.f32 %v4070, %v4078
    %4081 = vset.pattern.permute.xlu0 0
    %4082 = vperm.xlu0 %4081, %v4079
    %v4083 = vpop.permute.xlu0 %4082
    %v4085 = vmul.f32 %v4083, %v2082
    %v4086 = vsel %vm2608, %v4085, 0.0
    %v4087 = vrot.slane %v4086, 4
    %v4088 = vadd.f32 %v4086, %v4087
    %v4089 = vrot.slane %v4088, 2
    %v4090 = vadd.f32 %v4088, %v4089
    %v4091 = vrot.slane %v4090, 1
    %v4092 = vadd.f32 %v4090, %v4091
    %v4093 = vmul.f32 %v4083, %v2132
    %v4094 = vsel %vm2608, %v4093, 0.0
    %v4095 = vrot.slane %v4094, 4
    %v4096 = vadd.f32 %v4094, %v4095
    %v4097 = vrot.slane %v4096, 2
    %v4098 = vadd.f32 %v4096, %v4097
    %v4099 = vrot.slane %v4098, 1
    %v4100 = vadd.f32 %v4098, %v4099
    %v4101 = vlaneseq
    %v4102 = vshrl.u32 %v4101, 7
    %v4103 = vsub.s32 1, %v4102
    %v4104 = vrot.slane %v4047, %v4103
    %v4105 = vadd.f32 %v2460, %v4104
    %v4106 = vtanh.pop %v4105
    %v4107 = vmul.f32 %v4106, %v2469
    %v4108 = vsel %vm46, %v4107, 0.0
    %4109 = vadd.xlane.f32.xlu0 %v4108
    %v4110 = vpop.xlane.xlu0 %4109
    %v4111 = vadd.f32 %v4110, %v2465
    %v4112 = vsel %vm2582, %v4111, -inf
    %v4113 = vrot.slane %v4112, 4
    %v4114 = vmax.f32 %v4112, %v4113
    %v4115 = vrot.slane %v4114, 2
    %v4116 = vmax.f32 %v4114, %v4115
    %v4117 = vrot.slane %v4116, 1
    %v4118 = vmax.f32 %v4116, %v4117
    %v4119 = vsub.f32 %v4111, %v4118
    %v4120 = vmul.f32 %v4119, 1.442695
    %v4121 = vpow.pop %v4120
    %v4122 = vsel %vm2582, %v4121, 0.0
    %v4123 = vrot.slane %v4122, 4
    %v4124 = vadd.f32 %v4122, %v4123
    %v4125 = vrot.slane %v4124, 2
    %v4126 = vadd.f32 %v4124, %v4125
    %v4127 = vrot.slane %v4126, 1
    %v4128 = vadd.f32 %v4126, %v4127
    %v4129 = vrcp.pop %v4128
    %v4130 = vmul.f32 %v4121, %v4129
    %4132 = vset.pattern.permute.xlu0 0
    %4133 = vperm.xlu0 %4132, %v4130
    %v4134 = vpop.permute.xlu0 %4133
    %v4136 = vmul.f32 %v4134, %v2104
    %v4137 = vsel %vm2608, %v4136, 0.0
    %v4138 = vrot.slane %v4137, 4
    %v4139 = vadd.f32 %v4137, %v4138
    %v4140 = vrot.slane %v4139, 2
    %v4141 = vadd.f32 %v4139, %v4140
    %v4142 = vrot.slane %v4141, 1
    %v4143 = vadd.f32 %v4141, %v4142
    %v4144 = vmul.f32 %v4134, %v2154
    %v4145 = vsel %vm2608, %v4144, 0.0
    %v4146 = vrot.slane %v4145, 4
    %v4147 = vadd.f32 %v4145, %v4146
    %v4148 = vrot.slane %v4147, 2
    %v4149 = vadd.f32 %v4147, %v4148
    %v4150 = vrot.slane %v4149, 1
    %v4151 = vadd.f32 %v4149, %v4150
    %v4152 = vsel %vm2069, %v4092, %v4143
    %v4153 = vsel %vm2069, %v4100, %v4151
    %s4154 = scalar_lea.vmem %s3, 4
    %v4155 = vld [vmem:[%s4154] sm:$0x3]
    %4157 = vrot.lane.b32.xlu0 %v4152, 96
    %v4158 = vpop.permute.xlu0 %4157
    %v4159 = vsel %vm46, %v4158, 0
    %4161 = vmatprep.subr.mxu0 0.0
    %4162 = vmatpush1.msra.mxu0 %v2474
    %4163 = vmatprep.subr.mxu0 0.0
    %4164 = vmatpush1.msra.mxu0 %v2475
    %4165 = vmatprep.subr.mxu0 0.0
    %4166 = vmatpush1.msra.mxu0 %v2476
    %4167 = vmatprep.subr.mxu0 0.0
    %4168 = vmatpush1.msra.mxu0 %v2477
    %4169 = vmatprep.subr.mxu0 0.0
    %4170 = vmatpush1.msra.mxu0 0.0
    %4171 = vmatprep.subr.mxu0 0.0
    %4172 = vmatpush1.msra.mxu0 0.0
    %4173 = vmatprep.subr.mxu0 0.0
    %4174 = vmatpush1.msra.mxu0 0.0
    %4175 = vmatprep.subr.mxu0 0.0
    %4176 = vmatpush1.msra.mxu0 0.0
    %4177 = vmatprep.subr.mxu0 0.0
    %4178 = vmatpush1.msra.mxu0 0.0
    %4179 = vmatprep.subr.mxu0 0.0
    %4180 = vmatpush1.msra.mxu0 0.0
    %4181 = vmatprep.subr.mxu0 0.0
    %4182 = vmatpush1.msra.mxu0 0.0
    %4183 = vmatprep.subr.mxu0 0.0
    %4184 = vmatpush1.msra.mxu0 0.0
    %4185 = vmatprep.subr.mxu0 0.0
    %4186 = vmatpush1.msra.mxu0 0.0
    %4187 = vmatprep.subr.mxu0 0.0
    %4188 = vmatpush1.msra.mxu0 0.0
    %4189 = vmatprep.subr.mxu0 0.0
    %4190 = vmatpush1.msra.mxu0 0.0
    %4191 = vmatprep.subr.mxu0 0.0
    %4192 = vmatpush1.msra.mxu0 0.0
    %4193 = vmatprep.subr.mxu0 0.0
    %4194 = vmatpush1.msra.mxu0 0.0
    %4195 = vmatprep.subr.mxu0 0.0
    %4196 = vmatpush1.msra.mxu0 0.0
    %4197 = vmatprep.subr.mxu0 0.0
    %4198 = vmatpush1.msra.mxu0 0.0
    %4199 = vmatprep.subr.mxu0 0.0
    %4200 = vmatpush1.msra.mxu0 0.0
    %4201 = vmatprep.subr.mxu0 0.0
    %4202 = vmatpush1.msra.mxu0 0.0
    %4203 = vmatprep.subr.mxu0 0.0
    %4204 = vmatpush1.msra.mxu0 0.0
    %4205 = vmatprep.subr.mxu0 0.0
    %4206 = vmatpush1.msra.mxu0 0.0
    %4207 = vmatprep.subr.mxu0 0.0
    %4208 = vmatpush1.msra.mxu0 0.0
    %4209 = vmatprep.subr.mxu0 0.0
    %4210 = vmatpush1.msra.mxu0 0.0
    %4211 = vmatprep.subr.mxu0 0.0
    %4212 = vmatpush1.msra.mxu0 0.0
    %4213 = vmatprep.subr.mxu0 0.0
    %4214 = vmatpush1.msra.mxu0 0.0
    %4215 = vmatprep.subr.mxu0 0.0
    %4216 = vmatpush1.msra.mxu0 0.0
    %4217 = vmatprep.subr.mxu0 0.0
    %4218 = vmatpush1.msra.mxu0 0.0
    %4219 = vmatprep.subr.mxu0 0.0
    %4220 = vmatpush1.msra.mxu0 0.0
    %4221 = vmatprep.subr.mxu0 0.0
    %4222 = vmatpush1.msra.mxu0 0.0
    %4223 = vmatprep.subr.mxu0 0.0
    %4224 = vmatpush1.msra.mxu0 0.0
    %4225 = vmatprep.mubr.f32.mxu0 0.0
    %4226 = vmatmul.mubr.f32.gmra.mrb[0].mxu0 %v4159
    %v4227 = vpop.f32.mrb[0].mxu0
    %v4228 = vadd.f32 0.0, %v4227
    %v4229 = vpop.f32.mrb[0].mxu0
    %4230 = vdwg.mxu0
    %v4231 = vadd.f32 %v4155, %v4228
    %4233 = vrot.lane.b32.xlu0 %v4153, 96
    %v4234 = vpop.permute.xlu0 %4233
    %v4235 = vsel %vm46, %v4234, 0
    %4237 = vmatprep.subr.mxu0 0.0
    %4238 = vmatpush1.msra.mxu0 %v2478
    %4239 = vmatprep.subr.mxu0 0.0
    %4240 = vmatpush1.msra.mxu0 %v2479
    %4241 = vmatprep.subr.mxu0 0.0
    %4242 = vmatpush1.msra.mxu0 %v2480
    %4243 = vmatprep.subr.mxu0 0.0
    %4244 = vmatpush1.msra.mxu0 %v2481
    %4245 = vmatprep.subr.mxu0 0.0
    %4246 = vmatpush1.msra.mxu0 0.0
    %4247 = vmatprep.subr.mxu0 0.0
    %4248 = vmatpush1.msra.mxu0 0.0
    %4249 = vmatprep.subr.mxu0 0.0
    %4250 = vmatpush1.msra.mxu0 0.0
    %4251 = vmatprep.subr.mxu0 0.0
    %4252 = vmatpush1.msra.mxu0 0.0
    %4253 = vmatprep.subr.mxu0 0.0
    %4254 = vmatpush1.msra.mxu0 0.0
    %4255 = vmatprep.subr.mxu0 0.0
    %4256 = vmatpush1.msra.mxu0 0.0
    %4257 = vmatprep.subr.mxu0 0.0
    %4258 = vmatpush1.msra.mxu0 0.0
    %4259 = vmatprep.subr.mxu0 0.0
    %4260 = vmatpush1.msra.mxu0 0.0
    %4261 = vmatprep.subr.mxu0 0.0
    %4262 = vmatpush1.msra.mxu0 0.0
    %4263 = vmatprep.subr.mxu0 0.0
    %4264 = vmatpush1.msra.mxu0 0.0
    %4265 = vmatprep.subr.mxu0 0.0
    %4266 = vmatpush1.msra.mxu0 0.0
    %4267 = vmatprep.subr.mxu0 0.0
    %4268 = vmatpush1.msra.mxu0 0.0
    %4269 = vmatprep.subr.mxu0 0.0
    %4270 = vmatpush1.msra.mxu0 0.0
    %4271 = vmatprep.subr.mxu0 0.0
    %4272 = vmatpush1.msra.mxu0 0.0
    %4273 = vmatprep.subr.mxu0 0.0
    %4274 = vmatpush1.msra.mxu0 0.0
    %4275 = vmatprep.subr.mxu0 0.0
    %4276 = vmatpush1.msra.mxu0 0.0
    %4277 = vmatprep.subr.mxu0 0.0
    %4278 = vmatpush1.msra.mxu0 0.0
    %4279 = vmatprep.subr.mxu0 0.0
    %4280 = vmatpush1.msra.mxu0 0.0
    %4281 = vmatprep.subr.mxu0 0.0
    %4282 = vmatpush1.msra.mxu0 0.0
    %4283 = vmatprep.subr.mxu0 0.0
    %4284 = vmatpush1.msra.mxu0 0.0
    %4285 = vmatprep.subr.mxu0 0.0
    %4286 = vmatpush1.msra.mxu0 0.0
    %4287 = vmatprep.subr.mxu0 0.0
    %4288 = vmatpush1.msra.mxu0 0.0
    %4289 = vmatprep.subr.mxu0 0.0
    %4290 = vmatpush1.msra.mxu0 0.0
    %4291 = vmatprep.subr.mxu0 0.0
    %4292 = vmatpush1.msra.mxu0 0.0
    %4293 = vmatprep.subr.mxu0 0.0
    %4294 = vmatpush1.msra.mxu0 0.0
    %4295 = vmatprep.subr.mxu0 0.0
    %4296 = vmatpush1.msra.mxu0 0.0
    %4297 = vmatprep.subr.mxu0 0.0
    %4298 = vmatpush1.msra.mxu0 0.0
    %4299 = vmatprep.subr.mxu0 0.0
    %4300 = vmatpush1.msra.mxu0 0.0
    %4301 = vmatprep.mubr.f32.mxu0 0.0
    %4302 = vmatmul.mubr.f32.gmra.mrb[0].mxu0 %v4235
    %v4303 = vpop.f32.mrb[0].mxu0
    %v4304 = vadd.f32 0.0, %v4303
    %v4305 = vpop.f32.mrb[0].mxu0
    %4306 = vdwg.mxu0
    %v4307 = vadd.f32 %v4231, %v4304
    %4308 = vmatprep.subr.mxu0 0.0
    %4309 = vmatpush1.msra.mxu0 %v2470
    %4310 = vmatprep.subr.mxu0 0.0
    %4311 = vmatpush1.msra.mxu0 %v2471
    %4312 = vmatprep.subr.mxu0 0.0
    %4313 = vmatpush1.msra.mxu0 %v2472
    %4314 = vmatprep.subr.mxu0 0.0
    %4315 = vmatpush1.msra.mxu0 %v2473
    %4316 = vmatprep.subr.mxu0 0.0
    %4317 = vmatpush1.msra.mxu0 0.0
    %4318 = vmatprep.subr.mxu0 0.0
    %4319 = vmatpush1.msra.mxu0 0.0
    %4320 = vmatprep.subr.mxu0 0.0
    %4321 = vmatpush1.msra.mxu0 0.0
    %4322 = vmatprep.subr.mxu0 0.0
    %4323 = vmatpush1.msra.mxu0 0.0
    %4324 = vmatprep.subr.mxu0 0.0
    %4325 = vmatpush1.msra.mxu0 0.0
    %4326 = vmatprep.subr.mxu0 0.0
    %4327 = vmatpush1.msra.mxu0 0.0
    %4328 = vmatprep.subr.mxu0 0.0
    %4329 = vmatpush1.msra.mxu0 0.0
    %4330 = vmatprep.subr.mxu0 0.0
    %4331 = vmatpush1.msra.mxu0 0.0
    %4332 = vmatprep.subr.mxu0 0.0
    %4333 = vmatpush1.msra.mxu0 0.0
    %4334 = vmatprep.subr.mxu0 0.0
    %4335 = vmatpush1.msra.mxu0 0.0
    %4336 = vmatprep.subr.mxu0 0.0
    %4337 = vmatpush1.msra.mxu0 0.0
    %4338 = vmatprep.subr.mxu0 0.0
    %4339 = vmatpush1.msra.mxu0 0.0
    %4340 = vmatprep.subr.mxu0 0.0
    %4341 = vmatpush1.msra.mxu0 0.0
    %4342 = vmatprep.subr.mxu0 0.0
    %4343 = vmatpush1.msra.mxu0 0.0
    %4344 = vmatprep.subr.mxu0 0.0
    %4345 = vmatpush1.msra.mxu0 0.0
    %4346 = vmatprep.subr.mxu0 0.0
    %4347 = vmatpush1.msra.mxu0 0.0
    %4348 = vmatprep.subr.mxu0 0.0
    %4349 = vmatpush1.msra.mxu0 0.0
    %4350 = vmatprep.subr.mxu0 0.0
    %4351 = vmatpush1.msra.mxu0 0.0
    %4352 = vmatprep.subr.mxu0 0.0
    %4353 = vmatpush1.msra.mxu0 0.0
    %4354 = vmatprep.subr.mxu0 0.0
    %4355 = vmatpush1.msra.mxu0 0.0
    %4356 = vmatprep.subr.mxu0 0.0
    %4357 = vmatpush1.msra.mxu0 0.0
    %4358 = vmatprep.subr.mxu0 0.0
    %4359 = vmatpush1.msra.mxu0 0.0
    %4360 = vmatprep.subr.mxu0 0.0
    %4361 = vmatpush1.msra.mxu0 0.0
    %4362 = vmatprep.subr.mxu0 0.0
    %4363 = vmatpush1.msra.mxu0 0.0
    %4364 = vmatprep.subr.mxu0 0.0
    %4365 = vmatpush1.msra.mxu0 0.0
    %4366 = vmatprep.subr.mxu0 0.0
    %4367 = vmatpush1.msra.mxu0 0.0
    %4368 = vmatprep.subr.mxu0 0.0
    %4369 = vmatpush1.msra.mxu0 0.0
    %4370 = vmatprep.subr.mxu0 0.0
    %4371 = vmatpush1.msra.mxu0 0.0
    %4372 = vmatprep.mubr.f32.mxu0 0.0
    %4373 = vmatmul.mubr.f32.gmra.mrb[0].mxu0 %v3714
    %v4374 = vpop.f32.mrb[0].mxu0
    %v4375 = vadd.f32 0.0, %v4374
    %v4376 = vpop.f32.mrb[0].mxu0
    %4377 = vdwg.mxu0
    %v4378 = vadd.f32 %v4307, %v4375
    %v4379 = vxor.u32 %v4378, 2147483648
    %v4380 = vmul.f32 %v4379, 1.442695
    %v4381 = vpow.pop %v4380
    %v4382 = vadd.f32 %v4381, 1.0
    %v4383 = vrcp.pop %v4382
    %v4384 = vmul.f32 1.0, %v4383
    %v4385 = vadd.f32 %v4375, %v2913
    %4387 = vrot.lane.b32.xlu0 %v4385, 64
    %v4388 = vpop.permute.xlu0 %4387
    %v4390 = vmul.f32 %v4384, %v4388
    %4392 = vrot.lane.b32.xlu0 %v4390, 64
    %v4393 = vpop.permute.xlu0 %4392
    %v4395 = vadd.f32 %v4307, %v4393
    %v4396 = vtanh.pop %v4395
    %v4397 = vsub.f32 1.0, %v4384
    %4399 = vrot.lane.b32.xlu0 %v4396, 96
    %v4400 = vpop.permute.xlu0 %4399
    %v4402 = vmul.f32 %v4397, %v4400
    %v4403 = vmul.f32 %v4384, %v3671
    %v4404 = vadd.f32 %v4402, %v4403
    %v4407 = vunpack.c.l.s4 1966171168
    %v4408 = vunpack.c.0.s8 %v4407
    %v4409 = vlaneseq
    %v4410 = vshrl.u32 %v4409, 7
    %v4411 = vsub.s32 %v4408, %v4410
    %v4412 = vrot.slane %v4404, %v4411
    %v4413 = vcombine.high %v4412, %v4412
    %v4415 = vunpack.c.l.s4 1966171168
    %v4416 = vunpack.c.0.s8 %v4415
    %v4417 = vlaneseq
    %v4418 = vshrl.u32 %v4417, 7
    %v4419 = vsub.s32 %v4416, %v4418
    %v4420 = vrot.slane %v4412, %v4419
    %v4422 = vunpack.c.l.s4 1966171168
    %v4423 = vunpack.c.0.s8 %v4422
    %v4424 = vlaneseq
    %v4425 = vshrl.u32 %v4424, 7
    %v4426 = vsub.s32 %v4423, %v4425
    %v4427 = vrot.slane %v4413, %v4426
    %v4428 = vlaneseq
    %v4429 = vshrl.u32 %v4428, 7
    %v4430 = vsub.s32 0, %v4429
    %v4431 = vrot.slane %v4420, %v4430
    %v4432 = vlaneseq
    %v4433 = vshrl.u32 %v4432, 7
    %v4434 = vsub.s32 0, %v4433
    %v4435 = vrot.slane %v4427, %v4434
    %4436 = vrot.lane.b32.xlu0 %v4431, 96
    %v4437 = vpop.permute.xlu0 %4436
    %4438 = vrot.lane.b32.xlu0 %v4435, 96
    %v4439 = vpop.permute.xlu0 %4438
    %4442 = vst.msk [vmem:[#allocation2 + $0x2] sm:$0x1] %vm2975, %v4437
    %4443 = vst.msk [vmem:[#allocation2 + $0xa] sm:$0x1] %vm2975, %v4439
    %v4444 = vld [vmem:[%s4154] sm:$0x3]
    %4445 = vrot.lane.b32.xlu0 %v4404, 96
    %v4446 = vpop.permute.xlu0 %4445
    %v4447 = vsel %vm46, %v4446, 0
    %4449 = vmatprep.subr.mxu0 0.0
    %4450 = vmatpush1.msra.mxu0 %v2486
    %4451 = vmatprep.subr.mxu0 0.0
    %4452 = vmatpush1.msra.mxu0 %v2487
    %4453 = vmatprep.subr.mxu0 0.0
    %4454 = vmatpush1.msra.mxu0 %v2488
    %4455 = vmatprep.subr.mxu0 0.0
    %4456 = vmatpush1.msra.mxu0 %v2489
    %4457 = vmatprep.subr.mxu0 0.0
    %4458 = vmatpush1.msra.mxu0 0.0
    %4459 = vmatprep.subr.mxu0 0.0
    %4460 = vmatpush1.msra.mxu0 0.0
    %4461 = vmatprep.subr.mxu0 0.0
    %4462 = vmatpush1.msra.mxu0 0.0
    %4463 = vmatprep.subr.mxu0 0.0
    %4464 = vmatpush1.msra.mxu0 0.0
    %4465 = vmatprep.subr.mxu0 0.0
    %4466 = vmatpush1.msra.mxu0 0.0
    %4467 = vmatprep.subr.mxu0 0.0
    %4468 = vmatpush1.msra.mxu0 0.0
    %4469 = vmatprep.subr.mxu0 0.0
    %4470 = vmatpush1.msra.mxu0 0.0
    %4471 = vmatprep.subr.mxu0 0.0
    %4472 = vmatpush1.msra.mxu0 0.0
    %4473 = vmatprep.subr.mxu0 0.0
    %4474 = vmatpush1.msra.mxu0 0.0
    %4475 = vmatprep.subr.mxu0 0.0
    %4476 = vmatpush1.msra.mxu0 0.0
    %4477 = vmatprep.subr.mxu0 0.0
    %4478 = vmatpush1.msra.mxu0 0.0
    %4479 = vmatprep.subr.mxu0 0.0
    %4480 = vmatpush1.msra.mxu0 0.0
    %4481 = vmatprep.subr.mxu0 0.0
    %4482 = vmatpush1.msra.mxu0 0.0
    %4483 = vmatprep.subr.mxu0 0.0
    %4484 = vmatpush1.msra.mxu0 0.0
    %4485 = vmatprep.subr.mxu0 0.0
    %4486 = vmatpush1.msra.mxu0 0.0
    %4487 = vmatprep.subr.mxu0 0.0
    %4488 = vmatpush1.msra.mxu0 0.0
    %4489 = vmatprep.subr.mxu0 0.0
    %4490 = vmatpush1.msra.mxu0 0.0
    %4491 = vmatprep.subr.mxu0 0.0
    %4492 = vmatpush1.msra.mxu0 0.0
    %4493 = vmatprep.subr.mxu0 0.0
    %4494 = vmatpush1.msra.mxu0 0.0
    %4495 = vmatprep.subr.mxu0 0.0
    %4496 = vmatpush1.msra.mxu0 0.0
    %4497 = vmatprep.subr.mxu0 0.0
    %4498 = vmatpush1.msra.mxu0 0.0
    %4499 = vmatprep.subr.mxu0 0.0
    %4500 = vmatpush1.msra.mxu0 0.0
    %4501 = vmatprep.subr.mxu0 0.0
    %4502 = vmatpush1.msra.mxu0 0.0
    %4503 = vmatprep.subr.mxu0 0.0
    %4504 = vmatpush1.msra.mxu0 0.0
    %4505 = vmatprep.subr.mxu0 0.0
    %4506 = vmatpush1.msra.mxu0 0.0
    %4507 = vmatprep.subr.mxu0 0.0
    %4508 = vmatpush1.msra.mxu0 0.0
    %4509 = vmatprep.subr.mxu0 0.0
    %4510 = vmatpush1.msra.mxu0 0.0
    %4511 = vmatprep.subr.mxu0 0.0
    %4512 = vmatpush1.msra.mxu0 0.0
    %4513 = vmatprep.mubr.f32.mxu0 0.0
    %4514 = vmatmul.mubr.f32.gmra.mrb[0].mxu0 %v4447
    %v4515 = vpop.f32.mrb[0].mxu0
    %v4516 = vadd.f32 0.0, %v4515
    %v4517 = vpop.f32.mrb[0].mxu0
    %4518 = vdwg.mxu0
    %4520 = vrot.lane.b32.xlu0 %v4516, 96
    %v4521 = vpop.permute.xlu0 %4520
    %v4523 = vadd.f32 %v4444, %v4521
    %4524 = vmatprep.subr.mxu0 0.0
    %4525 = vmatpush1.msra.mxu0 %v2490
    %4526 = vmatprep.subr.mxu0 0.0
    %4527 = vmatpush1.msra.mxu0 %v2491
    %4528 = vmatprep.subr.mxu0 0.0
    %4529 = vmatpush1.msra.mxu0 %v2492
    %4530 = vmatprep.subr.mxu0 0.0
    %4531 = vmatpush1.msra.mxu0 %v2493
    %4532 = vmatprep.subr.mxu0 0.0
    %4533 = vmatpush1.msra.mxu0 0.0
    %4534 = vmatprep.subr.mxu0 0.0
    %4535 = vmatpush1.msra.mxu0 0.0
    %4536 = vmatprep.subr.mxu0 0.0
    %4537 = vmatpush1.msra.mxu0 0.0
    %4538 = vmatprep.subr.mxu0 0.0
    %4539 = vmatpush1.msra.mxu0 0.0
    %4540 = vmatprep.subr.mxu0 0.0
    %4541 = vmatpush1.msra.mxu0 0.0
    %4542 = vmatprep.subr.mxu0 0.0
    %4543 = vmatpush1.msra.mxu0 0.0
    %4544 = vmatprep.subr.mxu0 0.0
    %4545 = vmatpush1.msra.mxu0 0.0
    %4546 = vmatprep.subr.mxu0 0.0
    %4547 = vmatpush1.msra.mxu0 0.0
    %4548 = vmatprep.subr.mxu0 0.0
    %4549 = vmatpush1.msra.mxu0 0.0
    %4550 = vmatprep.subr.mxu0 0.0
    %4551 = vmatpush1.msra.mxu0 0.0
    %4552 = vmatprep.subr.mxu0 0.0
    %4553 = vmatpush1.msra.mxu0 0.0
    %4554 = vmatprep.subr.mxu0 0.0
    %4555 = vmatpush1.msra.mxu0 0.0
    %4556 = vmatprep.subr.mxu0 0.0
    %4557 = vmatpush1.msra.mxu0 0.0
    %4558 = vmatprep.subr.mxu0 0.0
    %4559 = vmatpush1.msra.mxu0 0.0
    %4560 = vmatprep.subr.mxu0 0.0
    %4561 = vmatpush1.msra.mxu0 0.0
    %4562 = vmatprep.subr.mxu0 0.0
    %4563 = vmatpush1.msra.mxu0 0.0
    %4564 = vmatprep.subr.mxu0 0.0
    %4565 = vmatpush1.msra.mxu0 0.0
    %4566 = vmatprep.subr.mxu0 0.0
    %4567 = vmatpush1.msra.mxu0 0.0
    %4568 = vmatprep.subr.mxu0 0.0
    %4569 = vmatpush1.msra.mxu0 0.0
    %4570 = vmatprep.subr.mxu0 0.0
    %4571 = vmatpush1.msra.mxu0 0.0
    %4572 = vmatprep.subr.mxu0 0.0
    %4573 = vmatpush1.msra.mxu0 0.0
    %4574 = vmatprep.subr.mxu0 0.0
    %4575 = vmatpush1.msra.mxu0 0.0
    %4576 = vmatprep.subr.mxu0 0.0
    %4577 = vmatpush1.msra.mxu0 0.0
    %4578 = vmatprep.subr.mxu0 0.0
    %4579 = vmatpush1.msra.mxu0 0.0
    %4580 = vmatprep.subr.mxu0 0.0
    %4581 = vmatpush1.msra.mxu0 0.0
    %4582 = vmatprep.subr.mxu0 0.0
    %4583 = vmatpush1.msra.mxu0 0.0
    %4584 = vmatprep.subr.mxu0 0.0
    %4585 = vmatpush1.msra.mxu0 0.0
    %4586 = vmatprep.subr.mxu0 0.0
    %4587 = vmatpush1.msra.mxu0 0.0
    %4588 = vmatprep.mubr.f32.mxu0 0.0
    %4589 = vmatmul.mubr.f32.gmra.mrb[0].mxu0 %v4159
    %v4590 = vpop.f32.mrb[0].mxu0
    %v4591 = vadd.f32 0.0, %v4590
    %v4592 = vpop.f32.mrb[0].mxu0
    %4593 = vdwg.mxu0
    %4595 = vrot.lane.b32.xlu0 %v4591, 96
    %v4596 = vpop.permute.xlu0 %4595
    %v4598 = vadd.f32 %v4523, %v4596
    %4599 = vmatprep.subr.mxu0 0.0
    %4600 = vmatpush1.msra.mxu0 %v2494
    %4601 = vmatprep.subr.mxu0 0.0
    %4602 = vmatpush1.msra.mxu0 %v2495
    %4603 = vmatprep.subr.mxu0 0.0
    %4604 = vmatpush1.msra.mxu0 %v2496
    %4605 = vmatprep.subr.mxu0 0.0
    %4606 = vmatpush1.msra.mxu0 %v2497
    %4607 = vmatprep.subr.mxu0 0.0
    %4608 = vmatpush1.msra.mxu0 0.0
    %4609 = vmatprep.subr.mxu0 0.0
    %4610 = vmatpush1.msra.mxu0 0.0
    %4611 = vmatprep.subr.mxu0 0.0
    %4612 = vmatpush1.msra.mxu0 0.0
    %4613 = vmatprep.subr.mxu0 0.0
    %4614 = vmatpush1.msra.mxu0 0.0
    %4615 = vmatprep.subr.mxu0 0.0
    %4616 = vmatpush1.msra.mxu0 0.0
    %4617 = vmatprep.subr.mxu0 0.0
    %4618 = vmatpush1.msra.mxu0 0.0
    %4619 = vmatprep.subr.mxu0 0.0
    %4620 = vmatpush1.msra.mxu0 0.0
    %4621 = vmatprep.subr.mxu0 0.0
    %4622 = vmatpush1.msra.mxu0 0.0
    %4623 = vmatprep.subr.mxu0 0.0
    %4624 = vmatpush1.msra.mxu0 0.0
    %4625 = vmatprep.subr.mxu0 0.0
    %4626 = vmatpush1.msra.mxu0 0.0
    %4627 = vmatprep.subr.mxu0 0.0
    %4628 = vmatpush1.msra.mxu0 0.0
    %4629 = vmatprep.subr.mxu0 0.0
    %4630 = vmatpush1.msra.mxu0 0.0
    %4631 = vmatprep.subr.mxu0 0.0
    %4632 = vmatpush1.msra.mxu0 0.0
    %4633 = vmatprep.subr.mxu0 0.0
    %4634 = vmatpush1.msra.mxu0 0.0
    %4635 = vmatprep.subr.mxu0 0.0
    %4636 = vmatpush1.msra.mxu0 0.0
    %4637 = vmatprep.subr.mxu0 0.0
    %4638 = vmatpush1.msra.mxu0 0.0
    %4639 = vmatprep.subr.mxu0 0.0
    %4640 = vmatpush1.msra.mxu0 0.0
    %4641 = vmatprep.subr.mxu0 0.0
    %4642 = vmatpush1.msra.mxu0 0.0
    %4643 = vmatprep.subr.mxu0 0.0
    %4644 = vmatpush1.msra.mxu0 0.0
    %4645 = vmatprep.subr.mxu0 0.0
    %4646 = vmatpush1.msra.mxu0 0.0
    %4647 = vmatprep.subr.mxu0 0.0
    %4648 = vmatpush1.msra.mxu0 0.0
    %4649 = vmatprep.subr.mxu0 0.0
    %4650 = vmatpush1.msra.mxu0 0.0
    %4651 = vmatprep.subr.mxu0 0.0
    %4652 = vmatpush1.msra.mxu0 0.0
    %4653 = vmatprep.subr.mxu0 0.0
    %4654 = vmatpush1.msra.mxu0 0.0
    %4655 = vmatprep.subr.mxu0 0.0
    %4656 = vmatpush1.msra.mxu0 0.0
    %4657 = vmatprep.subr.mxu0 0.0
    %4658 = vmatpush1.msra.mxu0 0.0
    %4659 = vmatprep.subr.mxu0 0.0
    %4660 = vmatpush1.msra.mxu0 0.0
    %4661 = vmatprep.subr.mxu0 0.0
    %4662 = vmatpush1.msra.mxu0 0.0
    %4663 = vmatprep.mubr.f32.mxu0 0.0
    %4664 = vmatmul.mubr.f32.gmra.mrb[0].mxu0 %v4235
    %v4665 = vpop.f32.mrb[0].mxu0
    %v4666 = vadd.f32 0.0, %v4665
    %v4667 = vpop.f32.mrb[0].mxu0
    %4668 = vdwg.mxu0
    %4670 = vrot.lane.b32.xlu0 %v4666, 96
    %v4671 = vpop.permute.xlu0 %4670
    %v4673 = vadd.f32 %v4598, %v4671
    %v4676 = vunpack.c.l.s4 1966171168
    %v4677 = vunpack.c.0.s8 %v4676
    %v4678 = vlaneseq
    %v4679 = vshrl.u32 %v4678, 7
    %v4680 = vsub.s32 %v4677, %v4679
    %v4681 = vrot.slane %v4673, %v4680
    %v4682 = vcombine.high %v4681, %v4681
    %v4684 = vunpack.c.l.s4 1966171168
    %v4685 = vunpack.c.0.s8 %v4684
    %v4686 = vlaneseq
    %v4687 = vshrl.u32 %v4686, 7
    %v4688 = vsub.s32 %v4685, %v4687
    %v4689 = vrot.slane %v4681, %v4688
    %v4691 = vunpack.c.l.s4 1966171168
    %v4692 = vunpack.c.0.s8 %v4691
    %v4693 = vlaneseq
    %v4694 = vshrl.u32 %v4693, 7
    %v4695 = vsub.s32 %v4692, %v4694
    %v4696 = vrot.slane %v4682, %v4695
    %v4697 = vlaneseq
    %v4698 = vshrl.u32 %v4697, 7
    %v4699 = vsub.s32 0, %v4698
    %v4700 = vrot.slane %v4689, %v4699
    %v4701 = vlaneseq
    %v4702 = vshrl.u32 %v4701, 7
    %v4703 = vsub.s32 0, %v4702
    %v4704 = vrot.slane %v4696, %v4703
    %4705 = vrot.lane.b32.xlu0 %v4700, 32
    %v4706 = vpop.permute.xlu0 %4705
    %4707 = vrot.lane.b32.xlu0 %v4704, 32
    %v4708 = vpop.permute.xlu0 %4707
    %4711 = vst.msk [vmem:[#allocation4 + $0x2] sm:$0x1] %vm2975, %v4706
    %4712 = vst.msk [vmem:[#allocation4 + $0xa] sm:$0x1] %vm2975, %v4708
    %4713 = vmatprep.subr.mxu0 0.0
    %4714 = vmatpush1.msra.mxu0 %v2482
    %4715 = vmatprep.subr.mxu0 0.0
    %4716 = vmatpush1.msra.mxu0 %v2483
    %4717 = vmatprep.subr.mxu0 0.0
    %4718 = vmatpush1.msra.mxu0 %v2484
    %4719 = vmatprep.subr.mxu0 0.0
    %4720 = vmatpush1.msra.mxu0 %v2485
    %4721 = vmatprep.subr.mxu0 0.0
    %4722 = vmatpush1.msra.mxu0 0.0
    %4723 = vmatprep.subr.mxu0 0.0
    %4724 = vmatpush1.msra.mxu0 0.0
    %4725 = vmatprep.subr.mxu0 0.0
    %4726 = vmatpush1.msra.mxu0 0.0
    %4727 = vmatprep.subr.mxu0 0.0
    %4728 = vmatpush1.msra.mxu0 0.0
    %4729 = vmatprep.subr.mxu0 0.0
    %4730 = vmatpush1.msra.mxu0 0.0
    %4731 = vmatprep.subr.mxu0 0.0
    %4732 = vmatpush1.msra.mxu0 0.0
    %4733 = vmatprep.subr.mxu0 0.0
    %4734 = vmatpush1.msra.mxu0 0.0
    %4735 = vmatprep.subr.mxu0 0.0
    %4736 = vmatpush1.msra.mxu0 0.0
    %4737 = vmatprep.subr.mxu0 0.0
    %4738 = vmatpush1.msra.mxu0 0.0
    %4739 = vmatprep.subr.mxu0 0.0
    %4740 = vmatpush1.msra.mxu0 0.0
    %4741 = vmatprep.subr.mxu0 0.0
    %4742 = vmatpush1.msra.mxu0 0.0
    %4743 = vmatprep.subr.mxu0 0.0
    %4744 = vmatpush1.msra.mxu0 0.0
    %4745 = vmatprep.subr.mxu0 0.0
    %4746 = vmatpush1.msra.mxu0 0.0
    %4747 = vmatprep.subr.mxu0 0.0
    %4748 = vmatpush1.msra.mxu0 0.0
    %4749 = vmatprep.subr.mxu0 0.0
    %4750 = vmatpush1.msra.mxu0 0.0
    %4751 = vmatprep.subr.mxu0 0.0
    %4752 = vmatpush1.msra.mxu0 0.0
    %4753 = vmatprep.subr.mxu0 0.0
    %4754 = vmatpush1.msra.mxu0 0.0
    %4755 = vmatprep.subr.mxu0 0.0
    %4756 = vmatpush1.msra.mxu0 0.0
    %4757 = vmatprep.subr.mxu0 0.0
    %4758 = vmatpush1.msra.mxu0 0.0
    %4759 = vmatprep.subr.mxu0 0.0
    %4760 = vmatpush1.msra.mxu0 0.0
    %4761 = vmatprep.subr.mxu0 0.0
    %4762 = vmatpush1.msra.mxu0 0.0
    %4763 = vmatprep.subr.mxu0 0.0
    %4764 = vmatpush1.msra.mxu0 0.0
    %4765 = vmatprep.subr.mxu0 0.0
    %4766 = vmatpush1.msra.mxu0 0.0
    %4767 = vmatprep.subr.mxu0 0.0
    %4768 = vmatpush1.msra.mxu0 0.0
    %4769 = vmatprep.subr.mxu0 0.0
    %4770 = vmatpush1.msra.mxu0 0.0
    %4771 = vmatprep.subr.mxu0 0.0
    %4772 = vmatpush1.msra.mxu0 0.0
    %4773 = vmatprep.subr.mxu0 0.0
    %4774 = vmatpush1.msra.mxu0 0.0
    %4775 = vmatprep.subr.mxu0 0.0
    %4776 = vmatpush1.msra.mxu0 0.0
    %4777 = vmatprep.mubr.f32.mxu0 0.0
    %4778 = vmatmul.mubr.f32.gmra.mrb[0].mxu0 %v4447
    %v4779 = vpop.f32.mrb[0].mxu0
    %v4780 = vadd.f32 0.0, %v4779
    %v4781 = vpop.f32.mrb[0].mxu0
    %4782 = vdwg.mxu0
    %v4783 = vlaneseq
    %v4784 = vshrl.u32 %v4783, 7
    %v4785 = vsub.s32 0, %v4784
    %v4786 = vrot.slane %v4780, %v4785
    %v4787 = vadd.f32 %v2310, %v4786
    %v4788 = vtanh.pop %v4787
    %v4789 = vmul.f32 %v4788, %v2469
    %v4790 = vsel %vm46, %v4789, 0.0
    %4791 = vadd.xlane.f32.xlu0 %v4790
    %v4792 = vpop.xlane.xlu0 %4791
    %v4793 = vadd.f32 %v4792, %v2463
    %v4794 = vsel %vm2582, %v4793, -inf
    %v4795 = vrot.slane %v4794, 4
    %v4796 = vmax.f32 %v4794, %v4795
    %v4797 = vrot.slane %v4796, 2
    %v4798 = vmax.f32 %v4796, %v4797
    %v4799 = vrot.slane %v4798, 1
    %v4800 = vmax.f32 %v4798, %v4799
    %v4801 = vsub.f32 %v4793, %v4800
    %v4802 = vmul.f32 %v4801, 1.442695
    %v4803 = vpow.pop %v4802
    %v4804 = vsel %vm2582, %v4803, 0.0
    %v4805 = vrot.slane %v4804, 4
    %v4806 = vadd.f32 %v4804, %v4805
    %v4807 = vrot.slane %v4806, 2
    %v4808 = vadd.f32 %v4806, %v4807
    %v4809 = vrot.slane %v4808, 1
    %v4810 = vadd.f32 %v4808, %v4809
    %v4811 = vrcp.pop %v4810
    %v4812 = vmul.f32 %v4803, %v4811
    %4814 = vset.pattern.permute.xlu0 0
    %4815 = vperm.xlu0 %4814, %v4812
    %v4816 = vpop.permute.xlu0 %4815
    %v4818 = vmul.f32 %v4816, %v2082
    %v4819 = vsel %vm2608, %v4818, 0.0
    %v4820 = vrot.slane %v4819, 4
    %v4821 = vadd.f32 %v4819, %v4820
    %v4822 = vrot.slane %v4821, 2
    %v4823 = vadd.f32 %v4821, %v4822
    %v4824 = vrot.slane %v4823, 1
    %v4825 = vadd.f32 %v4823, %v4824
    %v4826 = vmul.f32 %v4816, %v2132
    %v4827 = vsel %vm2608, %v4826, 0.0
    %v4828 = vrot.slane %v4827, 4
    %v4829 = vadd.f32 %v4827, %v4828
    %v4830 = vrot.slane %v4829, 2
    %v4831 = vadd.f32 %v4829, %v4830
    %v4832 = vrot.slane %v4831, 1
    %v4833 = vadd.f32 %v4831, %v4832
    %v4834 = vlaneseq
    %v4835 = vshrl.u32 %v4834, 7
    %v4836 = vsub.s32 1, %v4835
    %v4837 = vrot.slane %v4780, %v4836
    %v4838 = vadd.f32 %v2460, %v4837
    %v4839 = vtanh.pop %v4838
    %v4840 = vmul.f32 %v4839, %v2469
    %v4841 = vsel %vm46, %v4840, 0.0
    %4842 = vadd.xlane.f32.xlu0 %v4841
    %v4843 = vpop.xlane.xlu0 %4842
    %v4844 = vadd.f32 %v4843, %v2465
    %v4845 = vsel %vm2582, %v4844, -inf
    %v4846 = vrot.slane %v4845, 4
    %v4847 = vmax.f32 %v4845, %v4846
    %v4848 = vrot.slane %v4847, 2
    %v4849 = vmax.f32 %v4847, %v4848
    %v4850 = vrot.slane %v4849, 1
    %v4851 = vmax.f32 %v4849, %v4850
    %v4852 = vsub.f32 %v4844, %v4851
    %v4853 = vmul.f32 %v4852, 1.442695
    %v4854 = vpow.pop %v4853
    %v4855 = vsel %vm2582, %v4854, 0.0
    %v4856 = vrot.slane %v4855, 4
    %v4857 = vadd.f32 %v4855, %v4856
    %v4858 = vrot.slane %v4857, 2
    %v4859 = vadd.f32 %v4857, %v4858
    %v4860 = vrot.slane %v4859, 1
    %v4861 = vadd.f32 %v4859, %v4860
    %v4862 = vrcp.pop %v4861
    %v4863 = vmul.f32 %v4854, %v4862
    %4865 = vset.pattern.permute.xlu0 0
    %4866 = vperm.xlu0 %4865, %v4863
    %v4867 = vpop.permute.xlu0 %4866
    %v4869 = vmul.f32 %v4867, %v2104
    %v4870 = vsel %vm2608, %v4869, 0.0
    %v4871 = vrot.slane %v4870, 4
    %v4872 = vadd.f32 %v4870, %v4871
    %v4873 = vrot.slane %v4872, 2
    %v4874 = vadd.f32 %v4872, %v4873
    %v4875 = vrot.slane %v4874, 1
    %v4876 = vadd.f32 %v4874, %v4875
    %v4877 = vmul.f32 %v4867, %v2154
    %v4878 = vsel %vm2608, %v4877, 0.0
    %v4879 = vrot.slane %v4878, 4
    %v4880 = vadd.f32 %v4878, %v4879
    %v4881 = vrot.slane %v4880, 2
    %v4882 = vadd.f32 %v4880, %v4881
    %v4883 = vrot.slane %v4882, 1
    %v4884 = vadd.f32 %v4882, %v4883
    %v4885 = vsel %vm2069, %v4825, %v4876
    %v4886 = vsel %vm2069, %v4833, %v4884
    %s4887 = scalar_lea.vmem %s3, 6
    %v4888 = vld [vmem:[%s4887] sm:$0x3]
    %4890 = vrot.lane.b32.xlu0 %v4885, 96
    %v4891 = vpop.permute.xlu0 %4890
    %v4892 = vsel %vm46, %v4891, 0
    %4894 = vmatprep.subr.mxu0 0.0
    %4895 = vmatpush1.msra.mxu0 %v2474
    %4896 = vmatprep.subr.mxu0 0.0
    %4897 = vmatpush1.msra.mxu0 %v2475
    %4898 = vmatprep.subr.mxu0 0.0
    %4899 = vmatpush1.msra.mxu0 %v2476
    %4900 = vmatprep.subr.mxu0 0.0
    %4901 = vmatpush1.msra.mxu0 %v2477
    %4902 = vmatprep.subr.mxu0 0.0
    %4903 = vmatpush1.msra.mxu0 0.0
    %4904 = vmatprep.subr.mxu0 0.0
    %4905 = vmatpush1.msra.mxu0 0.0
    %4906 = vmatprep.subr.mxu0 0.0
    %4907 = vmatpush1.msra.mxu0 0.0
    %4908 = vmatprep.subr.mxu0 0.0
    %4909 = vmatpush1.msra.mxu0 0.0
    %4910 = vmatprep.subr.mxu0 0.0
    %4911 = vmatpush1.msra.mxu0 0.0
    %4912 = vmatprep.subr.mxu0 0.0
    %4913 = vmatpush1.msra.mxu0 0.0
    %4914 = vmatprep.subr.mxu0 0.0
    %4915 = vmatpush1.msra.mxu0 0.0
    %4916 = vmatprep.subr.mxu0 0.0
    %4917 = vmatpush1.msra.mxu0 0.0
    %4918 = vmatprep.subr.mxu0 0.0
    %4919 = vmatpush1.msra.mxu0 0.0
    %4920 = vmatprep.subr.mxu0 0.0
    %4921 = vmatpush1.msra.mxu0 0.0
    %4922 = vmatprep.subr.mxu0 0.0
    %4923 = vmatpush1.msra.mxu0 0.0
    %4924 = vmatprep.subr.mxu0 0.0
    %4925 = vmatpush1.msra.mxu0 0.0
    %4926 = vmatprep.subr.mxu0 0.0
    %4927 = vmatpush1.msra.mxu0 0.0
    %4928 = vmatprep.subr.mxu0 0.0
    %4929 = vmatpush1.msra.mxu0 0.0
    %4930 = vmatprep.subr.mxu0 0.0
    %4931 = vmatpush1.msra.mxu0 0.0
    %4932 = vmatprep.subr.mxu0 0.0
    %4933 = vmatpush1.msra.mxu0 0.0
    %4934 = vmatprep.subr.mxu0 0.0
    %4935 = vmatpush1.msra.mxu0 0.0
    %4936 = vmatprep.subr.mxu0 0.0
    %4937 = vmatpush1.msra.mxu0 0.0
    %4938 = vmatprep.subr.mxu0 0.0
    %4939 = vmatpush1.msra.mxu0 0.0
    %4940 = vmatprep.subr.mxu0 0.0
    %4941 = vmatpush1.msra.mxu0 0.0
    %4942 = vmatprep.subr.mxu0 0.0
    %4943 = vmatpush1.msra.mxu0 0.0
    %4944 = vmatprep.subr.mxu0 0.0
    %4945 = vmatpush1.msra.mxu0 0.0
    %4946 = vmatprep.subr.mxu0 0.0
    %4947 = vmatpush1.msra.mxu0 0.0
    %4948 = vmatprep.subr.mxu0 0.0
    %4949 = vmatpush1.msra.mxu0 0.0
    %4950 = vmatprep.subr.mxu0 0.0
    %4951 = vmatpush1.msra.mxu0 0.0
    %4952 = vmatprep.subr.mxu0 0.0
    %4953 = vmatpush1.msra.mxu0 0.0
    %4954 = vmatprep.subr.mxu0 0.0
    %4955 = vmatpush1.msra.mxu0 0.0
    %4956 = vmatprep.subr.mxu0 0.0
    %4957 = vmatpush1.msra.mxu0 0.0
    %4958 = vmatprep.mubr.f32.mxu0 0.0
    %4959 = vmatmul.mubr.f32.gmra.mrb[0].mxu0 %v4892
    %v4960 = vpop.f32.mrb[0].mxu0
    %v4961 = vadd.f32 0.0, %v4960
    %v4962 = vpop.f32.mrb[0].mxu0
    %4963 = vdwg.mxu0
    %v4964 = vadd.f32 %v4888, %v4961
    %4966 = vrot.lane.b32.xlu0 %v4886, 96
    %v4967 = vpop.permute.xlu0 %4966
    %v4968 = vsel %vm46, %v4967, 0
    %4970 = vmatprep.subr.mxu0 0.0
    %4971 = vmatpush1.msra.mxu0 %v2478
    %4972 = vmatprep.subr.mxu0 0.0
    %4973 = vmatpush1.msra.mxu0 %v2479
    %4974 = vmatprep.subr.mxu0 0.0
    %4975 = vmatpush1.msra.mxu0 %v2480
    %4976 = vmatprep.subr.mxu0 0.0
    %4977 = vmatpush1.msra.mxu0 %v2481
    %4978 = vmatprep.subr.mxu0 0.0
    %4979 = vmatpush1.msra.mxu0 0.0
    %4980 = vmatprep.subr.mxu0 0.0
    %4981 = vmatpush1.msra.mxu0 0.0
    %4982 = vmatprep.subr.mxu0 0.0
    %4983 = vmatpush1.msra.mxu0 0.0
    %4984 = vmatprep.subr.mxu0 0.0
    %4985 = vmatpush1.msra.mxu0 0.0
    %4986 = vmatprep.subr.mxu0 0.0
    %4987 = vmatpush1.msra.mxu0 0.0
    %4988 = vmatprep.subr.mxu0 0.0
    %4989 = vmatpush1.msra.mxu0 0.0
    %4990 = vmatprep.subr.mxu0 0.0
    %4991 = vmatpush1.msra.mxu0 0.0
    %4992 = vmatprep.subr.mxu0 0.0
    %4993 = vmatpush1.msra.mxu0 0.0
    %4994 = vmatprep.subr.mxu0 0.0
    %4995 = vmatpush1.msra.mxu0 0.0
    %4996 = vmatprep.subr.mxu0 0.0
    %4997 = vmatpush1.msra.mxu0 0.0
    %4998 = vmatprep.subr.mxu0 0.0
    %4999 = vmatpush1.msra.mxu0 0.0
    %5000 = vmatprep.subr.mxu0 0.0
    %5001 = vmatpush1.msra.mxu0 0.0
    %5002 = vmatprep.subr.mxu0 0.0
    %5003 = vmatpush1.msra.mxu0 0.0
    %5004 = vmatprep.subr.mxu0 0.0
    %5005 = vmatpush1.msra.mxu0 0.0
    %5006 = vmatprep.subr.mxu0 0.0
    %5007 = vmatpush1.msra.mxu0 0.0
    %5008 = vmatprep.subr.mxu0 0.0
    %5009 = vmatpush1.msra.mxu0 0.0
    %5010 = vmatprep.subr.mxu0 0.0
    %5011 = vmatpush1.msra.mxu0 0.0
    %5012 = vmatprep.subr.mxu0 0.0
    %5013 = vmatpush1.msra.mxu0 0.0
    %5014 = vmatprep.subr.mxu0 0.0
    %5015 = vmatpush1.msra.mxu0 0.0
    %5016 = vmatprep.subr.mxu0 0.0
    %5017 = vmatpush1.msra.mxu0 0.0
    %5018 = vmatprep.subr.mxu0 0.0
    %5019 = vmatpush1.msra.mxu0 0.0
    %5020 = vmatprep.subr.mxu0 0.0
    %5021 = vmatpush1.msra.mxu0 0.0
    %5022 = vmatprep.subr.mxu0 0.0
    %5023 = vmatpush1.msra.mxu0 0.0
    %5024 = vmatprep.subr.mxu0 0.0
    %5025 = vmatpush1.msra.mxu0 0.0
    %5026 = vmatprep.subr.mxu0 0.0
    %5027 = vmatpush1.msra.mxu0 0.0
    %5028 = vmatprep.subr.mxu0 0.0
    %5029 = vmatpush1.msra.mxu0 0.0
    %5030 = vmatprep.subr.mxu0 0.0
    %5031 = vmatpush1.msra.mxu0 0.0
    %5032 = vmatprep.subr.mxu0 0.0
    %5033 = vmatpush1.msra.mxu0 0.0
    %5034 = vmatprep.mubr.f32.mxu0 0.0
    %5035 = vmatmul.mubr.f32.gmra.mrb[0].mxu0 %v4968
    %v5036 = vpop.f32.mrb[0].mxu0
    %v5037 = vadd.f32 0.0, %v5036
    %v5038 = vpop.f32.mrb[0].mxu0
    %5039 = vdwg.mxu0
    %v5040 = vadd.f32 %v4964, %v5037
    %5041 = vmatprep.subr.mxu0 0.0
    %5042 = vmatpush1.msra.mxu0 %v2470
    %5043 = vmatprep.subr.mxu0 0.0
    %5044 = vmatpush1.msra.mxu0 %v2471
    %5045 = vmatprep.subr.mxu0 0.0
    %5046 = vmatpush1.msra.mxu0 %v2472
    %5047 = vmatprep.subr.mxu0 0.0
    %5048 = vmatpush1.msra.mxu0 %v2473
    %5049 = vmatprep.subr.mxu0 0.0
    %5050 = vmatpush1.msra.mxu0 0.0
    %5051 = vmatprep.subr.mxu0 0.0
    %5052 = vmatpush1.msra.mxu0 0.0
    %5053 = vmatprep.subr.mxu0 0.0
    %5054 = vmatpush1.msra.mxu0 0.0
    %5055 = vmatprep.subr.mxu0 0.0
    %5056 = vmatpush1.msra.mxu0 0.0
    %5057 = vmatprep.subr.mxu0 0.0
    %5058 = vmatpush1.msra.mxu0 0.0
    %5059 = vmatprep.subr.mxu0 0.0
    %5060 = vmatpush1.msra.mxu0 0.0
    %5061 = vmatprep.subr.mxu0 0.0
    %5062 = vmatpush1.msra.mxu0 0.0
    %5063 = vmatprep.subr.mxu0 0.0
    %5064 = vmatpush1.msra.mxu0 0.0
    %5065 = vmatprep.subr.mxu0 0.0
    %5066 = vmatpush1.msra.mxu0 0.0
    %5067 = vmatprep.subr.mxu0 0.0
    %5068 = vmatpush1.msra.mxu0 0.0
    %5069 = vmatprep.subr.mxu0 0.0
    %5070 = vmatpush1.msra.mxu0 0.0
    %5071 = vmatprep.subr.mxu0 0.0
    %5072 = vmatpush1.msra.mxu0 0.0
    %5073 = vmatprep.subr.mxu0 0.0
    %5074 = vmatpush1.msra.mxu0 0.0
    %5075 = vmatprep.subr.mxu0 0.0
    %5076 = vmatpush1.msra.mxu0 0.0
    %5077 = vmatprep.subr.mxu0 0.0
    %5078 = vmatpush1.msra.mxu0 0.0
    %5079 = vmatprep.subr.mxu0 0.0
    %5080 = vmatpush1.msra.mxu0 0.0
    %5081 = vmatprep.subr.mxu0 0.0
    %5082 = vmatpush1.msra.mxu0 0.0
    %5083 = vmatprep.subr.mxu0 0.0
    %5084 = vmatpush1.msra.mxu0 0.0
    %5085 = vmatprep.subr.mxu0 0.0
    %5086 = vmatpush1.msra.mxu0 0.0
    %5087 = vmatprep.subr.mxu0 0.0
    %5088 = vmatpush1.msra.mxu0 0.0
    %5089 = vmatprep.subr.mxu0 0.0
    %5090 = vmatpush1.msra.mxu0 0.0
    %5091 = vmatprep.subr.mxu0 0.0
    %5092 = vmatpush1.msra.mxu0 0.0
    %5093 = vmatprep.subr.mxu0 0.0
    %5094 = vmatpush1.msra.mxu0 0.0
    %5095 = vmatprep.subr.mxu0 0.0
    %5096 = vmatpush1.msra.mxu0 0.0
    %5097 = vmatprep.subr.mxu0 0.0
    %5098 = vmatpush1.msra.mxu0 0.0
    %5099 = vmatprep.subr.mxu0 0.0
    %5100 = vmatpush1.msra.mxu0 0.0
    %5101 = vmatprep.subr.mxu0 0.0
    %5102 = vmatpush1.msra.mxu0 0.0
    %5103 = vmatprep.subr.mxu0 0.0
    %5104 = vmatpush1.msra.mxu0 0.0
    %5105 = vmatprep.mubr.f32.mxu0 0.0
    %5106 = vmatmul.mubr.f32.gmra.mrb[0].mxu0 %v4447
    %v5107 = vpop.f32.mrb[0].mxu0
    %v5108 = vadd.f32 0.0, %v5107
    %v5109 = vpop.f32.mrb[0].mxu0
    %5110 = vdwg.mxu0
    %v5111 = vadd.f32 %v5040, %v5108
    %v5112 = vxor.u32 %v5111, 2147483648
    %v5113 = vmul.f32 %v5112, 1.442695
    %v5114 = vpow.pop %v5113
    %v5115 = vadd.f32 %v5114, 1.0
    %v5116 = vrcp.pop %v5115
    %v5117 = vmul.f32 1.0, %v5116
    %v5118 = vadd.f32 %v5108, %v2913
    %5120 = vrot.lane.b32.xlu0 %v5118, 64
    %v5121 = vpop.permute.xlu0 %5120
    %v5123 = vmul.f32 %v5117, %v5121
    %5125 = vrot.lane.b32.xlu0 %v5123, 64
    %v5126 = vpop.permute.xlu0 %5125
    %v5128 = vadd.f32 %v5040, %v5126
    %v5129 = vtanh.pop %v5128
    %v5130 = vsub.f32 1.0, %v5117
    %5132 = vrot.lane.b32.xlu0 %v5129, 96
    %v5133 = vpop.permute.xlu0 %5132
    %v5135 = vmul.f32 %v5130, %v5133
    %v5136 = vmul.f32 %v5117, %v4404
    %v5137 = vadd.f32 %v5135, %v5136
    %v5140 = vunpack.c.l.s4 1966171168
    %v5141 = vunpack.c.0.s8 %v5140
    %v5142 = vlaneseq
    %v5143 = vshrl.u32 %v5142, 7
    %v5144 = vsub.s32 %v5141, %v5143
    %v5145 = vrot.slane %v5137, %v5144
    %v5146 = vcombine.high %v5145, %v5145
    %v5148 = vunpack.c.l.s4 1966171168
    %v5149 = vunpack.c.0.s8 %v5148
    %v5150 = vlaneseq
    %v5151 = vshrl.u32 %v5150, 7
    %v5152 = vsub.s32 %v5149, %v5151
    %v5153 = vrot.slane %v5145, %v5152
    %v5155 = vunpack.c.l.s4 1966171168
    %v5156 = vunpack.c.0.s8 %v5155
    %v5157 = vlaneseq
    %v5158 = vshrl.u32 %v5157, 7
    %v5159 = vsub.s32 %v5156, %v5158
    %v5160 = vrot.slane %v5146, %v5159
    %v5161 = vlaneseq
    %v5162 = vshrl.u32 %v5161, 7
    %v5163 = vsub.s32 0, %v5162
    %v5164 = vrot.slane %v5153, %v5163
    %v5165 = vlaneseq
    %v5166 = vshrl.u32 %v5165, 7
    %v5167 = vsub.s32 0, %v5166
    %v5168 = vrot.slane %v5160, %v5167
    %5169 = vrot.lane.b32.xlu0 %v5164, 96
    %v5170 = vpop.permute.xlu0 %5169
    %5171 = vrot.lane.b32.xlu0 %v5168, 96
    %v5172 = vpop.permute.xlu0 %5171
    %5175 = vst.msk [vmem:[#allocation2 + $0x3] sm:$0x1] %vm2975, %v5170
    %5176 = vst.msk [vmem:[#allocation2 + $0xb] sm:$0x1] %vm2975, %v5172
    %v5177 = vld [vmem:[%s4887] sm:$0x3]
    %5178 = vrot.lane.b32.xlu0 %v5137, 96
    %v5179 = vpop.permute.xlu0 %5178
    %v5180 = vsel %vm46, %v5179, 0
    %5182 = vmatprep.subr.mxu0 0.0
    %5183 = vmatpush1.msra.mxu0 %v2486
    %5184 = vmatprep.subr.mxu0 0.0
    %5185 = vmatpush1.msra.mxu0 %v2487
    %5186 = vmatprep.subr.mxu0 0.0
    %5187 = vmatpush1.msra.mxu0 %v2488
    %5188 = vmatprep.subr.mxu0 0.0
    %5189 = vmatpush1.msra.mxu0 %v2489
    %5190 = vmatprep.subr.mxu0 0.0
    %5191 = vmatpush1.msra.mxu0 0.0
    %5192 = vmatprep.subr.mxu0 0.0
    %5193 = vmatpush1.msra.mxu0 0.0
    %5194 = vmatprep.subr.mxu0 0.0
    %5195 = vmatpush1.msra.mxu0 0.0
    %5196 = vmatprep.subr.mxu0 0.0
    %5197 = vmatpush1.msra.mxu0 0.0
    %5198 = vmatprep.subr.mxu0 0.0
    %5199 = vmatpush1.msra.mxu0 0.0
    %5200 = vmatprep.subr.mxu0 0.0
    %5201 = vmatpush1.msra.mxu0 0.0
    %5202 = vmatprep.subr.mxu0 0.0
    %5203 = vmatpush1.msra.mxu0 0.0
    %5204 = vmatprep.subr.mxu0 0.0
    %5205 = vmatpush1.msra.mxu0 0.0
    %5206 = vmatprep.subr.mxu0 0.0
    %5207 = vmatpush1.msra.mxu0 0.0
    %5208 = vmatprep.subr.mxu0 0.0
    %5209 = vmatpush1.msra.mxu0 0.0
    %5210 = vmatprep.subr.mxu0 0.0
    %5211 = vmatpush1.msra.mxu0 0.0
    %5212 = vmatprep.subr.mxu0 0.0
    %5213 = vmatpush1.msra.mxu0 0.0
    %5214 = vmatprep.subr.mxu0 0.0
    %5215 = vmatpush1.msra.mxu0 0.0
    %5216 = vmatprep.subr.mxu0 0.0
    %5217 = vmatpush1.msra.mxu0 0.0
    %5218 = vmatprep.subr.mxu0 0.0
    %5219 = vmatpush1.msra.mxu0 0.0
    %5220 = vmatprep.subr.mxu0 0.0
    %5221 = vmatpush1.msra.mxu0 0.0
    %5222 = vmatprep.subr.mxu0 0.0
    %5223 = vmatpush1.msra.mxu0 0.0
    %5224 = vmatprep.subr.mxu0 0.0
    %5225 = vmatpush1.msra.mxu0 0.0
    %5226 = vmatprep.subr.mxu0 0.0
    %5227 = vmatpush1.msra.mxu0 0.0
    %5228 = vmatprep.subr.mxu0 0.0
    %5229 = vmatpush1.msra.mxu0 0.0
    %5230 = vmatprep.subr.mxu0 0.0
    %5231 = vmatpush1.msra.mxu0 0.0
    %5232 = vmatprep.subr.mxu0 0.0
    %5233 = vmatpush1.msra.mxu0 0.0
    %5234 = vmatprep.subr.mxu0 0.0
    %5235 = vmatpush1.msra.mxu0 0.0
    %5236 = vmatprep.subr.mxu0 0.0
    %5237 = vmatpush1.msra.mxu0 0.0
    %5238 = vmatprep.subr.mxu0 0.0
    %5239 = vmatpush1.msra.mxu0 0.0
    %5240 = vmatprep.subr.mxu0 0.0
    %5241 = vmatpush1.msra.mxu0 0.0
    %5242 = vmatprep.subr.mxu0 0.0
    %5243 = vmatpush1.msra.mxu0 0.0
    %5244 = vmatprep.subr.mxu0 0.0
    %5245 = vmatpush1.msra.mxu0 0.0
    %5246 = vmatprep.mubr.f32.mxu0 0.0
    %5247 = vmatmul.mubr.f32.gmra.mrb[0].mxu0 %v5180
    %v5248 = vpop.f32.mrb[0].mxu0
    %v5249 = vadd.f32 0.0, %v5248
    %v5250 = vpop.f32.mrb[0].mxu0
    %5251 = vdwg.mxu0
    %5253 = vrot.lane.b32.xlu0 %v5249, 96
    %v5254 = vpop.permute.xlu0 %5253
    %v5256 = vadd.f32 %v5177, %v5254
    %5257 = vmatprep.subr.mxu0 0.0
    %5258 = vmatpush1.msra.mxu0 %v2490
    %5259 = vmatprep.subr.mxu0 0.0
    %5260 = vmatpush1.msra.mxu0 %v2491
    %5261 = vmatprep.subr.mxu0 0.0
    %5262 = vmatpush1.msra.mxu0 %v2492
    %5263 = vmatprep.subr.mxu0 0.0
    %5264 = vmatpush1.msra.mxu0 %v2493
    %5265 = vmatprep.subr.mxu0 0.0
    %5266 = vmatpush1.msra.mxu0 0.0
    %5267 = vmatprep.subr.mxu0 0.0
    %5268 = vmatpush1.msra.mxu0 0.0
    %5269 = vmatprep.subr.mxu0 0.0
    %5270 = vmatpush1.msra.mxu0 0.0
    %5271 = vmatprep.subr.mxu0 0.0
    %5272 = vmatpush1.msra.mxu0 0.0
    %5273 = vmatprep.subr.mxu0 0.0
    %5274 = vmatpush1.msra.mxu0 0.0
    %5275 = vmatprep.subr.mxu0 0.0
    %5276 = vmatpush1.msra.mxu0 0.0
    %5277 = vmatprep.subr.mxu0 0.0
    %5278 = vmatpush1.msra.mxu0 0.0
    %5279 = vmatprep.subr.mxu0 0.0
    %5280 = vmatpush1.msra.mxu0 0.0
    %5281 = vmatprep.subr.mxu0 0.0
    %5282 = vmatpush1.msra.mxu0 0.0
    %5283 = vmatprep.subr.mxu0 0.0
    %5284 = vmatpush1.msra.mxu0 0.0
    %5285 = vmatprep.subr.mxu0 0.0
    %5286 = vmatpush1.msra.mxu0 0.0
    %5287 = vmatprep.subr.mxu0 0.0
    %5288 = vmatpush1.msra.mxu0 0.0
    %5289 = vmatprep.subr.mxu0 0.0
    %5290 = vmatpush1.msra.mxu0 0.0
    %5291 = vmatprep.subr.mxu0 0.0
    %5292 = vmatpush1.msra.mxu0 0.0
    %5293 = vmatprep.subr.mxu0 0.0
    %5294 = vmatpush1.msra.mxu0 0.0
    %5295 = vmatprep.subr.mxu0 0.0
    %5296 = vmatpush1.msra.mxu0 0.0
    %5297 = vmatprep.subr.mxu0 0.0
    %5298 = vmatpush1.msra.mxu0 0.0
    %5299 = vmatprep.subr.mxu0 0.0
    %5300 = vmatpush1.msra.mxu0 0.0
    %5301 = vmatprep.subr.mxu0 0.0
    %5302 = vmatpush1.msra.mxu0 0.0
    %5303 = vmatprep.subr.mxu0 0.0
    %5304 = vmatpush1.msra.mxu0 0.0
    %5305 = vmatprep.subr.mxu0 0.0
    %5306 = vmatpush1.msra.mxu0 0.0
    %5307 = vmatprep.subr.mxu0 0.0
    %5308 = vmatpush1.msra.mxu0 0.0
    %5309 = vmatprep.subr.mxu0 0.0
    %5310 = vmatpush1.msra.mxu0 0.0
    %5311 = vmatprep.subr.mxu0 0.0
    %5312 = vmatpush1.msra.mxu0 0.0
    %5313 = vmatprep.subr.mxu0 0.0
    %5314 = vmatpush1.msra.mxu0 0.0
    %5315 = vmatprep.subr.mxu0 0.0
    %5316 = vmatpush1.msra.mxu0 0.0
    %5317 = vmatprep.subr.mxu0 0.0
    %5318 = vmatpush1.msra.mxu0 0.0
    %5319 = vmatprep.subr.mxu0 0.0
    %5320 = vmatpush1.msra.mxu0 0.0
    %5321 = vmatprep.mubr.f32.mxu0 0.0
    %5322 = vmatmul.mubr.f32.gmra.mrb[0].mxu0 %v4892
    %v5323 = vpop.f32.mrb[0].mxu0
    %v5324 = vadd.f32 0.0, %v5323
    %v5325 = vpop.f32.mrb[0].mxu0
    %5326 = vdwg.mxu0
    %5328 = vrot.lane.b32.xlu0 %v5324, 96
    %v5329 = vpop.permute.xlu0 %5328
    %v5331 = vadd.f32 %v5256, %v5329
    %5332 = vmatprep.subr.mxu0 0.0
    %5333 = vmatpush1.msra.mxu0 %v2494
    %5334 = vmatprep.subr.mxu0 0.0
    %5335 = vmatpush1.msra.mxu0 %v2495
    %5336 = vmatprep.subr.mxu0 0.0
    %5337 = vmatpush1.msra.mxu0 %v2496
    %5338 = vmatprep.subr.mxu0 0.0
    %5339 = vmatpush1.msra.mxu0 %v2497
    %5340 = vmatprep.subr.mxu0 0.0
    %5341 = vmatpush1.msra.mxu0 0.0
    %5342 = vmatprep.subr.mxu0 0.0
    %5343 = vmatpush1.msra.mxu0 0.0
    %5344 = vmatprep.subr.mxu0 0.0
    %5345 = vmatpush1.msra.mxu0 0.0
    %5346 = vmatprep.subr.mxu0 0.0
    %5347 = vmatpush1.msra.mxu0 0.0
    %5348 = vmatprep.subr.mxu0 0.0
    %5349 = vmatpush1.msra.mxu0 0.0
    %5350 = vmatprep.subr.mxu0 0.0
    %5351 = vmatpush1.msra.mxu0 0.0
    %5352 = vmatprep.subr.mxu0 0.0
    %5353 = vmatpush1.msra.mxu0 0.0
    %5354 = vmatprep.subr.mxu0 0.0
    %5355 = vmatpush1.msra.mxu0 0.0
    %5356 = vmatprep.subr.mxu0 0.0
    %5357 = vmatpush1.msra.mxu0 0.0
    %5358 = vmatprep.subr.mxu0 0.0
    %5359 = vmatpush1.msra.mxu0 0.0
    %5360 = vmatprep.subr.mxu0 0.0
    %5361 = vmatpush1.msra.mxu0 0.0
    %5362 = vmatprep.subr.mxu0 0.0
    %5363 = vmatpush1.msra.mxu0 0.0
    %5364 = vmatprep.subr.mxu0 0.0
    %5365 = vmatpush1.msra.mxu0 0.0
    %5366 = vmatprep.subr.mxu0 0.0
    %5367 = vmatpush1.msra.mxu0 0.0
    %5368 = vmatprep.subr.mxu0 0.0
    %5369 = vmatpush1.msra.mxu0 0.0
    %5370 = vmatprep.subr.mxu0 0.0
    %5371 = vmatpush1.msra.mxu0 0.0
    %5372 = vmatprep.subr.mxu0 0.0
    %5373 = vmatpush1.msra.mxu0 0.0
    %5374 = vmatprep.subr.mxu0 0.0
    %5375 = vmatpush1.msra.mxu0 0.0
    %5376 = vmatprep.subr.mxu0 0.0
    %5377 = vmatpush1.msra.mxu0 0.0
    %5378 = vmatprep.subr.mxu0 0.0
    %5379 = vmatpush1.msra.mxu0 0.0
    %5380 = vmatprep.subr.mxu0 0.0
    %5381 = vmatpush1.msra.mxu0 0.0
    %5382 = vmatprep.subr.mxu0 0.0
    %5383 = vmatpush1.msra.mxu0 0.0
    %5384 = vmatprep.subr.mxu0 0.0
    %5385 = vmatpush1.msra.mxu0 0.0
    %5386 = vmatprep.subr.mxu0 0.0
    %5387 = vmatpush1.msra.mxu0 0.0
    %5388 = vmatprep.subr.mxu0 0.0
    %5389 = vmatpush1.msra.mxu0 0.0
    %5390 = vmatprep.subr.mxu0 0.0
    %5391 = vmatpush1.msra.mxu0 0.0
    %5392 = vmatprep.subr.mxu0 0.0
    %5393 = vmatpush1.msra.mxu0 0.0
    %5394 = vmatprep.subr.mxu0 0.0
    %5395 = vmatpush1.msra.mxu0 0.0
    %5396 = vmatprep.mubr.f32.mxu0 0.0
    %5397 = vmatmul.mubr.f32.gmra.mrb[0].mxu0 %v4968
    %v5398 = vpop.f32.mrb[0].mxu0
    %v5399 = vadd.f32 0.0, %v5398
    %v5400 = vpop.f32.mrb[0].mxu0
    %5401 = vdwg.mxu0
    %5403 = vrot.lane.b32.xlu0 %v5399, 96
    %v5404 = vpop.permute.xlu0 %5403
    %v5406 = vadd.f32 %v5331, %v5404
    %v5409 = vunpack.c.l.s4 1966171168
    %v5410 = vunpack.c.0.s8 %v5409
    %v5411 = vlaneseq
    %v5412 = vshrl.u32 %v5411, 7
    %v5413 = vsub.s32 %v5410, %v5412
    %v5414 = vrot.slane %v5406, %v5413
    %v5415 = vcombine.high %v5414, %v5414
    %v5417 = vunpack.c.l.s4 1966171168
    %v5418 = vunpack.c.0.s8 %v5417
    %v5419 = vlaneseq
    %v5420 = vshrl.u32 %v5419, 7
    %v5421 = vsub.s32 %v5418, %v5420
    %v5422 = vrot.slane %v5414, %v5421
    %v5424 = vunpack.c.l.s4 1966171168
    %v5425 = vunpack.c.0.s8 %v5424
    %v5426 = vlaneseq
    %v5427 = vshrl.u32 %v5426, 7
    %v5428 = vsub.s32 %v5425, %v5427
    %v5429 = vrot.slane %v5415, %v5428
    %v5430 = vlaneseq
    %v5431 = vshrl.u32 %v5430, 7
    %v5432 = vsub.s32 0, %v5431
    %v5433 = vrot.slane %v5422, %v5432
    %v5434 = vlaneseq
    %v5435 = vshrl.u32 %v5434, 7
    %v5436 = vsub.s32 0, %v5435
    %v5437 = vrot.slane %v5429, %v5436
    %5438 = vrot.lane.b32.xlu0 %v5433, 32
    %v5439 = vpop.permute.xlu0 %5438
    %5440 = vrot.lane.b32.xlu0 %v5437, 32
    %v5441 = vpop.permute.xlu0 %5440
    %5444 = vst.msk [vmem:[#allocation4 + $0x3] sm:$0x1] %vm2975, %v5439
    %5445 = vst.msk [vmem:[#allocation4 + $0xb] sm:$0x1] %vm2975, %v5441
    %5446 = vmatprep.subr.mxu0 0.0
    %5447 = vmatpush1.msra.mxu0 %v2482
    %5448 = vmatprep.subr.mxu0 0.0
    %5449 = vmatpush1.msra.mxu0 %v2483
    %5450 = vmatprep.subr.mxu0 0.0
    %5451 = vmatpush1.msra.mxu0 %v2484
    %5452 = vmatprep.subr.mxu0 0.0
    %5453 = vmatpush1.msra.mxu0 %v2485
    %5454 = vmatprep.subr.mxu0 0.0
    %5455 = vmatpush1.msra.mxu0 0.0
    %5456 = vmatprep.subr.mxu0 0.0
    %5457 = vmatpush1.msra.mxu0 0.0
    %5458 = vmatprep.subr.mxu0 0.0
    %5459 = vmatpush1.msra.mxu0 0.0
    %5460 = vmatprep.subr.mxu0 0.0
    %5461 = vmatpush1.msra.mxu0 0.0
    %5462 = vmatprep.subr.mxu0 0.0
    %5463 = vmatpush1.msra.mxu0 0.0
    %5464 = vmatprep.subr.mxu0 0.0
    %5465 = vmatpush1.msra.mxu0 0.0
    %5466 = vmatprep.subr.mxu0 0.0
    %5467 = vmatpush1.msra.mxu0 0.0
    %5468 = vmatprep.subr.mxu0 0.0
    %5469 = vmatpush1.msra.mxu0 0.0
    %5470 = vmatprep.subr.mxu0 0.0
    %5471 = vmatpush1.msra.mxu0 0.0
    %5472 = vmatprep.subr.mxu0 0.0
    %5473 = vmatpush1.msra.mxu0 0.0
    %5474 = vmatprep.subr.mxu0 0.0
    %5475 = vmatpush1.msra.mxu0 0.0
    %5476 = vmatprep.subr.mxu0 0.0
    %5477 = vmatpush1.msra.mxu0 0.0
    %5478 = vmatprep.subr.mxu0 0.0
    %5479 = vmatpush1.msra.mxu0 0.0
    %5480 = vmatprep.subr.mxu0 0.0
    %5481 = vmatpush1.msra.mxu0 0.0
    %5482 = vmatprep.subr.mxu0 0.0
    %5483 = vmatpush1.msra.mxu0 0.0
    %5484 = vmatprep.subr.mxu0 0.0
    %5485 = vmatpush1.msra.mxu0 0.0
    %5486 = vmatprep.subr.mxu0 0.0
    %5487 = vmatpush1.msra.mxu0 0.0
    %5488 = vmatprep.subr.mxu0 0.0
    %5489 = vmatpush1.msra.mxu0 0.0
    %5490 = vmatprep.subr.mxu0 0.0
    %5491 = vmatpush1.msra.mxu0 0.0
    %5492 = vmatprep.subr.mxu0 0.0
    %5493 = vmatpush1.msra.mxu0 0.0
    %5494 = vmatprep.subr.mxu0 0.0
    %5495 = vmatpush1.msra.mxu0 0.0
    %5496 = vmatprep.subr.mxu0 0.0
    %5497 = vmatpush1.msra.mxu0 0.0
    %5498 = vmatprep.subr.mxu0 0.0
    %5499 = vmatpush1.msra.mxu0 0.0
    %5500 = vmatprep.subr.mxu0 0.0
    %5501 = vmatpush1.msra.mxu0 0.0
    %5502 = vmatprep.subr.mxu0 0.0
    %5503 = vmatpush1.msra.mxu0 0.0
    %5504 = vmatprep.subr.mxu0 0.0
    %5505 = vmatpush1.msra.mxu0 0.0
    %5506 = vmatprep.subr.mxu0 0.0
    %5507 = vmatpush1.msra.mxu0 0.0
    %5508 = vmatprep.subr.mxu0 0.0
    %5509 = vmatpush1.msra.mxu0 0.0
    %5510 = vmatprep.mubr.f32.mxu0 0.0
    %5511 = vmatmul.mubr.f32.gmra.mrb[0].mxu0 %v5180
    %v5512 = vpop.f32.mrb[0].mxu0
    %v5513 = vadd.f32 0.0, %v5512
    %v5514 = vpop.f32.mrb[0].mxu0
    %5515 = vdwg.mxu0
    %v5516 = vlaneseq
    %v5517 = vshrl.u32 %v5516, 7
    %v5518 = vsub.s32 0, %v5517
    %v5519 = vrot.slane %v5513, %v5518
    %v5520 = vadd.f32 %v2310, %v5519
    %v5521 = vtanh.pop %v5520
    %v5522 = vmul.f32 %v5521, %v2469
    %v5523 = vsel %vm46, %v5522, 0.0
    %5524 = vadd.xlane.f32.xlu0 %v5523
    %v5525 = vpop.xlane.xlu0 %5524
    %v5526 = vadd.f32 %v5525, %v2463
    %v5527 = vsel %vm2582, %v5526, -inf
    %v5528 = vrot.slane %v5527, 4
    %v5529 = vmax.f32 %v5527, %v5528
    %v5530 = vrot.slane %v5529, 2
    %v5531 = vmax.f32 %v5529, %v5530
    %v5532 = vrot.slane %v5531, 1
    %v5533 = vmax.f32 %v5531, %v5532
    %v5534 = vsub.f32 %v5526, %v5533
    %v5535 = vmul.f32 %v5534, 1.442695
    %v5536 = vpow.pop %v5535
    %v5537 = vsel %vm2582, %v5536, 0.0
    %v5538 = vrot.slane %v5537, 4
    %v5539 = vadd.f32 %v5537, %v5538
    %v5540 = vrot.slane %v5539, 2
    %v5541 = vadd.f32 %v5539, %v5540
    %v5542 = vrot.slane %v5541, 1
    %v5543 = vadd.f32 %v5541, %v5542
    %v5544 = vrcp.pop %v5543
    %v5545 = vmul.f32 %v5536, %v5544
    %5547 = vset.pattern.permute.xlu0 0
    %5548 = vperm.xlu0 %5547, %v5545
    %v5549 = vpop.permute.xlu0 %5548
    %v5551 = vmul.f32 %v5549, %v2082
    %v5552 = vsel %vm2608, %v5551, 0.0
    %v5553 = vrot.slane %v5552, 4
    %v5554 = vadd.f32 %v5552, %v5553
    %v5555 = vrot.slane %v5554, 2
    %v5556 = vadd.f32 %v5554, %v5555
    %v5557 = vrot.slane %v5556, 1
    %v5558 = vadd.f32 %v5556, %v5557
    %v5559 = vmul.f32 %v5549, %v2132
    %v5560 = vsel %vm2608, %v5559, 0.0
    %v5561 = vrot.slane %v5560, 4
    %v5562 = vadd.f32 %v5560, %v5561
    %v5563 = vrot.slane %v5562, 2
    %v5564 = vadd.f32 %v5562, %v5563
    %v5565 = vrot.slane %v5564, 1
    %v5566 = vadd.f32 %v5564, %v5565
    %v5567 = vlaneseq
    %v5568 = vshrl.u32 %v5567, 7
    %v5569 = vsub.s32 1, %v5568
    %v5570 = vrot.slane %v5513, %v5569
    %v5571 = vadd.f32 %v2460, %v5570
    %v5572 = vtanh.pop %v5571
    %v5573 = vmul.f32 %v5572, %v2469
    %v5574 = vsel %vm46, %v5573, 0.0
    %5575 = vadd.xlane.f32.xlu0 %v5574
    %v5576 = vpop.xlane.xlu0 %5575
    %v5577 = vadd.f32 %v5576, %v2465
    %v5578 = vsel %vm2582, %v5577, -inf
    %v5579 = vrot.slane %v5578, 4
    %v5580 = vmax.f32 %v5578, %v5579
    %v5581 = vrot.slane %v5580, 2
    %v5582 = vmax.f32 %v5580, %v5581
    %v5583 = vrot.slane %v5582, 1
    %v5584 = vmax.f32 %v5582, %v5583
    %v5585 = vsub.f32 %v5577, %v5584
    %v5586 = vmul.f32 %v5585, 1.442695
    %v5587 = vpow.pop %v5586
    %v5588 = vsel %vm2582, %v5587, 0.0
    %v5589 = vrot.slane %v5588, 4
    %v5590 = vadd.f32 %v5588, %v5589
    %v5591 = vrot.slane %v5590, 2
    %v5592 = vadd.f32 %v5590, %v5591
    %v5593 = vrot.slane %v5592, 1
    %v5594 = vadd.f32 %v5592, %v5593
    %v5595 = vrcp.pop %v5594
    %v5596 = vmul.f32 %v5587, %v5595
    %5598 = vset.pattern.permute.xlu0 0
    %5599 = vperm.xlu0 %5598, %v5596
    %v5600 = vpop.permute.xlu0 %5599
    %v5602 = vmul.f32 %v5600, %v2104
    %v5603 = vsel %vm2608, %v5602, 0.0
    %v5604 = vrot.slane %v5603, 4
    %v5605 = vadd.f32 %v5603, %v5604
    %v5606 = vrot.slane %v5605, 2
    %v5607 = vadd.f32 %v5605, %v5606
    %v5608 = vrot.slane %v5607, 1
    %v5609 = vadd.f32 %v5607, %v5608
    %v5610 = vmul.f32 %v5600, %v2154
    %v5611 = vsel %vm2608, %v5610, 0.0
    %v5612 = vrot.slane %v5611, 4
    %v5613 = vadd.f32 %v5611, %v5612
    %v5614 = vrot.slane %v5613, 2
    %v5615 = vadd.f32 %v5613, %v5614
    %v5616 = vrot.slane %v5615, 1
    %v5617 = vadd.f32 %v5615, %v5616
    %v5618 = vsel %vm2069, %v5558, %v5609
    %v5619 = vsel %vm2069, %v5566, %v5617
    %s5620 = scalar_lea.vmem %s3, 8
    %v5621 = vld [vmem:[%s5620] sm:$0x3]
    %5623 = vrot.lane.b32.xlu0 %v5618, 96
    %v5624 = vpop.permute.xlu0 %5623
    %v5625 = vsel %vm46, %v5624, 0
    %5627 = vmatprep.subr.mxu0 0.0
    %5628 = vmatpush1.msra.mxu0 %v2474
    %5629 = vmatprep.subr.mxu0 0.0
    %5630 = vmatpush1.msra.mxu0 %v2475
    %5631 = vmatprep.subr.mxu0 0.0
    %5632 = vmatpush1.msra.mxu0 %v2476
    %5633 = vmatprep.subr.mxu0 0.0
    %5634 = vmatpush1.msra.mxu0 %v2477
    %5635 = vmatprep.subr.mxu0 0.0
    %5636 = vmatpush1.msra.mxu0 0.0
    %5637 = vmatprep.subr.mxu0 0.0
    %5638 = vmatpush1.msra.mxu0 0.0
    %5639 = vmatprep.subr.mxu0 0.0
    %5640 = vmatpush1.msra.mxu0 0.0
    %5641 = vmatprep.subr.mxu0 0.0
    %5642 = vmatpush1.msra.mxu0 0.0
    %5643 = vmatprep.subr.mxu0 0.0
    %5644 = vmatpush1.msra.mxu0 0.0
    %5645 = vmatprep.subr.mxu0 0.0
    %5646 = vmatpush1.msra.mxu0 0.0
    %5647 = vmatprep.subr.mxu0 0.0
    %5648 = vmatpush1.msra.mxu0 0.0
    %5649 = vmatprep.subr.mxu0 0.0
    %5650 = vmatpush1.msra.mxu0 0.0
    %5651 = vmatprep.subr.mxu0 0.0
    %5652 = vmatpush1.msra.mxu0 0.0
    %5653 = vmatprep.subr.mxu0 0.0
    %5654 = vmatpush1.msra.mxu0 0.0
    %5655 = vmatprep.subr.mxu0 0.0
    %5656 = vmatpush1.msra.mxu0 0.0
    %5657 = vmatprep.subr.mxu0 0.0
    %5658 = vmatpush1.msra.mxu0 0.0
    %5659 = vmatprep.subr.mxu0 0.0
    %5660 = vmatpush1.msra.mxu0 0.0
    %5661 = vmatprep.subr.mxu0 0.0
    %5662 = vmatpush1.msra.mxu0 0.0
    %5663 = vmatprep.subr.mxu0 0.0
    %5664 = vmatpush1.msra.mxu0 0.0
    %5665 = vmatprep.subr.mxu0 0.0
    %5666 = vmatpush1.msra.mxu0 0.0
    %5667 = vmatprep.subr.mxu0 0.0
    %5668 = vmatpush1.msra.mxu0 0.0
    %5669 = vmatprep.subr.mxu0 0.0
    %5670 = vmatpush1.msra.mxu0 0.0
    %5671 = vmatprep.subr.mxu0 0.0
    %5672 = vmatpush1.msra.mxu0 0.0
    %5673 = vmatprep.subr.mxu0 0.0
    %5674 = vmatpush1.msra.mxu0 0.0
    %5675 = vmatprep.subr.mxu0 0.0
    %5676 = vmatpush1.msra.mxu0 0.0
    %5677 = vmatprep.subr.mxu0 0.0
    %5678 = vmatpush1.msra.mxu0 0.0
    %5679 = vmatprep.subr.mxu0 0.0
    %5680 = vmatpush1.msra.mxu0 0.0
    %5681 = vmatprep.subr.mxu0 0.0
    %5682 = vmatpush1.msra.mxu0 0.0
    %5683 = vmatprep.subr.mxu0 0.0
    %5684 = vmatpush1.msra.mxu0 0.0
    %5685 = vmatprep.subr.mxu0 0.0
    %5686 = vmatpush1.msra.mxu0 0.0
    %5687 = vmatprep.subr.mxu0 0.0
    %5688 = vmatpush1.msra.mxu0 0.0
    %5689 = vmatprep.subr.mxu0 0.0
    %5690 = vmatpush1.msra.mxu0 0.0
    %5691 = vmatprep.mubr.f32.mxu0 0.0
    %5692 = vmatmul.mubr.f32.gmra.mrb[0].mxu0 %v5625
    %v5693 = vpop.f32.mrb[0].mxu0
    %v5694 = vadd.f32 0.0, %v5693
    %v5695 = vpop.f32.mrb[0].mxu0
    %5696 = vdwg.mxu0
    %v5697 = vadd.f32 %v5621, %v5694
    %5699 = vrot.lane.b32.xlu0 %v5619, 96
    %v5700 = vpop.permute.xlu0 %5699
    %v5701 = vsel %vm46, %v5700, 0
    %5703 = vmatprep.subr.mxu0 0.0
    %5704 = vmatpush1.msra.mxu0 %v2478
    %5705 = vmatprep.subr.mxu0 0.0
    %5706 = vmatpush1.msra.mxu0 %v2479
    %5707 = vmatprep.subr.mxu0 0.0
    %5708 = vmatpush1.msra.mxu0 %v2480
    %5709 = vmatprep.subr.mxu0 0.0
    %5710 = vmatpush1.msra.mxu0 %v2481
    %5711 = vmatprep.subr.mxu0 0.0
    %5712 = vmatpush1.msra.mxu0 0.0
    %5713 = vmatprep.subr.mxu0 0.0
    %5714 = vmatpush1.msra.mxu0 0.0
    %5715 = vmatprep.subr.mxu0 0.0
    %5716 = vmatpush1.msra.mxu0 0.0
    %5717 = vmatprep.subr.mxu0 0.0
    %5718 = vmatpush1.msra.mxu0 0.0
    %5719 = vmatprep.subr.mxu0 0.0
    %5720 = vmatpush1.msra.mxu0 0.0
    %5721 = vmatprep.subr.mxu0 0.0
    %5722 = vmatpush1.msra.mxu0 0.0
    %5723 = vmatprep.subr.mxu0 0.0
    %5724 = vmatpush1.msra.mxu0 0.0
    %5725 = vmatprep.subr.mxu0 0.0
    %5726 = vmatpush1.msra.mxu0 0.0
    %5727 = vmatprep.subr.mxu0 0.0
    %5728 = vmatpush1.msra.mxu0 0.0
    %5729 = vmatprep.subr.mxu0 0.0
    %5730 = vmatpush1.msra.mxu0 0.0
    %5731 = vmatprep.subr.mxu0 0.0
    %5732 = vmatpush1.msra.mxu0 0.0
    %5733 = vmatprep.subr.mxu0 0.0
    %5734 = vmatpush1.msra.mxu0 0.0
    %5735 = vmatprep.subr.mxu0 0.0
    %5736 = vmatpush1.msra.mxu0 0.0
    %5737 = vmatprep.subr.mxu0 0.0
    %5738 = vmatpush1.msra.mxu0 0.0
    %5739 = vmatprep.subr.mxu0 0.0
    %5740 = vmatpush1.msra.mxu0 0.0
    %5741 = vmatprep.subr.mxu0 0.0
    %5742 = vmatpush1.msra.mxu0 0.0
    %5743 = vmatprep.subr.mxu0 0.0
    %5744 = vmatpush1.msra.mxu0 0.0
    %5745 = vmatprep.subr.mxu0 0.0
    %5746 = vmatpush1.msra.mxu0 0.0
    %5747 = vmatprep.subr.mxu0 0.0
    %5748 = vmatpush1.msra.mxu0 0.0
    %5749 = vmatprep.subr.mxu0 0.0
    %5750 = vmatpush1.msra.mxu0 0.0
    %5751 = vmatprep.subr.mxu0 0.0
    %5752 = vmatpush1.msra.mxu0 0.0
    %5753 = vmatprep.subr.mxu0 0.0
    %5754 = vmatpush1.msra.mxu0 0.0
    %5755 = vmatprep.subr.mxu0 0.0
    %5756 = vmatpush1.msra.mxu0 0.0
    %5757 = vmatprep.subr.mxu0 0.0
    %5758 = vmatpush1.msra.mxu0 0.0
    %5759 = vmatprep.subr.mxu0 0.0
    %5760 = vmatpush1.msra.mxu0 0.0
    %5761 = vmatprep.subr.mxu0 0.0
    %5762 = vmatpush1.msra.mxu0 0.0
    %5763 = vmatprep.subr.mxu0 0.0
    %5764 = vmatpush1.msra.mxu0 0.0
    %5765 = vmatprep.subr.mxu0 0.0
    %5766 = vmatpush1.msra.mxu0 0.0
    %5767 = vmatprep.mubr.f32.mxu0 0.0
    %5768 = vmatmul.mubr.f32.gmra.mrb[0].mxu0 %v5701
    %v5769 = vpop.f32.mrb[0].mxu0
    %v5770 = vadd.f32 0.0, %v5769
    %v5771 = vpop.f32.mrb[0].mxu0
    %5772 = vdwg.mxu0
    %v5773 = vadd.f32 %v5697, %v5770
    %5774 = vmatprep.subr.mxu0 0.0
    %5775 = vmatpush1.msra.mxu0 %v2470
    %5776 = vmatprep.subr.mxu0 0.0
    %5777 = vmatpush1.msra.mxu0 %v2471
    %5778 = vmatprep.subr.mxu0 0.0
    %5779 = vmatpush1.msra.mxu0 %v2472
    %5780 = vmatprep.subr.mxu0 0.0
    %5781 = vmatpush1.msra.mxu0 %v2473
    %5782 = vmatprep.subr.mxu0 0.0
    %5783 = vmatpush1.msra.mxu0 0.0
    %5784 = vmatprep.subr.mxu0 0.0
    %5785 = vmatpush1.msra.mxu0 0.0
    %5786 = vmatprep.subr.mxu0 0.0
    %5787 = vmatpush1.msra.mxu0 0.0
    %5788 = vmatprep.subr.mxu0 0.0
    %5789 = vmatpush1.msra.mxu0 0.0
    %5790 = vmatprep.subr.mxu0 0.0
    %5791 = vmatpush1.msra.mxu0 0.0
    %5792 = vmatprep.subr.mxu0 0.0
    %5793 = vmatpush1.msra.mxu0 0.0
    %5794 = vmatprep.subr.mxu0 0.0
    %5795 = vmatpush1.msra.mxu0 0.0
    %5796 = vmatprep.subr.mxu0 0.0
    %5797 = vmatpush1.msra.mxu0 0.0
    %5798 = vmatprep.subr.mxu0 0.0
    %5799 = vmatpush1.msra.mxu0 0.0
    %5800 = vmatprep.subr.mxu0 0.0
    %5801 = vmatpush1.msra.mxu0 0.0
    %5802 = vmatprep.subr.mxu0 0.0
    %5803 = vmatpush1.msra.mxu0 0.0
    %5804 = vmatprep.subr.mxu0 0.0
    %5805 = vmatpush1.msra.mxu0 0.0
    %5806 = vmatprep.subr.mxu0 0.0
    %5807 = vmatpush1.msra.mxu0 0.0
    %5808 = vmatprep.subr.mxu0 0.0
    %5809 = vmatpush1.msra.mxu0 0.0
    %5810 = vmatprep.subr.mxu0 0.0
    %5811 = vmatpush1.msra.mxu0 0.0
    %5812 = vmatprep.subr.mxu0 0.0
    %5813 = vmatpush1.msra.mxu0 0.0
    %5814 = vmatprep.subr.mxu0 0.0
    %5815 = vmatpush1.msra.mxu0 0.0
    %5816 = vmatprep.subr.mxu0 0.0
    %5817 = vmatpush1.msra.mxu0 0.0
    %5818 = vmatprep.subr.mxu0 0.0
    %5819 = vmatpush1.msra.mxu0 0.0
    %5820 = vmatprep.subr.mxu0 0.0
    %5821 = vmatpush1.msra.mxu0 0.0
    %5822 = vmatprep.subr.mxu0 0.0
    %5823 = vmatpush1.msra.mxu0 0.0
    %5824 = vmatprep.subr.mxu0 0.0
    %5825 = vmatpush1.msra.mxu0 0.0
    %5826 = vmatprep.subr.mxu0 0.0
    %5827 = vmatpush1.msra.mxu0 0.0
    %5828 = vmatprep.subr.mxu0 0.0
    %5829 = vmatpush1.msra.mxu0 0.0
    %5830 = vmatprep.subr.mxu0 0.0
    %5831 = vmatpush1.msra.mxu0 0.0
    %5832 = vmatprep.subr.mxu0 0.0
    %5833 = vmatpush1.msra.mxu0 0.0
    %5834 = vmatprep.subr.mxu0 0.0
    %5835 = vmatpush1.msra.mxu0 0.0
    %5836 = vmatprep.subr.mxu0 0.0
    %5837 = vmatpush1.msra.mxu0 0.0
    %5838 = vmatprep.mubr.f32.mxu0 0.0
    %5839 = vmatmul.mubr.f32.gmra.mrb[0].mxu0 %v5180
    %v5840 = vpop.f32.mrb[0].mxu0
    %v5841 = vadd.f32 0.0, %v5840
    %v5842 = vpop.f32.mrb[0].mxu0
    %5843 = vdwg.mxu0
    %v5844 = vadd.f32 %v5773, %v5841
    %v5845 = vxor.u32 %v5844, 2147483648
    %v5846 = vmul.f32 %v5845, 1.442695
    %v5847 = vpow.pop %v5846
    %v5848 = vadd.f32 %v5847, 1.0
    %v5849 = vrcp.pop %v5848
    %v5850 = vmul.f32 1.0, %v5849
    %v5851 = vadd.f32 %v5841, %v2913
    %5853 = vrot.lane.b32.xlu0 %v5851, 64
    %v5854 = vpop.permute.xlu0 %5853
    %v5856 = vmul.f32 %v5850, %v5854
    %5858 = vrot.lane.b32.xlu0 %v5856, 64
    %v5859 = vpop.permute.xlu0 %5858
    %v5861 = vadd.f32 %v5773, %v5859
    %v5862 = vtanh.pop %v5861
    %v5863 = vsub.f32 1.0, %v5850
    %5865 = vrot.lane.b32.xlu0 %v5862, 96
    %v5866 = vpop.permute.xlu0 %5865
    %v5868 = vmul.f32 %v5863, %v5866
    %v5869 = vmul.f32 %v5850, %v5137
    %v5870 = vadd.f32 %v5868, %v5869
    %v5873 = vunpack.c.l.s4 1966171168
    %v5874 = vunpack.c.0.s8 %v5873
    %v5875 = vlaneseq
    %v5876 = vshrl.u32 %v5875, 7
    %v5877 = vsub.s32 %v5874, %v5876
    %v5878 = vrot.slane %v5870, %v5877
    %v5879 = vcombine.high %v5878, %v5878
    %v5881 = vunpack.c.l.s4 1966171168
    %v5882 = vunpack.c.0.s8 %v5881
    %v5883 = vlaneseq
    %v5884 = vshrl.u32 %v5883, 7
    %v5885 = vsub.s32 %v5882, %v5884
    %v5886 = vrot.slane %v5878, %v5885
    %v5888 = vunpack.c.l.s4 1966171168
    %v5889 = vunpack.c.0.s8 %v5888
    %v5890 = vlaneseq
    %v5891 = vshrl.u32 %v5890, 7
    %v5892 = vsub.s32 %v5889, %v5891
    %v5893 = vrot.slane %v5879, %v5892
    %v5894 = vlaneseq
    %v5895 = vshrl.u32 %v5894, 7
    %v5896 = vsub.s32 0, %v5895
    %v5897 = vrot.slane %v5886, %v5896
    %v5898 = vlaneseq
    %v5899 = vshrl.u32 %v5898, 7
    %v5900 = vsub.s32 0, %v5899
    %v5901 = vrot.slane %v5893, %v5900
    %5902 = vrot.lane.b32.xlu0 %v5897, 96
    %v5903 = vpop.permute.xlu0 %5902
    %5904 = vrot.lane.b32.xlu0 %v5901, 96
    %v5905 = vpop.permute.xlu0 %5904
    %5908 = vst.msk [vmem:[#allocation2 + $0x4] sm:$0x1] %vm2975, %v5903
    %5909 = vst.msk [vmem:[#allocation2 + $0xc] sm:$0x1] %vm2975, %v5905
    %v5910 = vld [vmem:[%s5620] sm:$0x3]
    %5911 = vrot.lane.b32.xlu0 %v5870, 96
    %v5912 = vpop.permute.xlu0 %5911
    %v5913 = vsel %vm46, %v5912, 0
    %5915 = vmatprep.subr.mxu0 0.0
    %5916 = vmatpush1.msra.mxu0 %v2486
    %5917 = vmatprep.subr.mxu0 0.0
    %5918 = vmatpush1.msra.mxu0 %v2487
    %5919 = vmatprep.subr.mxu0 0.0
    %5920 = vmatpush1.msra.mxu0 %v2488
    %5921 = vmatprep.subr.mxu0 0.0
    %5922 = vmatpush1.msra.mxu0 %v2489
    %5923 = vmatprep.subr.mxu0 0.0
    %5924 = vmatpush1.msra.mxu0 0.0
    %5925 = vmatprep.subr.mxu0 0.0
    %5926 = vmatpush1.msra.mxu0 0.0
    %5927 = vmatprep.subr.mxu0 0.0
    %5928 = vmatpush1.msra.mxu0 0.0
    %5929 = vmatprep.subr.mxu0 0.0
    %5930 = vmatpush1.msra.mxu0 0.0
    %5931 = vmatprep.subr.mxu0 0.0
    %5932 = vmatpush1.msra.mxu0 0.0
    %5933 = vmatprep.subr.mxu0 0.0
    %5934 = vmatpush1.msra.mxu0 0.0
    %5935 = vmatprep.subr.mxu0 0.0
    %5936 = vmatpush1.msra.mxu0 0.0
    %5937 = vmatprep.subr.mxu0 0.0
    %5938 = vmatpush1.msra.mxu0 0.0
    %5939 = vmatprep.subr.mxu0 0.0
    %5940 = vmatpush1.msra.mxu0 0.0
    %5941 = vmatprep.subr.mxu0 0.0
    %5942 = vmatpush1.msra.mxu0 0.0
    %5943 = vmatprep.subr.mxu0 0.0
    %5944 = vmatpush1.msra.mxu0 0.0
    %5945 = vmatprep.subr.mxu0 0.0
    %5946 = vmatpush1.msra.mxu0 0.0
    %5947 = vmatprep.subr.mxu0 0.0
    %5948 = vmatpush1.msra.mxu0 0.0
    %5949 = vmatprep.subr.mxu0 0.0
    %5950 = vmatpush1.msra.mxu0 0.0
    %5951 = vmatprep.subr.mxu0 0.0
    %5952 = vmatpush1.msra.mxu0 0.0
    %5953 = vmatprep.subr.mxu0 0.0
    %5954 = vmatpush1.msra.mxu0 0.0
    %5955 = vmatprep.subr.mxu0 0.0
    %5956 = vmatpush1.msra.mxu0 0.0
    %5957 = vmatprep.subr.mxu0 0.0
    %5958 = vmatpush1.msra.mxu0 0.0
    %5959 = vmatprep.subr.mxu0 0.0
    %5960 = vmatpush1.msra.mxu0 0.0
    %5961 = vmatprep.subr.mxu0 0.0
    %5962 = vmatpush1.msra.mxu0 0.0
    %5963 = vmatprep.subr.mxu0 0.0
    %5964 = vmatpush1.msra.mxu0 0.0
    %5965 = vmatprep.subr.mxu0 0.0
    %5966 = vmatpush1.msra.mxu0 0.0
    %5967 = vmatprep.subr.mxu0 0.0
    %5968 = vmatpush1.msra.mxu0 0.0
    %5969 = vmatprep.subr.mxu0 0.0
    %5970 = vmatpush1.msra.mxu0 0.0
    %5971 = vmatprep.subr.mxu0 0.0
    %5972 = vmatpush1.msra.mxu0 0.0
    %5973 = vmatprep.subr.mxu0 0.0
    %5974 = vmatpush1.msra.mxu0 0.0
    %5975 = vmatprep.subr.mxu0 0.0
    %5976 = vmatpush1.msra.mxu0 0.0
    %5977 = vmatprep.subr.mxu0 0.0
    %5978 = vmatpush1.msra.mxu0 0.0
    %5979 = vmatprep.mubr.f32.mxu0 0.0
    %5980 = vmatmul.mubr.f32.gmra.mrb[0].mxu0 %v5913
    %v5981 = vpop.f32.mrb[0].mxu0
    %v5982 = vadd.f32 0.0, %v5981
    %v5983 = vpop.f32.mrb[0].mxu0
    %5984 = vdwg.mxu0
    %5986 = vrot.lane.b32.xlu0 %v5982, 96
    %v5987 = vpop.permute.xlu0 %5986
    %v5989 = vadd.f32 %v5910, %v5987
    %5990 = vmatprep.subr.mxu0 0.0
    %5991 = vmatpush1.msra.mxu0 %v2490
    %5992 = vmatprep.subr.mxu0 0.0
    %5993 = vmatpush1.msra.mxu0 %v2491
    %5994 = vmatprep.subr.mxu0 0.0
    %5995 = vmatpush1.msra.mxu0 %v2492
    %5996 = vmatprep.subr.mxu0 0.0
    %5997 = vmatpush1.msra.mxu0 %v2493
    %5998 = vmatprep.subr.mxu0 0.0
    %5999 = vmatpush1.msra.mxu0 0.0
    %6000 = vmatprep.subr.mxu0 0.0
    %6001 = vmatpush1.msra.mxu0 0.0
    %6002 = vmatprep.subr.mxu0 0.0
    %6003 = vmatpush1.msra.mxu0 0.0
    %6004 = vmatprep.subr.mxu0 0.0
    %6005 = vmatpush1.msra.mxu0 0.0
    %6006 = vmatprep.subr.mxu0 0.0
    %6007 = vmatpush1.msra.mxu0 0.0
    %6008 = vmatprep.subr.mxu0 0.0
    %6009 = vmatpush1.msra.mxu0 0.0
    %6010 = vmatprep.subr.mxu0 0.0
    %6011 = vmatpush1.msra.mxu0 0.0
    %6012 = vmatprep.subr.mxu0 0.0
    %6013 = vmatpush1.msra.mxu0 0.0
    %6014 = vmatprep.subr.mxu0 0.0
    %6015 = vmatpush1.msra.mxu0 0.0
    %6016 = vmatprep.subr.mxu0 0.0
    %6017 = vmatpush1.msra.mxu0 0.0
    %6018 = vmatprep.subr.mxu0 0.0
    %6019 = vmatpush1.msra.mxu0 0.0
    %6020 = vmatprep.subr.mxu0 0.0
    %6021 = vmatpush1.msra.mxu0 0.0
    %6022 = vmatprep.subr.mxu0 0.0
    %6023 = vmatpush1.msra.mxu0 0.0
    %6024 = vmatprep.subr.mxu0 0.0
    %6025 = vmatpush1.msra.mxu0 0.0
    %6026 = vmatprep.subr.mxu0 0.0
    %6027 = vmatpush1.msra.mxu0 0.0
    %6028 = vmatprep.subr.mxu0 0.0
    %6029 = vmatpush1.msra.mxu0 0.0
    %6030 = vmatprep.subr.mxu0 0.0
    %6031 = vmatpush1.msra.mxu0 0.0
    %6032 = vmatprep.subr.mxu0 0.0
    %6033 = vmatpush1.msra.mxu0 0.0
    %6034 = vmatprep.subr.mxu0 0.0
    %6035 = vmatpush1.msra.mxu0 0.0
    %6036 = vmatprep.subr.mxu0 0.0
    %6037 = vmatpush1.msra.mxu0 0.0
    %6038 = vmatprep.subr.mxu0 0.0
    %6039 = vmatpush1.msra.mxu0 0.0
    %6040 = vmatprep.subr.mxu0 0.0
    %6041 = vmatpush1.msra.mxu0 0.0
    %6042 = vmatprep.subr.mxu0 0.0
    %6043 = vmatpush1.msra.mxu0 0.0
    %6044 = vmatprep.subr.mxu0 0.0
    %6045 = vmatpush1.msra.mxu0 0.0
    %6046 = vmatprep.subr.mxu0 0.0
    %6047 = vmatpush1.msra.mxu0 0.0
    %6048 = vmatprep.subr.mxu0 0.0
    %6049 = vmatpush1.msra.mxu0 0.0
    %6050 = vmatprep.subr.mxu0 0.0
    %6051 = vmatpush1.msra.mxu0 0.0
    %6052 = vmatprep.subr.mxu0 0.0
    %6053 = vmatpush1.msra.mxu0 0.0
    %6054 = vmatprep.mubr.f32.mxu0 0.0
    %6055 = vmatmul.mubr.f32.gmra.mrb[0].mxu0 %v5625
    %v6056 = vpop.f32.mrb[0].mxu0
    %v6057 = vadd.f32 0.0, %v6056
    %v6058 = vpop.f32.mrb[0].mxu0
    %6059 = vdwg.mxu0
    %6061 = vrot.lane.b32.xlu0 %v6057, 96
    %v6062 = vpop.permute.xlu0 %6061
    %v6064 = vadd.f32 %v5989, %v6062
    %6065 = vmatprep.subr.mxu0 0.0
    %6066 = vmatpush1.msra.mxu0 %v2494
    %6067 = vmatprep.subr.mxu0 0.0
    %6068 = vmatpush1.msra.mxu0 %v2495
    %6069 = vmatprep.subr.mxu0 0.0
    %6070 = vmatpush1.msra.mxu0 %v2496
    %6071 = vmatprep.subr.mxu0 0.0
    %6072 = vmatpush1.msra.mxu0 %v2497
    %6073 = vmatprep.subr.mxu0 0.0
    %6074 = vmatpush1.msra.mxu0 0.0
    %6075 = vmatprep.subr.mxu0 0.0
    %6076 = vmatpush1.msra.mxu0 0.0
    %6077 = vmatprep.subr.mxu0 0.0
    %6078 = vmatpush1.msra.mxu0 0.0
    %6079 = vmatprep.subr.mxu0 0.0
    %6080 = vmatpush1.msra.mxu0 0.0
    %6081 = vmatprep.subr.mxu0 0.0
    %6082 = vmatpush1.msra.mxu0 0.0
    %6083 = vmatprep.subr.mxu0 0.0
    %6084 = vmatpush1.msra.mxu0 0.0
    %6085 = vmatprep.subr.mxu0 0.0
    %6086 = vmatpush1.msra.mxu0 0.0
    %6087 = vmatprep.subr.mxu0 0.0
    %6088 = vmatpush1.msra.mxu0 0.0
    %6089 = vmatprep.subr.mxu0 0.0
    %6090 = vmatpush1.msra.mxu0 0.0
    %6091 = vmatprep.subr.mxu0 0.0
    %6092 = vmatpush1.msra.mxu0 0.0
    %6093 = vmatprep.subr.mxu0 0.0
    %6094 = vmatpush1.msra.mxu0 0.0
    %6095 = vmatprep.subr.mxu0 0.0
    %6096 = vmatpush1.msra.mxu0 0.0
    %6097 = vmatprep.subr.mxu0 0.0
    %6098 = vmatpush1.msra.mxu0 0.0
    %6099 = vmatprep.subr.mxu0 0.0
    %6100 = vmatpush1.msra.mxu0 0.0
    %6101 = vmatprep.subr.mxu0 0.0
    %6102 = vmatpush1.msra.mxu0 0.0
    %6103 = vmatprep.subr.mxu0 0.0
    %6104 = vmatpush1.msra.mxu0 0.0
    %6105 = vmatprep.subr.mxu0 0.0
    %6106 = vmatpush1.msra.mxu0 0.0
    %6107 = vmatprep.subr.mxu0 0.0
    %6108 = vmatpush1.msra.mxu0 0.0
    %6109 = vmatprep.subr.mxu0 0.0
    %6110 = vmatpush1.msra.mxu0 0.0
    %6111 = vmatprep.subr.mxu0 0.0
    %6112 = vmatpush1.msra.mxu0 0.0
    %6113 = vmatprep.subr.mxu0 0.0
    %6114 = vmatpush1.msra.mxu0 0.0
    %6115 = vmatprep.subr.mxu0 0.0
    %6116 = vmatpush1.msra.mxu0 0.0
    %6117 = vmatprep.subr.mxu0 0.0
    %6118 = vmatpush1.msra.mxu0 0.0
    %6119 = vmatprep.subr.mxu0 0.0
    %6120 = vmatpush1.msra.mxu0 0.0
    %6121 = vmatprep.subr.mxu0 0.0
    %6122 = vmatpush1.msra.mxu0 0.0
    %6123 = vmatprep.subr.mxu0 0.0
    %6124 = vmatpush1.msra.mxu0 0.0
    %6125 = vmatprep.subr.mxu0 0.0
    %6126 = vmatpush1.msra.mxu0 0.0
    %6127 = vmatprep.subr.mxu0 0.0
    %6128 = vmatpush1.msra.mxu0 0.0
    %6129 = vmatprep.mubr.f32.mxu0 0.0
    %6130 = vmatmul.mubr.f32.gmra.mrb[0].mxu0 %v5701
    %v6131 = vpop.f32.mrb[0].mxu0
    %v6132 = vadd.f32 0.0, %v6131
    %v6133 = vpop.f32.mrb[0].mxu0
    %6134 = vdwg.mxu0
    %6136 = vrot.lane.b32.xlu0 %v6132, 96
    %v6137 = vpop.permute.xlu0 %6136
    %v6139 = vadd.f32 %v6064, %v6137
    %v6142 = vunpack.c.l.s4 1966171168
    %v6143 = vunpack.c.0.s8 %v6142
    %v6144 = vlaneseq
    %v6145 = vshrl.u32 %v6144, 7
    %v6146 = vsub.s32 %v6143, %v6145
    %v6147 = vrot.slane %v6139, %v6146
    %v6148 = vcombine.high %v6147, %v6147
    %v6150 = vunpack.c.l.s4 1966171168
    %v6151 = vunpack.c.0.s8 %v6150
    %v6152 = vlaneseq
    %v6153 = vshrl.u32 %v6152, 7
    %v6154 = vsub.s32 %v6151, %v6153
    %v6155 = vrot.slane %v6147, %v6154
    %v6157 = vunpack.c.l.s4 1966171168
    %v6158 = vunpack.c.0.s8 %v6157
    %v6159 = vlaneseq
    %v6160 = vshrl.u32 %v6159, 7
    %v6161 = vsub.s32 %v6158, %v6160
    %v6162 = vrot.slane %v6148, %v6161
    %v6163 = vlaneseq
    %v6164 = vshrl.u32 %v6163, 7
    %v6165 = vsub.s32 0, %v6164
    %v6166 = vrot.slane %v6155, %v6165
    %v6167 = vlaneseq
    %v6168 = vshrl.u32 %v6167, 7
    %v6169 = vsub.s32 0, %v6168
    %v6170 = vrot.slane %v6162, %v6169
    %6171 = vrot.lane.b32.xlu0 %v6166, 32
    %v6172 = vpop.permute.xlu0 %6171
    %6173 = vrot.lane.b32.xlu0 %v6170, 32
    %v6174 = vpop.permute.xlu0 %6173
    %6177 = vst.msk [vmem:[#allocation4 + $0x4] sm:$0x1] %vm2975, %v6172
    %6178 = vst.msk [vmem:[#allocation4 + $0xc] sm:$0x1] %vm2975, %v6174
    %6179 = vmatprep.subr.mxu0 0.0
    %6180 = vmatpush1.msra.mxu0 %v2482
    %6181 = vmatprep.subr.mxu0 0.0
    %6182 = vmatpush1.msra.mxu0 %v2483
    %6183 = vmatprep.subr.mxu0 0.0
    %6184 = vmatpush1.msra.mxu0 %v2484
    %6185 = vmatprep.subr.mxu0 0.0
    %6186 = vmatpush1.msra.mxu0 %v2485
    %6187 = vmatprep.subr.mxu0 0.0
    %6188 = vmatpush1.msra.mxu0 0.0
    %6189 = vmatprep.subr.mxu0 0.0
    %6190 = vmatpush1.msra.mxu0 0.0
    %6191 = vmatprep.subr.mxu0 0.0
    %6192 = vmatpush1.msra.mxu0 0.0
    %6193 = vmatprep.subr.mxu0 0.0
    %6194 = vmatpush1.msra.mxu0 0.0
    %6195 = vmatprep.subr.mxu0 0.0
    %6196 = vmatpush1.msra.mxu0 0.0
    %6197 = vmatprep.subr.mxu0 0.0
    %6198 = vmatpush1.msra.mxu0 0.0
    %6199 = vmatprep.subr.mxu0 0.0
    %6200 = vmatpush1.msra.mxu0 0.0
    %6201 = vmatprep.subr.mxu0 0.0
    %6202 = vmatpush1.msra.mxu0 0.0
    %6203 = vmatprep.subr.mxu0 0.0
    %6204 = vmatpush1.msra.mxu0 0.0
    %6205 = vmatprep.subr.mxu0 0.0
    %6206 = vmatpush1.msra.mxu0 0.0
    %6207 = vmatprep.subr.mxu0 0.0
    %6208 = vmatpush1.msra.mxu0 0.0
    %6209 = vmatprep.subr.mxu0 0.0
    %6210 = vmatpush1.msra.mxu0 0.0
    %6211 = vmatprep.subr.mxu0 0.0
    %6212 = vmatpush1.msra.mxu0 0.0
    %6213 = vmatprep.subr.mxu0 0.0
    %6214 = vmatpush1.msra.mxu0 0.0
    %6215 = vmatprep.subr.mxu0 0.0
    %6216 = vmatpush1.msra.mxu0 0.0
    %6217 = vmatprep.subr.mxu0 0.0
    %6218 = vmatpush1.msra.mxu0 0.0
    %6219 = vmatprep.subr.mxu0 0.0
    %6220 = vmatpush1.msra.mxu0 0.0
    %6221 = vmatprep.subr.mxu0 0.0
    %6222 = vmatpush1.msra.mxu0 0.0
    %6223 = vmatprep.subr.mxu0 0.0
    %6224 = vmatpush1.msra.mxu0 0.0
    %6225 = vmatprep.subr.mxu0 0.0
    %6226 = vmatpush1.msra.mxu0 0.0
    %6227 = vmatprep.subr.mxu0 0.0
    %6228 = vmatpush1.msra.mxu0 0.0
    %6229 = vmatprep.subr.mxu0 0.0
    %6230 = vmatpush1.msra.mxu0 0.0
    %6231 = vmatprep.subr.mxu0 0.0
    %6232 = vmatpush1.msra.mxu0 0.0
    %6233 = vmatprep.subr.mxu0 0.0
    %6234 = vmatpush1.msra.mxu0 0.0
    %6235 = vmatprep.subr.mxu0 0.0
    %6236 = vmatpush1.msra.mxu0 0.0
    %6237 = vmatprep.subr.mxu0 0.0
    %6238 = vmatpush1.msra.mxu0 0.0
    %6239 = vmatprep.subr.mxu0 0.0
    %6240 = vmatpush1.msra.mxu0 0.0
    %6241 = vmatprep.subr.mxu0 0.0
    %6242 = vmatpush1.msra.mxu0 0.0
    %6243 = vmatprep.mubr.f32.mxu0 0.0
    %6244 = vmatmul.mubr.f32.gmra.mrb[0].mxu0 %v5913
    %v6245 = vpop.f32.mrb[0].mxu0
    %v6246 = vadd.f32 0.0, %v6245
    %v6247 = vpop.f32.mrb[0].mxu0
    %6248 = vdwg.mxu0
    %v6249 = vlaneseq
    %v6250 = vshrl.u32 %v6249, 7
    %v6251 = vsub.s32 0, %v6250
    %v6252 = vrot.slane %v6246, %v6251
    %v6253 = vadd.f32 %v2310, %v6252
    %v6254 = vtanh.pop %v6253
    %v6255 = vmul.f32 %v6254, %v2469
    %v6256 = vsel %vm46, %v6255, 0.0
    %6257 = vadd.xlane.f32.xlu0 %v6256
    %v6258 = vpop.xlane.xlu0 %6257
    %v6259 = vadd.f32 %v6258, %v2463
    %v6260 = vsel %vm2582, %v6259, -inf
    %v6261 = vrot.slane %v6260, 4
    %v6262 = vmax.f32 %v6260, %v6261
    %v6263 = vrot.slane %v6262, 2
    %v6264 = vmax.f32 %v6262, %v6263
    %v6265 = vrot.slane %v6264, 1
    %v6266 = vmax.f32 %v6264, %v6265
    %v6267 = vsub.f32 %v6259, %v6266
    %v6268 = vmul.f32 %v6267, 1.442695
    %v6269 = vpow.pop %v6268
    %v6270 = vsel %vm2582, %v6269, 0.0
    %v6271 = vrot.slane %v6270, 4
    %v6272 = vadd.f32 %v6270, %v6271
    %v6273 = vrot.slane %v6272, 2
    %v6274 = vadd.f32 %v6272, %v6273
    %v6275 = vrot.slane %v6274, 1
    %v6276 = vadd.f32 %v6274, %v6275
    %v6277 = vrcp.pop %v6276
    %v6278 = vmul.f32 %v6269, %v6277
    %6280 = vset.pattern.permute.xlu0 0
    %6281 = vperm.xlu0 %6280, %v6278
    %v6282 = vpop.permute.xlu0 %6281
    %v6284 = vmul.f32 %v6282, %v2082
    %v6285 = vsel %vm2608, %v6284, 0.0
    %v6286 = vrot.slane %v6285, 4
    %v6287 = vadd.f32 %v6285, %v6286
    %v6288 = vrot.slane %v6287, 2
    %v6289 = vadd.f32 %v6287, %v6288
    %v6290 = vrot.slane %v6289, 1
    %v6291 = vadd.f32 %v6289, %v6290
    %v6292 = vmul.f32 %v6282, %v2132
    %v6293 = vsel %vm2608, %v6292, 0.0
    %v6294 = vrot.slane %v6293, 4
    %v6295 = vadd.f32 %v6293, %v6294
    %v6296 = vrot.slane %v6295, 2
    %v6297 = vadd.f32 %v6295, %v6296
    %v6298 = vrot.slane %v6297, 1
    %v6299 = vadd.f32 %v6297, %v6298
    %v6300 = vlaneseq
    %v6301 = vshrl.u32 %v6300, 7
    %v6302 = vsub.s32 1, %v6301
    %v6303 = vrot.slane %v6246, %v6302
    %v6304 = vadd.f32 %v2460, %v6303
    %v6305 = vtanh.pop %v6304
    %v6306 = vmul.f32 %v6305, %v2469
    %v6307 = vsel %vm46, %v6306, 0.0
    %6308 = vadd.xlane.f32.xlu0 %v6307
    %v6309 = vpop.xlane.xlu0 %6308
    %v6310 = vadd.f32 %v6309, %v2465
    %v6311 = vsel %vm2582, %v6310, -inf
    %v6312 = vrot.slane %v6311, 4
    %v6313 = vmax.f32 %v6311, %v6312
    %v6314 = vrot.slane %v6313, 2
    %v6315 = vmax.f32 %v6313, %v6314
    %v6316 = vrot.slane %v6315, 1
    %v6317 = vmax.f32 %v6315, %v6316
    %v6318 = vsub.f32 %v6310, %v6317
    %v6319 = vmul.f32 %v6318, 1.442695
    %v6320 = vpow.pop %v6319
    %v6321 = vsel %vm2582, %v6320, 0.0
    %v6322 = vrot.slane %v6321, 4
    %v6323 = vadd.f32 %v6321, %v6322
    %v6324 = vrot.slane %v6323, 2
    %v6325 = vadd.f32 %v6323, %v6324
    %v6326 = vrot.slane %v6325, 1
    %v6327 = vadd.f32 %v6325, %v6326
    %v6328 = vrcp.pop %v6327
    %v6329 = vmul.f32 %v6320, %v6328
    %6331 = vset.pattern.permute.xlu0 0
    %6332 = vperm.xlu0 %6331, %v6329
    %v6333 = vpop.permute.xlu0 %6332
    %v6335 = vmul.f32 %v6333, %v2104
    %v6336 = vsel %vm2608, %v6335, 0.0
    %v6337 = vrot.slane %v6336, 4
    %v6338 = vadd.f32 %v6336, %v6337
    %v6339 = vrot.slane %v6338, 2
    %v6340 = vadd.f32 %v6338, %v6339
    %v6341 = vrot.slane %v6340, 1
    %v6342 = vadd.f32 %v6340, %v6341
    %v6343 = vmul.f32 %v6333, %v2154
    %v6344 = vsel %vm2608, %v6343, 0.0
    %v6345 = vrot.slane %v6344, 4
    %v6346 = vadd.f32 %v6344, %v6345
    %v6347 = vrot.slane %v6346, 2
    %v6348 = vadd.f32 %v6346, %v6347
    %v6349 = vrot.slane %v6348, 1
    %v6350 = vadd.f32 %v6348, %v6349
    %v6351 = vsel %vm2069, %v6291, %v6342
    %v6352 = vsel %vm2069, %v6299, %v6350
    %s6353 = scalar_lea.vmem %s3, 10
    %v6354 = vld [vmem:[%s6353] sm:$0x3]
    %6356 = vrot.lane.b32.xlu0 %v6351, 96
    %v6357 = vpop.permute.xlu0 %6356
    %v6358 = vsel %vm46, %v6357, 0
    %6360 = vmatprep.subr.mxu0 0.0
    %6361 = vmatpush1.msra.mxu0 %v2474
    %6362 = vmatprep.subr.mxu0 0.0
    %6363 = vmatpush1.msra.mxu0 %v2475
    %6364 = vmatprep.subr.mxu0 0.0
    %6365 = vmatpush1.msra.mxu0 %v2476
    %6366 = vmatprep.subr.mxu0 0.0
    %6367 = vmatpush1.msra.mxu0 %v2477
    %6368 = vmatprep.subr.mxu0 0.0
    %6369 = vmatpush1.msra.mxu0 0.0
    %6370 = vmatprep.subr.mxu0 0.0
    %6371 = vmatpush1.msra.mxu0 0.0
    %6372 = vmatprep.subr.mxu0 0.0
    %6373 = vmatpush1.msra.mxu0 0.0
    %6374 = vmatprep.subr.mxu0 0.0
    %6375 = vmatpush1.msra.mxu0 0.0
    %6376 = vmatprep.subr.mxu0 0.0
    %6377 = vmatpush1.msra.mxu0 0.0
    %6378 = vmatprep.subr.mxu0 0.0
    %6379 = vmatpush1.msra.mxu0 0.0
    %6380 = vmatprep.subr.mxu0 0.0
    %6381 = vmatpush1.msra.mxu0 0.0
    %6382 = vmatprep.subr.mxu0 0.0
    %6383 = vmatpush1.msra.mxu0 0.0
    %6384 = vmatprep.subr.mxu0 0.0
    %6385 = vmatpush1.msra.mxu0 0.0
    %6386 = vmatprep.subr.mxu0 0.0
    %6387 = vmatpush1.msra.mxu0 0.0
    %6388 = vmatprep.subr.mxu0 0.0
    %6389 = vmatpush1.msra.mxu0 0.0
    %6390 = vmatprep.subr.mxu0 0.0
    %6391 = vmatpush1.msra.mxu0 0.0
    %6392 = vmatprep.subr.mxu0 0.0
    %6393 = vmatpush1.msra.mxu0 0.0
    %6394 = vmatprep.subr.mxu0 0.0
    %6395 = vmatpush1.msra.mxu0 0.0
    %6396 = vmatprep.subr.mxu0 0.0
    %6397 = vmatpush1.msra.mxu0 0.0
    %6398 = vmatprep.subr.mxu0 0.0
    %6399 = vmatpush1.msra.mxu0 0.0
    %6400 = vmatprep.subr.mxu0 0.0
    %6401 = vmatpush1.msra.mxu0 0.0
    %6402 = vmatprep.subr.mxu0 0.0
    %6403 = vmatpush1.msra.mxu0 0.0
    %6404 = vmatprep.subr.mxu0 0.0
    %6405 = vmatpush1.msra.mxu0 0.0
    %6406 = vmatprep.subr.mxu0 0.0
    %6407 = vmatpush1.msra.mxu0 0.0
    %6408 = vmatprep.subr.mxu0 0.0
    %6409 = vmatpush1.msra.mxu0 0.0
    %6410 = vmatprep.subr.mxu0 0.0
    %6411 = vmatpush1.msra.mxu0 0.0
    %6412 = vmatprep.subr.mxu0 0.0
    %6413 = vmatpush1.msra.mxu0 0.0
    %6414 = vmatprep.subr.mxu0 0.0
    %6415 = vmatpush1.msra.mxu0 0.0
    %6416 = vmatprep.subr.mxu0 0.0
    %6417 = vmatpush1.msra.mxu0 0.0
    %6418 = vmatprep.subr.mxu0 0.0
    %6419 = vmatpush1.msra.mxu0 0.0
    %6420 = vmatprep.subr.mxu0 0.0
    %6421 = vmatpush1.msra.mxu0 0.0
    %6422 = vmatprep.subr.mxu0 0.0
    %6423 = vmatpush1.msra.mxu0 0.0
    %6424 = vmatprep.mubr.f32.mxu0 0.0
    %6425 = vmatmul.mubr.f32.gmra.mrb[0].mxu0 %v6358
    %v6426 = vpop.f32.mrb[0].mxu0
    %v6427 = vadd.f32 0.0, %v6426
    %v6428 = vpop.f32.mrb[0].mxu0
    %6429 = vdwg.mxu0
    %v6430 = vadd.f32 %v6354, %v6427
    %6432 = vrot.lane.b32.xlu0 %v6352, 96
    %v6433 = vpop.permute.xlu0 %6432
    %v6434 = vsel %vm46, %v6433, 0
    %6436 = vmatprep.subr.mxu0 0.0
    %6437 = vmatpush1.msra.mxu0 %v2478
    %6438 = vmatprep.subr.mxu0 0.0
    %6439 = vmatpush1.msra.mxu0 %v2479
    %6440 = vmatprep.subr.mxu0 0.0
    %6441 = vmatpush1.msra.mxu0 %v2480
    %6442 = vmatprep.subr.mxu0 0.0
    %6443 = vmatpush1.msra.mxu0 %v2481
    %6444 = vmatprep.subr.mxu0 0.0
    %6445 = vmatpush1.msra.mxu0 0.0
    %6446 = vmatprep.subr.mxu0 0.0
    %6447 = vmatpush1.msra.mxu0 0.0
    %6448 = vmatprep.subr.mxu0 0.0
    %6449 = vmatpush1.msra.mxu0 0.0
    %6450 = vmatprep.subr.mxu0 0.0
    %6451 = vmatpush1.msra.mxu0 0.0
    %6452 = vmatprep.subr.mxu0 0.0
    %6453 = vmatpush1.msra.mxu0 0.0
    %6454 = vmatprep.subr.mxu0 0.0
    %6455 = vmatpush1.msra.mxu0 0.0
    %6456 = vmatprep.subr.mxu0 0.0
    %6457 = vmatpush1.msra.mxu0 0.0
    %6458 = vmatprep.subr.mxu0 0.0
    %6459 = vmatpush1.msra.mxu0 0.0
    %6460 = vmatprep.subr.mxu0 0.0
    %6461 = vmatpush1.msra.mxu0 0.0
    %6462 = vmatprep.subr.mxu0 0.0
    %6463 = vmatpush1.msra.mxu0 0.0
    %6464 = vmatprep.subr.mxu0 0.0
    %6465 = vmatpush1.msra.mxu0 0.0
    %6466 = vmatprep.subr.mxu0 0.0
    %6467 = vmatpush1.msra.mxu0 0.0
    %6468 = vmatprep.subr.mxu0 0.0
    %6469 = vmatpush1.msra.mxu0 0.0
    %6470 = vmatprep.subr.mxu0 0.0
    %6471 = vmatpush1.msra.mxu0 0.0
    %6472 = vmatprep.subr.mxu0 0.0
    %6473 = vmatpush1.msra.mxu0 0.0
    %6474 = vmatprep.subr.mxu0 0.0
    %6475 = vmatpush1.msra.mxu0 0.0
    %6476 = vmatprep.subr.mxu0 0.0
    %6477 = vmatpush1.msra.mxu0 0.0
    %6478 = vmatprep.subr.mxu0 0.0
    %6479 = vmatpush1.msra.mxu0 0.0
    %6480 = vmatprep.subr.mxu0 0.0
    %6481 = vmatpush1.msra.mxu0 0.0
    %6482 = vmatprep.subr.mxu0 0.0
    %6483 = vmatpush1.msra.mxu0 0.0
    %6484 = vmatprep.subr.mxu0 0.0
    %6485 = vmatpush1.msra.mxu0 0.0
    %6486 = vmatprep.subr.mxu0 0.0
    %6487 = vmatpush1.msra.mxu0 0.0
    %6488 = vmatprep.subr.mxu0 0.0
    %6489 = vmatpush1.msra.mxu0 0.0
    %6490 = vmatprep.subr.mxu0 0.0
    %6491 = vmatpush1.msra.mxu0 0.0
    %6492 = vmatprep.subr.mxu0 0.0
    %6493 = vmatpush1.msra.mxu0 0.0
    %6494 = vmatprep.subr.mxu0 0.0
    %6495 = vmatpush1.msra.mxu0 0.0
    %6496 = vmatprep.subr.mxu0 0.0
    %6497 = vmatpush1.msra.mxu0 0.0
    %6498 = vmatprep.subr.mxu0 0.0
    %6499 = vmatpush1.msra.mxu0 0.0
    %6500 = vmatprep.mubr.f32.mxu0 0.0
    %6501 = vmatmul.mubr.f32.gmra.mrb[0].mxu0 %v6434
    %v6502 = vpop.f32.mrb[0].mxu0
    %v6503 = vadd.f32 0.0, %v6502
    %v6504 = vpop.f32.mrb[0].mxu0
    %6505 = vdwg.mxu0
    %v6506 = vadd.f32 %v6430, %v6503
    %6507 = vmatprep.subr.mxu0 0.0
    %6508 = vmatpush1.msra.mxu0 %v2470
    %6509 = vmatprep.subr.mxu0 0.0
    %6510 = vmatpush1.msra.mxu0 %v2471
    %6511 = vmatprep.subr.mxu0 0.0
    %6512 = vmatpush1.msra.mxu0 %v2472
    %6513 = vmatprep.subr.mxu0 0.0
    %6514 = vmatpush1.msra.mxu0 %v2473
    %6515 = vmatprep.subr.mxu0 0.0
    %6516 = vmatpush1.msra.mxu0 0.0
    %6517 = vmatprep.subr.mxu0 0.0
    %6518 = vmatpush1.msra.mxu0 0.0
    %6519 = vmatprep.subr.mxu0 0.0
    %6520 = vmatpush1.msra.mxu0 0.0
    %6521 = vmatprep.subr.mxu0 0.0
    %6522 = vmatpush1.msra.mxu0 0.0
    %6523 = vmatprep.subr.mxu0 0.0
    %6524 = vmatpush1.msra.mxu0 0.0
    %6525 = vmatprep.subr.mxu0 0.0
    %6526 = vmatpush1.msra.mxu0 0.0
    %6527 = vmatprep.subr.mxu0 0.0
    %6528 = vmatpush1.msra.mxu0 0.0
    %6529 = vmatprep.subr.mxu0 0.0
    %6530 = vmatpush1.msra.mxu0 0.0
    %6531 = vmatprep.subr.mxu0 0.0
    %6532 = vmatpush1.msra.mxu0 0.0
    %6533 = vmatprep.subr.mxu0 0.0
    %6534 = vmatpush1.msra.mxu0 0.0
    %6535 = vmatprep.subr.mxu0 0.0
    %6536 = vmatpush1.msra.mxu0 0.0
    %6537 = vmatprep.subr.mxu0 0.0
    %6538 = vmatpush1.msra.mxu0 0.0
    %6539 = vmatprep.subr.mxu0 0.0
    %6540 = vmatpush1.msra.mxu0 0.0
    %6541 = vmatprep.subr.mxu0 0.0
    %6542 = vmatpush1.msra.mxu0 0.0
    %6543 = vmatprep.subr.mxu0 0.0
    %6544 = vmatpush1.msra.mxu0 0.0
    %6545 = vmatprep.subr.mxu0 0.0
    %6546 = vmatpush1.msra.mxu0 0.0
    %6547 = vmatprep.subr.mxu0 0.0
    %6548 = vmatpush1.msra.mxu0 0.0
    %6549 = vmatprep.subr.mxu0 0.0
    %6550 = vmatpush1.msra.mxu0 0.0
    %6551 = vmatprep.subr.mxu0 0.0
    %6552 = vmatpush1.msra.mxu0 0.0
    %6553 = vmatprep.subr.mxu0 0.0
    %6554 = vmatpush1.msra.mxu0 0.0
    %6555 = vmatprep.subr.mxu0 0.0
    %6556 = vmatpush1.msra.mxu0 0.0
    %6557 = vmatprep.subr.mxu0 0.0
    %6558 = vmatpush1.msra.mxu0 0.0
    %6559 = vmatprep.subr.mxu0 0.0
    %6560 = vmatpush1.msra.mxu0 0.0
    %6561 = vmatprep.subr.mxu0 0.0
    %6562 = vmatpush1.msra.mxu0 0.0
    %6563 = vmatprep.subr.mxu0 0.0
    %6564 = vmatpush1.msra.mxu0 0.0
    %6565 = vmatprep.subr.mxu0 0.0
    %6566 = vmatpush1.msra.mxu0 0.0
    %6567 = vmatprep.subr.mxu0 0.0
    %6568 = vmatpush1.msra.mxu0 0.0
    %6569 = vmatprep.subr.mxu0 0.0
    %6570 = vmatpush1.msra.mxu0 0.0
    %6571 = vmatprep.mubr.f32.mxu0 0.0
    %6572 = vmatmul.mubr.f32.gmra.mrb[0].mxu0 %v5913
    %v6573 = vpop.f32.mrb[0].mxu0
    %v6574 = vadd.f32 0.0, %v6573
    %v6575 = vpop.f32.mrb[0].mxu0
    %6576 = vdwg.mxu0
    %v6577 = vadd.f32 %v6506, %v6574
    %v6578 = vxor.u32 %v6577, 2147483648
    %v6579 = vmul.f32 %v6578, 1.442695
    %v6580 = vpow.pop %v6579
    %v6581 = vadd.f32 %v6580, 1.0
    %v6582 = vrcp.pop %v6581
    %v6583 = vmul.f32 1.0, %v6582
    %v6584 = vadd.f32 %v6574, %v2913
    %6586 = vrot.lane.b32.xlu0 %v6584, 64
    %v6587 = vpop.permute.xlu0 %6586
    %v6589 = vmul.f32 %v6583, %v6587
    %6591 = vrot.lane.b32.xlu0 %v6589, 64
    %v6592 = vpop.permute.xlu0 %6591
    %v6594 = vadd.f32 %v6506, %v6592
    %v6595 = vtanh.pop %v6594
    %v6596 = vsub.f32 1.0, %v6583
    %6598 = vrot.lane.b32.xlu0 %v6595, 96
    %v6599 = vpop.permute.xlu0 %6598
    %v6601 = vmul.f32 %v6596, %v6599
    %v6602 = vmul.f32 %v6583, %v5870
    %v6603 = vadd.f32 %v6601, %v6602
    %v6606 = vunpack.c.l.s4 1966171168
    %v6607 = vunpack.c.0.s8 %v6606
    %v6608 = vlaneseq
    %v6609 = vshrl.u32 %v6608, 7
    %v6610 = vsub.s32 %v6607, %v6609
    %v6611 = vrot.slane %v6603, %v6610
    %v6612 = vcombine.high %v6611, %v6611
    %v6614 = vunpack.c.l.s4 1966171168
    %v6615 = vunpack.c.0.s8 %v6614
    %v6616 = vlaneseq
    %v6617 = vshrl.u32 %v6616, 7
    %v6618 = vsub.s32 %v6615, %v6617
    %v6619 = vrot.slane %v6611, %v6618
    %v6621 = vunpack.c.l.s4 1966171168
    %v6622 = vunpack.c.0.s8 %v6621
    %v6623 = vlaneseq
    %v6624 = vshrl.u32 %v6623, 7
    %v6625 = vsub.s32 %v6622, %v6624
    %v6626 = vrot.slane %v6612, %v6625
    %v6627 = vlaneseq
    %v6628 = vshrl.u32 %v6627, 7
    %v6629 = vsub.s32 0, %v6628
    %v6630 = vrot.slane %v6619, %v6629
    %v6631 = vlaneseq
    %v6632 = vshrl.u32 %v6631, 7
    %v6633 = vsub.s32 0, %v6632
    %v6634 = vrot.slane %v6626, %v6633
    %6635 = vrot.lane.b32.xlu0 %v6630, 96
    %v6636 = vpop.permute.xlu0 %6635
    %6637 = vrot.lane.b32.xlu0 %v6634, 96
    %v6638 = vpop.permute.xlu0 %6637
    %6641 = vst.msk [vmem:[#allocation2 + $0x5] sm:$0x1] %vm2975, %v6636
    %6642 = vst.msk [vmem:[#allocation2 + $0xd] sm:$0x1] %vm2975, %v6638
    %v6643 = vld [vmem:[%s6353] sm:$0x3]
    %6644 = vrot.lane.b32.xlu0 %v6603, 96
    %v6645 = vpop.permute.xlu0 %6644
    %v6646 = vsel %vm46, %v6645, 0
    %6648 = vmatprep.subr.mxu0 0.0
    %6649 = vmatpush1.msra.mxu0 %v2486
    %6650 = vmatprep.subr.mxu0 0.0
    %6651 = vmatpush1.msra.mxu0 %v2487
    %6652 = vmatprep.subr.mxu0 0.0
    %6653 = vmatpush1.msra.mxu0 %v2488
    %6654 = vmatprep.subr.mxu0 0.0
    %6655 = vmatpush1.msra.mxu0 %v2489
    %6656 = vmatprep.subr.mxu0 0.0
    %6657 = vmatpush1.msra.mxu0 0.0
    %6658 = vmatprep.subr.mxu0 0.0
    %6659 = vmatpush1.msra.mxu0 0.0
    %6660 = vmatprep.subr.mxu0 0.0
    %6661 = vmatpush1.msra.mxu0 0.0
    %6662 = vmatprep.subr.mxu0 0.0
    %6663 = vmatpush1.msra.mxu0 0.0
    %6664 = vmatprep.subr.mxu0 0.0
    %6665 = vmatpush1.msra.mxu0 0.0
    %6666 = vmatprep.subr.mxu0 0.0
    %6667 = vmatpush1.msra.mxu0 0.0
    %6668 = vmatprep.subr.mxu0 0.0
    %6669 = vmatpush1.msra.mxu0 0.0
    %6670 = vmatprep.subr.mxu0 0.0
    %6671 = vmatpush1.msra.mxu0 0.0
    %6672 = vmatprep.subr.mxu0 0.0
    %6673 = vmatpush1.msra.mxu0 0.0
    %6674 = vmatprep.subr.mxu0 0.0
    %6675 = vmatpush1.msra.mxu0 0.0
    %6676 = vmatprep.subr.mxu0 0.0
    %6677 = vmatpush1.msra.mxu0 0.0
    %6678 = vmatprep.subr.mxu0 0.0
    %6679 = vmatpush1.msra.mxu0 0.0
    %6680 = vmatprep.subr.mxu0 0.0
    %6681 = vmatpush1.msra.mxu0 0.0
    %6682 = vmatprep.subr.mxu0 0.0
    %6683 = vmatpush1.msra.mxu0 0.0
    %6684 = vmatprep.subr.mxu0 0.0
    %6685 = vmatpush1.msra.mxu0 0.0
    %6686 = vmatprep.subr.mxu0 0.0
    %6687 = vmatpush1.msra.mxu0 0.0
    %6688 = vmatprep.subr.mxu0 0.0
    %6689 = vmatpush1.msra.mxu0 0.0
    %6690 = vmatprep.subr.mxu0 0.0
    %6691 = vmatpush1.msra.mxu0 0.0
    %6692 = vmatprep.subr.mxu0 0.0
    %6693 = vmatpush1.msra.mxu0 0.0
    %6694 = vmatprep.subr.mxu0 0.0
    %6695 = vmatpush1.msra.mxu0 0.0
    %6696 = vmatprep.subr.mxu0 0.0
    %6697 = vmatpush1.msra.mxu0 0.0
    %6698 = vmatprep.subr.mxu0 0.0
    %6699 = vmatpush1.msra.mxu0 0.0
    %6700 = vmatprep.subr.mxu0 0.0
    %6701 = vmatpush1.msra.mxu0 0.0
    %6702 = vmatprep.subr.mxu0 0.0
    %6703 = vmatpush1.msra.mxu0 0.0
    %6704 = vmatprep.subr.mxu0 0.0
    %6705 = vmatpush1.msra.mxu0 0.0
    %6706 = vmatprep.subr.mxu0 0.0
    %6707 = vmatpush1.msra.mxu0 0.0
    %6708 = vmatprep.subr.mxu0 0.0
    %6709 = vmatpush1.msra.mxu0 0.0
    %6710 = vmatprep.subr.mxu0 0.0
    %6711 = vmatpush1.msra.mxu0 0.0
    %6712 = vmatprep.mubr.f32.mxu0 0.0
    %6713 = vmatmul.mubr.f32.gmra.mrb[0].mxu0 %v6646
    %v6714 = vpop.f32.mrb[0].mxu0
    %v6715 = vadd.f32 0.0, %v6714
    %v6716 = vpop.f32.mrb[0].mxu0
    %6717 = vdwg.mxu0
    %6719 = vrot.lane.b32.xlu0 %v6715, 96
    %v6720 = vpop.permute.xlu0 %6719
    %v6722 = vadd.f32 %v6643, %v6720
    %6723 = vmatprep.subr.mxu0 0.0
    %6724 = vmatpush1.msra.mxu0 %v2490
    %6725 = vmatprep.subr.mxu0 0.0
    %6726 = vmatpush1.msra.mxu0 %v2491
    %6727 = vmatprep.subr.mxu0 0.0
    %6728 = vmatpush1.msra.mxu0 %v2492
    %6729 = vmatprep.subr.mxu0 0.0
    %6730 = vmatpush1.msra.mxu0 %v2493
    %6731 = vmatprep.subr.mxu0 0.0
    %6732 = vmatpush1.msra.mxu0 0.0
    %6733 = vmatprep.subr.mxu0 0.0
    %6734 = vmatpush1.msra.mxu0 0.0
    %6735 = vmatprep.subr.mxu0 0.0
    %6736 = vmatpush1.msra.mxu0 0.0
    %6737 = vmatprep.subr.mxu0 0.0
    %6738 = vmatpush1.msra.mxu0 0.0
    %6739 = vmatprep.subr.mxu0 0.0
    %6740 = vmatpush1.msra.mxu0 0.0
    %6741 = vmatprep.subr.mxu0 0.0
    %6742 = vmatpush1.msra.mxu0 0.0
    %6743 = vmatprep.subr.mxu0 0.0
    %6744 = vmatpush1.msra.mxu0 0.0
    %6745 = vmatprep.subr.mxu0 0.0
    %6746 = vmatpush1.msra.mxu0 0.0
    %6747 = vmatprep.subr.mxu0 0.0
    %6748 = vmatpush1.msra.mxu0 0.0
    %6749 = vmatprep.subr.mxu0 0.0
    %6750 = vmatpush1.msra.mxu0 0.0
    %6751 = vmatprep.subr.mxu0 0.0
    %6752 = vmatpush1.msra.mxu0 0.0
    %6753 = vmatprep.subr.mxu0 0.0
    %6754 = vmatpush1.msra.mxu0 0.0
    %6755 = vmatprep.subr.mxu0 0.0
    %6756 = vmatpush1.msra.mxu0 0.0
    %6757 = vmatprep.subr.mxu0 0.0
    %6758 = vmatpush1.msra.mxu0 0.0
    %6759 = vmatprep.subr.mxu0 0.0
    %6760 = vmatpush1.msra.mxu0 0.0
    %6761 = vmatprep.subr.mxu0 0.0
    %6762 = vmatpush1.msra.mxu0 0.0
    %6763 = vmatprep.subr.mxu0 0.0
    %6764 = vmatpush1.msra.mxu0 0.0
    %6765 = vmatprep.subr.mxu0 0.0
    %6766 = vmatpush1.msra.mxu0 0.0
    %6767 = vmatprep.subr.mxu0 0.0
    %6768 = vmatpush1.msra.mxu0 0.0
    %6769 = vmatprep.subr.mxu0 0.0
    %6770 = vmatpush1.msra.mxu0 0.0
    %6771 = vmatprep.subr.mxu0 0.0
    %6772 = vmatpush1.msra.mxu0 0.0
    %6773 = vmatprep.subr.mxu0 0.0
    %6774 = vmatpush1.msra.mxu0 0.0
    %6775 = vmatprep.subr.mxu0 0.0
    %6776 = vmatpush1.msra.mxu0 0.0
    %6777 = vmatprep.subr.mxu0 0.0
    %6778 = vmatpush1.msra.mxu0 0.0
    %6779 = vmatprep.subr.mxu0 0.0
    %6780 = vmatpush1.msra.mxu0 0.0
    %6781 = vmatprep.subr.mxu0 0.0
    %6782 = vmatpush1.msra.mxu0 0.0
    %6783 = vmatprep.subr.mxu0 0.0
    %6784 = vmatpush1.msra.mxu0 0.0
    %6785 = vmatprep.subr.mxu0 0.0
    %6786 = vmatpush1.msra.mxu0 0.0
    %6787 = vmatprep.mubr.f32.mxu0 0.0
    %6788 = vmatmul.mubr.f32.gmra.mrb[0].mxu0 %v6358
    %v6789 = vpop.f32.mrb[0].mxu0
    %v6790 = vadd.f32 0.0, %v6789
    %v6791 = vpop.f32.mrb[0].mxu0
    %6792 = vdwg.mxu0
    %6794 = vrot.lane.b32.xlu0 %v6790, 96
    %v6795 = vpop.permute.xlu0 %6794
    %v6797 = vadd.f32 %v6722, %v6795
    %6798 = vmatprep.subr.mxu0 0.0
    %6799 = vmatpush1.msra.mxu0 %v2494
    %6800 = vmatprep.subr.mxu0 0.0
    %6801 = vmatpush1.msra.mxu0 %v2495
    %6802 = vmatprep.subr.mxu0 0.0
    %6803 = vmatpush1.msra.mxu0 %v2496
    %6804 = vmatprep.subr.mxu0 0.0
    %6805 = vmatpush1.msra.mxu0 %v2497
    %6806 = vmatprep.subr.mxu0 0.0
    %6807 = vmatpush1.msra.mxu0 0.0
    %6808 = vmatprep.subr.mxu0 0.0
    %6809 = vmatpush1.msra.mxu0 0.0
    %6810 = vmatprep.subr.mxu0 0.0
    %6811 = vmatpush1.msra.mxu0 0.0
    %6812 = vmatprep.subr.mxu0 0.0
    %6813 = vmatpush1.msra.mxu0 0.0
    %6814 = vmatprep.subr.mxu0 0.0
    %6815 = vmatpush1.msra.mxu0 0.0
    %6816 = vmatprep.subr.mxu0 0.0
    %6817 = vmatpush1.msra.mxu0 0.0
    %6818 = vmatprep.subr.mxu0 0.0
    %6819 = vmatpush1.msra.mxu0 0.0
    %6820 = vmatprep.subr.mxu0 0.0
    %6821 = vmatpush1.msra.mxu0 0.0
    %6822 = vmatprep.subr.mxu0 0.0
    %6823 = vmatpush1.msra.mxu0 0.0
    %6824 = vmatprep.subr.mxu0 0.0
    %6825 = vmatpush1.msra.mxu0 0.0
    %6826 = vmatprep.subr.mxu0 0.0
    %6827 = vmatpush1.msra.mxu0 0.0
    %6828 = vmatprep.subr.mxu0 0.0
    %6829 = vmatpush1.msra.mxu0 0.0
    %6830 = vmatprep.subr.mxu0 0.0
    %6831 = vmatpush1.msra.mxu0 0.0
    %6832 = vmatprep.subr.mxu0 0.0
    %6833 = vmatpush1.msra.mxu0 0.0
    %6834 = vmatprep.subr.mxu0 0.0
    %6835 = vmatpush1.msra.mxu0 0.0
    %6836 = vmatprep.subr.mxu0 0.0
    %6837 = vmatpush1.msra.mxu0 0.0
    %6838 = vmatprep.subr.mxu0 0.0
    %6839 = vmatpush1.msra.mxu0 0.0
    %6840 = vmatprep.subr.mxu0 0.0
    %6841 = vmatpush1.msra.mxu0 0.0
    %6842 = vmatprep.subr.mxu0 0.0
    %6843 = vmatpush1.msra.mxu0 0.0
    %6844 = vmatprep.subr.mxu0 0.0
    %6845 = vmatpush1.msra.mxu0 0.0
    %6846 = vmatprep.subr.mxu0 0.0
    %6847 = vmatpush1.msra.mxu0 0.0
    %6848 = vmatprep.subr.mxu0 0.0
    %6849 = vmatpush1.msra.mxu0 0.0
    %6850 = vmatprep.subr.mxu0 0.0
    %6851 = vmatpush1.msra.mxu0 0.0
    %6852 = vmatprep.subr.mxu0 0.0
    %6853 = vmatpush1.msra.mxu0 0.0
    %6854 = vmatprep.subr.mxu0 0.0
    %6855 = vmatpush1.msra.mxu0 0.0
    %6856 = vmatprep.subr.mxu0 0.0
    %6857 = vmatpush1.msra.mxu0 0.0
    %6858 = vmatprep.subr.mxu0 0.0
    %6859 = vmatpush1.msra.mxu0 0.0
    %6860 = vmatprep.subr.mxu0 0.0
    %6861 = vmatpush1.msra.mxu0 0.0
    %6862 = vmatprep.mubr.f32.mxu0 0.0
    %6863 = vmatmul.mubr.f32.gmra.mrb[0].mxu0 %v6434
    %v6864 = vpop.f32.mrb[0].mxu0
    %v6865 = vadd.f32 0.0, %v6864
    %v6866 = vpop.f32.mrb[0].mxu0
    %6867 = vdwg.mxu0
    %6869 = vrot.lane.b32.xlu0 %v6865, 96
    %v6870 = vpop.permute.xlu0 %6869
    %v6872 = vadd.f32 %v6797, %v6870
    %v6875 = vunpack.c.l.s4 1966171168
    %v6876 = vunpack.c.0.s8 %v6875
    %v6877 = vlaneseq
    %v6878 = vshrl.u32 %v6877, 7
    %v6879 = vsub.s32 %v6876, %v6878
    %v6880 = vrot.slane %v6872, %v6879
    %v6881 = vcombine.high %v6880, %v6880
    %v6883 = vunpack.c.l.s4 1966171168
    %v6884 = vunpack.c.0.s8 %v6883
    %v6885 = vlaneseq
    %v6886 = vshrl.u32 %v6885, 7
    %v6887 = vsub.s32 %v6884, %v6886
    %v6888 = vrot.slane %v6880, %v6887
    %v6890 = vunpack.c.l.s4 1966171168
    %v6891 = vunpack.c.0.s8 %v6890
    %v6892 = vlaneseq
    %v6893 = vshrl.u32 %v6892, 7
    %v6894 = vsub.s32 %v6891, %v6893
    %v6895 = vrot.slane %v6881, %v6894
    %v6896 = vlaneseq
    %v6897 = vshrl.u32 %v6896, 7
    %v6898 = vsub.s32 0, %v6897
    %v6899 = vrot.slane %v6888, %v6898
    %v6900 = vlaneseq
    %v6901 = vshrl.u32 %v6900, 7
    %v6902 = vsub.s32 0, %v6901
    %v6903 = vrot.slane %v6895, %v6902
    %6904 = vrot.lane.b32.xlu0 %v6899, 32
    %v6905 = vpop.permute.xlu0 %6904
    %6906 = vrot.lane.b32.xlu0 %v6903, 32
    %v6907 = vpop.permute.xlu0 %6906
    %6910 = vst.msk [vmem:[#allocation4 + $0x5] sm:$0x1] %vm2975, %v6905
    %6911 = vst.msk [vmem:[#allocation4 + $0xd] sm:$0x1] %vm2975, %v6907
    %6912 = vmatprep.subr.mxu0 0.0
    %6913 = vmatpush1.msra.mxu0 %v2482
    %6914 = vmatprep.subr.mxu0 0.0
    %6915 = vmatpush1.msra.mxu0 %v2483
    %6916 = vmatprep.subr.mxu0 0.0
    %6917 = vmatpush1.msra.mxu0 %v2484
    %6918 = vmatprep.subr.mxu0 0.0
    %6919 = vmatpush1.msra.mxu0 %v2485
    %6920 = vmatprep.subr.mxu0 0.0
    %6921 = vmatpush1.msra.mxu0 0.0
    %6922 = vmatprep.subr.mxu0 0.0
    %6923 = vmatpush1.msra.mxu0 0.0
    %6924 = vmatprep.subr.mxu0 0.0
    %6925 = vmatpush1.msra.mxu0 0.0
    %6926 = vmatprep.subr.mxu0 0.0
    %6927 = vmatpush1.msra.mxu0 0.0
    %6928 = vmatprep.subr.mxu0 0.0
    %6929 = vmatpush1.msra.mxu0 0.0
    %6930 = vmatprep.subr.mxu0 0.0
    %6931 = vmatpush1.msra.mxu0 0.0
    %6932 = vmatprep.subr.mxu0 0.0
    %6933 = vmatpush1.msra.mxu0 0.0
    %6934 = vmatprep.subr.mxu0 0.0
    %6935 = vmatpush1.msra.mxu0 0.0
    %6936 = vmatprep.subr.mxu0 0.0
    %6937 = vmatpush1.msra.mxu0 0.0
    %6938 = vmatprep.subr.mxu0 0.0
    %6939 = vmatpush1.msra.mxu0 0.0
    %6940 = vmatprep.subr.mxu0 0.0
    %6941 = vmatpush1.msra.mxu0 0.0
    %6942 = vmatprep.subr.mxu0 0.0
    %6943 = vmatpush1.msra.mxu0 0.0
    %6944 = vmatprep.subr.mxu0 0.0
    %6945 = vmatpush1.msra.mxu0 0.0
    %6946 = vmatprep.subr.mxu0 0.0
    %6947 = vmatpush1.msra.mxu0 0.0
    %6948 = vmatprep.subr.mxu0 0.0
    %6949 = vmatpush1.msra.mxu0 0.0
    %6950 = vmatprep.subr.mxu0 0.0
    %6951 = vmatpush1.msra.mxu0 0.0
    %6952 = vmatprep.subr.mxu0 0.0
    %6953 = vmatpush1.msra.mxu0 0.0
    %6954 = vmatprep.subr.mxu0 0.0
    %6955 = vmatpush1.msra.mxu0 0.0
    %6956 = vmatprep.subr.mxu0 0.0
    %6957 = vmatpush1.msra.mxu0 0.0
    %6958 = vmatprep.subr.mxu0 0.0
    %6959 = vmatpush1.msra.mxu0 0.0
    %6960 = vmatprep.subr.mxu0 0.0
    %6961 = vmatpush1.msra.mxu0 0.0
    %6962 = vmatprep.subr.mxu0 0.0
    %6963 = vmatpush1.msra.mxu0 0.0
    %6964 = vmatprep.subr.mxu0 0.0
    %6965 = vmatpush1.msra.mxu0 0.0
    %6966 = vmatprep.subr.mxu0 0.0
    %6967 = vmatpush1.msra.mxu0 0.0
    %6968 = vmatprep.subr.mxu0 0.0
    %6969 = vmatpush1.msra.mxu0 0.0
    %6970 = vmatprep.subr.mxu0 0.0
    %6971 = vmatpush1.msra.mxu0 0.0
    %6972 = vmatprep.subr.mxu0 0.0
    %6973 = vmatpush1.msra.mxu0 0.0
    %6974 = vmatprep.subr.mxu0 0.0
    %6975 = vmatpush1.msra.mxu0 0.0
    %6976 = vmatprep.mubr.f32.mxu0 0.0
    %6977 = vmatmul.mubr.f32.gmra.mrb[0].mxu0 %v6646
    %v6978 = vpop.f32.mrb[0].mxu0
    %v6979 = vadd.f32 0.0, %v6978
    %v6980 = vpop.f32.mrb[0].mxu0
    %6981 = vdwg.mxu0
    %v6982 = vlaneseq
    %v6983 = vshrl.u32 %v6982, 7
    %v6984 = vsub.s32 0, %v6983
    %v6985 = vrot.slane %v6979, %v6984
    %v6986 = vadd.f32 %v2310, %v6985
    %v6987 = vtanh.pop %v6986
    %v6988 = vmul.f32 %v6987, %v2469
    %v6989 = vsel %vm46, %v6988, 0.0
    %6990 = vadd.xlane.f32.xlu0 %v6989
    %v6991 = vpop.xlane.xlu0 %6990
    %v6992 = vadd.f32 %v6991, %v2463
    %v6993 = vsel %vm2582, %v6992, -inf
    %v6994 = vrot.slane %v6993, 4
    %v6995 = vmax.f32 %v6993, %v6994
    %v6996 = vrot.slane %v6995, 2
    %v6997 = vmax.f32 %v6995, %v6996
    %v6998 = vrot.slane %v6997, 1
    %v6999 = vmax.f32 %v6997, %v6998
    %v7000 = vsub.f32 %v6992, %v6999
    %v7001 = vmul.f32 %v7000, 1.442695
    %v7002 = vpow.pop %v7001
    %v7003 = vsel %vm2582, %v7002, 0.0
    %v7004 = vrot.slane %v7003, 4
    %v7005 = vadd.f32 %v7003, %v7004
    %v7006 = vrot.slane %v7005, 2
    %v7007 = vadd.f32 %v7005, %v7006
    %v7008 = vrot.slane %v7007, 1
    %v7009 = vadd.f32 %v7007, %v7008
    %v7010 = vrcp.pop %v7009
    %v7011 = vmul.f32 %v7002, %v7010
    %7013 = vset.pattern.permute.xlu0 0
    %7014 = vperm.xlu0 %7013, %v7011
    %v7015 = vpop.permute.xlu0 %7014
    %v7017 = vmul.f32 %v7015, %v2082
    %v7018 = vsel %vm2608, %v7017, 0.0
    %v7019 = vrot.slane %v7018, 4
    %v7020 = vadd.f32 %v7018, %v7019
    %v7021 = vrot.slane %v7020, 2
    %v7022 = vadd.f32 %v7020, %v7021
    %v7023 = vrot.slane %v7022, 1
    %v7024 = vadd.f32 %v7022, %v7023
    %v7025 = vmul.f32 %v7015, %v2132
    %v7026 = vsel %vm2608, %v7025, 0.0
    %v7027 = vrot.slane %v7026, 4
    %v7028 = vadd.f32 %v7026, %v7027
    %v7029 = vrot.slane %v7028, 2
    %v7030 = vadd.f32 %v7028, %v7029
    %v7031 = vrot.slane %v7030, 1
    %v7032 = vadd.f32 %v7030, %v7031
    %v7033 = vlaneseq
    %v7034 = vshrl.u32 %v7033, 7
    %v7035 = vsub.s32 1, %v7034
    %v7036 = vrot.slane %v6979, %v7035
    %v7037 = vadd.f32 %v2460, %v7036
    %v7038 = vtanh.pop %v7037
    %v7039 = vmul.f32 %v7038, %v2469
    %v7040 = vsel %vm46, %v7039, 0.0
    %7041 = vadd.xlane.f32.xlu0 %v7040
    %v7042 = vpop.xlane.xlu0 %7041
    %v7043 = vadd.f32 %v7042, %v2465
    %v7044 = vsel %vm2582, %v7043, -inf
    %v7045 = vrot.slane %v7044, 4
    %v7046 = vmax.f32 %v7044, %v7045
    %v7047 = vrot.slane %v7046, 2
    %v7048 = vmax.f32 %v7046, %v7047
    %v7049 = vrot.slane %v7048, 1
    %v7050 = vmax.f32 %v7048, %v7049
    %v7051 = vsub.f32 %v7043, %v7050
    %v7052 = vmul.f32 %v7051, 1.442695
    %v7053 = vpow.pop %v7052
    %v7054 = vsel %vm2582, %v7053, 0.0
    %v7055 = vrot.slane %v7054, 4
    %v7056 = vadd.f32 %v7054, %v7055
    %v7057 = vrot.slane %v7056, 2
    %v7058 = vadd.f32 %v7056, %v7057
    %v7059 = vrot.slane %v7058, 1
    %v7060 = vadd.f32 %v7058, %v7059
    %v7061 = vrcp.pop %v7060
    %v7062 = vmul.f32 %v7053, %v7061
    %7064 = vset.pattern.permute.xlu0 0
    %7065 = vperm.xlu0 %7064, %v7062
    %v7066 = vpop.permute.xlu0 %7065
    %v7068 = vmul.f32 %v7066, %v2104
    %v7069 = vsel %vm2608, %v7068, 0.0
    %v7070 = vrot.slane %v7069, 4
    %v7071 = vadd.f32 %v7069, %v7070
    %v7072 = vrot.slane %v7071, 2
    %v7073 = vadd.f32 %v7071, %v7072
    %v7074 = vrot.slane %v7073, 1
    %v7075 = vadd.f32 %v7073, %v7074
    %v7076 = vmul.f32 %v7066, %v2154
    %v7077 = vsel %vm2608, %v7076, 0.0
    %v7078 = vrot.slane %v7077, 4
    %v7079 = vadd.f32 %v7077, %v7078
    %v7080 = vrot.slane %v7079, 2
    %v7081 = vadd.f32 %v7079, %v7080
    %v7082 = vrot.slane %v7081, 1
    %v7083 = vadd.f32 %v7081, %v7082
    %v7084 = vsel %vm2069, %v7024, %v7075
    %v7085 = vsel %vm2069, %v7032, %v7083
    %s7086 = scalar_lea.vmem %s3, 12
    %v7087 = vld [vmem:[%s7086] sm:$0x3]
    %7089 = vrot.lane.b32.xlu0 %v7084, 96
    %v7090 = vpop.permute.xlu0 %7089
    %v7091 = vsel %vm46, %v7090, 0
    %7093 = vmatprep.subr.mxu0 0.0
    %7094 = vmatpush1.msra.mxu0 %v2474
    %7095 = vmatprep.subr.mxu0 0.0
    %7096 = vmatpush1.msra.mxu0 %v2475
    %7097 = vmatprep.subr.mxu0 0.0
    %7098 = vmatpush1.msra.mxu0 %v2476
    %7099 = vmatprep.subr.mxu0 0.0
    %7100 = vmatpush1.msra.mxu0 %v2477
    %7101 = vmatprep.subr.mxu0 0.0
    %7102 = vmatpush1.msra.mxu0 0.0
    %7103 = vmatprep.subr.mxu0 0.0
    %7104 = vmatpush1.msra.mxu0 0.0
    %7105 = vmatprep.subr.mxu0 0.0
    %7106 = vmatpush1.msra.mxu0 0.0
    %7107 = vmatprep.subr.mxu0 0.0
    %7108 = vmatpush1.msra.mxu0 0.0
    %7109 = vmatprep.subr.mxu0 0.0
    %7110 = vmatpush1.msra.mxu0 0.0
    %7111 = vmatprep.subr.mxu0 0.0
    %7112 = vmatpush1.msra.mxu0 0.0
    %7113 = vmatprep.subr.mxu0 0.0
    %7114 = vmatpush1.msra.mxu0 0.0
    %7115 = vmatprep.subr.mxu0 0.0
    %7116 = vmatpush1.msra.mxu0 0.0
    %7117 = vmatprep.subr.mxu0 0.0
    %7118 = vmatpush1.msra.mxu0 0.0
    %7119 = vmatprep.subr.mxu0 0.0
    %7120 = vmatpush1.msra.mxu0 0.0
    %7121 = vmatprep.subr.mxu0 0.0
    %7122 = vmatpush1.msra.mxu0 0.0
    %7123 = vmatprep.subr.mxu0 0.0
    %7124 = vmatpush1.msra.mxu0 0.0
    %7125 = vmatprep.subr.mxu0 0.0
    %7126 = vmatpush1.msra.mxu0 0.0
    %7127 = vmatprep.subr.mxu0 0.0
    %7128 = vmatpush1.msra.mxu0 0.0
    %7129 = vmatprep.subr.mxu0 0.0
    %7130 = vmatpush1.msra.mxu0 0.0
    %7131 = vmatprep.subr.mxu0 0.0
    %7132 = vmatpush1.msra.mxu0 0.0
    %7133 = vmatprep.subr.mxu0 0.0
    %7134 = vmatpush1.msra.mxu0 0.0
    %7135 = vmatprep.subr.mxu0 0.0
    %7136 = vmatpush1.msra.mxu0 0.0
    %7137 = vmatprep.subr.mxu0 0.0
    %7138 = vmatpush1.msra.mxu0 0.0
    %7139 = vmatprep.subr.mxu0 0.0
    %7140 = vmatpush1.msra.mxu0 0.0
    %7141 = vmatprep.subr.mxu0 0.0
    %7142 = vmatpush1.msra.mxu0 0.0
    %7143 = vmatprep.subr.mxu0 0.0
    %7144 = vmatpush1.msra.mxu0 0.0
    %7145 = vmatprep.subr.mxu0 0.0
    %7146 = vmatpush1.msra.mxu0 0.0
    %7147 = vmatprep.subr.mxu0 0.0
    %7148 = vmatpush1.msra.mxu0 0.0
    %7149 = vmatprep.subr.mxu0 0.0
    %7150 = vmatpush1.msra.mxu0 0.0
    %7151 = vmatprep.subr.mxu0 0.0
    %7152 = vmatpush1.msra.mxu0 0.0
    %7153 = vmatprep.subr.mxu0 0.0
    %7154 = vmatpush1.msra.mxu0 0.0
    %7155 = vmatprep.subr.mxu0 0.0
    %7156 = vmatpush1.msra.mxu0 0.0
    %7157 = vmatprep.mubr.f32.mxu0 0.0
    %7158 = vmatmul.mubr.f32.gmra.mrb[0].mxu0 %v7091
    %v7159 = vpop.f32.mrb[0].mxu0
    %v7160 = vadd.f32 0.0, %v7159
    %v7161 = vpop.f32.mrb[0].mxu0
    %7162 = vdwg.mxu0
    %v7163 = vadd.f32 %v7087, %v7160
    %7165 = vrot.lane.b32.xlu0 %v7085, 96
    %v7166 = vpop.permute.xlu0 %7165
    %v7167 = vsel %vm46, %v7166, 0
    %7169 = vmatprep.subr.mxu0 0.0
    %7170 = vmatpush1.msra.mxu0 %v2478
    %7171 = vmatprep.subr.mxu0 0.0
    %7172 = vmatpush1.msra.mxu0 %v2479
    %7173 = vmatprep.subr.mxu0 0.0
    %7174 = vmatpush1.msra.mxu0 %v2480
    %7175 = vmatprep.subr.mxu0 0.0
    %7176 = vmatpush1.msra.mxu0 %v2481
    %7177 = vmatprep.subr.mxu0 0.0
    %7178 = vmatpush1.msra.mxu0 0.0
    %7179 = vmatprep.subr.mxu0 0.0
    %7180 = vmatpush1.msra.mxu0 0.0
    %7181 = vmatprep.subr.mxu0 0.0
    %7182 = vmatpush1.msra.mxu0 0.0
    %7183 = vmatprep.subr.mxu0 0.0
    %7184 = vmatpush1.msra.mxu0 0.0
    %7185 = vmatprep.subr.mxu0 0.0
    %7186 = vmatpush1.msra.mxu0 0.0
    %7187 = vmatprep.subr.mxu0 0.0
    %7188 = vmatpush1.msra.mxu0 0.0
    %7189 = vmatprep.subr.mxu0 0.0
    %7190 = vmatpush1.msra.mxu0 0.0
    %7191 = vmatprep.subr.mxu0 0.0
    %7192 = vmatpush1.msra.mxu0 0.0
    %7193 = vmatprep.subr.mxu0 0.0
    %7194 = vmatpush1.msra.mxu0 0.0
    %7195 = vmatprep.subr.mxu0 0.0
    %7196 = vmatpush1.msra.mxu0 0.0
    %7197 = vmatprep.subr.mxu0 0.0
    %7198 = vmatpush1.msra.mxu0 0.0
    %7199 = vmatprep.subr.mxu0 0.0
    %7200 = vmatpush1.msra.mxu0 0.0
    %7201 = vmatprep.subr.mxu0 0.0
    %7202 = vmatpush1.msra.mxu0 0.0
    %7203 = vmatprep.subr.mxu0 0.0
    %7204 = vmatpush1.msra.mxu0 0.0
    %7205 = vmatprep.subr.mxu0 0.0
    %7206 = vmatpush1.msra.mxu0 0.0
    %7207 = vmatprep.subr.mxu0 0.0
    %7208 = vmatpush1.msra.mxu0 0.0
    %7209 = vmatprep.subr.mxu0 0.0
    %7210 = vmatpush1.msra.mxu0 0.0
    %7211 = vmatprep.subr.mxu0 0.0
    %7212 = vmatpush1.msra.mxu0 0.0
    %7213 = vmatprep.subr.mxu0 0.0
    %7214 = vmatpush1.msra.mxu0 0.0
    %7215 = vmatprep.subr.mxu0 0.0
    %7216 = vmatpush1.msra.mxu0 0.0
    %7217 = vmatprep.subr.mxu0 0.0
    %7218 = vmatpush1.msra.mxu0 0.0
    %7219 = vmatprep.subr.mxu0 0.0
    %7220 = vmatpush1.msra.mxu0 0.0
    %7221 = vmatprep.subr.mxu0 0.0
    %7222 = vmatpush1.msra.mxu0 0.0
    %7223 = vmatprep.subr.mxu0 0.0
    %7224 = vmatpush1.msra.mxu0 0.0
    %7225 = vmatprep.subr.mxu0 0.0
    %7226 = vmatpush1.msra.mxu0 0.0
    %7227 = vmatprep.subr.mxu0 0.0
    %7228 = vmatpush1.msra.mxu0 0.0
    %7229 = vmatprep.subr.mxu0 0.0
    %7230 = vmatpush1.msra.mxu0 0.0
    %7231 = vmatprep.subr.mxu0 0.0
    %7232 = vmatpush1.msra.mxu0 0.0
    %7233 = vmatprep.mubr.f32.mxu0 0.0
    %7234 = vmatmul.mubr.f32.gmra.mrb[0].mxu0 %v7167
    %v7235 = vpop.f32.mrb[0].mxu0
    %v7236 = vadd.f32 0.0, %v7235
    %v7237 = vpop.f32.mrb[0].mxu0
    %7238 = vdwg.mxu0
    %v7239 = vadd.f32 %v7163, %v7236
    %7240 = vmatprep.subr.mxu0 0.0
    %7241 = vmatpush1.msra.mxu0 %v2470
    %7242 = vmatprep.subr.mxu0 0.0
    %7243 = vmatpush1.msra.mxu0 %v2471
    %7244 = vmatprep.subr.mxu0 0.0
    %7245 = vmatpush1.msra.mxu0 %v2472
    %7246 = vmatprep.subr.mxu0 0.0
    %7247 = vmatpush1.msra.mxu0 %v2473
    %7248 = vmatprep.subr.mxu0 0.0
    %7249 = vmatpush1.msra.mxu0 0.0
    %7250 = vmatprep.subr.mxu0 0.0
    %7251 = vmatpush1.msra.mxu0 0.0
    %7252 = vmatprep.subr.mxu0 0.0
    %7253 = vmatpush1.msra.mxu0 0.0
    %7254 = vmatprep.subr.mxu0 0.0
    %7255 = vmatpush1.msra.mxu0 0.0
    %7256 = vmatprep.subr.mxu0 0.0
    %7257 = vmatpush1.msra.mxu0 0.0
    %7258 = vmatprep.subr.mxu0 0.0
    %7259 = vmatpush1.msra.mxu0 0.0
    %7260 = vmatprep.subr.mxu0 0.0
    %7261 = vmatpush1.msra.mxu0 0.0
    %7262 = vmatprep.subr.mxu0 0.0
    %7263 = vmatpush1.msra.mxu0 0.0
    %7264 = vmatprep.subr.mxu0 0.0
    %7265 = vmatpush1.msra.mxu0 0.0
    %7266 = vmatprep.subr.mxu0 0.0
    %7267 = vmatpush1.msra.mxu0 0.0
    %7268 = vmatprep.subr.mxu0 0.0
    %7269 = vmatpush1.msra.mxu0 0.0
    %7270 = vmatprep.subr.mxu0 0.0
    %7271 = vmatpush1.msra.mxu0 0.0
    %7272 = vmatprep.subr.mxu0 0.0
    %7273 = vmatpush1.msra.mxu0 0.0
    %7274 = vmatprep.subr.mxu0 0.0
    %7275 = vmatpush1.msra.mxu0 0.0
    %7276 = vmatprep.subr.mxu0 0.0
    %7277 = vmatpush1.msra.mxu0 0.0
    %7278 = vmatprep.subr.mxu0 0.0
    %7279 = vmatpush1.msra.mxu0 0.0
    %7280 = vmatprep.subr.mxu0 0.0
    %7281 = vmatpush1.msra.mxu0 0.0
    %7282 = vmatprep.subr.mxu0 0.0
    %7283 = vmatpush1.msra.mxu0 0.0
    %7284 = vmatprep.subr.mxu0 0.0
    %7285 = vmatpush1.msra.mxu0 0.0
    %7286 = vmatprep.subr.mxu0 0.0
    %7287 = vmatpush1.msra.mxu0 0.0
    %7288 = vmatprep.subr.mxu0 0.0
    %7289 = vmatpush1.msra.mxu0 0.0
    %7290 = vmatprep.subr.mxu0 0.0
    %7291 = vmatpush1.msra.mxu0 0.0
    %7292 = vmatprep.subr.mxu0 0.0
    %7293 = vmatpush1.msra.mxu0 0.0
    %7294 = vmatprep.subr.mxu0 0.0
    %7295 = vmatpush1.msra.mxu0 0.0
    %7296 = vmatprep.subr.mxu0 0.0
    %7297 = vmatpush1.msra.mxu0 0.0
    %7298 = vmatprep.subr.mxu0 0.0
    %7299 = vmatpush1.msra.mxu0 0.0
    %7300 = vmatprep.subr.mxu0 0.0
    %7301 = vmatpush1.msra.mxu0 0.0
    %7302 = vmatprep.subr.mxu0 0.0
    %7303 = vmatpush1.msra.mxu0 0.0
    %7304 = vmatprep.mubr.f32.mxu0 0.0
    %7305 = vmatmul.mubr.f32.gmra.mrb[0].mxu0 %v6646
    %v7306 = vpop.f32.mrb[0].mxu0
    %v7307 = vadd.f32 0.0, %v7306
    %v7308 = vpop.f32.mrb[0].mxu0
    %7309 = vdwg.mxu0
    %v7310 = vadd.f32 %v7239, %v7307
    %v7311 = vxor.u32 %v7310, 2147483648
    %v7312 = vmul.f32 %v7311, 1.442695
    %v7313 = vpow.pop %v7312
    %v7314 = vadd.f32 %v7313, 1.0
    %v7315 = vrcp.pop %v7314
    %v7316 = vmul.f32 1.0, %v7315
    %v7317 = vadd.f32 %v7307, %v2913
    %7319 = vrot.lane.b32.xlu0 %v7317, 64
    %v7320 = vpop.permute.xlu0 %7319
    %v7322 = vmul.f32 %v7316, %v7320
    %7324 = vrot.lane.b32.xlu0 %v7322, 64
    %v7325 = vpop.permute.xlu0 %7324
    %v7327 = vadd.f32 %v7239, %v7325
    %v7328 = vtanh.pop %v7327
    %v7329 = vsub.f32 1.0, %v7316
    %7331 = vrot.lane.b32.xlu0 %v7328, 96
    %v7332 = vpop.permute.xlu0 %7331
    %v7334 = vmul.f32 %v7329, %v7332
    %v7335 = vmul.f32 %v7316, %v6603
    %v7336 = vadd.f32 %v7334, %v7335
    %v7339 = vunpack.c.l.s4 1966171168
    %v7340 = vunpack.c.0.s8 %v7339
    %v7341 = vlaneseq
    %v7342 = vshrl.u32 %v7341, 7
    %v7343 = vsub.s32 %v7340, %v7342
    %v7344 = vrot.slane %v7336, %v7343
    %v7345 = vcombine.high %v7344, %v7344
    %v7347 = vunpack.c.l.s4 1966171168
    %v7348 = vunpack.c.0.s8 %v7347
    %v7349 = vlaneseq
    %v7350 = vshrl.u32 %v7349, 7
    %v7351 = vsub.s32 %v7348, %v7350
    %v7352 = vrot.slane %v7344, %v7351
    %v7354 = vunpack.c.l.s4 1966171168
    %v7355 = vunpack.c.0.s8 %v7354
    %v7356 = vlaneseq
    %v7357 = vshrl.u32 %v7356, 7
    %v7358 = vsub.s32 %v7355, %v7357
    %v7359 = vrot.slane %v7345, %v7358
    %v7360 = vlaneseq
    %v7361 = vshrl.u32 %v7360, 7
    %v7362 = vsub.s32 0, %v7361
    %v7363 = vrot.slane %v7352, %v7362
    %v7364 = vlaneseq
    %v7365 = vshrl.u32 %v7364, 7
    %v7366 = vsub.s32 0, %v7365
    %v7367 = vrot.slane %v7359, %v7366
    %7368 = vrot.lane.b32.xlu0 %v7363, 96
    %v7369 = vpop.permute.xlu0 %7368
    %7370 = vrot.lane.b32.xlu0 %v7367, 96
    %v7371 = vpop.permute.xlu0 %7370
    %7374 = vst.msk [vmem:[#allocation2 + $0x6] sm:$0x1] %vm2975, %v7369
    %7375 = vst.msk [vmem:[#allocation2 + $0xe] sm:$0x1] %vm2975, %v7371
    %v7376 = vld [vmem:[%s7086] sm:$0x3]
    %7377 = vrot.lane.b32.xlu0 %v7336, 96
    %v7378 = vpop.permute.xlu0 %7377
    %v7379 = vsel %vm46, %v7378, 0
    %7381 = vmatprep.subr.mxu0 0.0
    %7382 = vmatpush1.msra.mxu0 %v2486
    %7383 = vmatprep.subr.mxu0 0.0
    %7384 = vmatpush1.msra.mxu0 %v2487
    %7385 = vmatprep.subr.mxu0 0.0
    %7386 = vmatpush1.msra.mxu0 %v2488
    %7387 = vmatprep.subr.mxu0 0.0
    %7388 = vmatpush1.msra.mxu0 %v2489
    %7389 = vmatprep.subr.mxu0 0.0
    %7390 = vmatpush1.msra.mxu0 0.0
    %7391 = vmatprep.subr.mxu0 0.0
    %7392 = vmatpush1.msra.mxu0 0.0
    %7393 = vmatprep.subr.mxu0 0.0
    %7394 = vmatpush1.msra.mxu0 0.0
    %7395 = vmatprep.subr.mxu0 0.0
    %7396 = vmatpush1.msra.mxu0 0.0
    %7397 = vmatprep.subr.mxu0 0.0
    %7398 = vmatpush1.msra.mxu0 0.0
    %7399 = vmatprep.subr.mxu0 0.0
    %7400 = vmatpush1.msra.mxu0 0.0
    %7401 = vmatprep.subr.mxu0 0.0
    %7402 = vmatpush1.msra.mxu0 0.0
    %7403 = vmatprep.subr.mxu0 0.0
    %7404 = vmatpush1.msra.mxu0 0.0
    %7405 = vmatprep.subr.mxu0 0.0
    %7406 = vmatpush1.msra.mxu0 0.0
    %7407 = vmatprep.subr.mxu0 0.0
    %7408 = vmatpush1.msra.mxu0 0.0
    %7409 = vmatprep.subr.mxu0 0.0
    %7410 = vmatpush1.msra.mxu0 0.0
    %7411 = vmatprep.subr.mxu0 0.0
    %7412 = vmatpush1.msra.mxu0 0.0
    %7413 = vmatprep.subr.mxu0 0.0
    %7414 = vmatpush1.msra.mxu0 0.0
    %7415 = vmatprep.subr.mxu0 0.0
    %7416 = vmatpush1.msra.mxu0 0.0
    %7417 = vmatprep.subr.mxu0 0.0
    %7418 = vmatpush1.msra.mxu0 0.0
    %7419 = vmatprep.subr.mxu0 0.0
    %7420 = vmatpush1.msra.mxu0 0.0
    %7421 = vmatprep.subr.mxu0 0.0
    %7422 = vmatpush1.msra.mxu0 0.0
    %7423 = vmatprep.subr.mxu0 0.0
    %7424 = vmatpush1.msra.mxu0 0.0
    %7425 = vmatprep.subr.mxu0 0.0
    %7426 = vmatpush1.msra.mxu0 0.0
    %7427 = vmatprep.subr.mxu0 0.0
    %7428 = vmatpush1.msra.mxu0 0.0
    %7429 = vmatprep.subr.mxu0 0.0
    %7430 = vmatpush1.msra.mxu0 0.0
    %7431 = vmatprep.subr.mxu0 0.0
    %7432 = vmatpush1.msra.mxu0 0.0
    %7433 = vmatprep.subr.mxu0 0.0
    %7434 = vmatpush1.msra.mxu0 0.0
    %7435 = vmatprep.subr.mxu0 0.0
    %7436 = vmatpush1.msra.mxu0 0.0
    %7437 = vmatprep.subr.mxu0 0.0
    %7438 = vmatpush1.msra.mxu0 0.0
    %7439 = vmatprep.subr.mxu0 0.0
    %7440 = vmatpush1.msra.mxu0 0.0
    %7441 = vmatprep.subr.mxu0 0.0
    %7442 = vmatpush1.msra.mxu0 0.0
    %7443 = vmatprep.subr.mxu0 0.0
    %7444 = vmatpush1.msra.mxu0 0.0
    %7445 = vmatprep.mubr.f32.mxu0 0.0
    %7446 = vmatmul.mubr.f32.gmra.mrb[0].mxu0 %v7379
    %v7447 = vpop.f32.mrb[0].mxu0
    %v7448 = vadd.f32 0.0, %v7447
    %v7449 = vpop.f32.mrb[0].mxu0
    %7450 = vdwg.mxu0
    %7452 = vrot.lane.b32.xlu0 %v7448, 96
    %v7453 = vpop.permute.xlu0 %7452
    %v7455 = vadd.f32 %v7376, %v7453
    %7456 = vmatprep.subr.mxu0 0.0
    %7457 = vmatpush1.msra.mxu0 %v2490
    %7458 = vmatprep.subr.mxu0 0.0
    %7459 = vmatpush1.msra.mxu0 %v2491
    %7460 = vmatprep.subr.mxu0 0.0
    %7461 = vmatpush1.msra.mxu0 %v2492
    %7462 = vmatprep.subr.mxu0 0.0
    %7463 = vmatpush1.msra.mxu0 %v2493
    %7464 = vmatprep.subr.mxu0 0.0
    %7465 = vmatpush1.msra.mxu0 0.0
    %7466 = vmatprep.subr.mxu0 0.0
    %7467 = vmatpush1.msra.mxu0 0.0
    %7468 = vmatprep.subr.mxu0 0.0
    %7469 = vmatpush1.msra.mxu0 0.0
    %7470 = vmatprep.subr.mxu0 0.0
    %7471 = vmatpush1.msra.mxu0 0.0
    %7472 = vmatprep.subr.mxu0 0.0
    %7473 = vmatpush1.msra.mxu0 0.0
    %7474 = vmatprep.subr.mxu0 0.0
    %7475 = vmatpush1.msra.mxu0 0.0
    %7476 = vmatprep.subr.mxu0 0.0
    %7477 = vmatpush1.msra.mxu0 0.0
    %7478 = vmatprep.subr.mxu0 0.0
    %7479 = vmatpush1.msra.mxu0 0.0
    %7480 = vmatprep.subr.mxu0 0.0
    %7481 = vmatpush1.msra.mxu0 0.0
    %7482 = vmatprep.subr.mxu0 0.0
    %7483 = vmatpush1.msra.mxu0 0.0
    %7484 = vmatprep.subr.mxu0 0.0
    %7485 = vmatpush1.msra.mxu0 0.0
    %7486 = vmatprep.subr.mxu0 0.0
    %7487 = vmatpush1.msra.mxu0 0.0
    %7488 = vmatprep.subr.mxu0 0.0
    %7489 = vmatpush1.msra.mxu0 0.0
    %7490 = vmatprep.subr.mxu0 0.0
    %7491 = vmatpush1.msra.mxu0 0.0
    %7492 = vmatprep.subr.mxu0 0.0
    %7493 = vmatpush1.msra.mxu0 0.0
    %7494 = vmatprep.subr.mxu0 0.0
    %7495 = vmatpush1.msra.mxu0 0.0
    %7496 = vmatprep.subr.mxu0 0.0
    %7497 = vmatpush1.msra.mxu0 0.0
    %7498 = vmatprep.subr.mxu0 0.0
    %7499 = vmatpush1.msra.mxu0 0.0
    %7500 = vmatprep.subr.mxu0 0.0
    %7501 = vmatpush1.msra.mxu0 0.0
    %7502 = vmatprep.subr.mxu0 0.0
    %7503 = vmatpush1.msra.mxu0 0.0
    %7504 = vmatprep.subr.mxu0 0.0
    %7505 = vmatpush1.msra.mxu0 0.0
    %7506 = vmatprep.subr.mxu0 0.0
    %7507 = vmatpush1.msra.mxu0 0.0
    %7508 = vmatprep.subr.mxu0 0.0
    %7509 = vmatpush1.msra.mxu0 0.0
    %7510 = vmatprep.subr.mxu0 0.0
    %7511 = vmatpush1.msra.mxu0 0.0
    %7512 = vmatprep.subr.mxu0 0.0
    %7513 = vmatpush1.msra.mxu0 0.0
    %7514 = vmatprep.subr.mxu0 0.0
    %7515 = vmatpush1.msra.mxu0 0.0
    %7516 = vmatprep.subr.mxu0 0.0
    %7517 = vmatpush1.msra.mxu0 0.0
    %7518 = vmatprep.subr.mxu0 0.0
    %7519 = vmatpush1.msra.mxu0 0.0
    %7520 = vmatprep.mubr.f32.mxu0 0.0
    %7521 = vmatmul.mubr.f32.gmra.mrb[0].mxu0 %v7091
    %v7522 = vpop.f32.mrb[0].mxu0
    %v7523 = vadd.f32 0.0, %v7522
    %v7524 = vpop.f32.mrb[0].mxu0
    %7525 = vdwg.mxu0
    %7527 = vrot.lane.b32.xlu0 %v7523, 96
    %v7528 = vpop.permute.xlu0 %7527
    %v7530 = vadd.f32 %v7455, %v7528
    %7531 = vmatprep.subr.mxu0 0.0
    %7532 = vmatpush1.msra.mxu0 %v2494
    %7533 = vmatprep.subr.mxu0 0.0
    %7534 = vmatpush1.msra.mxu0 %v2495
    %7535 = vmatprep.subr.mxu0 0.0
    %7536 = vmatpush1.msra.mxu0 %v2496
    %7537 = vmatprep.subr.mxu0 0.0
    %7538 = vmatpush1.msra.mxu0 %v2497
    %7539 = vmatprep.subr.mxu0 0.0
    %7540 = vmatpush1.msra.mxu0 0.0
    %7541 = vmatprep.subr.mxu0 0.0
    %7542 = vmatpush1.msra.mxu0 0.0
    %7543 = vmatprep.subr.mxu0 0.0
    %7544 = vmatpush1.msra.mxu0 0.0
    %7545 = vmatprep.subr.mxu0 0.0
    %7546 = vmatpush1.msra.mxu0 0.0
    %7547 = vmatprep.subr.mxu0 0.0
    %7548 = vmatpush1.msra.mxu0 0.0
    %7549 = vmatprep.subr.mxu0 0.0
    %7550 = vmatpush1.msra.mxu0 0.0
    %7551 = vmatprep.subr.mxu0 0.0
    %7552 = vmatpush1.msra.mxu0 0.0
    %7553 = vmatprep.subr.mxu0 0.0
    %7554 = vmatpush1.msra.mxu0 0.0
    %7555 = vmatprep.subr.mxu0 0.0
    %7556 = vmatpush1.msra.mxu0 0.0
    %7557 = vmatprep.subr.mxu0 0.0
    %7558 = vmatpush1.msra.mxu0 0.0
    %7559 = vmatprep.subr.mxu0 0.0
    %7560 = vmatpush1.msra.mxu0 0.0
    %7561 = vmatprep.subr.mxu0 0.0
    %7562 = vmatpush1.msra.mxu0 0.0
    %7563 = vmatprep.subr.mxu0 0.0
    %7564 = vmatpush1.msra.mxu0 0.0
    %7565 = vmatprep.subr.mxu0 0.0
    %7566 = vmatpush1.msra.mxu0 0.0
    %7567 = vmatprep.subr.mxu0 0.0
    %7568 = vmatpush1.msra.mxu0 0.0
    %7569 = vmatprep.subr.mxu0 0.0
    %7570 = vmatpush1.msra.mxu0 0.0
    %7571 = vmatprep.subr.mxu0 0.0
    %7572 = vmatpush1.msra.mxu0 0.0
    %7573 = vmatprep.subr.mxu0 0.0
    %7574 = vmatpush1.msra.mxu0 0.0
    %7575 = vmatprep.subr.mxu0 0.0
    %7576 = vmatpush1.msra.mxu0 0.0
    %7577 = vmatprep.subr.mxu0 0.0
    %7578 = vmatpush1.msra.mxu0 0.0
    %7579 = vmatprep.subr.mxu0 0.0
    %7580 = vmatpush1.msra.mxu0 0.0
    %7581 = vmatprep.subr.mxu0 0.0
    %7582 = vmatpush1.msra.mxu0 0.0
    %7583 = vmatprep.subr.mxu0 0.0
    %7584 = vmatpush1.msra.mxu0 0.0
    %7585 = vmatprep.subr.mxu0 0.0
    %7586 = vmatpush1.msra.mxu0 0.0
    %7587 = vmatprep.subr.mxu0 0.0
    %7588 = vmatpush1.msra.mxu0 0.0
    %7589 = vmatprep.subr.mxu0 0.0
    %7590 = vmatpush1.msra.mxu0 0.0
    %7591 = vmatprep.subr.mxu0 0.0
    %7592 = vmatpush1.msra.mxu0 0.0
    %7593 = vmatprep.subr.mxu0 0.0
    %7594 = vmatpush1.msra.mxu0 0.0
    %7595 = vmatprep.mubr.f32.mxu0 0.0
    %7596 = vmatmul.mubr.f32.gmra.mrb[0].mxu0 %v7167
    %v7597 = vpop.f32.mrb[0].mxu0
    %v7598 = vadd.f32 0.0, %v7597
    %v7599 = vpop.f32.mrb[0].mxu0
    %7600 = vdwg.mxu0
    %7602 = vrot.lane.b32.xlu0 %v7598, 96
    %v7603 = vpop.permute.xlu0 %7602
    %v7605 = vadd.f32 %v7530, %v7603
    %v7608 = vunpack.c.l.s4 1966171168
    %v7609 = vunpack.c.0.s8 %v7608
    %v7610 = vlaneseq
    %v7611 = vshrl.u32 %v7610, 7
    %v7612 = vsub.s32 %v7609, %v7611
    %v7613 = vrot.slane %v7605, %v7612
    %v7614 = vcombine.high %v7613, %v7613
    %v7616 = vunpack.c.l.s4 1966171168
    %v7617 = vunpack.c.0.s8 %v7616
    %v7618 = vlaneseq
    %v7619 = vshrl.u32 %v7618, 7
    %v7620 = vsub.s32 %v7617, %v7619
    %v7621 = vrot.slane %v7613, %v7620
    %v7623 = vunpack.c.l.s4 1966171168
    %v7624 = vunpack.c.0.s8 %v7623
    %v7625 = vlaneseq
    %v7626 = vshrl.u32 %v7625, 7
    %v7627 = vsub.s32 %v7624, %v7626
    %v7628 = vrot.slane %v7614, %v7627
    %v7629 = vlaneseq
    %v7630 = vshrl.u32 %v7629, 7
    %v7631 = vsub.s32 0, %v7630
    %v7632 = vrot.slane %v7621, %v7631
    %v7633 = vlaneseq
    %v7634 = vshrl.u32 %v7633, 7
    %v7635 = vsub.s32 0, %v7634
    %v7636 = vrot.slane %v7628, %v7635
    %7637 = vrot.lane.b32.xlu0 %v7632, 32
    %v7638 = vpop.permute.xlu0 %7637
    %7639 = vrot.lane.b32.xlu0 %v7636, 32
    %v7640 = vpop.permute.xlu0 %7639
    %7643 = vst.msk [vmem:[#allocation4 + $0x6] sm:$0x1] %vm2975, %v7638
    %7644 = vst.msk [vmem:[#allocation4 + $0xe] sm:$0x1] %vm2975, %v7640
    %7645 = vmatprep.subr.mxu0 0.0
    %7646 = vmatpush1.msra.mxu0 %v2482
    %7647 = vmatprep.subr.mxu0 0.0
    %7648 = vmatpush1.msra.mxu0 %v2483
    %7649 = vmatprep.subr.mxu0 0.0
    %7650 = vmatpush1.msra.mxu0 %v2484
    %7651 = vmatprep.subr.mxu0 0.0
    %7652 = vmatpush1.msra.mxu0 %v2485
    %7653 = vmatprep.subr.mxu0 0.0
    %7654 = vmatpush1.msra.mxu0 0.0
    %7655 = vmatprep.subr.mxu0 0.0
    %7656 = vmatpush1.msra.mxu0 0.0
    %7657 = vmatprep.subr.mxu0 0.0
    %7658 = vmatpush1.msra.mxu0 0.0
    %7659 = vmatprep.subr.mxu0 0.0
    %7660 = vmatpush1.msra.mxu0 0.0
    %7661 = vmatprep.subr.mxu0 0.0
    %7662 = vmatpush1.msra.mxu0 0.0
    %7663 = vmatprep.subr.mxu0 0.0
    %7664 = vmatpush1.msra.mxu0 0.0
    %7665 = vmatprep.subr.mxu0 0.0
    %7666 = vmatpush1.msra.mxu0 0.0
    %7667 = vmatprep.subr.mxu0 0.0
    %7668 = vmatpush1.msra.mxu0 0.0
    %7669 = vmatprep.subr.mxu0 0.0
    %7670 = vmatpush1.msra.mxu0 0.0
    %7671 = vmatprep.subr.mxu0 0.0
    %7672 = vmatpush1.msra.mxu0 0.0
    %7673 = vmatprep.subr.mxu0 0.0
    %7674 = vmatpush1.msra.mxu0 0.0
    %7675 = vmatprep.subr.mxu0 0.0
    %7676 = vmatpush1.msra.mxu0 0.0
    %7677 = vmatprep.subr.mxu0 0.0
    %7678 = vmatpush1.msra.mxu0 0.0
    %7679 = vmatprep.subr.mxu0 0.0
    %7680 = vmatpush1.msra.mxu0 0.0
    %7681 = vmatprep.subr.mxu0 0.0
    %7682 = vmatpush1.msra.mxu0 0.0
    %7683 = vmatprep.subr.mxu0 0.0
    %7684 = vmatpush1.msra.mxu0 0.0
    %7685 = vmatprep.subr.mxu0 0.0
    %7686 = vmatpush1.msra.mxu0 0.0
    %7687 = vmatprep.subr.mxu0 0.0
    %7688 = vmatpush1.msra.mxu0 0.0
    %7689 = vmatprep.subr.mxu0 0.0
    %7690 = vmatpush1.msra.mxu0 0.0
    %7691 = vmatprep.subr.mxu0 0.0
    %7692 = vmatpush1.msra.mxu0 0.0
    %7693 = vmatprep.subr.mxu0 0.0
    %7694 = vmatpush1.msra.mxu0 0.0
    %7695 = vmatprep.subr.mxu0 0.0
    %7696 = vmatpush1.msra.mxu0 0.0
    %7697 = vmatprep.subr.mxu0 0.0
    %7698 = vmatpush1.msra.mxu0 0.0
    %7699 = vmatprep.subr.mxu0 0.0
    %7700 = vmatpush1.msra.mxu0 0.0
    %7701 = vmatprep.subr.mxu0 0.0
    %7702 = vmatpush1.msra.mxu0 0.0
    %7703 = vmatprep.subr.mxu0 0.0
    %7704 = vmatpush1.msra.mxu0 0.0
    %7705 = vmatprep.subr.mxu0 0.0
    %7706 = vmatpush1.msra.mxu0 0.0
    %7707 = vmatprep.subr.mxu0 0.0
    %7708 = vmatpush1.msra.mxu0 0.0
    %7709 = vmatprep.mubr.f32.mxu0 0.0
    %7710 = vmatmul.mubr.f32.gmra.mrb[0].mxu0 %v7379
    %v7711 = vpop.f32.mrb[0].mxu0
    %v7712 = vadd.f32 0.0, %v7711
    %v7713 = vpop.f32.mrb[0].mxu0
    %7714 = vdwg.mxu0
    %v7715 = vlaneseq
    %v7716 = vshrl.u32 %v7715, 7
    %v7717 = vsub.s32 0, %v7716
    %v7718 = vrot.slane %v7712, %v7717
    %v7719 = vadd.f32 %v2310, %v7718
    %v7720 = vtanh.pop %v7719
    %v7721 = vmul.f32 %v7720, %v2469
    %v7722 = vsel %vm46, %v7721, 0.0
    %7723 = vadd.xlane.f32.xlu0 %v7722
    %v7724 = vpop.xlane.xlu0 %7723
    %v7725 = vadd.f32 %v7724, %v2463
    %v7726 = vsel %vm2582, %v7725, -inf
    %v7727 = vrot.slane %v7726, 4
    %v7728 = vmax.f32 %v7726, %v7727
    %v7729 = vrot.slane %v7728, 2
    %v7730 = vmax.f32 %v7728, %v7729
    %v7731 = vrot.slane %v7730, 1
    %v7732 = vmax.f32 %v7730, %v7731
    %v7733 = vsub.f32 %v7725, %v7732
    %v7734 = vmul.f32 %v7733, 1.442695
    %v7735 = vpow.pop %v7734
    %v7736 = vsel %vm2582, %v7735, 0.0
    %v7737 = vrot.slane %v7736, 4
    %v7738 = vadd.f32 %v7736, %v7737
    %v7739 = vrot.slane %v7738, 2
    %v7740 = vadd.f32 %v7738, %v7739
    %v7741 = vrot.slane %v7740, 1
    %v7742 = vadd.f32 %v7740, %v7741
    %v7743 = vrcp.pop %v7742
    %v7744 = vmul.f32 %v7735, %v7743
    %7746 = vset.pattern.permute.xlu0 0
    %7747 = vperm.xlu0 %7746, %v7744
    %v7748 = vpop.permute.xlu0 %7747
    %v7750 = vmul.f32 %v7748, %v2082
    %v7751 = vsel %vm2608, %v7750, 0.0
    %v7752 = vrot.slane %v7751, 4
    %v7753 = vadd.f32 %v7751, %v7752
    %v7754 = vrot.slane %v7753, 2
    %v7755 = vadd.f32 %v7753, %v7754
    %v7756 = vrot.slane %v7755, 1
    %v7757 = vadd.f32 %v7755, %v7756
    %v7758 = vmul.f32 %v7748, %v2132
    %v7759 = vsel %vm2608, %v7758, 0.0
    %v7760 = vrot.slane %v7759, 4
    %v7761 = vadd.f32 %v7759, %v7760
    %v7762 = vrot.slane %v7761, 2
    %v7763 = vadd.f32 %v7761, %v7762
    %v7764 = vrot.slane %v7763, 1
    %v7765 = vadd.f32 %v7763, %v7764
    %v7766 = vlaneseq
    %v7767 = vshrl.u32 %v7766, 7
    %v7768 = vsub.s32 1, %v7767
    %v7769 = vrot.slane %v7712, %v7768
    %v7770 = vadd.f32 %v2460, %v7769
    %v7771 = vtanh.pop %v7770
    %v7772 = vmul.f32 %v7771, %v2469
    %v7773 = vsel %vm46, %v7772, 0.0
    %7774 = vadd.xlane.f32.xlu0 %v7773
    %v7775 = vpop.xlane.xlu0 %7774
    %v7776 = vadd.f32 %v7775, %v2465
    %v7777 = vsel %vm2582, %v7776, -inf
    %v7778 = vrot.slane %v7777, 4
    %v7779 = vmax.f32 %v7777, %v7778
    %v7780 = vrot.slane %v7779, 2
    %v7781 = vmax.f32 %v7779, %v7780
    %v7782 = vrot.slane %v7781, 1
    %v7783 = vmax.f32 %v7781, %v7782
    %v7784 = vsub.f32 %v7776, %v7783
    %v7785 = vmul.f32 %v7784, 1.442695
    %v7786 = vpow.pop %v7785
    %v7787 = vsel %vm2582, %v7786, 0.0
    %v7788 = vrot.slane %v7787, 4
    %v7789 = vadd.f32 %v7787, %v7788
    %v7790 = vrot.slane %v7789, 2
    %v7791 = vadd.f32 %v7789, %v7790
    %v7792 = vrot.slane %v7791, 1
    %v7793 = vadd.f32 %v7791, %v7792
    %v7794 = vrcp.pop %v7793
    %v7795 = vmul.f32 %v7786, %v7794
    %7797 = vset.pattern.permute.xlu0 0
    %7798 = vperm.xlu0 %7797, %v7795
    %v7799 = vpop.permute.xlu0 %7798
    %v7801 = vmul.f32 %v7799, %v2104
    %v7802 = vsel %vm2608, %v7801, 0.0
    %v7803 = vrot.slane %v7802, 4
    %v7804 = vadd.f32 %v7802, %v7803
    %v7805 = vrot.slane %v7804, 2
    %v7806 = vadd.f32 %v7804, %v7805
    %v7807 = vrot.slane %v7806, 1
    %v7808 = vadd.f32 %v7806, %v7807
    %v7809 = vmul.f32 %v7799, %v2154
    %v7810 = vsel %vm2608, %v7809, 0.0
    %v7811 = vrot.slane %v7810, 4
    %v7812 = vadd.f32 %v7810, %v7811
    %v7813 = vrot.slane %v7812, 2
    %v7814 = vadd.f32 %v7812, %v7813
    %v7815 = vrot.slane %v7814, 1
    %v7816 = vadd.f32 %v7814, %v7815
    %v7817 = vsel %vm2069, %v7757, %v7808
    %v7818 = vsel %vm2069, %v7765, %v7816
    %s7819 = scalar_lea.vmem %s3, 14
    %v7820 = vld [vmem:[%s7819] sm:$0x3]
    %7822 = vrot.lane.b32.xlu0 %v7817, 96
    %v7823 = vpop.permute.xlu0 %7822
    %v7824 = vsel %vm46, %v7823, 0
    %7826 = vmatprep.subr.mxu0 0.0
    %7827 = vmatpush1.msra.mxu0 %v2474
    %7828 = vmatprep.subr.mxu0 0.0
    %7829 = vmatpush1.msra.mxu0 %v2475
    %7830 = vmatprep.subr.mxu0 0.0
    %7831 = vmatpush1.msra.mxu0 %v2476
    %7832 = vmatprep.subr.mxu0 0.0
    %7833 = vmatpush1.msra.mxu0 %v2477
    %7834 = vmatprep.subr.mxu0 0.0
    %7835 = vmatpush1.msra.mxu0 0.0
    %7836 = vmatprep.subr.mxu0 0.0
    %7837 = vmatpush1.msra.mxu0 0.0
    %7838 = vmatprep.subr.mxu0 0.0
    %7839 = vmatpush1.msra.mxu0 0.0
    %7840 = vmatprep.subr.mxu0 0.0
    %7841 = vmatpush1.msra.mxu0 0.0
    %7842 = vmatprep.subr.mxu0 0.0
    %7843 = vmatpush1.msra.mxu0 0.0
    %7844 = vmatprep.subr.mxu0 0.0
    %7845 = vmatpush1.msra.mxu0 0.0
    %7846 = vmatprep.subr.mxu0 0.0
    %7847 = vmatpush1.msra.mxu0 0.0
    %7848 = vmatprep.subr.mxu0 0.0
    %7849 = vmatpush1.msra.mxu0 0.0
    %7850 = vmatprep.subr.mxu0 0.0
    %7851 = vmatpush1.msra.mxu0 0.0
    %7852 = vmatprep.subr.mxu0 0.0
    %7853 = vmatpush1.msra.mxu0 0.0
    %7854 = vmatprep.subr.mxu0 0.0
    %7855 = vmatpush1.msra.mxu0 0.0
    %7856 = vmatprep.subr.mxu0 0.0
    %7857 = vmatpush1.msra.mxu0 0.0
    %7858 = vmatprep.subr.mxu0 0.0
    %7859 = vmatpush1.msra.mxu0 0.0
    %7860 = vmatprep.subr.mxu0 0.0
    %7861 = vmatpush1.msra.mxu0 0.0
    %7862 = vmatprep.subr.mxu0 0.0
    %7863 = vmatpush1.msra.mxu0 0.0
    %7864 = vmatprep.subr.mxu0 0.0
    %7865 = vmatpush1.msra.mxu0 0.0
    %7866 = vmatprep.subr.mxu0 0.0
    %7867 = vmatpush1.msra.mxu0 0.0
    %7868 = vmatprep.subr.mxu0 0.0
    %7869 = vmatpush1.msra.mxu0 0.0
    %7870 = vmatprep.subr.mxu0 0.0
    %7871 = vmatpush1.msra.mxu0 0.0
    %7872 = vmatprep.subr.mxu0 0.0
    %7873 = vmatpush1.msra.mxu0 0.0
    %7874 = vmatprep.subr.mxu0 0.0
    %7875 = vmatpush1.msra.mxu0 0.0
    %7876 = vmatprep.subr.mxu0 0.0
    %7877 = vmatpush1.msra.mxu0 0.0
    %7878 = vmatprep.subr.mxu0 0.0
    %7879 = vmatpush1.msra.mxu0 0.0
    %7880 = vmatprep.subr.mxu0 0.0
    %7881 = vmatpush1.msra.mxu0 0.0
    %7882 = vmatprep.subr.mxu0 0.0
    %7883 = vmatpush1.msra.mxu0 0.0
    %7884 = vmatprep.subr.mxu0 0.0
    %7885 = vmatpush1.msra.mxu0 0.0
    %7886 = vmatprep.subr.mxu0 0.0
    %7887 = vmatpush1.msra.mxu0 0.0
    %7888 = vmatprep.subr.mxu0 0.0
    %7889 = vmatpush1.msra.mxu0 0.0
    %7890 = vmatprep.mubr.f32.mxu0 0.0
    %7891 = vmatmul.mubr.f32.gmra.mrb[0].mxu0 %v7824
    %v7892 = vpop.f32.mrb[0].mxu0
    %v7893 = vadd.f32 0.0, %v7892
    %v7894 = vpop.f32.mrb[0].mxu0
    %7895 = vdwg.mxu0
    %v7896 = vadd.f32 %v7820, %v7893
    %7898 = vrot.lane.b32.xlu0 %v7818, 96
    %v7899 = vpop.permute.xlu0 %7898
    %v7900 = vsel %vm46, %v7899, 0
    %7902 = vmatprep.subr.mxu0 0.0
    %7903 = vmatpush1.msra.mxu0 %v2478
    %7904 = vmatprep.subr.mxu0 0.0
    %7905 = vmatpush1.msra.mxu0 %v2479
    %7906 = vmatprep.subr.mxu0 0.0
    %7907 = vmatpush1.msra.mxu0 %v2480
    %7908 = vmatprep.subr.mxu0 0.0
    %7909 = vmatpush1.msra.mxu0 %v2481
    %7910 = vmatprep.subr.mxu0 0.0
    %7911 = vmatpush1.msra.mxu0 0.0
    %7912 = vmatprep.subr.mxu0 0.0
    %7913 = vmatpush1.msra.mxu0 0.0
    %7914 = vmatprep.subr.mxu0 0.0
    %7915 = vmatpush1.msra.mxu0 0.0
    %7916 = vmatprep.subr.mxu0 0.0
    %7917 = vmatpush1.msra.mxu0 0.0
    %7918 = vmatprep.subr.mxu0 0.0
    %7919 = vmatpush1.msra.mxu0 0.0
    %7920 = vmatprep.subr.mxu0 0.0
    %7921 = vmatpush1.msra.mxu0 0.0
    %7922 = vmatprep.subr.mxu0 0.0
    %7923 = vmatpush1.msra.mxu0 0.0
    %7924 = vmatprep.subr.mxu0 0.0
    %7925 = vmatpush1.msra.mxu0 0.0
    %7926 = vmatprep.subr.mxu0 0.0
    %7927 = vmatpush1.msra.mxu0 0.0
    %7928 = vmatprep.subr.mxu0 0.0
    %7929 = vmatpush1.msra.mxu0 0.0
    %7930 = vmatprep.subr.mxu0 0.0
    %7931 = vmatpush1.msra.mxu0 0.0
    %7932 = vmatprep.subr.mxu0 0.0
    %7933 = vmatpush1.msra.mxu0 0.0
    %7934 = vmatprep.subr.mxu0 0.0
    %7935 = vmatpush1.msra.mxu0 0.0
    %7936 = vmatprep.subr.mxu0 0.0
    %7937 = vmatpush1.msra.mxu0 0.0
    %7938 = vmatprep.subr.mxu0 0.0
    %7939 = vmatpush1.msra.mxu0 0.0
    %7940 = vmatprep.subr.mxu0 0.0
    %7941 = vmatpush1.msra.mxu0 0.0
    %7942 = vmatprep.subr.mxu0 0.0
    %7943 = vmatpush1.msra.mxu0 0.0
    %7944 = vmatprep.subr.mxu0 0.0
    %7945 = vmatpush1.msra.mxu0 0.0
    %7946 = vmatprep.subr.mxu0 0.0
    %7947 = vmatpush1.msra.mxu0 0.0
    %7948 = vmatprep.subr.mxu0 0.0
    %7949 = vmatpush1.msra.mxu0 0.0
    %7950 = vmatprep.subr.mxu0 0.0
    %7951 = vmatpush1.msra.mxu0 0.0
    %7952 = vmatprep.subr.mxu0 0.0
    %7953 = vmatpush1.msra.mxu0 0.0
    %7954 = vmatprep.subr.mxu0 0.0
    %7955 = vmatpush1.msra.mxu0 0.0
    %7956 = vmatprep.subr.mxu0 0.0
    %7957 = vmatpush1.msra.mxu0 0.0
    %7958 = vmatprep.subr.mxu0 0.0
    %7959 = vmatpush1.msra.mxu0 0.0
    %7960 = vmatprep.subr.mxu0 0.0
    %7961 = vmatpush1.msra.mxu0 0.0
    %7962 = vmatprep.subr.mxu0 0.0
    %7963 = vmatpush1.msra.mxu0 0.0
    %7964 = vmatprep.subr.mxu0 0.0
    %7965 = vmatpush1.msra.mxu0 0.0
    %7966 = vmatprep.mubr.f32.mxu0 0.0
    %7967 = vmatmul.mubr.f32.gmra.mrb[0].mxu0 %v7900
    %v7968 = vpop.f32.mrb[0].mxu0
    %v7969 = vadd.f32 0.0, %v7968
    %v7970 = vpop.f32.mrb[0].mxu0
    %7971 = vdwg.mxu0
    %v7972 = vadd.f32 %v7896, %v7969
    %7973 = vmatprep.subr.mxu0 0.0
    %7974 = vmatpush1.msra.mxu0 %v2470
    %7975 = vmatprep.subr.mxu0 0.0
    %7976 = vmatpush1.msra.mxu0 %v2471
    %7977 = vmatprep.subr.mxu0 0.0
    %7978 = vmatpush1.msra.mxu0 %v2472
    %7979 = vmatprep.subr.mxu0 0.0
    %7980 = vmatpush1.msra.mxu0 %v2473
    %7981 = vmatprep.subr.mxu0 0.0
    %7982 = vmatpush1.msra.mxu0 0.0
    %7983 = vmatprep.subr.mxu0 0.0
    %7984 = vmatpush1.msra.mxu0 0.0
    %7985 = vmatprep.subr.mxu0 0.0
    %7986 = vmatpush1.msra.mxu0 0.0
    %7987 = vmatprep.subr.mxu0 0.0
    %7988 = vmatpush1.msra.mxu0 0.0
    %7989 = vmatprep.subr.mxu0 0.0
    %7990 = vmatpush1.msra.mxu0 0.0
    %7991 = vmatprep.subr.mxu0 0.0
    %7992 = vmatpush1.msra.mxu0 0.0
    %7993 = vmatprep.subr.mxu0 0.0
    %7994 = vmatpush1.msra.mxu0 0.0
    %7995 = vmatprep.subr.mxu0 0.0
    %7996 = vmatpush1.msra.mxu0 0.0
    %7997 = vmatprep.subr.mxu0 0.0
    %7998 = vmatpush1.msra.mxu0 0.0
    %7999 = vmatprep.subr.mxu0 0.0
    %8000 = vmatpush1.msra.mxu0 0.0
    %8001 = vmatprep.subr.mxu0 0.0
    %8002 = vmatpush1.msra.mxu0 0.0
    %8003 = vmatprep.subr.mxu0 0.0
    %8004 = vmatpush1.msra.mxu0 0.0
    %8005 = vmatprep.subr.mxu0 0.0
    %8006 = vmatpush1.msra.mxu0 0.0
    %8007 = vmatprep.subr.mxu0 0.0
    %8008 = vmatpush1.msra.mxu0 0.0
    %8009 = vmatprep.subr.mxu0 0.0
    %8010 = vmatpush1.msra.mxu0 0.0
    %8011 = vmatprep.subr.mxu0 0.0
    %8012 = vmatpush1.msra.mxu0 0.0
    %8013 = vmatprep.subr.mxu0 0.0
    %8014 = vmatpush1.msra.mxu0 0.0
    %8015 = vmatprep.subr.mxu0 0.0
    %8016 = vmatpush1.msra.mxu0 0.0
    %8017 = vmatprep.subr.mxu0 0.0
    %8018 = vmatpush1.msra.mxu0 0.0
    %8019 = vmatprep.subr.mxu0 0.0
    %8020 = vmatpush1.msra.mxu0 0.0
    %8021 = vmatprep.subr.mxu0 0.0
    %8022 = vmatpush1.msra.mxu0 0.0
    %8023 = vmatprep.subr.mxu0 0.0
    %8024 = vmatpush1.msra.mxu0 0.0
    %8025 = vmatprep.subr.mxu0 0.0
    %8026 = vmatpush1.msra.mxu0 0.0
    %8027 = vmatprep.subr.mxu0 0.0
    %8028 = vmatpush1.msra.mxu0 0.0
    %8029 = vmatprep.subr.mxu0 0.0
    %8030 = vmatpush1.msra.mxu0 0.0
    %8031 = vmatprep.subr.mxu0 0.0
    %8032 = vmatpush1.msra.mxu0 0.0
    %8033 = vmatprep.subr.mxu0 0.0
    %8034 = vmatpush1.msra.mxu0 0.0
    %8035 = vmatprep.subr.mxu0 0.0
    %8036 = vmatpush1.msra.mxu0 0.0
    %8037 = vmatprep.mubr.f32.mxu0 0.0
    %8038 = vmatmul.mubr.f32.gmra.mrb[0].mxu0 %v7379
    %v8039 = vpop.f32.mrb[0].mxu0
    %v8040 = vadd.f32 0.0, %v8039
    %v8041 = vpop.f32.mrb[0].mxu0
    %8042 = vdwg.mxu0
    %v8043 = vadd.f32 %v7972, %v8040
    %v8044 = vxor.u32 %v8043, 2147483648
    %v8045 = vmul.f32 %v8044, 1.442695
    %v8046 = vpow.pop %v8045
    %v8047 = vadd.f32 %v8046, 1.0
    %v8048 = vrcp.pop %v8047
    %v8049 = vmul.f32 1.0, %v8048
    %v8050 = vadd.f32 %v8040, %v2913
    %8052 = vrot.lane.b32.xlu0 %v8050, 64
    %v8053 = vpop.permute.xlu0 %8052
    %v8055 = vmul.f32 %v8049, %v8053
    %8057 = vrot.lane.b32.xlu0 %v8055, 64
    %v8058 = vpop.permute.xlu0 %8057
    %v8060 = vadd.f32 %v7972, %v8058
    %v8061 = vtanh.pop %v8060
    %v8062 = vsub.f32 1.0, %v8049
    %8064 = vrot.lane.b32.xlu0 %v8061, 96
    %v8065 = vpop.permute.xlu0 %8064
    %v8067 = vmul.f32 %v8062, %v8065
    %v8068 = vmul.f32 %v8049, %v7336
    %v8069 = vadd.f32 %v8067, %v8068
    %v8072 = vunpack.c.l.s4 1966171168
    %v8073 = vunpack.c.0.s8 %v8072
    %v8074 = vlaneseq
    %v8075 = vshrl.u32 %v8074, 7
    %v8076 = vsub.s32 %v8073, %v8075
    %v8077 = vrot.slane %v8069, %v8076
    %v8078 = vcombine.high %v8077, %v8077
    %v8080 = vunpack.c.l.s4 1966171168
    %v8081 = vunpack.c.0.s8 %v8080
    %v8082 = vlaneseq
    %v8083 = vshrl.u32 %v8082, 7
    %v8084 = vsub.s32 %v8081, %v8083
    %v8085 = vrot.slane %v8077, %v8084
    %v8087 = vunpack.c.l.s4 1966171168
    %v8088 = vunpack.c.0.s8 %v8087
    %v8089 = vlaneseq
    %v8090 = vshrl.u32 %v8089, 7
    %v8091 = vsub.s32 %v8088, %v8090
    %v8092 = vrot.slane %v8078, %v8091
    %v8093 = vlaneseq
    %v8094 = vshrl.u32 %v8093, 7
    %v8095 = vsub.s32 0, %v8094
    %v8096 = vrot.slane %v8085, %v8095
    %v8097 = vlaneseq
    %v8098 = vshrl.u32 %v8097, 7
    %v8099 = vsub.s32 0, %v8098
    %v8100 = vrot.slane %v8092, %v8099
    %8101 = vrot.lane.b32.xlu0 %v8096, 96
    %v8102 = vpop.permute.xlu0 %8101
    %8103 = vrot.lane.b32.xlu0 %v8100, 96
    %v8104 = vpop.permute.xlu0 %8103
    %8107 = vst.msk [vmem:[#allocation2 + $0x7] sm:$0x1] %vm2975, %v8102
    %8108 = vst.msk [vmem:[#allocation2 + $0xf] sm:$0x1] %vm2975, %v8104
    %v8109 = vld [vmem:[%s7819] sm:$0x3]
    %8110 = vrot.lane.b32.xlu0 %v8069, 96
    %v8111 = vpop.permute.xlu0 %8110
    %v8112 = vsel %vm46, %v8111, 0
    %8114 = vmatprep.subr.mxu0 0.0
    %8115 = vmatpush1.msra.mxu0 %v2486
    %8116 = vmatprep.subr.mxu0 0.0
    %8117 = vmatpush1.msra.mxu0 %v2487
    %8118 = vmatprep.subr.mxu0 0.0
    %8119 = vmatpush1.msra.mxu0 %v2488
    %8120 = vmatprep.subr.mxu0 0.0
    %8121 = vmatpush1.msra.mxu0 %v2489
    %8122 = vmatprep.subr.mxu0 0.0
    %8123 = vmatpush1.msra.mxu0 0.0
    %8124 = vmatprep.subr.mxu0 0.0
    %8125 = vmatpush1.msra.mxu0 0.0
    %8126 = vmatprep.subr.mxu0 0.0
    %8127 = vmatpush1.msra.mxu0 0.0
    %8128 = vmatprep.subr.mxu0 0.0
    %8129 = vmatpush1.msra.mxu0 0.0
    %8130 = vmatprep.subr.mxu0 0.0
    %8131 = vmatpush1.msra.mxu0 0.0
    %8132 = vmatprep.subr.mxu0 0.0
    %8133 = vmatpush1.msra.mxu0 0.0
    %8134 = vmatprep.subr.mxu0 0.0
    %8135 = vmatpush1.msra.mxu0 0.0
    %8136 = vmatprep.subr.mxu0 0.0
    %8137 = vmatpush1.msra.mxu0 0.0
    %8138 = vmatprep.subr.mxu0 0.0
    %8139 = vmatpush1.msra.mxu0 0.0
    %8140 = vmatprep.subr.mxu0 0.0
    %8141 = vmatpush1.msra.mxu0 0.0
    %8142 = vmatprep.subr.mxu0 0.0
    %8143 = vmatpush1.msra.mxu0 0.0
    %8144 = vmatprep.subr.mxu0 0.0
    %8145 = vmatpush1.msra.mxu0 0.0
    %8146 = vmatprep.subr.mxu0 0.0
    %8147 = vmatpush1.msra.mxu0 0.0
    %8148 = vmatprep.subr.mxu0 0.0
    %8149 = vmatpush1.msra.mxu0 0.0
    %8150 = vmatprep.subr.mxu0 0.0
    %8151 = vmatpush1.msra.mxu0 0.0
    %8152 = vmatprep.subr.mxu0 0.0
    %8153 = vmatpush1.msra.mxu0 0.0
    %8154 = vmatprep.subr.mxu0 0.0
    %8155 = vmatpush1.msra.mxu0 0.0
    %8156 = vmatprep.subr.mxu0 0.0
    %8157 = vmatpush1.msra.mxu0 0.0
    %8158 = vmatprep.subr.mxu0 0.0
    %8159 = vmatpush1.msra.mxu0 0.0
    %8160 = vmatprep.subr.mxu0 0.0
    %8161 = vmatpush1.msra.mxu0 0.0
    %8162 = vmatprep.subr.mxu0 0.0
    %8163 = vmatpush1.msra.mxu0 0.0
    %8164 = vmatprep.subr.mxu0 0.0
    %8165 = vmatpush1.msra.mxu0 0.0
    %8166 = vmatprep.subr.mxu0 0.0
    %8167 = vmatpush1.msra.mxu0 0.0
    %8168 = vmatprep.subr.mxu0 0.0
    %8169 = vmatpush1.msra.mxu0 0.0
    %8170 = vmatprep.subr.mxu0 0.0
    %8171 = vmatpush1.msra.mxu0 0.0
    %8172 = vmatprep.subr.mxu0 0.0
    %8173 = vmatpush1.msra.mxu0 0.0
    %8174 = vmatprep.subr.mxu0 0.0
    %8175 = vmatpush1.msra.mxu0 0.0
    %8176 = vmatprep.subr.mxu0 0.0
    %8177 = vmatpush1.msra.mxu0 0.0
    %8178 = vmatprep.mubr.f32.mxu0 0.0
    %8179 = vmatmul.mubr.f32.gmra.mrb[0].mxu0 %v8112
    %v8180 = vpop.f32.mrb[0].mxu0
    %v8181 = vadd.f32 0.0, %v8180
    %v8182 = vpop.f32.mrb[0].mxu0
    %8183 = vdwg.mxu0
    %8185 = vrot.lane.b32.xlu0 %v8181, 96
    %v8186 = vpop.permute.xlu0 %8185
    %v8188 = vadd.f32 %v8109, %v8186
    %8189 = vmatprep.subr.mxu0 0.0
    %8190 = vmatpush1.msra.mxu0 %v2490
    %8191 = vmatprep.subr.mxu0 0.0
    %8192 = vmatpush1.msra.mxu0 %v2491
    %8193 = vmatprep.subr.mxu0 0.0
    %8194 = vmatpush1.msra.mxu0 %v2492
    %8195 = vmatprep.subr.mxu0 0.0
    %8196 = vmatpush1.msra.mxu0 %v2493
    %8197 = vmatprep.subr.mxu0 0.0
    %8198 = vmatpush1.msra.mxu0 0.0
    %8199 = vmatprep.subr.mxu0 0.0
    %8200 = vmatpush1.msra.mxu0 0.0
    %8201 = vmatprep.subr.mxu0 0.0
    %8202 = vmatpush1.msra.mxu0 0.0
    %8203 = vmatprep.subr.mxu0 0.0
    %8204 = vmatpush1.msra.mxu0 0.0
    %8205 = vmatprep.subr.mxu0 0.0
    %8206 = vmatpush1.msra.mxu0 0.0
    %8207 = vmatprep.subr.mxu0 0.0
    %8208 = vmatpush1.msra.mxu0 0.0
    %8209 = vmatprep.subr.mxu0 0.0
    %8210 = vmatpush1.msra.mxu0 0.0
    %8211 = vmatprep.subr.mxu0 0.0
    %8212 = vmatpush1.msra.mxu0 0.0
    %8213 = vmatprep.subr.mxu0 0.0
    %8214 = vmatpush1.msra.mxu0 0.0
    %8215 = vmatprep.subr.mxu0 0.0
    %8216 = vmatpush1.msra.mxu0 0.0
    %8217 = vmatprep.subr.mxu0 0.0
    %8218 = vmatpush1.msra.mxu0 0.0
    %8219 = vmatprep.subr.mxu0 0.0
    %8220 = vmatpush1.msra.mxu0 0.0
    %8221 = vmatprep.subr.mxu0 0.0
    %8222 = vmatpush1.msra.mxu0 0.0
    %8223 = vmatprep.subr.mxu0 0.0
    %8224 = vmatpush1.msra.mxu0 0.0
    %8225 = vmatprep.subr.mxu0 0.0
    %8226 = vmatpush1.msra.mxu0 0.0
    %8227 = vmatprep.subr.mxu0 0.0
    %8228 = vmatpush1.msra.mxu0 0.0
    %8229 = vmatprep.subr.mxu0 0.0
    %8230 = vmatpush1.msra.mxu0 0.0
    %8231 = vmatprep.subr.mxu0 0.0
    %8232 = vmatpush1.msra.mxu0 0.0
    %8233 = vmatprep.subr.mxu0 0.0
    %8234 = vmatpush1.msra.mxu0 0.0
    %8235 = vmatprep.subr.mxu0 0.0
    %8236 = vmatpush1.msra.mxu0 0.0
    %8237 = vmatprep.subr.mxu0 0.0
    %8238 = vmatpush1.msra.mxu0 0.0
    %8239 = vmatprep.subr.mxu0 0.0
    %8240 = vmatpush1.msra.mxu0 0.0
    %8241 = vmatprep.subr.mxu0 0.0
    %8242 = vmatpush1.msra.mxu0 0.0
    %8243 = vmatprep.subr.mxu0 0.0
    %8244 = vmatpush1.msra.mxu0 0.0
    %8245 = vmatprep.subr.mxu0 0.0
    %8246 = vmatpush1.msra.mxu0 0.0
    %8247 = vmatprep.subr.mxu0 0.0
    %8248 = vmatpush1.msra.mxu0 0.0
    %8249 = vmatprep.subr.mxu0 0.0
    %8250 = vmatpush1.msra.mxu0 0.0
    %8251 = vmatprep.subr.mxu0 0.0
    %8252 = vmatpush1.msra.mxu0 0.0
    %8253 = vmatprep.mubr.f32.mxu0 0.0
    %8254 = vmatmul.mubr.f32.gmra.mrb[0].mxu0 %v7824
    %v8255 = vpop.f32.mrb[0].mxu0
    %v8256 = vadd.f32 0.0, %v8255
    %v8257 = vpop.f32.mrb[0].mxu0
    %8258 = vdwg.mxu0
    %8260 = vrot.lane.b32.xlu0 %v8256, 96
    %v8261 = vpop.permute.xlu0 %8260
    %v8263 = vadd.f32 %v8188, %v8261
    %8264 = vmatprep.subr.mxu0 0.0
    %8265 = vmatpush1.msra.mxu0 %v2494
    %8266 = vmatprep.subr.mxu0 0.0
    %8267 = vmatpush1.msra.mxu0 %v2495
    %8268 = vmatprep.subr.mxu0 0.0
    %8269 = vmatpush1.msra.mxu0 %v2496
    %8270 = vmatprep.subr.mxu0 0.0
    %8271 = vmatpush1.msra.mxu0 %v2497
    %8272 = vmatprep.subr.mxu0 0.0
    %8273 = vmatpush1.msra.mxu0 0.0
    %8274 = vmatprep.subr.mxu0 0.0
    %8275 = vmatpush1.msra.mxu0 0.0
    %8276 = vmatprep.subr.mxu0 0.0
    %8277 = vmatpush1.msra.mxu0 0.0
    %8278 = vmatprep.subr.mxu0 0.0
    %8279 = vmatpush1.msra.mxu0 0.0
    %8280 = vmatprep.subr.mxu0 0.0
    %8281 = vmatpush1.msra.mxu0 0.0
    %8282 = vmatprep.subr.mxu0 0.0
    %8283 = vmatpush1.msra.mxu0 0.0
    %8284 = vmatprep.subr.mxu0 0.0
    %8285 = vmatpush1.msra.mxu0 0.0
    %8286 = vmatprep.subr.mxu0 0.0
    %8287 = vmatpush1.msra.mxu0 0.0
    %8288 = vmatprep.subr.mxu0 0.0
    %8289 = vmatpush1.msra.mxu0 0.0
    %8290 = vmatprep.subr.mxu0 0.0
    %8291 = vmatpush1.msra.mxu0 0.0
    %8292 = vmatprep.subr.mxu0 0.0
    %8293 = vmatpush1.msra.mxu0 0.0
    %8294 = vmatprep.subr.mxu0 0.0
    %8295 = vmatpush1.msra.mxu0 0.0
    %8296 = vmatprep.subr.mxu0 0.0
    %8297 = vmatpush1.msra.mxu0 0.0
    %8298 = vmatprep.subr.mxu0 0.0
    %8299 = vmatpush1.msra.mxu0 0.0
    %8300 = vmatprep.subr.mxu0 0.0
    %8301 = vmatpush1.msra.mxu0 0.0
    %8302 = vmatprep.subr.mxu0 0.0
    %8303 = vmatpush1.msra.mxu0 0.0
    %8304 = vmatprep.subr.mxu0 0.0
    %8305 = vmatpush1.msra.mxu0 0.0
    %8306 = vmatprep.subr.mxu0 0.0
    %8307 = vmatpush1.msra.mxu0 0.0
    %8308 = vmatprep.subr.mxu0 0.0
    %8309 = vmatpush1.msra.mxu0 0.0
    %8310 = vmatprep.subr.mxu0 0.0
    %8311 = vmatpush1.msra.mxu0 0.0
    %8312 = vmatprep.subr.mxu0 0.0
    %8313 = vmatpush1.msra.mxu0 0.0
    %8314 = vmatprep.subr.mxu0 0.0
    %8315 = vmatpush1.msra.mxu0 0.0
    %8316 = vmatprep.subr.mxu0 0.0
    %8317 = vmatpush1.msra.mxu0 0.0
    %8318 = vmatprep.subr.mxu0 0.0
    %8319 = vmatpush1.msra.mxu0 0.0
    %8320 = vmatprep.subr.mxu0 0.0
    %8321 = vmatpush1.msra.mxu0 0.0
    %8322 = vmatprep.subr.mxu0 0.0
    %8323 = vmatpush1.msra.mxu0 0.0
    %8324 = vmatprep.subr.mxu0 0.0
    %8325 = vmatpush1.msra.mxu0 0.0
    %8326 = vmatprep.subr.mxu0 0.0
    %8327 = vmatpush1.msra.mxu0 0.0
    %8328 = vmatprep.mubr.f32.mxu0 0.0
    %8329 = vmatmul.mubr.f32.gmra.mrb[0].mxu0 %v7900
    %v8330 = vpop.f32.mrb[0].mxu0
    %v8331 = vadd.f32 0.0, %v8330
    %v8332 = vpop.f32.mrb[0].mxu0
    %8333 = vdwg.mxu0
    %8335 = vrot.lane.b32.xlu0 %v8331, 96
    %v8336 = vpop.permute.xlu0 %8335
    %v8338 = vadd.f32 %v8263, %v8336
    %v8341 = vunpack.c.l.s4 1966171168
    %v8342 = vunpack.c.0.s8 %v8341
    %v8343 = vlaneseq
    %v8344 = vshrl.u32 %v8343, 7
    %v8345 = vsub.s32 %v8342, %v8344
    %v8346 = vrot.slane %v8338, %v8345
    %v8347 = vcombine.high %v8346, %v8346
    %v8349 = vunpack.c.l.s4 1966171168
    %v8350 = vunpack.c.0.s8 %v8349
    %v8351 = vlaneseq
    %v8352 = vshrl.u32 %v8351, 7
    %v8353 = vsub.s32 %v8350, %v8352
    %v8354 = vrot.slane %v8346, %v8353
    %v8356 = vunpack.c.l.s4 1966171168
    %v8357 = vunpack.c.0.s8 %v8356
    %v8358 = vlaneseq
    %v8359 = vshrl.u32 %v8358, 7
    %v8360 = vsub.s32 %v8357, %v8359
    %v8361 = vrot.slane %v8347, %v8360
    %v8362 = vlaneseq
    %v8363 = vshrl.u32 %v8362, 7
    %v8364 = vsub.s32 0, %v8363
    %v8365 = vrot.slane %v8354, %v8364
    %v8366 = vlaneseq
    %v8367 = vshrl.u32 %v8366, 7
    %v8368 = vsub.s32 0, %v8367
    %v8369 = vrot.slane %v8361, %v8368
    %8370 = vrot.lane.b32.xlu0 %v8365, 32
    %v8371 = vpop.permute.xlu0 %8370
    %8372 = vrot.lane.b32.xlu0 %v8369, 32
    %v8373 = vpop.permute.xlu0 %8372
    %8376 = vst.msk [vmem:[#allocation4 + $0x7] sm:$0x1] %vm2975, %v8371
    %8377 = vst.msk [vmem:[#allocation4 + $0xf] sm:$0x1] %vm2975, %v8373
    %vm8379 = vcmask 254976
    %8380 = vst.msk [vmem:[#allocation6] sm:$0x3] %vm8379, %v8111
    // Predicated region
    $region30: #{encoder_decoder_forward.1} parent=1 // pred_check
      _
    $region31: #{encoder_decoder_forward.1} parent=1 // pred_check_branch
      %8382 = sbr.rel (0) target = $region33
    $region32: #{encoder_decoder_forward.1} parent=1 // pred_region
      %s8384 = ssub.s32 256, 256
      %8385 = vsyncadd [#allocation3], %s8384
      %s8386 = sshll.u32 [#allocation2], 4
      %s8387 = int_to_ptr.vmem [resolvable:$true] %s8386
      %8392 = dma.vmem_to_hbm [thread:$0]  %s8387, 256, %s7, [#allocation3], 128, 128, 8
    $region33: #{encoder_decoder_forward.1} parent=1 // pred_fallthru
      _
    // Predicated region
    $region34: #{encoder_decoder_forward.1} parent=1 // pred_check
      _
    $region35: #{encoder_decoder_forward.1} parent=1 // pred_check_branch
      %8394 = sbr.rel (0) target = $region37
    $region36: #{encoder_decoder_forward.1} parent=1 // pred_region
      %s8396 = ssub.s32 256, 256
      %8397 = vsyncadd [#allocation5], %s8396
      %s8398 = sshll.u32 [#allocation4], 4
      %s8399 = int_to_ptr.vmem [resolvable:$true] %s8398
      %8404 = dma.vmem_to_hbm [thread:$0]  %s8399, 256, %s8, [#allocation5], 128, 128, 8
    $region37: #{encoder_decoder_forward.1} parent=1 // pred_fallthru
      _
    // Predicated region
    $region38: #{encoder_decoder_forward.1} parent=1 // pred_check
      _
    $region39: #{encoder_decoder_forward.1} parent=1 // pred_check_branch
      %8406 = sbr.rel (0) target = $region41
    $region40: #{encoder_decoder_forward.1} parent=1 // pred_region
      %s8408 = ssub.s32 32, 32
      %8409 = vsyncadd [#allocation5], %s8408
      %s8411 = sshll.u32 [#allocation6], 4
      %s8412 = int_to_ptr.vmem [resolvable:$true] %s8411
      %8414 = dma.vmem_to_hbm [thread:$0]  %s8412, 32, %s9, [#allocation5]
    $region41: #{encoder_decoder_forward.1} parent=1 // pred_fallthru
      _
    // Predicated region
    $region42: #{encoder_decoder_forward.1} parent=1 // pred_check
      _
    $region43: #{encoder_decoder_forward.1} parent=1 // pred_check_branch
      %8416 = sbr.rel (0) target = $region45
    $region44: #{encoder_decoder_forward.1} parent=1 // pred_region
      %8417 = dma.done [#allocation3], 256
    $region45: #{encoder_decoder_forward.1} parent=1 // pred_fallthru
      _
    // Predicated region
    $region46: #{encoder_decoder_forward.1} parent=1 // pred_check
      _
    $region47: #{encoder_decoder_forward.1} parent=1 // pred_check_branch
      %8419 = sbr.rel (0) target = $region49
    $region48: #{encoder_decoder_forward.1} parent=1 // pred_region
      %8420 = dma.done [#allocation5], 256
    $region49: #{encoder_decoder_forward.1} parent=1 // pred_fallthru
      _
    // Predicated region
    $region50: #{encoder_decoder_forward.1} parent=1 // pred_check
      _
    $region51: #{encoder_decoder_forward.1} parent=1 // pred_check_branch
      %8422 = sbr.rel (0) target = $region53
    $region52: #{encoder_decoder_forward.1} parent=1 // pred_region
      %8423 = dma.done [#allocation5], 32
    $region53: #{encoder_decoder_forward.1} parent=1 // pred_fallthru
      _
    %8424 = vsyncpa [#allocation3], 1
    %8425 = vsyncpa [#allocation5], 1

</llo_original>
